<compile_context>
chip_gen: v6e
topology: v6e:2x2x1
jax: 0.10.0
libtpu: 0.0.40
codegen_flags: <defaults>
</compile_context>

<pallas_src>
import functools

import jax
import jax.numpy as jnp
from jax.experimental import pallas as pl
from jax.experimental.pallas import tpu as pltpu


# Logical (unpadded) channel widths of the reduced MobileNetV4-style stack.
STEM_C, B1_EXP, B1_OUT, B2_EXP, HEAD_C = 16, 48, 32, 96, 64
# Every channel axis is zero-padded to the 128-wide TPU lane dimension.
LANE = 128
# Column offset of real data inside the halo scratch: a full sublane tile (8)
# of left halo keeps the interior store tile-aligned while still providing the
# 1-column zero halo the 3x3 depthwise conv needs.
COL0 = 8


# ----------------------------------------------------------------------------
# Kernel 1: fused stem conv (3x3, stride 2, pad 1) + bias + ReLU.
# im2col is folded into the kernel: the image sits in a zeroed VMEM halo
# scratch and each of the 9 taps is a stride-2 slice feeding an MXU dot.
# ----------------------------------------------------------------------------
def _stem_kernel(x_ref, w_ref, b_ref, o_ref, pad_ref, *, H, W):
    Ho, Wo = H // 2, W // 2
    Cin = x_ref.shape[-1]
    Cout = o_ref.shape[-1]

    # Zero-filled halo scratch; real pixels at rows [1, H], cols [COL0, COL0+W).
    pad_ref[...] = jnp.zeros_like(pad_ref)
    pad_ref[1:H + 1, COL0:COL0 + W, :] = x_ref[0]

    w = w_ref[...]                                      # (3, 3, Cin, Cout)
    acc = jnp.zeros((Ho * Wo, Cout), jnp.float32)
    for di in range(3):
        for dj in range(3):
            tap = pad_ref[pl.ds(di, Ho, 2),
                          pl.ds(COL0 - 1 + dj, Wo, 2), :]   # (Ho, Wo, Cin)
            acc = acc + jnp.dot(tap.reshape(Ho * Wo, Cin), w[di, dj],
                                preferred_element_type=jnp.float32)
    acc = jnp.maximum(acc + b_ref[...], 0.0)
    o_ref[0] = acc.reshape(Ho, Wo, Cout).astype(o_ref.dtype)


def stem_conv3x3_s2_relu(x_nhwc, w, b):
    N, H, W, Cin = x_nhwc.shape
    Cout = w.shape[-1]
    Ho, Wo = H // 2, W // 2
    return pl.pallas_call(
        functools.partial(_stem_kernel, H=H, W=W),
        out_shape=jax.ShapeDtypeStruct((N, Ho, Wo, Cout), jnp.bfloat16),
        grid=(N,),
        in_specs=[
            pl.BlockSpec((1, H, W, Cin), lambda n: (n, 0, 0, 0)),
            pl.BlockSpec((3, 3, Cin, Cout), lambda n: (0, 0, 0, 0)),
            pl.BlockSpec((1, Cout), lambda n: (0, 0)),
        ],
        out_specs=pl.BlockSpec((1, Ho, Wo, Cout), lambda n: (n, 0, 0, 0)),
        scratch_shapes=[pltpu.VMEM((H + 2, W + 2 * COL0, Cin), jnp.float32)],
        compiler_params=pltpu.CompilerParams(
            dimension_semantics=("parallel",)),
    )(x_nhwc, w, b)


# ----------------------------------------------------------------------------
# Kernel 2: fused inverted-bottleneck (UIB) block for one image:
#   expand 1x1 (+ReLU) -> depthwise 3x3 @stride (+ReLU) -> project 1x1
#   [+ residual] [+ fused 1x1 head (+ReLU)]
# The expanded activation never leaves VMEM (halo scratch `hbuf`); the
# stride-2 case reads stride-2 taps directly (no compute-then-subsample).
# ----------------------------------------------------------------------------
def _uib_kernel(*refs, H, W, stride, residual, fuse_head):
    if fuse_head:
        (x_ref, we_ref, be_ref, wd_ref, bd_ref, wp_ref, bp_ref,
         wh_ref, bh_ref, o_ref, hbuf) = refs
    else:
        (x_ref, we_ref, be_ref, wd_ref, bd_ref, wp_ref, bp_ref,
         o_ref, hbuf) = refs
    Ho, Wo = H // stride, W // stride
    Ce = hbuf.shape[-1]

    # ---- expand 1x1 + ReLU (bf16 MXU, f32 accumulate) -----------------------
    xf = x_ref[0].astype(jnp.float32)                 # f32 before reshape
    x2 = xf.reshape(H * W, x_ref.shape[-1])
    h = jnp.dot(x2.astype(jnp.bfloat16), we_ref[...],
                preferred_element_type=jnp.float32)
    h = jnp.maximum(h + be_ref[...], 0.0)             # (H*W, Ce) f32

    # ---- stage into zero-padded VMEM halo scratch (in-kernel padding) -------
    hbuf[...] = jnp.zeros_like(hbuf)
    hbuf[1:H + 1, COL0:COL0 + W, :] = h.reshape(H, W, Ce)

    # ---- depthwise 3x3 + bias + ReLU, computed directly at `stride` ---------
    wd = wd_ref[...]                                  # (3, 3, Ce) f32
    acc = jnp.zeros((Ho, Wo, Ce), jnp.float32)
    for di in range(3):
        for dj in range(3):
            if stride == 1:
                tap = hbuf[di:di + Ho, COL0 - 1 + dj:COL0 - 1 + dj + Wo, :]
            else:
                tap = hbuf[pl.ds(di, Ho, stride),
                           pl.ds(COL0 - 1 + dj, Wo, stride), :]
            acc = acc + tap * wd[di, dj]
    acc = jnp.maximum(acc + bd_ref[...], 0.0)         # (Ho, Wo, Ce)

    # ---- project 1x1 (linear) ------------------------------------------------
    g = acc.reshape(Ho * Wo, Ce).astype(jnp.bfloat16)
    out = jnp.dot(g, wp_ref[...], preferred_element_type=jnp.float32)
    out = out + bp_ref[...]
    if residual:                                      # Cin == Cout, stride == 1
        out = out + x2
    if fuse_head:                                     # final 1x1 conv + ReLU
        out = jnp.dot(out.astype(jnp.bfloat16), wh_ref[...],
                      preferred_element_type=jnp.float32) + bh_ref[...]
        out = jnp.maximum(out, 0.0)
    o_ref[0] = out.reshape(Ho, Wo, out.shape[-1]).astype(o_ref.dtype)


def uib_block(x_nhwc, we, be, wd, bd, wp, bp, head=None, *, stride, residual):
    N, H, W, Cin = x_nhwc.shape
    Ce = we.shape[-1]
    Cout = wp.shape[-1]
    Ho, Wo = H // stride, W // stride

    inputs = [x_nhwc, we, be, wd, bd, wp, bp]
    in_specs = [
        pl.BlockSpec((1, H, W, Cin), lambda n: (n, 0, 0, 0)),
        pl.BlockSpec((Cin, Ce), lambda n: (0, 0)),
        pl.BlockSpec((1, Ce), lambda n: (0, 0)),
        pl.BlockSpec((3, 3, Ce), lambda n: (0, 0, 0)),
        pl.BlockSpec((1, Ce), lambda n: (0, 0)),
        pl.BlockSpec((Ce, Cout), lambda n: (0, 0)),
        pl.BlockSpec((1, Cout), lambda n: (0, 0)),
    ]
    if head is not None:
        wh, bh = head
        out_c = wh.shape[-1]
        inputs += [wh, bh]
        in_specs += [pl.BlockSpec((Cout, out_c), lambda n: (0, 0)),
                     pl.BlockSpec((1, out_c), lambda n: (0, 0))]
        out_dtype = jnp.float32        # network output stays f32
    else:
        out_c = Cout
        out_dtype = jnp.bfloat16       # internal activation: bf16 in HBM

    return pl.pallas_call(
        functools.partial(_uib_kernel, H=H, W=W, stride=stride,
                          residual=residual, fuse_head=head is not None),
        out_shape=jax.ShapeDtypeStruct((N, Ho, Wo, out_c), out_dtype),
        grid=(N,),
        in_specs=in_specs,
        out_specs=pl.BlockSpec((1, Ho, Wo, out_c), lambda n: (n, 0, 0, 0)),
        # TODO(synk): at production MobileNetV4 resolutions, tile H into row
        # strips with a 1-row halo and set vmem_limit_bytes for v7x's 64 MiB.
        scratch_shapes=[pltpu.VMEM((H + 2, W + 2 * COL0, Ce), jnp.float32)],
        compiler_params=pltpu.CompilerParams(
            dimension_semantics=("parallel",)),
    )(*inputs)


# ----------------------------------------------------------------------------
# Parameters: deterministic random init of the logical weights, then zero-pad
# every channel axis to 128 lanes (numerically exact) and cast 1x1 matmul
# weights to bf16.
# ----------------------------------------------------------------------------
def init_params(key, nc=3):
    # TODO(synk): real deployment must fold the pretrained BatchNorm
    # scale/shift into these conv weights/biases.
    ks = jax.random.split(key, 16)
    s = 0.1

    def nrm(k, shape):
        return (s * jax.random.normal(k, shape)).astype(jnp.float32)

    return {
        "stem_w": nrm(ks[0], (3, 3, nc, STEM_C)),
        "stem_b": nrm(ks[1], (STEM_C,)),
        "b1_exp_w": nrm(ks[2], (STEM_C, B1_EXP)),
        "b1_exp_b": nrm(ks[3], (B1_EXP,)),
        "b1_dw_w": nrm(ks[4], (3, 3, B1_EXP)),
        "b1_dw_b": nrm(ks[5], (B1_EXP,)),
        "b1_prj_w": nrm(ks[6], (B1_EXP, B1_OUT)),
        "b1_prj_b": nrm(ks[7], (B1_OUT,)),
        "b2_exp_w": nrm(ks[8], (B1_OUT, B2_EXP)),
        "b2_exp_b": nrm(ks[9], (B2_EXP,)),
        "b2_dw_w": nrm(ks[10], (3, 3, B2_EXP)),
        "b2_dw_b": nrm(ks[11], (B2_EXP,)),
        "b2_prj_w": nrm(ks[12], (B2_EXP, B1_OUT)),
        "b2_prj_b": nrm(ks[13], (B1_OUT,)),
        "head_w": nrm(ks[14], (B1_OUT, HEAD_C)),
        "head_b": nrm(ks[15], (HEAD_C,)),
    }


def _pad_mat(w):
    k, n = w.shape
    out = jnp.zeros((LANE, LANE), jnp.float32).at[:k, :n].set(w)
    return out.astype(jnp.bfloat16)


def _pad_vec(b):
    return jnp.zeros((1, LANE), jnp.float32).at[0, :b.shape[0]].set(b)


def prepare_params(p):
    q = {}
    q["stem_w"] = jnp.zeros((3, 3, p["stem_w"].shape[2], LANE),
                            jnp.float32).at[..., :STEM_C].set(p["stem_w"])
    q["stem_b"] = _pad_vec(p["stem_b"])
    for blk in ("b1", "b2"):
        q[f"{blk}_exp_w"] = _pad_mat(p[f"{blk}_exp_w"])
        q[f"{blk}_exp_b"] = _pad_vec(p[f"{blk}_exp_b"])
        dw = p[f"{blk}_dw_w"]
        q[f"{blk}_dw_w"] = jnp.zeros((3, 3, LANE),
                                     jnp.float32).at[..., :dw.shape[-1]].set(dw)
        q[f"{blk}_dw_b"] = _pad_vec(p[f"{blk}_dw_b"])
        q[f"{blk}_prj_w"] = _pad_mat(p[f"{blk}_prj_w"])
        q[f"{blk}_prj_b"] = _pad_vec(p[f"{blk}_prj_b"])
    q["head_w"] = _pad_mat(p["head_w"])
    q["head_b"] = _pad_vec(p["head_b"])
    return q


# ----------------------------------------------------------------------------
# Encoder forward (PyTorch-facing: NCHW in, NCHW out; boundary transposes only,
# the network itself runs NHWC / lane-dense inside three fused pallas_calls).
# ----------------------------------------------------------------------------
@jax.jit
def encoder_forward(params, x_nchw):
    x = jnp.transpose(x_nchw, (0, 2, 3, 1))               # NCHW -> NHWC
    x = stem_conv3x3_s2_relu(x, params["stem_w"], params["stem_b"])
    # block 1: expand -> DW3x3 (stride 2) -> project, fully fused
    x = uib_block(x, params["b1_exp_w"], params["b1_exp_b"],
                  params["b1_dw_w"], params["b1_dw_b"],
                  params["b1_prj_w"], params["b1_prj_b"],
                  stride=2, residual=False)
    # block 2: expand -> DW3x3 (stride 1) -> project + residual + fused head
    x = uib_block(x, params["b2_exp_w"], params["b2_exp_b"],
                  params["b2_dw_w"], params["b2_dw_b"],
                  params["b2_prj_w"], params["b2_prj_b"],
                  head=(params["head_w"], params["head_b"]),
                  stride=1, residual=True)
    x = x[..., :HEAD_C]                                    # strip lane padding
    return jnp.transpose(x, (0, 3, 1, 2))                  # NHWC -> NCHW


if __name__ == "__main__":
    root = jax.random.PRNGKey(0)
    k_params, k_input = jax.random.split(root)
    params = prepare_params(init_params(k_params, nc=3))
    x = jax.random.normal(k_input, (2, 3, 32, 32), dtype=jnp.float32)

    out = jax.block_until_ready(encoder_forward(params, x))

    assert out.shape == (2, HEAD_C, 8, 8), out.shape
    assert out.dtype == jnp.float32, out.dtype
    assert bool(jnp.isfinite(out).all())
    print("KERNEL_OK")
</pallas_src>

<mosaic_0001>
module attributes {stable_mosaic.version = 11 : i64} {
  func.func @_uib_kernel(%arg0: i32, %arg1: memref<1x16x16x128xbf16, #tpu.memory_space<vmem>>, %arg2: memref<128x128xbf16, #tpu.memory_space<vmem>>, %arg3: memref<1x128xf32, #tpu.memory_space<vmem>>, %arg4: memref<3x3x128xf32, #tpu.memory_space<vmem>>, %arg5: memref<1x128xf32, #tpu.memory_space<vmem>>, %arg6: memref<128x128xbf16, #tpu.memory_space<vmem>>, %arg7: memref<1x128xf32, #tpu.memory_space<vmem>>, %arg8: memref<1x8x8x128xbf16, #tpu.memory_space<vmem>>, %arg9: memref<18x32x128xf32, #tpu.memory_space<vmem>>) attributes {dimension_semantics = [#tpu.dimension_semantics<parallel>], iteration_bounds = array<i64: 2>, scalar_prefetch = 0 : i64, scratch_operands = 1 : i64, tpu.core_type = #tpu.core_type<tc>, window_params = [{transform_indices = @transform_0, window_bounds = array<i64: 1, 16, 16, 128>}, {pipeline_mode = #tpu.pipeline_mode<synchronous>, transform_indices = @transform_1, window_bounds = array<i64: 128, 128>}, {pipeline_mode = #tpu.pipeline_mode<synchronous>, transform_indices = @transform_2, window_bounds = array<i64: 1, 128>}, {pipeline_mode = #tpu.pipeline_mode<synchronous>, transform_indices = @transform_3, window_bounds = array<i64: 3, 3, 128>}, {pipeline_mode = #tpu.pipeline_mode<synchronous>, transform_indices = @transform_4, window_bounds = array<i64: 1, 128>}, {pipeline_mode = #tpu.pipeline_mode<synchronous>, transform_indices = @transform_5, window_bounds = array<i64: 128, 128>}, {pipeline_mode = #tpu.pipeline_mode<synchronous>, transform_indices = @transform_6, window_bounds = array<i64: 1, 128>}, {transform_indices = @transform_7, window_bounds = array<i64: 1, 8, 8, 128>}]} {
    %c0 = arith.constant 0 : index
    %c0_0 = arith.constant 0 : index
    %c0_1 = arith.constant 0 : index
    %c0_2 = arith.constant 0 : index
    %0 = vector.load %arg1[%c0, %c0_0, %c0_1, %c0_2] : memref<1x16x16x128xbf16, #tpu.memory_space<vmem>>, vector<1x16x16x128xbf16>
    %1 = vector.shape_cast %0 : vector<1x16x16x128xbf16> to vector<16x16x128xbf16>
    %2 = arith.extf %1 : vector<16x16x128xbf16> to vector<16x16x128xf32>
    %3 = vector.shape_cast %2 : vector<16x16x128xf32> to vector<256x128xf32>
    %4 = arith.truncf %3 : vector<256x128xf32> to vector<256x128xbf16>
    %c0_3 = arith.constant 0 : index
    %c0_4 = arith.constant 0 : index
    %5 = vector.load %arg2[%c0_3, %c0_4] : memref<128x128xbf16, #tpu.memory_space<vmem>>, vector<128x128xbf16>
    %cst = arith.constant dense<0.000000e+00> : vector<256x128xf32>
    %6 = tpu.matmul %4, %5, %cst {dimension_numbers = #tpu.dot_dimension_numbers<[1], [0], [0], [1], [0, 0, 1, 1], [], []>} : vector<256x128xbf16>, vector<128x128xbf16>, vector<256x128xf32> -> vector<256x128xf32>
    %c0_5 = arith.constant 0 : index
    %c0_6 = arith.constant 0 : index
    %7 = vector.load %arg3[%c0_5, %c0_6] : memref<1x128xf32, #tpu.memory_space<vmem>>, vector<1x128xf32>
    %8 = vector.broadcast %7 : vector<1x128xf32> to vector<256x128xf32>
    %9 = arith.addf %6, %8 : vector<256x128xf32>
    %cst_7 = arith.constant 0.000000e+00 : f32
    %10 = vector.broadcast %cst_7 : f32 to vector<256x128xf32>
    %11 = arith.maximumf %9, %10 : vector<256x128xf32>
    %cst_8 = arith.constant 0.000000e+00 : f32
    %12 = vector.broadcast %cst_8 : f32 to vector<18x32x128xf32>
    %c0_9 = arith.constant 0 : index
    %c0_10 = arith.constant 0 : index
    %c0_11 = arith.constant 0 : index
    %13 = vector.load %arg9[%c0_9, %c0_10, %c0_11] : memref<18x32x128xf32, #tpu.memory_space<vmem>>, vector<18x32x128xf32>
    tpu.vector_store %arg9[%c0_9, %c0_10, %c0_11], %12 {strides = array<i32>} : memref<18x32x128xf32, #tpu.memory_space<vmem>>, vector<18x32x128xf32>,
    %14 = vector.shape_cast %11 : vector<256x128xf32> to vector<16x16x128xf32>
    %c1 = arith.constant 1 : index
    %c8 = arith.constant 8 : index
    %c0_12 = arith.constant 0 : index
    %15 = vector.load %arg9[%c1, %c8, %c0_12] : memref<18x32x128xf32, #tpu.memory_space<vmem>>, vector<16x16x128xf32>
    tpu.vector_store %arg9[%c1, %c8, %c0_12], %14 {strides = array<i32>} : memref<18x32x128xf32, #tpu.memory_space<vmem>>, vector<16x16x128xf32>,
    %c0_13 = arith.constant 0 : index
    %c0_14 = arith.constant 0 : index
    %c0_15 = arith.constant 0 : index
    %16 = vector.load %arg4[%c0_13, %c0_14, %c0_15] : memref<3x3x128xf32, #tpu.memory_space<vmem>>, vector<3x3x128xf32>
    %cst_16 = arith.constant 0.000000e+00 : f32
    %17 = vector.broadcast %cst_16 : f32 to vector<8x8x128xf32>
    %c0_17 = arith.constant 0 : index
    %c7 = arith.constant 7 : index
    %c0_18 = arith.constant 0 : index
    %18 = tpu.strided_load %arg9[%c0_17, %c7, %c0_18] {strides = array<i32: 2, 2, 1>} : memref<18x32x128xf32, #tpu.memory_space<vmem>>, vector<8x8x128xf32>
    %19 = vector.extract_strided_slice %16 {offsets = [0, 0, 0], sizes = [1, 1, 128], strides = [1, 1, 1]} : vector<3x3x128xf32> to vector<1x1x128xf32>
    %20 = vector.shape_cast %19 : vector<1x1x128xf32> to vector<128xf32>
    %21 = vector.shape_cast %20 : vector<128xf32> to vector<1x1x128xf32>
    %22 = vector.broadcast %21 : vector<1x1x128xf32> to vector<8x8x128xf32>
    %23 = arith.mulf %18, %22 : vector<8x8x128xf32>
    %24 = arith.addf %17, %23 : vector<8x8x128xf32>
    %c0_19 = arith.constant 0 : index
    %c8_20 = arith.constant 8 : index
    %c0_21 = arith.constant 0 : index
    %25 = tpu.strided_load %arg9[%c0_19, %c8_20, %c0_21] {strides = array<i32: 2, 2, 1>} : memref<18x32x128xf32, #tpu.memory_space<vmem>>, vector<8x8x128xf32>
    %26 = vector.extract_strided_slice %16 {offsets = [0, 1, 0], sizes = [1, 1, 128], strides = [1, 1, 1]} : vector<3x3x128xf32> to vector<1x1x128xf32>
    %27 = vector.shape_cast %26 : vector<1x1x128xf32> to vector<128xf32>
    %28 = vector.shape_cast %27 : vector<128xf32> to vector<1x1x128xf32>
    %29 = vector.broadcast %28 : vector<1x1x128xf32> to vector<8x8x128xf32>
    %30 = arith.mulf %25, %29 : vector<8x8x128xf32>
    %31 = arith.addf %24, %30 : vector<8x8x128xf32>
    %c0_22 = arith.constant 0 : index
    %c9 = arith.constant 9 : index
    %c0_23 = arith.constant 0 : index
    %32 = tpu.strided_load %arg9[%c0_22, %c9, %c0_23] {strides = array<i32: 2, 2, 1>} : memref<18x32x128xf32, #tpu.memory_space<vmem>>, vector<8x8x128xf32>
    %33 = vector.extract_strided_slice %16 {offsets = [0, 2, 0], sizes = [1, 1, 128], strides = [1, 1, 1]} : vector<3x3x128xf32> to vector<1x1x128xf32>
    %34 = vector.shape_cast %33 : vector<1x1x128xf32> to vector<128xf32>
    %35 = vector.shape_cast %34 : vector<128xf32> to vector<1x1x128xf32>
    %36 = vector.broadcast %35 : vector<1x1x128xf32> to vector<8x8x128xf32>
    %37 = arith.mulf %32, %36 : vector<8x8x128xf32>
    %38 = arith.addf %31, %37 : vector<8x8x128xf32>
    %c1_24 = arith.constant 1 : index
    %c7_25 = arith.constant 7 : index
    %c0_26 = arith.constant 0 : index
    %39 = tpu.strided_load %arg9[%c1_24, %c7_25, %c0_26] {strides = array<i32: 2, 2, 1>} : memref<18x32x128xf32, #tpu.memory_space<vmem>>, vector<8x8x128xf32>
    %40 = vector.extract_strided_slice %16 {offsets = [1, 0, 0], sizes = [1, 1, 128], strides = [1, 1, 1]} : vector<3x3x128xf32> to vector<1x1x128xf32>
    %41 = vector.shape_cast %40 : vector<1x1x128xf32> to vector<128xf32>
    %42 = vector.shape_cast %41 : vector<128xf32> to vector<1x1x128xf32>
    %43 = vector.broadcast %42 : vector<1x1x128xf32> to vector<8x8x128xf32>
    %44 = arith.mulf %39, %43 : vector<8x8x128xf32>
    %45 = arith.addf %38, %44 : vector<8x8x128xf32>
    %c1_27 = arith.constant 1 : index
    %c8_28 = arith.constant 8 : index
    %c0_29 = arith.constant 0 : index
    %46 = tpu.strided_load %arg9[%c1_27, %c8_28, %c0_29] {strides = array<i32: 2, 2, 1>} : memref<18x32x128xf32, #tpu.memory_space<vmem>>, vector<8x8x128xf32>
    %47 = vector.extract_strided_slice %16 {offsets = [1, 1, 0], sizes = [1, 1, 128], strides = [1, 1, 1]} : vector<3x3x128xf32> to vector<1x1x128xf32>
    %48 = vector.shape_cast %47 : vector<1x1x128xf32> to vector<128xf32>
    %49 = vector.shape_cast %48 : vector<128xf32> to vector<1x1x128xf32>
    %50 = vector.broadcast %49 : vector<1x1x128xf32> to vector<8x8x128xf32>
    %51 = arith.mulf %46, %50 : vector<8x8x128xf32>
    %52 = arith.addf %45, %51 : vector<8x8x128xf32>
    %c1_30 = arith.constant 1 : index
    %c9_31 = arith.constant 9 : index
    %c0_32 = arith.constant 0 : index
    %53 = tpu.strided_load %arg9[%c1_30, %c9_31, %c0_32] {strides = array<i32: 2, 2, 1>} : memref<18x32x128xf32, #tpu.memory_space<vmem>>, vector<8x8x128xf32>
    %54 = vector.extract_strided_slice %16 {offsets = [1, 2, 0], sizes = [1, 1, 128], strides = [1, 1, 1]} : vector<3x3x128xf32> to vector<1x1x128xf32>
    %55 = vector.shape_cast %54 : vector<1x1x128xf32> to vector<128xf32>
    %56 = vector.shape_cast %55 : vector<128xf32> to vector<1x1x128xf32>
    %57 = vector.broadcast %56 : vector<1x1x128xf32> to vector<8x8x128xf32>
    %58 = arith.mulf %53, %57 : vector<8x8x128xf32>
    %59 = arith.addf %52, %58 : vector<8x8x128xf32>
    %c2 = arith.constant 2 : index
    %c7_33 = arith.constant 7 : index
    %c0_34 = arith.constant 0 : index
    %60 = tpu.strided_load %arg9[%c2, %c7_33, %c0_34] {strides = array<i32: 2, 2, 1>} : memref<18x32x128xf32, #tpu.memory_space<vmem>>, vector<8x8x128xf32>
    %61 = vector.extract_strided_slice %16 {offsets = [2, 0, 0], sizes = [1, 1, 128], strides = [1, 1, 1]} : vector<3x3x128xf32> to vector<1x1x128xf32>
    %62 = vector.shape_cast %61 : vector<1x1x128xf32> to vector<128xf32>
    %63 = vector.shape_cast %62 : vector<128xf32> to vector<1x1x128xf32>
    %64 = vector.broadcast %63 : vector<1x1x128xf32> to vector<8x8x128xf32>
    %65 = arith.mulf %60, %64 : vector<8x8x128xf32>
    %66 = arith.addf %59, %65 : vector<8x8x128xf32>
    %c2_35 = arith.constant 2 : index
    %c8_36 = arith.constant 8 : index
    %c0_37 = arith.constant 0 : index
    %67 = tpu.strided_load %arg9[%c2_35, %c8_36, %c0_37] {strides = array<i32: 2, 2, 1>} : memref<18x32x128xf32, #tpu.memory_space<vmem>>, vector<8x8x128xf32>
    %68 = vector.extract_strided_slice %16 {offsets = [2, 1, 0], sizes = [1, 1, 128], strides = [1, 1, 1]} : vector<3x3x128xf32> to vector<1x1x128xf32>
    %69 = vector.shape_cast %68 : vector<1x1x128xf32> to vector<128xf32>
    %70 = vector.shape_cast %69 : vector<128xf32> to vector<1x1x128xf32>
    %71 = vector.broadcast %70 : vector<1x1x128xf32> to vector<8x8x128xf32>
    %72 = arith.mulf %67, %71 : vector<8x8x128xf32>
    %73 = arith.addf %66, %72 : vector<8x8x128xf32>
    %c2_38 = arith.constant 2 : index
    %c9_39 = arith.constant 9 : index
    %c0_40 = arith.constant 0 : index
    %74 = tpu.strided_load %arg9[%c2_38, %c9_39, %c0_40] {strides = array<i32: 2, 2, 1>} : memref<18x32x128xf32, #tpu.memory_space<vmem>>, vector<8x8x128xf32>
    %75 = vector.extract_strided_slice %16 {offsets = [2, 2, 0], sizes = [1, 1, 128], strides = [1, 1, 1]} : vector<3x3x128xf32> to vector<1x1x128xf32>
    %76 = vector.shape_cast %75 : vector<1x1x128xf32> to vector<128xf32>
    %77 = vector.shape_cast %76 : vector<128xf32> to vector<1x1x128xf32>
    %78 = vector.broadcast %77 : vector<1x1x128xf32> to vector<8x8x128xf32>
    %79 = arith.mulf %74, %78 : vector<8x8x128xf32>
    %80 = arith.addf %73, %79 : vector<8x8x128xf32>
    %c0_41 = arith.constant 0 : index
    %c0_42 = arith.constant 0 : index
    %81 = vector.load %arg5[%c0_41, %c0_42] : memref<1x128xf32, #tpu.memory_space<vmem>>, vector<1x128xf32>
    %82 = vector.shape_cast %81 : vector<1x128xf32> to vector<1x1x128xf32>
    %83 = vector.broadcast %82 : vector<1x1x128xf32> to vector<8x8x128xf32>
    %84 = arith.addf %80, %83 : vector<8x8x128xf32>
    %cst_43 = arith.constant 0.000000e+00 : f32
    %85 = vector.broadcast %cst_43 : f32 to vector<8x8x128xf32>
    %86 = arith.maximumf %84, %85 : vector<8x8x128xf32>
    %87 = vector.shape_cast %86 : vector<8x8x128xf32> to vector<64x128xf32>
    %88 = arith.truncf %87 : vector<64x128xf32> to vector<64x128xbf16>
    %c0_44 = arith.constant 0 : index
    %c0_45 = arith.constant 0 : index
    %89 = vector.load %arg6[%c0_44, %c0_45] : memref<128x128xbf16, #tpu.memory_space<vmem>>, vector<128x128xbf16>
    %cst_46 = arith.constant dense<0.000000e+00> : vector<64x128xf32>
    %90 = tpu.matmul %88, %89, %cst_46 {dimension_numbers = #tpu.dot_dimension_numbers<[1], [0], [0], [1], [0, 0, 1, 1], [], []>} : vector<64x128xbf16>, vector<128x128xbf16>, vector<64x128xf32> -> vector<64x128xf32>
    %c0_47 = arith.constant 0 : index
    %c0_48 = arith.constant 0 : index
    %91 = vector.load %arg7[%c0_47, %c0_48] : memref<1x128xf32, #tpu.memory_space<vmem>>, vector<1x128xf32>
    %92 = vector.broadcast %91 : vector<1x128xf32> to vector<64x128xf32>
    %93 = arith.addf %90, %92 : vector<64x128xf32>
    %94 = vector.shape_cast %93 : vector<64x128xf32> to vector<8x8x128xf32>
    %95 = arith.truncf %94 : vector<8x8x128xf32> to vector<8x8x128xbf16>
    %c0_49 = arith.constant 0 : index
    %c0_50 = arith.constant 0 : index
    %c0_51 = arith.constant 0 : index
    %c0_52 = arith.constant 0 : index
    %96 = vector.load %arg8[%c0_49, %c0_50, %c0_51, %c0_52] : memref<1x8x8x128xbf16, #tpu.memory_space<vmem>>, vector<1x8x8x128xbf16>
    %97 = vector.shape_cast %96 : vector<1x8x8x128xbf16> to vector<8x8x128xbf16>
    %98 = vector.shape_cast %95 : vector<8x8x128xbf16> to vector<1x8x8x128xbf16>
    tpu.vector_store %arg8[%c0_49, %c0_50, %c0_51, %c0_52], %98 {strides = array<i32>} : memref<1x8x8x128xbf16, #tpu.memory_space<vmem>>, vector<1x8x8x128xbf16>,
    return
  }
  func.func @transform_0(%arg0: i32) -> (i32, i32, i32, i32) {
    %c0_i32 = arith.constant 0 : i32
    %c0_i32_0 = arith.constant 0 : i32
    %c0_i32_1 = arith.constant 0 : i32
    %c0_i32_2 = arith.constant 0 : i32
    return %arg0, %c0_i32, %c0_i32_0, %c0_i32_1 : i32, i32, i32, i32
  }
  func.func @transform_1(%arg0: i32) -> (i32, i32) {
    %c0_i32 = arith.constant 0 : i32
    %c0_i32_0 = arith.constant 0 : i32
    %c0_i32_1 = arith.constant 0 : i32
    return %c0_i32, %c0_i32_0 : i32, i32
  }
  func.func @transform_2(%arg0: i32) -> (i32, i32) {
    %c0_i32 = arith.constant 0 : i32
    %c0_i32_0 = arith.constant 0 : i32
    %c0_i32_1 = arith.constant 0 : i32
    return %c0_i32, %c0_i32_0 : i32, i32
  }
  func.func @transform_3(%arg0: i32) -> (i32, i32, i32) {
    %c0_i32 = arith.constant 0 : i32
    %c0_i32_0 = arith.constant 0 : i32
    %c0_i32_1 = arith.constant 0 : i32
    %c0_i32_2 = arith.constant 0 : i32
    return %c0_i32, %c0_i32_0, %c0_i32_1 : i32, i32, i32
  }
  func.func @transform_4(%arg0: i32) -> (i32, i32) {
    %c0_i32 = arith.constant 0 : i32
    %c0_i32_0 = arith.constant 0 : i32
    %c0_i32_1 = arith.constant 0 : i32
    return %c0_i32, %c0_i32_0 : i32, i32
  }
  func.func @transform_5(%arg0: i32) -> (i32, i32) {
    %c0_i32 = arith.constant 0 : i32
    %c0_i32_0 = arith.constant 0 : i32
    %c0_i32_1 = arith.constant 0 : i32
    return %c0_i32, %c0_i32_0 : i32, i32
  }
  func.func @transform_6(%arg0: i32) -> (i32, i32) {
    %c0_i32 = arith.constant 0 : i32
    %c0_i32_0 = arith.constant 0 : i32
    %c0_i32_1 = arith.constant 0 : i32
    return %c0_i32, %c0_i32_0 : i32, i32
  }
  func.func @transform_7(%arg0: i32) -> (i32, i32, i32, i32) {
    %c0_i32 = arith.constant 0 : i32
    %c0_i32_0 = arith.constant 0 : i32
    %c0_i32_1 = arith.constant 0 : i32
    %c0_i32_2 = arith.constant 0 : i32
    return %arg0, %c0_i32, %c0_i32_0, %c0_i32_1 : i32, i32, i32, i32
  }
}

module attributes {stable_mosaic.version = 11 : i64} {
  func.func @_uib_kernel(%arg0: i32, %arg1: memref<1x8x8x128xbf16, #tpu.memory_space<vmem>>, %arg2: memref<128x128xbf16, #tpu.memory_space<vmem>>, %arg3: memref<1x128xf32, #tpu.memory_space<vmem>>, %arg4: memref<3x3x128xf32, #tpu.memory_space<vmem>>, %arg5: memref<1x128xf32, #tpu.memory_space<vmem>>, %arg6: memref<128x128xbf16, #tpu.memory_space<vmem>>, %arg7: memref<1x128xf32, #tpu.memory_space<vmem>>, %arg8: memref<128x128xbf16, #tpu.memory_space<vmem>>, %arg9: memref<1x128xf32, #tpu.memory_space<vmem>>, %arg10: memref<1x8x8x128xf32, #tpu.memory_space<vmem>>, %arg11: memref<10x24x128xf32, #tpu.memory_space<vmem>>) attributes {dimension_semantics = [#tpu.dimension_semantics<parallel>], iteration_bounds = array<i64: 2>, scalar_prefetch = 0 : i64, scratch_operands = 1 : i64, tpu.core_type = #tpu.core_type<tc>, window_params = [{transform_indices = @transform_0, window_bounds = array<i64: 1, 8, 8, 128>}, {pipeline_mode = #tpu.pipeline_mode<synchronous>, transform_indices = @transform_1, window_bounds = array<i64: 128, 128>}, {pipeline_mode = #tpu.pipeline_mode<synchronous>, transform_indices = @transform_2, window_bounds = array<i64: 1, 128>}, {pipeline_mode = #tpu.pipeline_mode<synchronous>, transform_indices = @transform_3, window_bounds = array<i64: 3, 3, 128>}, {pipeline_mode = #tpu.pipeline_mode<synchronous>, transform_indices = @transform_4, window_bounds = array<i64: 1, 128>}, {pipeline_mode = #tpu.pipeline_mode<synchronous>, transform_indices = @transform_5, window_bounds = array<i64: 128, 128>}, {pipeline_mode = #tpu.pipeline_mode<synchronous>, transform_indices = @transform_6, window_bounds = array<i64: 1, 128>}, {pipeline_mode = #tpu.pipeline_mode<synchronous>, transform_indices = @transform_7, window_bounds = array<i64: 128, 128>}, {pipeline_mode = #tpu.pipeline_mode<synchronous>, transform_indices = @transform_8, window_bounds = array<i64: 1, 128>}, {transform_indices = @transform_9, window_bounds = array<i64: 1, 8, 8, 128>}]} {
    %c0 = arith.constant 0 : index
    %c0_0 = arith.constant 0 : index
    %c0_1 = arith.constant 0 : index
    %c0_2 = arith.constant 0 : index
    %0 = vector.load %arg1[%c0, %c0_0, %c0_1, %c0_2] : memref<1x8x8x128xbf16, #tpu.memory_space<vmem>>, vector<1x8x8x128xbf16>
    %1 = vector.shape_cast %0 : vector<1x8x8x128xbf16> to vector<8x8x128xbf16>
    %2 = arith.extf %1 : vector<8x8x128xbf16> to vector<8x8x128xf32>
    %3 = vector.shape_cast %2 : vector<8x8x128xf32> to vector<64x128xf32>
    %4 = arith.truncf %3 : vector<64x128xf32> to vector<64x128xbf16>
    %c0_3 = arith.constant 0 : index
    %c0_4 = arith.constant 0 : index
    %5 = vector.load %arg2[%c0_3, %c0_4] : memref<128x128xbf16, #tpu.memory_space<vmem>>, vector<128x128xbf16>
    %cst = arith.constant dense<0.000000e+00> : vector<64x128xf32>
    %6 = tpu.matmul %4, %5, %cst {dimension_numbers = #tpu.dot_dimension_numbers<[1], [0], [0], [1], [0, 0, 1, 1], [], []>} : vector<64x128xbf16>, vector<128x128xbf16>, vector<64x128xf32> -> vector<64x128xf32>
    %c0_5 = arith.constant 0 : index
    %c0_6 = arith.constant 0 : index
    %7 = vector.load %arg3[%c0_5, %c0_6] : memref<1x128xf32, #tpu.memory_space<vmem>>, vector<1x128xf32>
    %8 = vector.broadcast %7 : vector<1x128xf32> to vector<64x128xf32>
    %9 = arith.addf %6, %8 : vector<64x128xf32>
    %cst_7 = arith.constant 0.000000e+00 : f32
    %10 = vector.broadcast %cst_7 : f32 to vector<64x128xf32>
    %11 = arith.maximumf %9, %10 : vector<64x128xf32>
    %cst_8 = arith.constant 0.000000e+00 : f32
    %12 = vector.broadcast %cst_8 : f32 to vector<10x24x128xf32>
    %c0_9 = arith.constant 0 : index
    %c0_10 = arith.constant 0 : index
    %c0_11 = arith.constant 0 : index
    %13 = vector.load %arg11[%c0_9, %c0_10, %c0_11] : memref<10x24x128xf32, #tpu.memory_space<vmem>>, vector<10x24x128xf32>
    tpu.vector_store %arg11[%c0_9, %c0_10, %c0_11], %12 {strides = array<i32>} : memref<10x24x128xf32, #tpu.memory_space<vmem>>, vector<10x24x128xf32>,
    %14 = vector.shape_cast %11 : vector<64x128xf32> to vector<8x8x128xf32>
    %c1 = arith.constant 1 : index
    %c8 = arith.constant 8 : index
    %c0_12 = arith.constant 0 : index
    %15 = vector.load %arg11[%c1, %c8, %c0_12] : memref<10x24x128xf32, #tpu.memory_space<vmem>>, vector<8x8x128xf32>
    tpu.vector_store %arg11[%c1, %c8, %c0_12], %14 {strides = array<i32>} : memref<10x24x128xf32, #tpu.memory_space<vmem>>, vector<8x8x128xf32>,
    %c0_13 = arith.constant 0 : index
    %c0_14 = arith.constant 0 : index
    %c0_15 = arith.constant 0 : index
    %16 = vector.load %arg4[%c0_13, %c0_14, %c0_15] : memref<3x3x128xf32, #tpu.memory_space<vmem>>, vector<3x3x128xf32>
    %cst_16 = arith.constant 0.000000e+00 : f32
    %17 = vector.broadcast %cst_16 : f32 to vector<8x8x128xf32>
    %c0_17 = arith.constant 0 : index
    %c7 = arith.constant 7 : index
    %c0_18 = arith.constant 0 : index
    %18 = vector.load %arg11[%c0_17, %c7, %c0_18] : memref<10x24x128xf32, #tpu.memory_space<vmem>>, vector<8x8x128xf32>
    %19 = vector.extract_strided_slice %16 {offsets = [0, 0, 0], sizes = [1, 1, 128], strides = [1, 1, 1]} : vector<3x3x128xf32> to vector<1x1x128xf32>
    %20 = vector.shape_cast %19 : vector<1x1x128xf32> to vector<128xf32>
    %21 = vector.shape_cast %20 : vector<128xf32> to vector<1x1x128xf32>
    %22 = vector.broadcast %21 : vector<1x1x128xf32> to vector<8x8x128xf32>
    %23 = arith.mulf %18, %22 : vector<8x8x128xf32>
    %24 = arith.addf %17, %23 : vector<8x8x128xf32>
    %c0_19 = arith.constant 0 : index
    %c8_20 = arith.constant 8 : index
    %c0_21 = arith.constant 0 : index
    %25 = vector.load %arg11[%c0_19, %c8_20, %c0_21] : memref<10x24x128xf32, #tpu.memory_space<vmem>>, vector<8x8x128xf32>
    %26 = vector.extract_strided_slice %16 {offsets = [0, 1, 0], sizes = [1, 1, 128], strides = [1, 1, 1]} : vector<3x3x128xf32> to vector<1x1x128xf32>
    %27 = vector.shape_cast %26 : vector<1x1x128xf32> to vector<128xf32>
    %28 = vector.shape_cast %27 : vector<128xf32> to vector<1x1x128xf32>
    %29 = vector.broadcast %28 : vector<1x1x128xf32> to vector<8x8x128xf32>
    %30 = arith.mulf %25, %29 : vector<8x8x128xf32>
    %31 = arith.addf %24, %30 : vector<8x8x128xf32>
    %c0_22 = arith.constant 0 : index
    %c9 = arith.constant 9 : index
    %c0_23 = arith.constant 0 : index
    %32 = vector.load %arg11[%c0_22, %c9, %c0_23] : memref<10x24x128xf32, #tpu.memory_space<vmem>>, vector<8x8x128xf32>
    %33 = vector.extract_strided_slice %16 {offsets = [0, 2, 0], sizes = [1, 1, 128], strides = [1, 1, 1]} : vector<3x3x128xf32> to vector<1x1x128xf32>
    %34 = vector.shape_cast %33 : vector<1x1x128xf32> to vector<128xf32>
    %35 = vector.shape_cast %34 : vector<128xf32> to vector<1x1x128xf32>
    %36 = vector.broadcast %35 : vector<1x1x128xf32> to vector<8x8x128xf32>
    %37 = arith.mulf %32, %36 : vector<8x8x128xf32>
    %38 = arith.addf %31, %37 : vector<8x8x128xf32>
    %c1_24 = arith.constant 1 : index
    %c7_25 = arith.constant 7 : index
    %c0_26 = arith.constant 0 : index
    %39 = vector.load %arg11[%c1_24, %c7_25, %c0_26] : memref<10x24x128xf32, #tpu.memory_space<vmem>>, vector<8x8x128xf32>
    %40 = vector.extract_strided_slice %16 {offsets = [1, 0, 0], sizes = [1, 1, 128], strides = [1, 1, 1]} : vector<3x3x128xf32> to vector<1x1x128xf32>
    %41 = vector.shape_cast %40 : vector<1x1x128xf32> to vector<128xf32>
    %42 = vector.shape_cast %41 : vector<128xf32> to vector<1x1x128xf32>
    %43 = vector.broadcast %42 : vector<1x1x128xf32> to vector<8x8x128xf32>
    %44 = arith.mulf %39, %43 : vector<8x8x128xf32>
    %45 = arith.addf %38, %44 : vector<8x8x128xf32>
    %c1_27 = arith.constant 1 : index
    %c8_28 = arith.constant 8 : index
    %c0_29 = arith.constant 0 : index
    %46 = vector.load %arg11[%c1_27, %c8_28, %c0_29] : memref<10x24x128xf32, #tpu.memory_space<vmem>>, vector<8x8x128xf32>
    %47 = vector.extract_strided_slice %16 {offsets = [1, 1, 0], sizes = [1, 1, 128], strides = [1, 1, 1]} : vector<3x3x128xf32> to vector<1x1x128xf32>
    %48 = vector.shape_cast %47 : vector<1x1x128xf32> to vector<128xf32>
    %49 = vector.shape_cast %48 : vector<128xf32> to vector<1x1x128xf32>
    %50 = vector.broadcast %49 : vector<1x1x128xf32> to vector<8x8x128xf32>
    %51 = arith.mulf %46, %50 : vector<8x8x128xf32>
    %52 = arith.addf %45, %51 : vector<8x8x128xf32>
    %c1_30 = arith.constant 1 : index
    %c9_31 = arith.constant 9 : index
    %c0_32 = arith.constant 0 : index
    %53 = vector.load %arg11[%c1_30, %c9_31, %c0_32] : memref<10x24x128xf32, #tpu.memory_space<vmem>>, vector<8x8x128xf32>
    %54 = vector.extract_strided_slice %16 {offsets = [1, 2, 0], sizes = [1, 1, 128], strides = [1, 1, 1]} : vector<3x3x128xf32> to vector<1x1x128xf32>
    %55 = vector.shape_cast %54 : vector<1x1x128xf32> to vector<128xf32>
    %56 = vector.shape_cast %55 : vector<128xf32> to vector<1x1x128xf32>
    %57 = vector.broadcast %56 : vector<1x1x128xf32> to vector<8x8x128xf32>
    %58 = arith.mulf %53, %57 : vector<8x8x128xf32>
    %59 = arith.addf %52, %58 : vector<8x8x128xf32>
    %c2 = arith.constant 2 : index
    %c7_33 = arith.constant 7 : index
    %c0_34 = arith.constant 0 : index
    %60 = vector.load %arg11[%c2, %c7_33, %c0_34] : memref<10x24x128xf32, #tpu.memory_space<vmem>>, vector<8x8x128xf32>
    %61 = vector.extract_strided_slice %16 {offsets = [2, 0, 0], sizes = [1, 1, 128], strides = [1, 1, 1]} : vector<3x3x128xf32> to vector<1x1x128xf32>
    %62 = vector.shape_cast %61 : vector<1x1x128xf32> to vector<128xf32>
    %63 = vector.shape_cast %62 : vector<128xf32> to vector<1x1x128xf32>
    %64 = vector.broadcast %63 : vector<1x1x128xf32> to vector<8x8x128xf32>
    %65 = arith.mulf %60, %64 : vector<8x8x128xf32>
    %66 = arith.addf %59, %65 : vector<8x8x128xf32>
    %c2_35 = arith.constant 2 : index
    %c8_36 = arith.constant 8 : index
    %c0_37 = arith.constant 0 : index
    %67 = vector.load %arg11[%c2_35, %c8_36, %c0_37] : memref<10x24x128xf32, #tpu.memory_space<vmem>>, vector<8x8x128xf32>
    %68 = vector.extract_strided_slice %16 {offsets = [2, 1, 0], sizes = [1, 1, 128], strides = [1, 1, 1]} : vector<3x3x128xf32> to vector<1x1x128xf32>
    %69 = vector.shape_cast %68 : vector<1x1x128xf32> to vector<128xf32>
    %70 = vector.shape_cast %69 : vector<128xf32> to vector<1x1x128xf32>
    %71 = vector.broadcast %70 : vector<1x1x128xf32> to vector<8x8x128xf32>
    %72 = arith.mulf %67, %71 : vector<8x8x128xf32>
    %73 = arith.addf %66, %72 : vector<8x8x128xf32>
    %c2_38 = arith.constant 2 : index
    %c9_39 = arith.constant 9 : index
    %c0_40 = arith.constant 0 : index
    %74 = vector.load %arg11[%c2_38, %c9_39, %c0_40] : memref<10x24x128xf32, #tpu.memory_space<vmem>>, vector<8x8x128xf32>
    %75 = vector.extract_strided_slice %16 {offsets = [2, 2, 0], sizes = [1, 1, 128], strides = [1, 1, 1]} : vector<3x3x128xf32> to vector<1x1x128xf32>
    %76 = vector.shape_cast %75 : vector<1x1x128xf32> to vector<128xf32>
    %77 = vector.shape_cast %76 : vector<128xf32> to vector<1x1x128xf32>
    %78 = vector.broadcast %77 : vector<1x1x128xf32> to vector<8x8x128xf32>
    %79 = arith.mulf %74, %78 : vector<8x8x128xf32>
    %80 = arith.addf %73, %79 : vector<8x8x128xf32>
    %c0_41 = arith.constant 0 : index
    %c0_42 = arith.constant 0 : index
    %81 = vector.load %arg5[%c0_41, %c0_42] : memref<1x128xf32, #tpu.memory_space<vmem>>, vector<1x128xf32>
    %82 = vector.shape_cast %81 : vector<1x128xf32> to vector<1x1x128xf32>
    %83 = vector.broadcast %82 : vector<1x1x128xf32> to vector<8x8x128xf32>
    %84 = arith.addf %80, %83 : vector<8x8x128xf32>
    %cst_43 = arith.constant 0.000000e+00 : f32
    %85 = vector.broadcast %cst_43 : f32 to vector<8x8x128xf32>
    %86 = arith.maximumf %84, %85 : vector<8x8x128xf32>
    %87 = vector.shape_cast %86 : vector<8x8x128xf32> to vector<64x128xf32>
    %88 = arith.truncf %87 : vector<64x128xf32> to vector<64x128xbf16>
    %c0_44 = arith.constant 0 : index
    %c0_45 = arith.constant 0 : index
    %89 = vector.load %arg6[%c0_44, %c0_45] : memref<128x128xbf16, #tpu.memory_space<vmem>>, vector<128x128xbf16>
    %cst_46 = arith.constant dense<0.000000e+00> : vector<64x128xf32>
    %90 = tpu.matmul %88, %89, %cst_46 {dimension_numbers = #tpu.dot_dimension_numbers<[1], [0], [0], [1], [0, 0, 1, 1], [], []>} : vector<64x128xbf16>, vector<128x128xbf16>, vector<64x128xf32> -> vector<64x128xf32>
    %c0_47 = arith.constant 0 : index
    %c0_48 = arith.constant 0 : index
    %91 = vector.load %arg7[%c0_47, %c0_48] : memref<1x128xf32, #tpu.memory_space<vmem>>, vector<1x128xf32>
    %92 = vector.broadcast %91 : vector<1x128xf32> to vector<64x128xf32>
    %93 = arith.addf %90, %92 : vector<64x128xf32>
    %94 = arith.addf %93, %3 : vector<64x128xf32>
    %95 = arith.truncf %94 : vector<64x128xf32> to vector<64x128xbf16>
    %c0_49 = arith.constant 0 : index
    %c0_50 = arith.constant 0 : index
    %96 = vector.load %arg8[%c0_49, %c0_50] : memref<128x128xbf16, #tpu.memory_space<vmem>>, vector<128x128xbf16>
    %cst_51 = arith.constant dense<0.000000e+00> : vector<64x128xf32>
    %97 = tpu.matmul %95, %96, %cst_51 {dimension_numbers = #tpu.dot_dimension_numbers<[1], [0], [0], [1], [0, 0, 1, 1], [], []>} : vector<64x128xbf16>, vector<128x128xbf16>, vector<64x128xf32> -> vector<64x128xf32>
    %c0_52 = arith.constant 0 : index
    %c0_53 = arith.constant 0 : index
    %98 = vector.load %arg9[%c0_52, %c0_53] : memref<1x128xf32, #tpu.memory_space<vmem>>, vector<1x128xf32>
    %99 = vector.broadcast %98 : vector<1x128xf32> to vector<64x128xf32>
    %100 = arith.addf %97, %99 : vector<64x128xf32>
    %cst_54 = arith.constant 0.000000e+00 : f32
    %101 = vector.broadcast %cst_54 : f32 to vector<64x128xf32>
    %102 = arith.maximumf %100, %101 : vector<64x128xf32>
    %103 = vector.shape_cast %102 : vector<64x128xf32> to vector<8x8x128xf32>
    %c0_55 = arith.constant 0 : index
    %c0_56 = arith.constant 0 : index
    %c0_57 = arith.constant 0 : index
    %c0_58 = arith.constant 0 : index
    %104 = vector.load %arg10[%c0_55, %c0_56, %c0_57, %c0_58] : memref<1x8x8x128xf32, #tpu.memory_space<vmem>>, vector<1x8x8x128xf32>
    %105 = vector.shape_cast %104 : vector<1x8x8x128xf32> to vector<8x8x128xf32>
    %106 = vector.shape_cast %103 : vector<8x8x128xf32> to vector<1x8x8x128xf32>
    tpu.vector_store %arg10[%c0_55, %c0_56, %c0_57, %c0_58], %106 {strides = array<i32>} : memref<1x8x8x128xf32, #tpu.memory_space<vmem>>, vector<1x8x8x128xf32>,
    return
  }
  func.func @transform_0(%arg0: i32) -> (i32, i32, i32, i32) {
    %c0_i32 = arith.constant 0 : i32
    %c0_i32_0 = arith.constant 0 : i32
    %c0_i32_1 = arith.constant 0 : i32
    %c0_i32_2 = arith.constant 0 : i32
    return %arg0, %c0_i32, %c0_i32_0, %c0_i32_1 : i32, i32, i32, i32
  }
  func.func @transform_1(%arg0: i32) -> (i32, i32) {
    %c0_i32 = arith.constant 0 : i32
    %c0_i32_0 = arith.constant 0 : i32
    %c0_i32_1 = arith.constant 0 : i32
    return %c0_i32, %c0_i32_0 : i32, i32
  }
  func.func @transform_2(%arg0: i32) -> (i32, i32) {
    %c0_i32 = arith.constant 0 : i32
    %c0_i32_0 = arith.constant 0 : i32
    %c0_i32_1 = arith.constant 0 : i32
    return %c0_i32, %c0_i32_0 : i32, i32
  }
  func.func @transform_3(%arg0: i32) -> (i32, i32, i32) {
    %c0_i32 = arith.constant 0 : i32
    %c0_i32_0 = arith.constant 0 : i32
    %c0_i32_1 = arith.constant 0 : i32
    %c0_i32_2 = arith.constant 0 : i32
    return %c0_i32, %c0_i32_0, %c0_i32_1 : i32, i32, i32
  }
  func.func @transform_4(%arg0: i32) -> (i32, i32) {
    %c0_i32 = arith.constant 0 : i32
    %c0_i32_0 = arith.constant 0 : i32
    %c0_i32_1 = arith.constant 0 : i32
    return %c0_i32, %c0_i32_0 : i32, i32
  }
  func.func @transform_5(%arg0: i32) -> (i32, i32) {
    %c0_i32 = arith.constant 0 : i32
    %c0_i32_0 = arith.constant 0 : i32
    %c0_i32_1 = arith.constant 0 : i32
    return %c0_i32, %c0_i32_0 : i32, i32
  }
  func.func @transform_6(%arg0: i32) -> (i32, i32) {
    %c0_i32 = arith.constant 0 : i32
    %c0_i32_0 = arith.constant 0 : i32
    %c0_i32_1 = arith.constant 0 : i32
    return %c0_i32, %c0_i32_0 : i32, i32
  }
  func.func @transform_7(%arg0: i32) -> (i32, i32) {
    %c0_i32 = arith.constant 0 : i32
    %c0_i32_0 = arith.constant 0 : i32
    %c0_i32_1 = arith.constant 0 : i32
    return %c0_i32, %c0_i32_0 : i32, i32
  }
  func.func @transform_8(%arg0: i32) -> (i32, i32) {
    %c0_i32 = arith.constant 0 : i32
    %c0_i32_0 = arith.constant 0 : i32
    %c0_i32_1 = arith.constant 0 : i32
    return %c0_i32, %c0_i32_0 : i32, i32
  }
  func.func @transform_9(%arg0: i32) -> (i32, i32, i32, i32) {
    %c0_i32 = arith.constant 0 : i32
    %c0_i32_0 = arith.constant 0 : i32
    %c0_i32_1 = arith.constant 0 : i32
    %c0_i32_2 = arith.constant 0 : i32
    return %arg0, %c0_i32, %c0_i32_0, %c0_i32_1 : i32, i32, i32, i32
  }
}

module attributes {stable_mosaic.version = 11 : i64} {
  func.func @_stem_kernel(%arg0: i32, %arg1: memref<1x32x32x3xf32, #tpu.memory_space<vmem>>, %arg2: memref<3x3x3x128xf32, #tpu.memory_space<vmem>>, %arg3: memref<1x128xf32, #tpu.memory_space<vmem>>, %arg4: memref<1x16x16x128xbf16, #tpu.memory_space<vmem>>, %arg5: memref<34x48x3xf32, #tpu.memory_space<vmem>>) attributes {dimension_semantics = [#tpu.dimension_semantics<parallel>], iteration_bounds = array<i64: 2>, scalar_prefetch = 0 : i64, scratch_operands = 1 : i64, tpu.core_type = #tpu.core_type<tc>, window_params = [{transform_indices = @transform_0, window_bounds = array<i64: 1, 32, 32, 3>}, {pipeline_mode = #tpu.pipeline_mode<synchronous>, transform_indices = @transform_1, window_bounds = array<i64: 3, 3, 3, 128>}, {pipeline_mode = #tpu.pipeline_mode<synchronous>, transform_indices = @transform_2, window_bounds = array<i64: 1, 128>}, {transform_indices = @transform_3, window_bounds = array<i64: 1, 16, 16, 128>}]} {
    %cst = arith.constant 0.000000e+00 : f32
    %0 = vector.broadcast %cst : f32 to vector<34x48x3xf32>
    %c0 = arith.constant 0 : index
    %c0_0 = arith.constant 0 : index
    %c0_1 = arith.constant 0 : index
    %1 = vector.load %arg5[%c0, %c0_0, %c0_1] : memref<34x48x3xf32, #tpu.memory_space<vmem>>, vector<34x48x3xf32>
    tpu.vector_store %arg5[%c0, %c0_0, %c0_1], %0 {strides = array<i32>} : memref<34x48x3xf32, #tpu.memory_space<vmem>>, vector<34x48x3xf32>,
    %c0_2 = arith.constant 0 : index
    %c0_3 = arith.constant 0 : index
    %c0_4 = arith.constant 0 : index
    %c0_5 = arith.constant 0 : index
    %2 = vector.load %arg1[%c0_2, %c0_3, %c0_4, %c0_5] : memref<1x32x32x3xf32, #tpu.memory_space<vmem>>, vector<1x32x32x3xf32>
    %3 = vector.shape_cast %2 : vector<1x32x32x3xf32> to vector<32x32x3xf32>
    %c1 = arith.constant 1 : index
    %c8 = arith.constant 8 : index
    %c0_6 = arith.constant 0 : index
    %4 = vector.load %arg5[%c1, %c8, %c0_6] : memref<34x48x3xf32, #tpu.memory_space<vmem>>, vector<32x32x3xf32>
    tpu.vector_store %arg5[%c1, %c8, %c0_6], %3 {strides = array<i32>} : memref<34x48x3xf32, #tpu.memory_space<vmem>>, vector<32x32x3xf32>,
    %c0_7 = arith.constant 0 : index
    %c0_8 = arith.constant 0 : index
    %c0_9 = arith.constant 0 : index
    %c0_10 = arith.constant 0 : index
    %5 = vector.load %arg2[%c0_7, %c0_8, %c0_9, %c0_10] : memref<3x3x3x128xf32, #tpu.memory_space<vmem>>, vector<3x3x3x128xf32>
    %cst_11 = arith.constant 0.000000e+00 : f32
    %6 = vector.broadcast %cst_11 : f32 to vector<256x128xf32>
    %c0_12 = arith.constant 0 : index
    %c7 = arith.constant 7 : index
    %c0_13 = arith.constant 0 : index
    %7 = tpu.strided_load %arg5[%c0_12, %c7, %c0_13] {strides = array<i32: 2, 2, 1>} : memref<34x48x3xf32, #tpu.memory_space<vmem>>, vector<16x16x3xf32>
    %8 = vector.shape_cast %7 : vector<16x16x3xf32> to vector<256x3xf32>
    %9 = vector.extract_strided_slice %5 {offsets = [0, 0, 0, 0], sizes = [1, 1, 3, 128], strides = [1, 1, 1, 1]} : vector<3x3x3x128xf32> to vector<1x1x3x128xf32>
    %10 = vector.shape_cast %9 : vector<1x1x3x128xf32> to vector<3x128xf32>
    %cst_14 = arith.constant dense<0.000000e+00> : vector<256x128xf32>
    %11 = tpu.matmul %8, %10, %cst_14 {dimension_numbers = #tpu.dot_dimension_numbers<[1], [0], [0], [1], [0, 0, 1, 1], [], []>} : vector<256x3xf32>, vector<3x128xf32>, vector<256x128xf32> -> vector<256x128xf32>
    %12 = arith.addf %6, %11 : vector<256x128xf32>
    %c0_15 = arith.constant 0 : index
    %c8_16 = arith.constant 8 : index
    %c0_17 = arith.constant 0 : index
    %13 = tpu.strided_load %arg5[%c0_15, %c8_16, %c0_17] {strides = array<i32: 2, 2, 1>} : memref<34x48x3xf32, #tpu.memory_space<vmem>>, vector<16x16x3xf32>
    %14 = vector.shape_cast %13 : vector<16x16x3xf32> to vector<256x3xf32>
    %15 = vector.extract_strided_slice %5 {offsets = [0, 1, 0, 0], sizes = [1, 1, 3, 128], strides = [1, 1, 1, 1]} : vector<3x3x3x128xf32> to vector<1x1x3x128xf32>
    %16 = vector.shape_cast %15 : vector<1x1x3x128xf32> to vector<3x128xf32>
    %cst_18 = arith.constant dense<0.000000e+00> : vector<256x128xf32>
    %17 = tpu.matmul %14, %16, %cst_18 {dimension_numbers = #tpu.dot_dimension_numbers<[1], [0], [0], [1], [0, 0, 1, 1], [], []>} : vector<256x3xf32>, vector<3x128xf32>, vector<256x128xf32> -> vector<256x128xf32>
    %18 = arith.addf %12, %17 : vector<256x128xf32>
    %c0_19 = arith.constant 0 : index
    %c9 = arith.constant 9 : index
    %c0_20 = arith.constant 0 : index
    %19 = tpu.strided_load %arg5[%c0_19, %c9, %c0_20] {strides = array<i32: 2, 2, 1>} : memref<34x48x3xf32, #tpu.memory_space<vmem>>, vector<16x16x3xf32>
    %20 = vector.shape_cast %19 : vector<16x16x3xf32> to vector<256x3xf32>
    %21 = vector.extract_strided_slice %5 {offsets = [0, 2, 0, 0], sizes = [1, 1, 3, 128], strides = [1, 1, 1, 1]} : vector<3x3x3x128xf32> to vector<1x1x3x128xf32>
    %22 = vector.shape_cast %21 : vector<1x1x3x128xf32> to vector<3x128xf32>
    %cst_21 = arith.constant dense<0.000000e+00> : vector<256x128xf32>
    %23 = tpu.matmul %20, %22, %cst_21 {dimension_numbers = #tpu.dot_dimension_numbers<[1], [0], [0], [1], [0, 0, 1, 1], [], []>} : vector<256x3xf32>, vector<3x128xf32>, vector<256x128xf32> -> vector<256x128xf32>
    %24 = arith.addf %18, %23 : vector<256x128xf32>
    %c1_22 = arith.constant 1 : index
    %c7_23 = arith.constant 7 : index
    %c0_24 = arith.constant 0 : index
    %25 = tpu.strided_load %arg5[%c1_22, %c7_23, %c0_24] {strides = array<i32: 2, 2, 1>} : memref<34x48x3xf32, #tpu.memory_space<vmem>>, vector<16x16x3xf32>
    %26 = vector.shape_cast %25 : vector<16x16x3xf32> to vector<256x3xf32>
    %27 = vector.extract_strided_slice %5 {offsets = [1, 0, 0, 0], sizes = [1, 1, 3, 128], strides = [1, 1, 1, 1]} : vector<3x3x3x128xf32> to vector<1x1x3x128xf32>
    %28 = vector.shape_cast %27 : vector<1x1x3x128xf32> to vector<3x128xf32>
    %cst_25 = arith.constant dense<0.000000e+00> : vector<256x128xf32>
    %29 = tpu.matmul %26, %28, %cst_25 {dimension_numbers = #tpu.dot_dimension_numbers<[1], [0], [0], [1], [0, 0, 1, 1], [], []>} : vector<256x3xf32>, vector<3x128xf32>, vector<256x128xf32> -> vector<256x128xf32>
    %30 = arith.addf %24, %29 : vector<256x128xf32>
    %c1_26 = arith.constant 1 : index
    %c8_27 = arith.constant 8 : index
    %c0_28 = arith.constant 0 : index
    %31 = tpu.strided_load %arg5[%c1_26, %c8_27, %c0_28] {strides = array<i32: 2, 2, 1>} : memref<34x48x3xf32, #tpu.memory_space<vmem>>, vector<16x16x3xf32>
    %32 = vector.shape_cast %31 : vector<16x16x3xf32> to vector<256x3xf32>
    %33 = vector.extract_strided_slice %5 {offsets = [1, 1, 0, 0], sizes = [1, 1, 3, 128], strides = [1, 1, 1, 1]} : vector<3x3x3x128xf32> to vector<1x1x3x128xf32>
    %34 = vector.shape_cast %33 : vector<1x1x3x128xf32> to vector<3x128xf32>
    %cst_29 = arith.constant dense<0.000000e+00> : vector<256x128xf32>
    %35 = tpu.matmul %32, %34, %cst_29 {dimension_numbers = #tpu.dot_dimension_numbers<[1], [0], [0], [1], [0, 0, 1, 1], [], []>} : vector<256x3xf32>, vector<3x128xf32>, vector<256x128xf32> -> vector<256x128xf32>
    %36 = arith.addf %30, %35 : vector<256x128xf32>
    %c1_30 = arith.constant 1 : index
    %c9_31 = arith.constant 9 : index
    %c0_32 = arith.constant 0 : index
    %37 = tpu.strided_load %arg5[%c1_30, %c9_31, %c0_32] {strides = array<i32: 2, 2, 1>} : memref<34x48x3xf32, #tpu.memory_space<vmem>>, vector<16x16x3xf32>
    %38 = vector.shape_cast %37 : vector<16x16x3xf32> to vector<256x3xf32>
    %39 = vector.extract_strided_slice %5 {offsets = [1, 2, 0, 0], sizes = [1, 1, 3, 128], strides = [1, 1, 1, 1]} : vector<3x3x3x128xf32> to vector<1x1x3x128xf32>
    %40 = vector.shape_cast %39 : vector<1x1x3x128xf32> to vector<3x128xf32>
    %cst_33 = arith.constant dense<0.000000e+00> : vector<256x128xf32>
    %41 = tpu.matmul %38, %40, %cst_33 {dimension_numbers = #tpu.dot_dimension_numbers<[1], [0], [0], [1], [0, 0, 1, 1], [], []>} : vector<256x3xf32>, vector<3x128xf32>, vector<256x128xf32> -> vector<256x128xf32>
    %42 = arith.addf %36, %41 : vector<256x128xf32>
    %c2 = arith.constant 2 : index
    %c7_34 = arith.constant 7 : index
    %c0_35 = arith.constant 0 : index
    %43 = tpu.strided_load %arg5[%c2, %c7_34, %c0_35] {strides = array<i32: 2, 2, 1>} : memref<34x48x3xf32, #tpu.memory_space<vmem>>, vector<16x16x3xf32>
    %44 = vector.shape_cast %43 : vector<16x16x3xf32> to vector<256x3xf32>
    %45 = vector.extract_strided_slice %5 {offsets = [2, 0, 0, 0], sizes = [1, 1, 3, 128], strides = [1, 1, 1, 1]} : vector<3x3x3x128xf32> to vector<1x1x3x128xf32>
    %46 = vector.shape_cast %45 : vector<1x1x3x128xf32> to vector<3x128xf32>
    %cst_36 = arith.constant dense<0.000000e+00> : vector<256x128xf32>
    %47 = tpu.matmul %44, %46, %cst_36 {dimension_numbers = #tpu.dot_dimension_numbers<[1], [0], [0], [1], [0, 0, 1, 1], [], []>} : vector<256x3xf32>, vector<3x128xf32>, vector<256x128xf32> -> vector<256x128xf32>
    %48 = arith.addf %42, %47 : vector<256x128xf32>
    %c2_37 = arith.constant 2 : index
    %c8_38 = arith.constant 8 : index
    %c0_39 = arith.constant 0 : index
    %49 = tpu.strided_load %arg5[%c2_37, %c8_38, %c0_39] {strides = array<i32: 2, 2, 1>} : memref<34x48x3xf32, #tpu.memory_space<vmem>>, vector<16x16x3xf32>
    %50 = vector.shape_cast %49 : vector<16x16x3xf32> to vector<256x3xf32>
    %51 = vector.extract_strided_slice %5 {offsets = [2, 1, 0, 0], sizes = [1, 1, 3, 128], strides = [1, 1, 1, 1]} : vector<3x3x3x128xf32> to vector<1x1x3x128xf32>
    %52 = vector.shape_cast %51 : vector<1x1x3x128xf32> to vector<3x128xf32>
    %cst_40 = arith.constant dense<0.000000e+00> : vector<256x128xf32>
    %53 = tpu.matmul %50, %52, %cst_40 {dimension_numbers = #tpu.dot_dimension_numbers<[1], [0], [0], [1], [0, 0, 1, 1], [], []>} : vector<256x3xf32>, vector<3x128xf32>, vector<256x128xf32> -> vector<256x128xf32>
    %54 = arith.addf %48, %53 : vector<256x128xf32>
    %c2_41 = arith.constant 2 : index
    %c9_42 = arith.constant 9 : index
    %c0_43 = arith.constant 0 : index
    %55 = tpu.strided_load %arg5[%c2_41, %c9_42, %c0_43] {strides = array<i32: 2, 2, 1>} : memref<34x48x3xf32, #tpu.memory_space<vmem>>, vector<16x16x3xf32>
    %56 = vector.shape_cast %55 : vector<16x16x3xf32> to vector<256x3xf32>
    %57 = vector.extract_strided_slice %5 {offsets = [2, 2, 0, 0], sizes = [1, 1, 3, 128], strides = [1, 1, 1, 1]} : vector<3x3x3x128xf32> to vector<1x1x3x128xf32>
    %58 = vector.shape_cast %57 : vector<1x1x3x128xf32> to vector<3x128xf32>
    %cst_44 = arith.constant dense<0.000000e+00> : vector<256x128xf32>
    %59 = tpu.matmul %56, %58, %cst_44 {dimension_numbers = #tpu.dot_dimension_numbers<[1], [0], [0], [1], [0, 0, 1, 1], [], []>} : vector<256x3xf32>, vector<3x128xf32>, vector<256x128xf32> -> vector<256x128xf32>
    %60 = arith.addf %54, %59 : vector<256x128xf32>
    %c0_45 = arith.constant 0 : index
    %c0_46 = arith.constant 0 : index
    %61 = vector.load %arg3[%c0_45, %c0_46] : memref<1x128xf32, #tpu.memory_space<vmem>>, vector<1x128xf32>
    %62 = vector.broadcast %61 : vector<1x128xf32> to vector<256x128xf32>
    %63 = arith.addf %60, %62 : vector<256x128xf32>
    %cst_47 = arith.constant 0.000000e+00 : f32
    %64 = vector.broadcast %cst_47 : f32 to vector<256x128xf32>
    %65 = arith.maximumf %63, %64 : vector<256x128xf32>
    %66 = vector.shape_cast %65 : vector<256x128xf32> to vector<16x16x128xf32>
    %67 = arith.truncf %66 : vector<16x16x128xf32> to vector<16x16x128xbf16>
    %c0_48 = arith.constant 0 : index
    %c0_49 = arith.constant 0 : index
    %c0_50 = arith.constant 0 : index
    %c0_51 = arith.constant 0 : index
    %68 = vector.load %arg4[%c0_48, %c0_49, %c0_50, %c0_51] : memref<1x16x16x128xbf16, #tpu.memory_space<vmem>>, vector<1x16x16x128xbf16>
    %69 = vector.shape_cast %68 : vector<1x16x16x128xbf16> to vector<16x16x128xbf16>
    %70 = vector.shape_cast %67 : vector<16x16x128xbf16> to vector<1x16x16x128xbf16>
    tpu.vector_store %arg4[%c0_48, %c0_49, %c0_50, %c0_51], %70 {strides = array<i32>} : memref<1x16x16x128xbf16, #tpu.memory_space<vmem>>, vector<1x16x16x128xbf16>,
    return
  }
  func.func @transform_0(%arg0: i32) -> (i32, i32, i32, i32) {
    %c0_i32 = arith.constant 0 : i32
    %c0_i32_0 = arith.constant 0 : i32
    %c0_i32_1 = arith.constant 0 : i32
    %c0_i32_2 = arith.constant 0 : i32
    return %arg0, %c0_i32, %c0_i32_0, %c0_i32_1 : i32, i32, i32, i32
  }
  func.func @transform_1(%arg0: i32) -> (i32, i32, i32, i32) {
    %c0_i32 = arith.constant 0 : i32
    %c0_i32_0 = arith.constant 0 : i32
    %c0_i32_1 = arith.constant 0 : i32
    %c0_i32_2 = arith.constant 0 : i32
    %c0_i32_3 = arith.constant 0 : i32
    return %c0_i32, %c0_i32_0, %c0_i32_1, %c0_i32_2 : i32, i32, i32, i32
  }
  func.func @transform_2(%arg0: i32) -> (i32, i32) {
    %c0_i32 = arith.constant 0 : i32
    %c0_i32_0 = arith.constant 0 : i32
    %c0_i32_1 = arith.constant 0 : i32
    return %c0_i32, %c0_i32_0 : i32, i32
  }
  func.func @transform_3(%arg0: i32) -> (i32, i32, i32, i32) {
    %c0_i32 = arith.constant 0 : i32
    %c0_i32_0 = arith.constant 0 : i32
    %c0_i32_1 = arith.constant 0 : i32
    %c0_i32_2 = arith.constant 0 : i32
    return %arg0, %c0_i32, %c0_i32_0, %c0_i32_1 : i32, i32, i32, i32
  }
}

</mosaic_0001>

<llo_original>
// kernel: encoder_forward.5
$region0: #{encoder_forward.5}
  #allocation0 [shape = 'u32[]', space=smem, size = 0x4, offset = 0x4, fixed_abs, tag = 'smem constant byte address 0x4 - core index']
  #allocation1 [shape = 'u32[144,128]{1,0:T(1,128)}', space=vmem, size = 0x12000, scoped, tag = 'internal scratch']
  #allocation2 [shape = 'f32[10,24,128]{2,1,0:T(8,128)}', space=vmem, size = 0x1e000, scoped, tag = 'scratch operand']
  %s0 = inlined_call_operand.vmem [shape: bf16[2,8,8,128], index: 0, kind: input, shape index: {}]
  %s1 = inlined_call_operand.vmem [shape: bf16[128,128], index: 1, kind: input, shape index: {}]
  %s2 = inlined_call_operand.vmem [shape: f32[1,128], index: 2, kind: input, shape index: {}]
  %s3 = inlined_call_operand.vmem [shape: f32[3,3,128], index: 3, kind: input, shape index: {}]
  %s4 = inlined_call_operand.vmem [shape: f32[1,128], index: 4, kind: input, shape index: {}]
  %s5 = inlined_call_operand.vmem [shape: bf16[128,128], index: 5, kind: input, shape index: {}]
  %s6 = inlined_call_operand.vmem [shape: f32[1,128], index: 6, kind: input, shape index: {}]
  %s7 = inlined_call_operand.vmem [shape: bf16[128,128], index: 7, kind: input, shape index: {}]
  %s8 = inlined_call_operand.vmem [shape: f32[1,128], index: 8, kind: input, shape index: {}]
  %s9 = inlined_call_operand.vmem [shape: f32[2,8,8,128], index: 9, kind: output, shape index: {}]
  %s10 = sld [smem:[#allocation0]]
  $region69: #{encoder_forward.5} parent=0
    _
  %s12 = ssub.s32 1, %s10
  %s13 = scalar_select 0, %s12, %s10
  loop: start=0, step=1, limit=4
  $region2: #{encoder_forward.5} parent=0 // loop_pre_header
    _
  $region3: #{encoder_forward.5} parent=0 // loop_header
    %s15 = sphi 0, %s19
    %p16 = scmp.ge.s32.totalorder %s15, 4
    %s25 = sphi 0, %s27
    %s28 = sphi 0, %s25
    %s29 = sphi 0, %s28
    %s45 = sphi 0, %s29
    %s49 = sphi 0, %s49
    %s51 = sphi 0, %s49
    %s52 = sphi 0, %s51
    %s66 = sphi 0, %s52
    %s70 = sphi 0, %s70
    %s72 = sphi 0, %s70
    %s73 = sphi 0, %s72
    %s87 = sphi 0, %s73
    %s91 = sphi 0, %s91
    %s93 = sphi 0, %s91
    %s94 = sphi 0, %s93
    %s108 = sphi 0, %s94
    %s112 = sphi 0, %s112
    %s114 = sphi 0, %s112
    %s115 = sphi 0, %s114
    %s129 = sphi 0, %s115
    %s133 = sphi 0, %s133
    %s135 = sphi 0, %s133
    %s136 = sphi 0, %s135
    %s150 = sphi 0, %s136
    %s154 = sphi 0, %s154
    %s156 = sphi 0, %s154
    %s157 = sphi 0, %s156
    %s171 = sphi 0, %s157
    %s175 = sphi 0, %s175
    %s177 = sphi 0, %s175
    %s178 = sphi 0, %s177
    %s192 = sphi 0, %s178
    %s196 = sphi 0, %s196
    %s198 = sphi 0, %s196
    %s199 = sphi 0, %s198
    %s213 = sphi 0, %s199
    %s219 = sphi 0, %s221
    %s222 = sphi 0, %s219
    %s223 = sphi 0, %s222
    %s239 = sphi 0, %s223
  $region4: #{encoder_forward.5} parent=0 // loop_header_branch
    %18 = sbr.rel (%p16) target = $region8
  $region5: #{encoder_forward.5} parent=0 // loop_body
    %s20 = ssub.s32 %s15, 1
    %s21 = ssub.s32 %s15, 2
    %s22 = sadd.s32 %s15, 1
    %s23 = ssub.s32 %s15, %s22
    %p24 = scmp.eq.s32.totalorder %s23, 0
    %s26 = sadd.s32 %s25, 1
    %s27 = scalar_select %p24, %s25, %s26
    %p30 = pneg %p24
    %p31 = scmp.eq.s32.totalorder %s15, 1
    %p32 = por %p30, %p31
    %p33 = scmp.ne.s32.totalorder %s25, %s28
    %p34 = scmp.eq.s32.totalorder %s15, 0
    %p35 = por %p33, %p34
    %p36 = scmp.ne.s32.totalorder %s25, %s28
    %p37 = scmp.eq.s32.totalorder %s20, 1
    %p38 = por %p36, %p37
    %p39 = scmp.ne.s32.totalorder %s28, %s29
    %p40 = scmp.eq.s32.totalorder %s20, 0
    %p41 = por %p39, %p40
    %p42 = scmp.ne.s32.totalorder %s28, %s29
    %p43 = scmp.eq.s32.totalorder %s21, 1
    %p44 = por %p42, %p43
    %p46 = scmp.ne.s32.totalorder %s29, %s45
    %p47 = scmp.eq.s32.totalorder %s21, 0
    %p48 = por %p46, %p47
    %s50 = sadd.s32 %s49, 1
    %p53 = scmp.eq.s32.totalorder %s15, 1
    %p54 = scmp.ne.s32.totalorder %s49, %s51
    %p55 = scmp.eq.s32.totalorder %s15, 0
    %p56 = por %p54, %p55
    %p57 = scmp.ne.s32.totalorder %s49, %s51
    %p58 = scmp.eq.s32.totalorder %s20, 1
    %p59 = por %p57, %p58
    %p60 = scmp.ne.s32.totalorder %s51, %s52
    %p61 = scmp.eq.s32.totalorder %s20, 0
    %p62 = por %p60, %p61
    %p63 = scmp.ne.s32.totalorder %s51, %s52
    %p64 = scmp.eq.s32.totalorder %s21, 1
    %p65 = por %p63, %p64
    %p67 = scmp.ne.s32.totalorder %s52, %s66
    %p68 = scmp.eq.s32.totalorder %s21, 0
    %p69 = por %p67, %p68
    %s71 = sadd.s32 %s70, 1
    %p74 = scmp.eq.s32.totalorder %s15, 1
    %p75 = scmp.ne.s32.totalorder %s70, %s72
    %p76 = scmp.eq.s32.totalorder %s15, 0
    %p77 = por %p75, %p76
    %p78 = scmp.ne.s32.totalorder %s70, %s72
    %p79 = scmp.eq.s32.totalorder %s20, 1
    %p80 = por %p78, %p79
    %p81 = scmp.ne.s32.totalorder %s72, %s73
    %p82 = scmp.eq.s32.totalorder %s20, 0
    %p83 = por %p81, %p82
    %p84 = scmp.ne.s32.totalorder %s72, %s73
    %p85 = scmp.eq.s32.totalorder %s21, 1
    %p86 = por %p84, %p85
    %p88 = scmp.ne.s32.totalorder %s73, %s87
    %p89 = scmp.eq.s32.totalorder %s21, 0
    %p90 = por %p88, %p89
    %s92 = sadd.s32 %s91, 1
    %p95 = scmp.eq.s32.totalorder %s15, 1
    %p96 = scmp.ne.s32.totalorder %s91, %s93
    %p97 = scmp.eq.s32.totalorder %s15, 0
    %p98 = por %p96, %p97
    %p99 = scmp.ne.s32.totalorder %s91, %s93
    %p100 = scmp.eq.s32.totalorder %s20, 1
    %p101 = por %p99, %p100
    %p102 = scmp.ne.s32.totalorder %s93, %s94
    %p103 = scmp.eq.s32.totalorder %s20, 0
    %p104 = por %p102, %p103
    %p105 = scmp.ne.s32.totalorder %s93, %s94
    %p106 = scmp.eq.s32.totalorder %s21, 1
    %p107 = por %p105, %p106
    %p109 = scmp.ne.s32.totalorder %s94, %s108
    %p110 = scmp.eq.s32.totalorder %s21, 0
    %p111 = por %p109, %p110
    %s113 = sadd.s32 %s112, 1
    %p116 = scmp.eq.s32.totalorder %s15, 1
    %p117 = scmp.ne.s32.totalorder %s112, %s114
    %p118 = scmp.eq.s32.totalorder %s15, 0
    %p119 = por %p117, %p118
    %p120 = scmp.ne.s32.totalorder %s112, %s114
    %p121 = scmp.eq.s32.totalorder %s20, 1
    %p122 = por %p120, %p121
    %p123 = scmp.ne.s32.totalorder %s114, %s115
    %p124 = scmp.eq.s32.totalorder %s20, 0
    %p125 = por %p123, %p124
    %p126 = scmp.ne.s32.totalorder %s114, %s115
    %p127 = scmp.eq.s32.totalorder %s21, 1
    %p128 = por %p126, %p127
    %p130 = scmp.ne.s32.totalorder %s115, %s129
    %p131 = scmp.eq.s32.totalorder %s21, 0
    %p132 = por %p130, %p131
    %s134 = sadd.s32 %s133, 1
    %p137 = scmp.eq.s32.totalorder %s15, 1
    %p138 = scmp.ne.s32.totalorder %s133, %s135
    %p139 = scmp.eq.s32.totalorder %s15, 0
    %p140 = por %p138, %p139
    %p141 = scmp.ne.s32.totalorder %s133, %s135
    %p142 = scmp.eq.s32.totalorder %s20, 1
    %p143 = por %p141, %p142
    %p144 = scmp.ne.s32.totalorder %s135, %s136
    %p145 = scmp.eq.s32.totalorder %s20, 0
    %p146 = por %p144, %p145
    %p147 = scmp.ne.s32.totalorder %s135, %s136
    %p148 = scmp.eq.s32.totalorder %s21, 1
    %p149 = por %p147, %p148
    %p151 = scmp.ne.s32.totalorder %s136, %s150
    %p152 = scmp.eq.s32.totalorder %s21, 0
    %p153 = por %p151, %p152
    %s155 = sadd.s32 %s154, 1
    %p158 = scmp.eq.s32.totalorder %s15, 1
    %p159 = scmp.ne.s32.totalorder %s154, %s156
    %p160 = scmp.eq.s32.totalorder %s15, 0
    %p161 = por %p159, %p160
    %p162 = scmp.ne.s32.totalorder %s154, %s156
    %p163 = scmp.eq.s32.totalorder %s20, 1
    %p164 = por %p162, %p163
    %p165 = scmp.ne.s32.totalorder %s156, %s157
    %p166 = scmp.eq.s32.totalorder %s20, 0
    %p167 = por %p165, %p166
    %p168 = scmp.ne.s32.totalorder %s156, %s157
    %p169 = scmp.eq.s32.totalorder %s21, 1
    %p170 = por %p168, %p169
    %p172 = scmp.ne.s32.totalorder %s157, %s171
    %p173 = scmp.eq.s32.totalorder %s21, 0
    %p174 = por %p172, %p173
    %s176 = sadd.s32 %s175, 1
    %p179 = scmp.eq.s32.totalorder %s15, 1
    %p180 = scmp.ne.s32.totalorder %s175, %s177
    %p181 = scmp.eq.s32.totalorder %s15, 0
    %p182 = por %p180, %p181
    %p183 = scmp.ne.s32.totalorder %s175, %s177
    %p184 = scmp.eq.s32.totalorder %s20, 1
    %p185 = por %p183, %p184
    %p186 = scmp.ne.s32.totalorder %s177, %s178
    %p187 = scmp.eq.s32.totalorder %s20, 0
    %p188 = por %p186, %p187
    %p189 = scmp.ne.s32.totalorder %s177, %s178
    %p190 = scmp.eq.s32.totalorder %s21, 1
    %p191 = por %p189, %p190
    %p193 = scmp.ne.s32.totalorder %s178, %s192
    %p194 = scmp.eq.s32.totalorder %s21, 0
    %p195 = por %p193, %p194
    %s197 = sadd.s32 %s196, 1
    %p200 = scmp.eq.s32.totalorder %s15, 1
    %p201 = scmp.ne.s32.totalorder %s196, %s198
    %p202 = scmp.eq.s32.totalorder %s15, 0
    %p203 = por %p201, %p202
    %p204 = scmp.ne.s32.totalorder %s196, %s198
    %p205 = scmp.eq.s32.totalorder %s20, 1
    %p206 = por %p204, %p205
    %p207 = scmp.ne.s32.totalorder %s198, %s199
    %p208 = scmp.eq.s32.totalorder %s20, 0
    %p209 = por %p207, %p208
    %p210 = scmp.ne.s32.totalorder %s198, %s199
    %p211 = scmp.eq.s32.totalorder %s21, 1
    %p212 = por %p210, %p211
    %p214 = scmp.ne.s32.totalorder %s199, %s213
    %p215 = scmp.eq.s32.totalorder %s21, 0
    %p216 = por %p214, %p215
    %s217 = ssub.s32 %s15, %s22
    %p218 = scmp.eq.s32.totalorder %s217, 0
    %s220 = sadd.s32 %s219, 1
    %s221 = scalar_select %p218, %s219, %s220
    %p224 = pneg %p218
    %p225 = scmp.eq.s32.totalorder %s15, 1
    %p226 = por %p224, %p225
    %p227 = scmp.ne.s32.totalorder %s219, %s222
    %p228 = scmp.eq.s32.totalorder %s15, 0
    %p229 = por %p227, %p228
    %p230 = scmp.ne.s32.totalorder %s219, %s222
    %p231 = scmp.eq.s32.totalorder %s20, 1
    %p232 = por %p230, %p231
    %p233 = scmp.ne.s32.totalorder %s222, %s223
    %p234 = scmp.eq.s32.totalorder %s20, 0
    %p235 = por %p233, %p234
    %p236 = scmp.ne.s32.totalorder %s222, %s223
    %p237 = scmp.eq.s32.totalorder %s21, 1
    %p238 = por %p236, %p237
    %p240 = scmp.ne.s32.totalorder %s223, %s239
    %p241 = scmp.eq.s32.totalorder %s21, 0
    %p242 = por %p240, %p241
    %p243 = scmp.le.s32.totalorder 1, %s15
    %p244 = scmp.lt.s32.totalorder %s15, 3
    %p245 = pnand %p243, %p244
    %p246 = pneg %p245
    // Predicated region
    $region9: #{encoder_forward.5} parent=5 // pred_check
      _
    $region10: #{encoder_forward.5} parent=5 // pred_check_branch
      %248 = sbr.rel (%p245) target = $region12
    $region11: #{encoder_forward.5} parent=5 // pred_region
      %s249 = ssub.s32 %s15, 1
      // Predicated region
      $region13: #{encoder_forward.5} parent=11 // pred_check
        %p250 = pneg %p62
      $region14: #{encoder_forward.5} parent=11 // pred_check_branch
        %252 = sbr.rel (%p250) target = $region16
      $region15: #{encoder_forward.5} parent=11 // pred_region
        _
      $region16: #{encoder_forward.5} parent=11 // pred_fallthru
        _
      // Predicated region
      $region17: #{encoder_forward.5} parent=11 // pred_check
        %p253 = pneg %p83
      $region18: #{encoder_forward.5} parent=11 // pred_check_branch
        %255 = sbr.rel (%p253) target = $region20
      $region19: #{encoder_forward.5} parent=11 // pred_region
        _
      $region20: #{encoder_forward.5} parent=11 // pred_fallthru
        _
      // Predicated region
      $region21: #{encoder_forward.5} parent=11 // pred_check
        %p256 = pneg %p104
      $region22: #{encoder_forward.5} parent=11 // pred_check_branch
        %258 = sbr.rel (%p256) target = $region24
      $region23: #{encoder_forward.5} parent=11 // pred_region
        _
      $region24: #{encoder_forward.5} parent=11 // pred_fallthru
        _
      // Predicated region
      $region25: #{encoder_forward.5} parent=11 // pred_check
        %p259 = pneg %p125
      $region26: #{encoder_forward.5} parent=11 // pred_check_branch
        %261 = sbr.rel (%p259) target = $region28
      $region27: #{encoder_forward.5} parent=11 // pred_region
        _
      $region28: #{encoder_forward.5} parent=11 // pred_fallthru
        _
      // Predicated region
      $region29: #{encoder_forward.5} parent=11 // pred_check
        %p262 = pneg %p146
      $region30: #{encoder_forward.5} parent=11 // pred_check_branch
        %264 = sbr.rel (%p262) target = $region32
      $region31: #{encoder_forward.5} parent=11 // pred_region
        _
      $region32: #{encoder_forward.5} parent=11 // pred_fallthru
        _
      // Predicated region
      $region33: #{encoder_forward.5} parent=11 // pred_check
        %p265 = pneg %p167
      $region34: #{encoder_forward.5} parent=11 // pred_check_branch
        %267 = sbr.rel (%p265) target = $region36
      $region35: #{encoder_forward.5} parent=11 // pred_region
        _
      $region36: #{encoder_forward.5} parent=11 // pred_fallthru
        _
      // Predicated region
      $region37: #{encoder_forward.5} parent=11 // pred_check
        %p268 = pneg %p188
      $region38: #{encoder_forward.5} parent=11 // pred_check_branch
        %270 = sbr.rel (%p268) target = $region40
      $region39: #{encoder_forward.5} parent=11 // pred_region
        _
      $region40: #{encoder_forward.5} parent=11 // pred_fallthru
        _
      // Predicated region
      $region41: #{encoder_forward.5} parent=11 // pred_check
        %p271 = pneg %p209
      $region42: #{encoder_forward.5} parent=11 // pred_check_branch
        %273 = sbr.rel (%p271) target = $region44
      $region43: #{encoder_forward.5} parent=11 // pred_region
        _
      $region44: #{encoder_forward.5} parent=11 // pred_fallthru
        _
    $region12: #{encoder_forward.5} parent=5 // pred_fallthru
      _
    %p274 = scmp.lt.s32.totalorder %s15, 2
    // Predicated region
    $region45: #{encoder_forward.5} parent=5 // pred_check
      %p275 = pneg %p274
    $region46: #{encoder_forward.5} parent=5 // pred_check_branch
      %277 = sbr.rel (%p275) target = $region48
    $region47: #{encoder_forward.5} parent=5 // pred_region
      // Predicated region
      $region49: #{encoder_forward.5} parent=47 // pred_check
        %p278 = pneg %p35
      $region50: #{encoder_forward.5} parent=47 // pred_check_branch
        %280 = sbr.rel (%p278) target = $region52
      $region51: #{encoder_forward.5} parent=47 // pred_region
        %p281 = scmp.lt.s32.totalorder %s15, 1
        %s282 = scalar_select %p281, %s15, 1
        %s283 = smul.addr %s282, 8
        %s284 = smul.addr %s283, 4
        %s285 = scalar_lea.vmem %s0, %s284
      $region52: #{encoder_forward.5} parent=47 // pred_fallthru
        _
    $region48: #{encoder_forward.5} parent=5 // pred_fallthru
      _
    %p286 = scmp.le.s32.totalorder 1, %s15
    %p287 = scmp.lt.s32.totalorder %s15, 3
    %p288 = pnand %p286, %p287
    %p289 = pneg %p288
    // Predicated region
    $region53: #{encoder_forward.5} parent=5 // pred_check
      _
    $region54: #{encoder_forward.5} parent=5 // pred_check_branch
      %291 = sbr.rel (%p288) target = $region56
    $region55: #{encoder_forward.5} parent=5 // pred_region
      %s292 = ssub.s32 %s15, 1
      %p293 = scmp.lt.s32.totalorder %s20, 1
      %s294 = scalar_select %p293, %s20, 1
      %s295 = smul.addr %s294, 8
      %s296 = smul.addr %s295, 4
      %s297 = scalar_lea.vmem %s0, %s296
      %p298 = pneg %p41
      %p299 = pneg %p38
      %p300 = pneg %p62
      %p301 = pneg %p59
      %p302 = pneg %p83
      %p303 = pneg %p80
      %p304 = pneg %p104
      %p305 = pneg %p101
      %p306 = pneg %p125
      %p307 = pneg %p122
      %p308 = pneg %p146
      %p309 = pneg %p143
      %p310 = pneg %p167
      %p311 = pneg %p164
      %p312 = pneg %p188
      %p313 = pneg %p185
      %p314 = pneg %p209
      %p315 = pneg %p206
      %p316 = pneg %p235
      %p317 = pneg %p232
      %p318 = scmp.lt.s32.totalorder %s20, 1
      %s319 = scalar_select %p318, %s20, 1
      %s320 = smul.addr %s319, 8
      %s321 = smul.addr %s320, 8
      %s322 = scalar_lea.vmem %s9, %s321
      %p323 = scmp.lt.s32.totalorder %s20, 1
      %s324 = scalar_select %p323, %s20, 1
      %s325 = smul.addr %s324, 8
      %s326 = smul.addr %s325, 4
      %s327 = scalar_lea.vmem %s0, %s326
      %p328 = scmp.lt.s32.totalorder %s20, 1
      %s329 = scalar_select %p328, %s20, 1
      %s330 = smul.addr %s329, 8
      %s331 = smul.addr %s330, 8
      %s332 = scalar_lea.vmem %s9, %s331
      %v334 = vld [vmem:[%s327] sm:$0xf]
      %v335 = vld [vmem:[%s327 + $0x4] sm:$0xf]
      %v336 = vld [vmem:[%s327 + $0x8] sm:$0xf]
      %v337 = vld [vmem:[%s327 + $0xc] sm:$0xf]
      %v338 = vld [vmem:[%s327 + $0x10] sm:$0xf]
      %v339 = vld [vmem:[%s327 + $0x14] sm:$0xf]
      %v340 = vld [vmem:[%s327 + $0x18] sm:$0xf]
      %v341 = vld [vmem:[%s327 + $0x1c] sm:$0xf]
      %v342 = vunpack.c.l.bf16 %v334
      %v343 = vunpack.c.l.bf16 %v335
      %v344 = vunpack.c.l.bf16 %v336
      %v345 = vunpack.c.l.bf16 %v337
      %v346 = vunpack.c.l.bf16 %v338
      %v347 = vunpack.c.l.bf16 %v339
      %v348 = vunpack.c.l.bf16 %v340
      %v349 = vunpack.c.l.bf16 %v341
      %v350 = vpack.c.bf16 %v343, %v342
      %v351 = vpack.c.bf16 %v345, %v344
      %v352 = vpack.c.bf16 %v347, %v346
      %v353 = vpack.c.bf16 %v349, %v348
      %v354 = vld [vmem:[%s1] sm:$0xf]
      %v355 = vld [vmem:[%s1 + $0x4] sm:$0xf]
      %v356 = vld [vmem:[%s1 + $0x8] sm:$0xf]
      %v357 = vld [vmem:[%s1 + $0xc] sm:$0xf]
      %v358 = vld [vmem:[%s1 + $0x10] sm:$0xf]
      %v359 = vld [vmem:[%s1 + $0x14] sm:$0xf]
      %v360 = vld [vmem:[%s1 + $0x18] sm:$0xf]
      %v361 = vld [vmem:[%s1 + $0x1c] sm:$0xf]
      %v362 = vld [vmem:[%s1 + $0x20] sm:$0xf]
      %v363 = vld [vmem:[%s1 + $0x24] sm:$0xf]
      %v364 = vld [vmem:[%s1 + $0x28] sm:$0xf]
      %v365 = vld [vmem:[%s1 + $0x2c] sm:$0xf]
      %v366 = vld [vmem:[%s1 + $0x30] sm:$0xf]
      %v367 = vld [vmem:[%s1 + $0x34] sm:$0xf]
      %v368 = vld [vmem:[%s1 + $0x38] sm:$0xf]
      %v369 = vld [vmem:[%s1 + $0x3c] sm:$0xf]
      %v370 = vld [vmem:[%s2] sm:$0x1]
      %v372 = vlaneseq
      %v373 = vshrl.u32 %v372, 7
      %v374 = vsub.s32 0, %v373
      %v375 = vrot.slane %v370, %v374
      %v393 = vunpack.c.l.b16 %v354
      %v394 = vunpack.c.l.b16 %v355
      %v395 = vunpack.c.l.b16 %v356
      %v396 = vunpack.c.l.b16 %v357
      %v397 = vunpack.c.l.b16 %v358
      %v398 = vunpack.c.l.b16 %v359
      %v399 = vunpack.c.l.b16 %v360
      %v400 = vunpack.c.l.b16 %v361
      %v401 = vunpack.c.l.b16 %v362
      %v402 = vunpack.c.l.b16 %v363
      %v403 = vunpack.c.l.b16 %v364
      %v404 = vunpack.c.l.b16 %v365
      %v405 = vunpack.c.l.b16 %v366
      %v406 = vunpack.c.l.b16 %v367
      %v407 = vunpack.c.l.b16 %v368
      %v408 = vunpack.c.l.b16 %v369
      %v409 = vpack.c.b16 %v394, %v393
      %v410 = vpack.c.b16 %v396, %v395
      %v411 = vpack.c.b16 %v398, %v397
      %v412 = vpack.c.b16 %v400, %v399
      %v413 = vpack.c.b16 %v402, %v401
      %v414 = vpack.c.b16 %v404, %v403
      %v415 = vpack.c.b16 %v406, %v405
      %v416 = vpack.c.b16 %v408, %v407
      %425 = vmatprep.subr.bf16.mxu0 0
      %426 = vmatpush1.bf16.msra.mxu0 %v416
      %427 = vmatprep.subr.bf16.mxu0 0
      %428 = vmatpush1.bf16.msra.mxu0 %v415
      %429 = vmatprep.subr.bf16.mxu0 0
      %430 = vmatpush1.bf16.msra.mxu0 %v414
      %431 = vmatprep.subr.bf16.mxu0 0
      %432 = vmatpush1.bf16.msra.mxu0 %v413
      %433 = vmatprep.subr.bf16.mxu0 0
      %434 = vmatpush1.bf16.msra.mxu0 %v412
      %435 = vmatprep.subr.bf16.mxu0 0
      %436 = vmatpush1.bf16.msra.mxu0 %v411
      %437 = vmatprep.subr.bf16.mxu0 0
      %438 = vmatpush1.bf16.msra.mxu0 %v410
      %439 = vmatprep.subr.bf16.mxu0 0
      %440 = vmatpush1.bf16.msra.mxu0 %v409
      %441 = vmatprep.subr.bf16.mxu0 0
      %442 = vmatpush2.bf16.msra.mxu0 0
      %443 = vmatprep.subr.bf16.mxu0 0
      %444 = vmatpush2.bf16.msra.mxu0 0
      %445 = vmatprep.subr.bf16.mxu0 0
      %446 = vmatpush2.bf16.msra.mxu0 0
      %447 = vmatprep.subr.bf16.mxu0 0
      %448 = vmatpush2.bf16.msra.mxu0 0
      %449 = vmatprep.subr.bf16.mxu0 0
      %450 = vmatpush2.bf16.msra.mxu0 0
      %451 = vmatprep.subr.bf16.mxu0 0
      %452 = vmatpush2.bf16.msra.mxu0 0
      %453 = vmatprep.subr.bf16.mxu0 0
      %454 = vmatpush2.bf16.msra.mxu0 0
      %455 = vmatprep.subr.bf16.mxu0 0
      %456 = vmatpush2.bf16.msra.mxu0 0
      %457 = vmatprep.mubr.bf16.mxu0 0
      %458 = vmatmul.mubr.bf16.gmra.mxu0 %v350
      %v459 = vpop.f32.mrf.mxu0
      %v460 = vadd.f32 %v375, %v459
      %v461 = vpop.f32.mrf.mxu0
      %v462 = vpop.f32.mrf.mxu0
      %v463 = vadd.f32 %v375, %v462
      %v464 = vpop.f32.mrf.mxu0
      %465 = vmatprep.mubr.bf16.mxu0 0
      %466 = vmatmul.mubr.bf16.gmra.mxu0 %v351
      %v467 = vpop.f32.mrf.mxu0
      %v468 = vadd.f32 %v375, %v467
      %v469 = vpop.f32.mrf.mxu0
      %v470 = vpop.f32.mrf.mxu0
      %v471 = vadd.f32 %v375, %v470
      %v472 = vpop.f32.mrf.mxu0
      %473 = vmatprep.mubr.bf16.mxu0 0
      %474 = vmatmul.mubr.bf16.gmra.mxu0 %v352
      %v475 = vpop.f32.mrf.mxu0
      %v476 = vadd.f32 %v375, %v475
      %v477 = vpop.f32.mrf.mxu0
      %v478 = vpop.f32.mrf.mxu0
      %v479 = vadd.f32 %v375, %v478
      %v480 = vpop.f32.mrf.mxu0
      %481 = vmatprep.mubr.bf16.mxu0 0
      %482 = vmatmul.mubr.bf16.gmra.mxu0 %v353
      %v483 = vpop.f32.mrf.mxu0
      %v484 = vadd.f32 %v375, %v483
      %v485 = vpop.f32.mrf.mxu0
      %v486 = vpop.f32.mrf.mxu0
      %v487 = vadd.f32 %v375, %v486
      %v488 = vpop.f32.mrf.mxu0
      %489 = vdwg.mxu0
      %v490 = vmax.f32 %v460, 0.0
      %v491 = vmax.f32 %v463, 0.0
      %v492 = vmax.f32 %v468, 0.0
      %v493 = vmax.f32 %v471, 0.0
      %v494 = vmax.f32 %v476, 0.0
      %v495 = vmax.f32 %v479, 0.0
      %v496 = vmax.f32 %v484, 0.0
      %v497 = vmax.f32 %v487, 0.0
      %498 = vst [vmem:[#allocation2] sm:$0xff] 0.0
      %499 = vst [vmem:[#allocation2 + $0x8] sm:$0xff] 0.0
      %500 = vst [vmem:[#allocation2 + $0x10] sm:$0xff] 0.0
      %501 = vst [vmem:[#allocation2 + $0x18] sm:$0xff] 0.0
      %502 = vst [vmem:[#allocation2 + $0x20] sm:$0xff] 0.0
      %503 = vst [vmem:[#allocation2 + $0x28] sm:$0xff] 0.0
      %504 = vst [vmem:[#allocation2 + $0x30] sm:$0xff] 0.0
      %505 = vst [vmem:[#allocation2 + $0x38] sm:$0xff] 0.0
      %506 = vst [vmem:[#allocation2 + $0x40] sm:$0xff] 0.0
      %507 = vst [vmem:[#allocation2 + $0x48] sm:$0xff] 0.0
      %508 = vst [vmem:[#allocation2 + $0x50] sm:$0xff] 0.0
      %509 = vst [vmem:[#allocation2 + $0x58] sm:$0xff] 0.0
      %510 = vst [vmem:[#allocation2 + $0x60] sm:$0xff] 0.0
      %511 = vst [vmem:[#allocation2 + $0x68] sm:$0xff] 0.0
      %512 = vst [vmem:[#allocation2 + $0x70] sm:$0xff] 0.0
      %513 = vst [vmem:[#allocation2 + $0x78] sm:$0xff] 0.0
      %514 = vst [vmem:[#allocation2 + $0x80] sm:$0xff] 0.0
      %515 = vst [vmem:[#allocation2 + $0x88] sm:$0xff] 0.0
      %516 = vst [vmem:[#allocation2 + $0x90] sm:$0xff] 0.0
      %517 = vst [vmem:[#allocation2 + $0x98] sm:$0xff] 0.0
      %518 = vst [vmem:[#allocation2 + $0xa0] sm:$0xff] 0.0
      %519 = vst [vmem:[#allocation2 + $0xa8] sm:$0xff] 0.0
      %520 = vst [vmem:[#allocation2 + $0xb0] sm:$0xff] 0.0
      %521 = vst [vmem:[#allocation2 + $0xb8] sm:$0xff] 0.0
      %522 = vst [vmem:[#allocation2 + $0xc0] sm:$0xff] 0.0
      %523 = vst [vmem:[#allocation2 + $0xc8] sm:$0xff] 0.0
      %524 = vst [vmem:[#allocation2 + $0xd0] sm:$0xff] 0.0
      %525 = vst [vmem:[#allocation2 + $0xd8] sm:$0xff] 0.0
      %526 = vst [vmem:[#allocation2 + $0xe0] sm:$0xff] 0.0
      %527 = vst [vmem:[#allocation2 + $0xe8] sm:$0xff] 0.0
      %s528 = scalar_lea.vmem [#allocation2], 24
      %529 = vst [vmem:[%s528 + $0x8] sm:$0xff] %v490
      %530 = vst [vmem:[%s528 + $0x20] sm:$0xff] %v491
      %531 = vst [vmem:[%s528 + $0x38] sm:$0xff] %v492
      %532 = vst [vmem:[%s528 + $0x50] sm:$0xff] %v493
      %533 = vst [vmem:[%s528 + $0x68] sm:$0xff] %v494
      %534 = vst [vmem:[%s528 + $0x80] sm:$0xff] %v495
      %535 = vst [vmem:[%s528 + $0x98] sm:$0xff] %v496
      %536 = vst [vmem:[%s528 + $0xb0] sm:$0xff] %v497
      %v537 = vld [vmem:[%s3] sm:$0x7]
      %v538 = vld [vmem:[%s3 + $0x4] sm:$0x7]
      %v539 = vld [vmem:[%s3 + $0x8] sm:$0x7]
      %v540 = vld [vmem:[#allocation2 + $0x7] sm:$0xff]
      %v541 = vld [vmem:[#allocation2 + $0x1f] sm:$0xff]
      %v542 = vld [vmem:[#allocation2 + $0x37] sm:$0xff]
      %v543 = vld [vmem:[#allocation2 + $0x4f] sm:$0xff]
      %v544 = vld [vmem:[#allocation2 + $0x67] sm:$0xff]
      %v545 = vld [vmem:[#allocation2 + $0x7f] sm:$0xff]
      %v546 = vld [vmem:[#allocation2 + $0x97] sm:$0xff]
      %v547 = vld [vmem:[#allocation2 + $0xaf] sm:$0xff]
      %v548 = vlaneseq
      %v549 = vshrl.u32 %v548, 7
      %v550 = vsub.s32 0, %v549
      %v551 = vrot.slane %v537, %v550
      %v552 = vmul.f32 %v540, %v551
      %v553 = vmul.f32 %v541, %v551
      %v554 = vmul.f32 %v542, %v551
      %v555 = vmul.f32 %v543, %v551
      %v556 = vmul.f32 %v544, %v551
      %v557 = vmul.f32 %v545, %v551
      %v558 = vmul.f32 %v546, %v551
      %v559 = vmul.f32 %v547, %v551
      %v560 = vadd.f32 %v552, 0.0
      %v561 = vadd.f32 %v553, 0.0
      %v562 = vadd.f32 %v554, 0.0
      %v563 = vadd.f32 %v555, 0.0
      %v564 = vadd.f32 %v556, 0.0
      %v565 = vadd.f32 %v557, 0.0
      %v566 = vadd.f32 %v558, 0.0
      %v567 = vadd.f32 %v559, 0.0
      %v568 = vld [vmem:[#allocation2 + $0x8] sm:$0xff]
      %v569 = vld [vmem:[#allocation2 + $0x20] sm:$0xff]
      %v570 = vld [vmem:[#allocation2 + $0x38] sm:$0xff]
      %v571 = vld [vmem:[#allocation2 + $0x50] sm:$0xff]
      %v572 = vld [vmem:[#allocation2 + $0x68] sm:$0xff]
      %v573 = vld [vmem:[#allocation2 + $0x80] sm:$0xff]
      %v574 = vld [vmem:[#allocation2 + $0x98] sm:$0xff]
      %v575 = vld [vmem:[#allocation2 + $0xb0] sm:$0xff]
      %v576 = vlaneseq
      %v577 = vshrl.u32 %v576, 7
      %v578 = vsub.s32 1, %v577
      %v579 = vrot.slane %v537, %v578
      %v580 = vmul.f32 %v568, %v579
      %v581 = vmul.f32 %v569, %v579
      %v582 = vmul.f32 %v570, %v579
      %v583 = vmul.f32 %v571, %v579
      %v584 = vmul.f32 %v572, %v579
      %v585 = vmul.f32 %v573, %v579
      %v586 = vmul.f32 %v574, %v579
      %v587 = vmul.f32 %v575, %v579
      %v588 = vadd.f32 %v560, %v580
      %v589 = vadd.f32 %v561, %v581
      %v590 = vadd.f32 %v562, %v582
      %v591 = vadd.f32 %v563, %v583
      %v592 = vadd.f32 %v564, %v584
      %v593 = vadd.f32 %v565, %v585
      %v594 = vadd.f32 %v566, %v586
      %v595 = vadd.f32 %v567, %v587
      %v596 = vld [vmem:[#allocation2 + $0x9] sm:$0xff]
      %v597 = vld [vmem:[#allocation2 + $0x21] sm:$0xff]
      %v598 = vld [vmem:[#allocation2 + $0x39] sm:$0xff]
      %v599 = vld [vmem:[#allocation2 + $0x51] sm:$0xff]
      %v600 = vld [vmem:[#allocation2 + $0x69] sm:$0xff]
      %v601 = vld [vmem:[#allocation2 + $0x81] sm:$0xff]
      %v602 = vld [vmem:[#allocation2 + $0x99] sm:$0xff]
      %v603 = vld [vmem:[#allocation2 + $0xb1] sm:$0xff]
      %v604 = vlaneseq
      %v605 = vshrl.u32 %v604, 7
      %v606 = vsub.s32 2, %v605
      %v607 = vrot.slane %v537, %v606
      %v608 = vmul.f32 %v596, %v607
      %v609 = vmul.f32 %v597, %v607
      %v610 = vmul.f32 %v598, %v607
      %v611 = vmul.f32 %v599, %v607
      %v612 = vmul.f32 %v600, %v607
      %v613 = vmul.f32 %v601, %v607
      %v614 = vmul.f32 %v602, %v607
      %v615 = vmul.f32 %v603, %v607
      %v616 = vadd.f32 %v588, %v608
      %v617 = vadd.f32 %v589, %v609
      %v618 = vadd.f32 %v590, %v610
      %v619 = vadd.f32 %v591, %v611
      %v620 = vadd.f32 %v592, %v612
      %v621 = vadd.f32 %v593, %v613
      %v622 = vadd.f32 %v594, %v614
      %v623 = vadd.f32 %v595, %v615
      %v624 = vld [vmem:[%s528 + $0x7] sm:$0xff]
      %v625 = vld [vmem:[%s528 + $0x1f] sm:$0xff]
      %v626 = vld [vmem:[%s528 + $0x37] sm:$0xff]
      %v627 = vld [vmem:[%s528 + $0x4f] sm:$0xff]
      %v628 = vld [vmem:[%s528 + $0x67] sm:$0xff]
      %v629 = vld [vmem:[%s528 + $0x7f] sm:$0xff]
      %v630 = vld [vmem:[%s528 + $0x97] sm:$0xff]
      %v631 = vld [vmem:[%s528 + $0xaf] sm:$0xff]
      %v632 = vlaneseq
      %v633 = vshrl.u32 %v632, 7
      %v634 = vsub.s32 0, %v633
      %v635 = vrot.slane %v538, %v634
      %v636 = vmul.f32 %v624, %v635
      %v637 = vmul.f32 %v625, %v635
      %v638 = vmul.f32 %v626, %v635
      %v639 = vmul.f32 %v627, %v635
      %v640 = vmul.f32 %v628, %v635
      %v641 = vmul.f32 %v629, %v635
      %v642 = vmul.f32 %v630, %v635
      %v643 = vmul.f32 %v631, %v635
      %v644 = vadd.f32 %v616, %v636
      %v645 = vadd.f32 %v617, %v637
      %v646 = vadd.f32 %v618, %v638
      %v647 = vadd.f32 %v619, %v639
      %v648 = vadd.f32 %v620, %v640
      %v649 = vadd.f32 %v621, %v641
      %v650 = vadd.f32 %v622, %v642
      %v651 = vadd.f32 %v623, %v643
      %v652 = vld [vmem:[%s528 + $0x8] sm:$0xff]
      %v653 = vld [vmem:[%s528 + $0x20] sm:$0xff]
      %v654 = vld [vmem:[%s528 + $0x38] sm:$0xff]
      %v655 = vld [vmem:[%s528 + $0x50] sm:$0xff]
      %v656 = vld [vmem:[%s528 + $0x68] sm:$0xff]
      %v657 = vld [vmem:[%s528 + $0x80] sm:$0xff]
      %v658 = vld [vmem:[%s528 + $0x98] sm:$0xff]
      %v659 = vld [vmem:[%s528 + $0xb0] sm:$0xff]
      %v660 = vlaneseq
      %v661 = vshrl.u32 %v660, 7
      %v662 = vsub.s32 1, %v661
      %v663 = vrot.slane %v538, %v662
      %v664 = vmul.f32 %v652, %v663
      %v665 = vmul.f32 %v653, %v663
      %v666 = vmul.f32 %v654, %v663
      %v667 = vmul.f32 %v655, %v663
      %v668 = vmul.f32 %v656, %v663
      %v669 = vmul.f32 %v657, %v663
      %v670 = vmul.f32 %v658, %v663
      %v671 = vmul.f32 %v659, %v663
      %v672 = vadd.f32 %v644, %v664
      %v673 = vadd.f32 %v645, %v665
      %v674 = vadd.f32 %v646, %v666
      %v675 = vadd.f32 %v647, %v667
      %v676 = vadd.f32 %v648, %v668
      %v677 = vadd.f32 %v649, %v669
      %v678 = vadd.f32 %v650, %v670
      %v679 = vadd.f32 %v651, %v671
      %v680 = vld [vmem:[%s528 + $0x9] sm:$0xff]
      %v681 = vld [vmem:[%s528 + $0x21] sm:$0xff]
      %v682 = vld [vmem:[%s528 + $0x39] sm:$0xff]
      %v683 = vld [vmem:[%s528 + $0x51] sm:$0xff]
      %v684 = vld [vmem:[%s528 + $0x69] sm:$0xff]
      %v685 = vld [vmem:[%s528 + $0x81] sm:$0xff]
      %v686 = vld [vmem:[%s528 + $0x99] sm:$0xff]
      %v687 = vld [vmem:[%s528 + $0xb1] sm:$0xff]
      %v688 = vlaneseq
      %v689 = vshrl.u32 %v688, 7
      %v690 = vsub.s32 2, %v689
      %v691 = vrot.slane %v538, %v690
      %v692 = vmul.f32 %v680, %v691
      %v693 = vmul.f32 %v681, %v691
      %v694 = vmul.f32 %v682, %v691
      %v695 = vmul.f32 %v683, %v691
      %v696 = vmul.f32 %v684, %v691
      %v697 = vmul.f32 %v685, %v691
      %v698 = vmul.f32 %v686, %v691
      %v699 = vmul.f32 %v687, %v691
      %v700 = vadd.f32 %v672, %v692
      %v701 = vadd.f32 %v673, %v693
      %v702 = vadd.f32 %v674, %v694
      %v703 = vadd.f32 %v675, %v695
      %v704 = vadd.f32 %v676, %v696
      %v705 = vadd.f32 %v677, %v697
      %v706 = vadd.f32 %v678, %v698
      %v707 = vadd.f32 %v679, %v699
      %s708 = scalar_lea.vmem [#allocation2], 48
      %v709 = vld [vmem:[%s708 + $0x7] sm:$0xff]
      %v710 = vld [vmem:[%s708 + $0x1f] sm:$0xff]
      %v711 = vld [vmem:[%s708 + $0x37] sm:$0xff]
      %v712 = vld [vmem:[%s708 + $0x4f] sm:$0xff]
      %v713 = vld [vmem:[%s708 + $0x67] sm:$0xff]
      %v714 = vld [vmem:[%s708 + $0x7f] sm:$0xff]
      %v715 = vld [vmem:[%s708 + $0x97] sm:$0xff]
      %v716 = vld [vmem:[%s708 + $0xaf] sm:$0xff]
      %v717 = vlaneseq
      %v718 = vshrl.u32 %v717, 7
      %v719 = vsub.s32 0, %v718
      %v720 = vrot.slane %v539, %v719
      %v721 = vmul.f32 %v709, %v720
      %v722 = vmul.f32 %v710, %v720
      %v723 = vmul.f32 %v711, %v720
      %v724 = vmul.f32 %v712, %v720
      %v725 = vmul.f32 %v713, %v720
      %v726 = vmul.f32 %v714, %v720
      %v727 = vmul.f32 %v715, %v720
      %v728 = vmul.f32 %v716, %v720
      %v729 = vadd.f32 %v700, %v721
      %v730 = vadd.f32 %v701, %v722
      %v731 = vadd.f32 %v702, %v723
      %v732 = vadd.f32 %v703, %v724
      %v733 = vadd.f32 %v704, %v725
      %v734 = vadd.f32 %v705, %v726
      %v735 = vadd.f32 %v706, %v727
      %v736 = vadd.f32 %v707, %v728
      %v737 = vld [vmem:[%s708 + $0x8] sm:$0xff]
      %v738 = vld [vmem:[%s708 + $0x20] sm:$0xff]
      %v739 = vld [vmem:[%s708 + $0x38] sm:$0xff]
      %v740 = vld [vmem:[%s708 + $0x50] sm:$0xff]
      %v741 = vld [vmem:[%s708 + $0x68] sm:$0xff]
      %v742 = vld [vmem:[%s708 + $0x80] sm:$0xff]
      %v743 = vld [vmem:[%s708 + $0x98] sm:$0xff]
      %v744 = vld [vmem:[%s708 + $0xb0] sm:$0xff]
      %v745 = vlaneseq
      %v746 = vshrl.u32 %v745, 7
      %v747 = vsub.s32 1, %v746
      %v748 = vrot.slane %v539, %v747
      %v749 = vmul.f32 %v737, %v748
      %v750 = vmul.f32 %v738, %v748
      %v751 = vmul.f32 %v739, %v748
      %v752 = vmul.f32 %v740, %v748
      %v753 = vmul.f32 %v741, %v748
      %v754 = vmul.f32 %v742, %v748
      %v755 = vmul.f32 %v743, %v748
      %v756 = vmul.f32 %v744, %v748
      %v757 = vadd.f32 %v729, %v749
      %v758 = vadd.f32 %v730, %v750
      %v759 = vadd.f32 %v731, %v751
      %v760 = vadd.f32 %v732, %v752
      %v761 = vadd.f32 %v733, %v753
      %v762 = vadd.f32 %v734, %v754
      %v763 = vadd.f32 %v735, %v755
      %v764 = vadd.f32 %v736, %v756
      %v765 = vld [vmem:[%s708 + $0x9] sm:$0xff]
      %v766 = vld [vmem:[%s708 + $0x21] sm:$0xff]
      %v767 = vld [vmem:[%s708 + $0x39] sm:$0xff]
      %v768 = vld [vmem:[%s708 + $0x51] sm:$0xff]
      %v769 = vld [vmem:[%s708 + $0x69] sm:$0xff]
      %v770 = vld [vmem:[%s708 + $0x81] sm:$0xff]
      %v771 = vld [vmem:[%s708 + $0x99] sm:$0xff]
      %v772 = vld [vmem:[%s708 + $0xb1] sm:$0xff]
      %v773 = vlaneseq
      %v774 = vshrl.u32 %v773, 7
      %v775 = vsub.s32 2, %v774
      %v776 = vrot.slane %v539, %v775
      %v777 = vmul.f32 %v765, %v776
      %v778 = vmul.f32 %v766, %v776
      %v779 = vmul.f32 %v767, %v776
      %v780 = vmul.f32 %v768, %v776
      %v781 = vmul.f32 %v769, %v776
      %v782 = vmul.f32 %v770, %v776
      %v783 = vmul.f32 %v771, %v776
      %v784 = vmul.f32 %v772, %v776
      %v785 = vadd.f32 %v757, %v777
      %v786 = vadd.f32 %v758, %v778
      %v787 = vadd.f32 %v759, %v779
      %v788 = vadd.f32 %v760, %v780
      %v789 = vadd.f32 %v761, %v781
      %v790 = vadd.f32 %v762, %v782
      %v791 = vadd.f32 %v763, %v783
      %v792 = vadd.f32 %v764, %v784
      %v793 = vld [vmem:[%s4] sm:$0x1]
      %v795 = vlaneseq
      %v796 = vshrl.u32 %v795, 7
      %v797 = vsub.s32 0, %v796
      %v798 = vrot.slane %v793, %v797
      %v800 = vadd.f32 %v785, %v798
      %v801 = vadd.f32 %v786, %v798
      %v802 = vadd.f32 %v787, %v798
      %v803 = vadd.f32 %v788, %v798
      %v804 = vadd.f32 %v789, %v798
      %v805 = vadd.f32 %v790, %v798
      %v806 = vadd.f32 %v791, %v798
      %v807 = vadd.f32 %v792, %v798
      %v808 = vmax.f32 %v800, 0.0
      %v809 = vmax.f32 %v801, 0.0
      %v810 = vmax.f32 %v802, 0.0
      %v811 = vmax.f32 %v803, 0.0
      %v812 = vmax.f32 %v804, 0.0
      %v813 = vmax.f32 %v805, 0.0
      %v814 = vmax.f32 %v806, 0.0
      %v815 = vmax.f32 %v807, 0.0
      %v816 = vpack.c.bf16 %v809, %v808
      %v817 = vpack.c.bf16 %v811, %v810
      %v818 = vpack.c.bf16 %v813, %v812
      %v819 = vpack.c.bf16 %v815, %v814
      %v820 = vld [vmem:[%s5] sm:$0xf]
      %v821 = vld [vmem:[%s5 + $0x4] sm:$0xf]
      %v822 = vld [vmem:[%s5 + $0x8] sm:$0xf]
      %v823 = vld [vmem:[%s5 + $0xc] sm:$0xf]
      %v824 = vld [vmem:[%s5 + $0x10] sm:$0xf]
      %v825 = vld [vmem:[%s5 + $0x14] sm:$0xf]
      %v826 = vld [vmem:[%s5 + $0x18] sm:$0xf]
      %v827 = vld [vmem:[%s5 + $0x1c] sm:$0xf]
      %v828 = vld [vmem:[%s5 + $0x20] sm:$0xf]
      %v829 = vld [vmem:[%s5 + $0x24] sm:$0xf]
      %v830 = vld [vmem:[%s5 + $0x28] sm:$0xf]
      %v831 = vld [vmem:[%s5 + $0x2c] sm:$0xf]
      %v832 = vld [vmem:[%s5 + $0x30] sm:$0xf]
      %v833 = vld [vmem:[%s5 + $0x34] sm:$0xf]
      %v834 = vld [vmem:[%s5 + $0x38] sm:$0xf]
      %v835 = vld [vmem:[%s5 + $0x3c] sm:$0xf]
      %v836 = vld [vmem:[%s6] sm:$0x1]
      %v838 = vlaneseq
      %v839 = vshrl.u32 %v838, 7
      %v840 = vsub.s32 0, %v839
      %v841 = vrot.slane %v836, %v840
      %v859 = vunpack.c.l.b16 %v820
      %v860 = vunpack.c.l.b16 %v821
      %v861 = vunpack.c.l.b16 %v822
      %v862 = vunpack.c.l.b16 %v823
      %v863 = vunpack.c.l.b16 %v824
      %v864 = vunpack.c.l.b16 %v825
      %v865 = vunpack.c.l.b16 %v826
      %v866 = vunpack.c.l.b16 %v827
      %v867 = vunpack.c.l.b16 %v828
      %v868 = vunpack.c.l.b16 %v829
      %v869 = vunpack.c.l.b16 %v830
      %v870 = vunpack.c.l.b16 %v831
      %v871 = vunpack.c.l.b16 %v832
      %v872 = vunpack.c.l.b16 %v833
      %v873 = vunpack.c.l.b16 %v834
      %v874 = vunpack.c.l.b16 %v835
      %v875 = vpack.c.b16 %v860, %v859
      %v876 = vpack.c.b16 %v862, %v861
      %v877 = vpack.c.b16 %v864, %v863
      %v878 = vpack.c.b16 %v866, %v865
      %v879 = vpack.c.b16 %v868, %v867
      %v880 = vpack.c.b16 %v870, %v869
      %v881 = vpack.c.b16 %v872, %v871
      %v882 = vpack.c.b16 %v874, %v873
      %891 = vmatprep.subr.bf16.mxu0 0
      %892 = vmatpush1.bf16.msra.mxu0 %v882
      %893 = vmatprep.subr.bf16.mxu0 0
      %894 = vmatpush1.bf16.msra.mxu0 %v881
      %895 = vmatprep.subr.bf16.mxu0 0
      %896 = vmatpush1.bf16.msra.mxu0 %v880
      %897 = vmatprep.subr.bf16.mxu0 0
      %898 = vmatpush1.bf16.msra.mxu0 %v879
      %899 = vmatprep.subr.bf16.mxu0 0
      %900 = vmatpush1.bf16.msra.mxu0 %v878
      %901 = vmatprep.subr.bf16.mxu0 0
      %902 = vmatpush1.bf16.msra.mxu0 %v877
      %903 = vmatprep.subr.bf16.mxu0 0
      %904 = vmatpush1.bf16.msra.mxu0 %v876
      %905 = vmatprep.subr.bf16.mxu0 0
      %906 = vmatpush1.bf16.msra.mxu0 %v875
      %907 = vmatprep.subr.bf16.mxu0 0
      %908 = vmatpush2.bf16.msra.mxu0 0
      %909 = vmatprep.subr.bf16.mxu0 0
      %910 = vmatpush2.bf16.msra.mxu0 0
      %911 = vmatprep.subr.bf16.mxu0 0
      %912 = vmatpush2.bf16.msra.mxu0 0
      %913 = vmatprep.subr.bf16.mxu0 0
      %914 = vmatpush2.bf16.msra.mxu0 0
      %915 = vmatprep.subr.bf16.mxu0 0
      %916 = vmatpush2.bf16.msra.mxu0 0
      %917 = vmatprep.subr.bf16.mxu0 0
      %918 = vmatpush2.bf16.msra.mxu0 0
      %919 = vmatprep.subr.bf16.mxu0 0
      %920 = vmatpush2.bf16.msra.mxu0 0
      %921 = vmatprep.subr.bf16.mxu0 0
      %922 = vmatpush2.bf16.msra.mxu0 0
      %923 = vmatprep.mubr.bf16.mxu0 0
      %924 = vmatmul.mubr.bf16.gmra.mxu0 %v816
      %v925 = vpop.f32.mrf.mxu0
      %v926 = vadd.f32 %v841, %v925
      %v927 = vpop.f32.mrf.mxu0
      %v928 = vpop.f32.mrf.mxu0
      %v929 = vadd.f32 %v841, %v928
      %v930 = vpop.f32.mrf.mxu0
      %931 = vmatprep.mubr.bf16.mxu0 0
      %932 = vmatmul.mubr.bf16.gmra.mxu0 %v817
      %v933 = vpop.f32.mrf.mxu0
      %v934 = vadd.f32 %v841, %v933
      %v935 = vpop.f32.mrf.mxu0
      %v936 = vpop.f32.mrf.mxu0
      %v937 = vadd.f32 %v841, %v936
      %v938 = vpop.f32.mrf.mxu0
      %939 = vmatprep.mubr.bf16.mxu0 0
      %940 = vmatmul.mubr.bf16.gmra.mxu0 %v818
      %v941 = vpop.f32.mrf.mxu0
      %v942 = vadd.f32 %v841, %v941
      %v943 = vpop.f32.mrf.mxu0
      %v944 = vpop.f32.mrf.mxu0
      %v945 = vadd.f32 %v841, %v944
      %v946 = vpop.f32.mrf.mxu0
      %947 = vmatprep.mubr.bf16.mxu0 0
      %948 = vmatmul.mubr.bf16.gmra.mxu0 %v819
      %v949 = vpop.f32.mrf.mxu0
      %v950 = vadd.f32 %v841, %v949
      %v951 = vpop.f32.mrf.mxu0
      %v952 = vpop.f32.mrf.mxu0
      %v953 = vadd.f32 %v841, %v952
      %v954 = vpop.f32.mrf.mxu0
      %955 = vdwg.mxu0
      %v956 = vadd.f32 %v926, %v342
      %v957 = vadd.f32 %v929, %v343
      %v958 = vadd.f32 %v934, %v344
      %v959 = vadd.f32 %v937, %v345
      %v960 = vadd.f32 %v942, %v346
      %v961 = vadd.f32 %v945, %v347
      %v962 = vadd.f32 %v950, %v348
      %v963 = vadd.f32 %v953, %v349
      %v964 = vpack.c.bf16 %v957, %v956
      %v965 = vpack.c.bf16 %v959, %v958
      %v966 = vpack.c.bf16 %v961, %v960
      %v967 = vpack.c.bf16 %v963, %v962
      %v968 = vld [vmem:[%s7] sm:$0xf]
      %v969 = vld [vmem:[%s7 + $0x4] sm:$0xf]
      %v970 = vld [vmem:[%s7 + $0x8] sm:$0xf]
      %v971 = vld [vmem:[%s7 + $0xc] sm:$0xf]
      %v972 = vld [vmem:[%s7 + $0x10] sm:$0xf]
      %v973 = vld [vmem:[%s7 + $0x14] sm:$0xf]
      %v974 = vld [vmem:[%s7 + $0x18] sm:$0xf]
      %v975 = vld [vmem:[%s7 + $0x1c] sm:$0xf]
      %v976 = vld [vmem:[%s7 + $0x20] sm:$0xf]
      %v977 = vld [vmem:[%s7 + $0x24] sm:$0xf]
      %v978 = vld [vmem:[%s7 + $0x28] sm:$0xf]
      %v979 = vld [vmem:[%s7 + $0x2c] sm:$0xf]
      %v980 = vld [vmem:[%s7 + $0x30] sm:$0xf]
      %v981 = vld [vmem:[%s7 + $0x34] sm:$0xf]
      %v982 = vld [vmem:[%s7 + $0x38] sm:$0xf]
      %v983 = vld [vmem:[%s7 + $0x3c] sm:$0xf]
      %v984 = vld [vmem:[%s8] sm:$0x1]
      %v986 = vlaneseq
      %v987 = vshrl.u32 %v986, 7
      %v988 = vsub.s32 0, %v987
      %v989 = vrot.slane %v984, %v988
      %v1007 = vunpack.c.l.b16 %v968
      %v1008 = vunpack.c.l.b16 %v969
      %v1009 = vunpack.c.l.b16 %v970
      %v1010 = vunpack.c.l.b16 %v971
      %v1011 = vunpack.c.l.b16 %v972
      %v1012 = vunpack.c.l.b16 %v973
      %v1013 = vunpack.c.l.b16 %v974
      %v1014 = vunpack.c.l.b16 %v975
      %v1015 = vunpack.c.l.b16 %v976
      %v1016 = vunpack.c.l.b16 %v977
      %v1017 = vunpack.c.l.b16 %v978
      %v1018 = vunpack.c.l.b16 %v979
      %v1019 = vunpack.c.l.b16 %v980
      %v1020 = vunpack.c.l.b16 %v981
      %v1021 = vunpack.c.l.b16 %v982
      %v1022 = vunpack.c.l.b16 %v983
      %v1023 = vpack.c.b16 %v1008, %v1007
      %v1024 = vpack.c.b16 %v1010, %v1009
      %v1025 = vpack.c.b16 %v1012, %v1011
      %v1026 = vpack.c.b16 %v1014, %v1013
      %v1027 = vpack.c.b16 %v1016, %v1015
      %v1028 = vpack.c.b16 %v1018, %v1017
      %v1029 = vpack.c.b16 %v1020, %v1019
      %v1030 = vpack.c.b16 %v1022, %v1021
      %1039 = vmatprep.subr.bf16.mxu0 0
      %1040 = vmatpush1.bf16.msra.mxu0 %v1030
      %1041 = vmatprep.subr.bf16.mxu0 0
      %1042 = vmatpush1.bf16.msra.mxu0 %v1029
      %1043 = vmatprep.subr.bf16.mxu0 0
      %1044 = vmatpush1.bf16.msra.mxu0 %v1028
      %1045 = vmatprep.subr.bf16.mxu0 0
      %1046 = vmatpush1.bf16.msra.mxu0 %v1027
      %1047 = vmatprep.subr.bf16.mxu0 0
      %1048 = vmatpush1.bf16.msra.mxu0 %v1026
      %1049 = vmatprep.subr.bf16.mxu0 0
      %1050 = vmatpush1.bf16.msra.mxu0 %v1025
      %1051 = vmatprep.subr.bf16.mxu0 0
      %1052 = vmatpush1.bf16.msra.mxu0 %v1024
      %1053 = vmatprep.subr.bf16.mxu0 0
      %1054 = vmatpush1.bf16.msra.mxu0 %v1023
      %1055 = vmatprep.subr.bf16.mxu0 0
      %1056 = vmatpush2.bf16.msra.mxu0 0
      %1057 = vmatprep.subr.bf16.mxu0 0
      %1058 = vmatpush2.bf16.msra.mxu0 0
      %1059 = vmatprep.subr.bf16.mxu0 0
      %1060 = vmatpush2.bf16.msra.mxu0 0
      %1061 = vmatprep.subr.bf16.mxu0 0
      %1062 = vmatpush2.bf16.msra.mxu0 0
      %1063 = vmatprep.subr.bf16.mxu0 0
      %1064 = vmatpush2.bf16.msra.mxu0 0
      %1065 = vmatprep.subr.bf16.mxu0 0
      %1066 = vmatpush2.bf16.msra.mxu0 0
      %1067 = vmatprep.subr.bf16.mxu0 0
      %1068 = vmatpush2.bf16.msra.mxu0 0
      %1069 = vmatprep.subr.bf16.mxu0 0
      %1070 = vmatpush2.bf16.msra.mxu0 0
      %1071 = vmatprep.mubr.bf16.mxu0 0
      %1072 = vmatmul.mubr.bf16.gmra.mxu0 %v964
      %v1073 = vpop.f32.mrf.mxu0
      %v1074 = vadd.f32 %v989, %v1073
      %v1075 = vpop.f32.mrf.mxu0
      %v1076 = vpop.f32.mrf.mxu0
      %v1077 = vadd.f32 %v989, %v1076
      %v1078 = vpop.f32.mrf.mxu0
      %1079 = vmatprep.mubr.bf16.mxu0 0
      %1080 = vmatmul.mubr.bf16.gmra.mxu0 %v965
      %v1081 = vpop.f32.mrf.mxu0
      %v1082 = vadd.f32 %v989, %v1081
      %v1083 = vpop.f32.mrf.mxu0
      %v1084 = vpop.f32.mrf.mxu0
      %v1085 = vadd.f32 %v989, %v1084
      %v1086 = vpop.f32.mrf.mxu0
      %1087 = vmatprep.mubr.bf16.mxu0 0
      %1088 = vmatmul.mubr.bf16.gmra.mxu0 %v966
      %v1089 = vpop.f32.mrf.mxu0
      %v1090 = vadd.f32 %v989, %v1089
      %v1091 = vpop.f32.mrf.mxu0
      %v1092 = vpop.f32.mrf.mxu0
      %v1093 = vadd.f32 %v989, %v1092
      %v1094 = vpop.f32.mrf.mxu0
      %1095 = vmatprep.mubr.bf16.mxu0 0
      %1096 = vmatmul.mubr.bf16.gmra.mxu0 %v967
      %v1097 = vpop.f32.mrf.mxu0
      %v1098 = vadd.f32 %v989, %v1097
      %v1099 = vpop.f32.mrf.mxu0
      %v1100 = vpop.f32.mrf.mxu0
      %v1101 = vadd.f32 %v989, %v1100
      %v1102 = vpop.f32.mrf.mxu0
      %1103 = vdwg.mxu0
      %v1104 = vmax.f32 %v1074, 0.0
      %v1105 = vmax.f32 %v1077, 0.0
      %v1106 = vmax.f32 %v1082, 0.0
      %v1107 = vmax.f32 %v1085, 0.0
      %v1108 = vmax.f32 %v1090, 0.0
      %v1109 = vmax.f32 %v1093, 0.0
      %v1110 = vmax.f32 %v1098, 0.0
      %v1111 = vmax.f32 %v1101, 0.0
      %1112 = vst [vmem:[%s332] sm:$0xff] %v1104
      %1113 = vst [vmem:[%s332 + $0x8] sm:$0xff] %v1105
      %1114 = vst [vmem:[%s332 + $0x10] sm:$0xff] %v1106
      %1115 = vst [vmem:[%s332 + $0x18] sm:$0xff] %v1107
      %1116 = vst [vmem:[%s332 + $0x20] sm:$0xff] %v1108
      %1117 = vst [vmem:[%s332 + $0x28] sm:$0xff] %v1109
      %1118 = vst [vmem:[%s332 + $0x30] sm:$0xff] %v1110
      %1119 = vst [vmem:[%s332 + $0x38] sm:$0xff] %v1111
      %p1120 = scmp.lt.s32.totalorder %s20, 1
      %s1121 = scalar_select %p1120, %s20, 1
      %s1122 = smul.addr %s1121, 8
      %s1123 = smul.addr %s1122, 8
      %s1124 = scalar_lea.vmem %s9, %s1123
      // Predicated region
      $region57: #{encoder_forward.5} parent=55 // pred_check
        %p1125 = pneg %p232
      $region58: #{encoder_forward.5} parent=55 // pred_check_branch
        %1127 = sbr.rel (%p1125) target = $region60
      $region59: #{encoder_forward.5} parent=55 // pred_region
        _
      $region60: #{encoder_forward.5} parent=55 // pred_fallthru
        _
    $region56: #{encoder_forward.5} parent=5 // pred_fallthru
      _
    %p1128 = scmp.le.s32.totalorder 2, %s15
    // Predicated region
    $region61: #{encoder_forward.5} parent=5 // pred_check
      %p1129 = pneg %p1128
    $region62: #{encoder_forward.5} parent=5 // pred_check_branch
      %1131 = sbr.rel (%p1129) target = $region64
    $region63: #{encoder_forward.5} parent=5 // pred_region
      %s1132 = ssub.s32 %s15, 2
      // Predicated region
      $region65: #{encoder_forward.5} parent=63 // pred_check
        %p1133 = pneg %p238
      $region66: #{encoder_forward.5} parent=63 // pred_check_branch
        %1135 = sbr.rel (%p1133) target = $region68
      $region67: #{encoder_forward.5} parent=63 // pred_region
        %p1136 = scmp.lt.s32.totalorder %s21, 1
        %s1137 = scalar_select %p1136, %s21, 1
        %s1138 = smul.addr %s1137, 8
        %s1139 = smul.addr %s1138, 8
        %s1140 = scalar_lea.vmem %s9, %s1139
      $region68: #{encoder_forward.5} parent=63 // pred_fallthru
        _
    $region64: #{encoder_forward.5} parent=5 // pred_fallthru
      _
  $region6: #{encoder_forward.5} parent=0 // loop_footer
    %s19 = sadd.s32 1, %s15
  $region7: #{encoder_forward.5} parent=0 // loop_footer_branch
    %14 = sbr.rel target = $region3
  $region8: #{encoder_forward.5} parent=0 // loop_exit
    _

// kernel: encoder_forward.4
$region0: #{encoder_forward.4}
  #allocation0 [shape = 'u32[]', space=smem, size = 0x4, offset = 0x4, fixed_abs, tag = 'smem constant byte address 0x4 - core index']
  #allocation1 [shape = 'u32[144,128]{1,0:T(1,128)}', space=vmem, size = 0x12000, scoped, tag = 'internal scratch']
  #allocation2 [shape = 'f32[18,32,128]{2,1,0:T(8,128)}', space=vmem, size = 0x48000, scoped, tag = 'scratch operand']
  %s0 = inlined_call_operand.vmem [shape: bf16[2,16,16,128], index: 0, kind: input, shape index: {}]
  %s1 = inlined_call_operand.vmem [shape: bf16[128,128], index: 1, kind: input, shape index: {}]
  %s2 = inlined_call_operand.vmem [shape: f32[1,128], index: 2, kind: input, shape index: {}]
  %s3 = inlined_call_operand.vmem [shape: f32[3,3,128], index: 3, kind: input, shape index: {}]
  %s4 = inlined_call_operand.vmem [shape: f32[1,128], index: 4, kind: input, shape index: {}]
  %s5 = inlined_call_operand.vmem [shape: bf16[128,128], index: 5, kind: input, shape index: {}]
  %s6 = inlined_call_operand.vmem [shape: f32[1,128], index: 6, kind: input, shape index: {}]
  %s7 = inlined_call_operand.vmem [shape: bf16[2,8,8,128], index: 7, kind: output, shape index: {}]
  %s8 = sld [smem:[#allocation0]]
  $region61: #{encoder_forward.4} parent=0
    _
  %s10 = ssub.s32 1, %s8
  %s11 = scalar_select 0, %s10, %s8
  loop: start=0, step=1, limit=4
  $region2: #{encoder_forward.4} parent=0 // loop_pre_header
    _
  $region3: #{encoder_forward.4} parent=0 // loop_header
    %s13 = sphi 0, %s17
    %p14 = scmp.ge.s32.totalorder %s13, 4
    %s23 = sphi 0, %s25
    %s26 = sphi 0, %s23
    %s27 = sphi 0, %s26
    %s43 = sphi 0, %s27
    %s47 = sphi 0, %s47
    %s49 = sphi 0, %s47
    %s50 = sphi 0, %s49
    %s64 = sphi 0, %s50
    %s68 = sphi 0, %s68
    %s70 = sphi 0, %s68
    %s71 = sphi 0, %s70
    %s85 = sphi 0, %s71
    %s89 = sphi 0, %s89
    %s91 = sphi 0, %s89
    %s92 = sphi 0, %s91
    %s106 = sphi 0, %s92
    %s110 = sphi 0, %s110
    %s112 = sphi 0, %s110
    %s113 = sphi 0, %s112
    %s127 = sphi 0, %s113
    %s131 = sphi 0, %s131
    %s133 = sphi 0, %s131
    %s134 = sphi 0, %s133
    %s148 = sphi 0, %s134
    %s152 = sphi 0, %s152
    %s154 = sphi 0, %s152
    %s155 = sphi 0, %s154
    %s169 = sphi 0, %s155
    %s175 = sphi 0, %s177
    %s178 = sphi 0, %s175
    %s179 = sphi 0, %s178
    %s195 = sphi 0, %s179
  $region4: #{encoder_forward.4} parent=0 // loop_header_branch
    %16 = sbr.rel (%p14) target = $region8
  $region5: #{encoder_forward.4} parent=0 // loop_body
    %s18 = ssub.s32 %s13, 1
    %s19 = ssub.s32 %s13, 2
    %s20 = sadd.s32 %s13, 1
    %s21 = ssub.s32 %s13, %s20
    %p22 = scmp.eq.s32.totalorder %s21, 0
    %s24 = sadd.s32 %s23, 1
    %s25 = scalar_select %p22, %s23, %s24
    %p28 = pneg %p22
    %p29 = scmp.eq.s32.totalorder %s13, 1
    %p30 = por %p28, %p29
    %p31 = scmp.ne.s32.totalorder %s23, %s26
    %p32 = scmp.eq.s32.totalorder %s13, 0
    %p33 = por %p31, %p32
    %p34 = scmp.ne.s32.totalorder %s23, %s26
    %p35 = scmp.eq.s32.totalorder %s18, 1
    %p36 = por %p34, %p35
    %p37 = scmp.ne.s32.totalorder %s26, %s27
    %p38 = scmp.eq.s32.totalorder %s18, 0
    %p39 = por %p37, %p38
    %p40 = scmp.ne.s32.totalorder %s26, %s27
    %p41 = scmp.eq.s32.totalorder %s19, 1
    %p42 = por %p40, %p41
    %p44 = scmp.ne.s32.totalorder %s27, %s43
    %p45 = scmp.eq.s32.totalorder %s19, 0
    %p46 = por %p44, %p45
    %s48 = sadd.s32 %s47, 1
    %p51 = scmp.eq.s32.totalorder %s13, 1
    %p52 = scmp.ne.s32.totalorder %s47, %s49
    %p53 = scmp.eq.s32.totalorder %s13, 0
    %p54 = por %p52, %p53
    %p55 = scmp.ne.s32.totalorder %s47, %s49
    %p56 = scmp.eq.s32.totalorder %s18, 1
    %p57 = por %p55, %p56
    %p58 = scmp.ne.s32.totalorder %s49, %s50
    %p59 = scmp.eq.s32.totalorder %s18, 0
    %p60 = por %p58, %p59
    %p61 = scmp.ne.s32.totalorder %s49, %s50
    %p62 = scmp.eq.s32.totalorder %s19, 1
    %p63 = por %p61, %p62
    %p65 = scmp.ne.s32.totalorder %s50, %s64
    %p66 = scmp.eq.s32.totalorder %s19, 0
    %p67 = por %p65, %p66
    %s69 = sadd.s32 %s68, 1
    %p72 = scmp.eq.s32.totalorder %s13, 1
    %p73 = scmp.ne.s32.totalorder %s68, %s70
    %p74 = scmp.eq.s32.totalorder %s13, 0
    %p75 = por %p73, %p74
    %p76 = scmp.ne.s32.totalorder %s68, %s70
    %p77 = scmp.eq.s32.totalorder %s18, 1
    %p78 = por %p76, %p77
    %p79 = scmp.ne.s32.totalorder %s70, %s71
    %p80 = scmp.eq.s32.totalorder %s18, 0
    %p81 = por %p79, %p80
    %p82 = scmp.ne.s32.totalorder %s70, %s71
    %p83 = scmp.eq.s32.totalorder %s19, 1
    %p84 = por %p82, %p83
    %p86 = scmp.ne.s32.totalorder %s71, %s85
    %p87 = scmp.eq.s32.totalorder %s19, 0
    %p88 = por %p86, %p87
    %s90 = sadd.s32 %s89, 1
    %p93 = scmp.eq.s32.totalorder %s13, 1
    %p94 = scmp.ne.s32.totalorder %s89, %s91
    %p95 = scmp.eq.s32.totalorder %s13, 0
    %p96 = por %p94, %p95
    %p97 = scmp.ne.s32.totalorder %s89, %s91
    %p98 = scmp.eq.s32.totalorder %s18, 1
    %p99 = por %p97, %p98
    %p100 = scmp.ne.s32.totalorder %s91, %s92
    %p101 = scmp.eq.s32.totalorder %s18, 0
    %p102 = por %p100, %p101
    %p103 = scmp.ne.s32.totalorder %s91, %s92
    %p104 = scmp.eq.s32.totalorder %s19, 1
    %p105 = por %p103, %p104
    %p107 = scmp.ne.s32.totalorder %s92, %s106
    %p108 = scmp.eq.s32.totalorder %s19, 0
    %p109 = por %p107, %p108
    %s111 = sadd.s32 %s110, 1
    %p114 = scmp.eq.s32.totalorder %s13, 1
    %p115 = scmp.ne.s32.totalorder %s110, %s112
    %p116 = scmp.eq.s32.totalorder %s13, 0
    %p117 = por %p115, %p116
    %p118 = scmp.ne.s32.totalorder %s110, %s112
    %p119 = scmp.eq.s32.totalorder %s18, 1
    %p120 = por %p118, %p119
    %p121 = scmp.ne.s32.totalorder %s112, %s113
    %p122 = scmp.eq.s32.totalorder %s18, 0
    %p123 = por %p121, %p122
    %p124 = scmp.ne.s32.totalorder %s112, %s113
    %p125 = scmp.eq.s32.totalorder %s19, 1
    %p126 = por %p124, %p125
    %p128 = scmp.ne.s32.totalorder %s113, %s127
    %p129 = scmp.eq.s32.totalorder %s19, 0
    %p130 = por %p128, %p129
    %s132 = sadd.s32 %s131, 1
    %p135 = scmp.eq.s32.totalorder %s13, 1
    %p136 = scmp.ne.s32.totalorder %s131, %s133
    %p137 = scmp.eq.s32.totalorder %s13, 0
    %p138 = por %p136, %p137
    %p139 = scmp.ne.s32.totalorder %s131, %s133
    %p140 = scmp.eq.s32.totalorder %s18, 1
    %p141 = por %p139, %p140
    %p142 = scmp.ne.s32.totalorder %s133, %s134
    %p143 = scmp.eq.s32.totalorder %s18, 0
    %p144 = por %p142, %p143
    %p145 = scmp.ne.s32.totalorder %s133, %s134
    %p146 = scmp.eq.s32.totalorder %s19, 1
    %p147 = por %p145, %p146
    %p149 = scmp.ne.s32.totalorder %s134, %s148
    %p150 = scmp.eq.s32.totalorder %s19, 0
    %p151 = por %p149, %p150
    %s153 = sadd.s32 %s152, 1
    %p156 = scmp.eq.s32.totalorder %s13, 1
    %p157 = scmp.ne.s32.totalorder %s152, %s154
    %p158 = scmp.eq.s32.totalorder %s13, 0
    %p159 = por %p157, %p158
    %p160 = scmp.ne.s32.totalorder %s152, %s154
    %p161 = scmp.eq.s32.totalorder %s18, 1
    %p162 = por %p160, %p161
    %p163 = scmp.ne.s32.totalorder %s154, %s155
    %p164 = scmp.eq.s32.totalorder %s18, 0
    %p165 = por %p163, %p164
    %p166 = scmp.ne.s32.totalorder %s154, %s155
    %p167 = scmp.eq.s32.totalorder %s19, 1
    %p168 = por %p166, %p167
    %p170 = scmp.ne.s32.totalorder %s155, %s169
    %p171 = scmp.eq.s32.totalorder %s19, 0
    %p172 = por %p170, %p171
    %s173 = ssub.s32 %s13, %s20
    %p174 = scmp.eq.s32.totalorder %s173, 0
    %s176 = sadd.s32 %s175, 1
    %s177 = scalar_select %p174, %s175, %s176
    %p180 = pneg %p174
    %p181 = scmp.eq.s32.totalorder %s13, 1
    %p182 = por %p180, %p181
    %p183 = scmp.ne.s32.totalorder %s175, %s178
    %p184 = scmp.eq.s32.totalorder %s13, 0
    %p185 = por %p183, %p184
    %p186 = scmp.ne.s32.totalorder %s175, %s178
    %p187 = scmp.eq.s32.totalorder %s18, 1
    %p188 = por %p186, %p187
    %p189 = scmp.ne.s32.totalorder %s178, %s179
    %p190 = scmp.eq.s32.totalorder %s18, 0
    %p191 = por %p189, %p190
    %p192 = scmp.ne.s32.totalorder %s178, %s179
    %p193 = scmp.eq.s32.totalorder %s19, 1
    %p194 = por %p192, %p193
    %p196 = scmp.ne.s32.totalorder %s179, %s195
    %p197 = scmp.eq.s32.totalorder %s19, 0
    %p198 = por %p196, %p197
    %p199 = scmp.le.s32.totalorder 1, %s13
    %p200 = scmp.lt.s32.totalorder %s13, 3
    %p201 = pnand %p199, %p200
    %p202 = pneg %p201
    // Predicated region
    $region9: #{encoder_forward.4} parent=5 // pred_check
      _
    $region10: #{encoder_forward.4} parent=5 // pred_check_branch
      %204 = sbr.rel (%p201) target = $region12
    $region11: #{encoder_forward.4} parent=5 // pred_region
      %s205 = ssub.s32 %s13, 1
      // Predicated region
      $region13: #{encoder_forward.4} parent=11 // pred_check
        %p206 = pneg %p60
      $region14: #{encoder_forward.4} parent=11 // pred_check_branch
        %208 = sbr.rel (%p206) target = $region16
      $region15: #{encoder_forward.4} parent=11 // pred_region
        _
      $region16: #{encoder_forward.4} parent=11 // pred_fallthru
        _
      // Predicated region
      $region17: #{encoder_forward.4} parent=11 // pred_check
        %p209 = pneg %p81
      $region18: #{encoder_forward.4} parent=11 // pred_check_branch
        %211 = sbr.rel (%p209) target = $region20
      $region19: #{encoder_forward.4} parent=11 // pred_region
        _
      $region20: #{encoder_forward.4} parent=11 // pred_fallthru
        _
      // Predicated region
      $region21: #{encoder_forward.4} parent=11 // pred_check
        %p212 = pneg %p102
      $region22: #{encoder_forward.4} parent=11 // pred_check_branch
        %214 = sbr.rel (%p212) target = $region24
      $region23: #{encoder_forward.4} parent=11 // pred_region
        _
      $region24: #{encoder_forward.4} parent=11 // pred_fallthru
        _
      // Predicated region
      $region25: #{encoder_forward.4} parent=11 // pred_check
        %p215 = pneg %p123
      $region26: #{encoder_forward.4} parent=11 // pred_check_branch
        %217 = sbr.rel (%p215) target = $region28
      $region27: #{encoder_forward.4} parent=11 // pred_region
        _
      $region28: #{encoder_forward.4} parent=11 // pred_fallthru
        _
      // Predicated region
      $region29: #{encoder_forward.4} parent=11 // pred_check
        %p218 = pneg %p144
      $region30: #{encoder_forward.4} parent=11 // pred_check_branch
        %220 = sbr.rel (%p218) target = $region32
      $region31: #{encoder_forward.4} parent=11 // pred_region
        _
      $region32: #{encoder_forward.4} parent=11 // pred_fallthru
        _
      // Predicated region
      $region33: #{encoder_forward.4} parent=11 // pred_check
        %p221 = pneg %p165
      $region34: #{encoder_forward.4} parent=11 // pred_check_branch
        %223 = sbr.rel (%p221) target = $region36
      $region35: #{encoder_forward.4} parent=11 // pred_region
        _
      $region36: #{encoder_forward.4} parent=11 // pred_fallthru
        _
    $region12: #{encoder_forward.4} parent=5 // pred_fallthru
      _
    %p224 = scmp.lt.s32.totalorder %s13, 2
    // Predicated region
    $region37: #{encoder_forward.4} parent=5 // pred_check
      %p225 = pneg %p224
    $region38: #{encoder_forward.4} parent=5 // pred_check_branch
      %227 = sbr.rel (%p225) target = $region40
    $region39: #{encoder_forward.4} parent=5 // pred_region
      // Predicated region
      $region41: #{encoder_forward.4} parent=39 // pred_check
        %p228 = pneg %p33
      $region42: #{encoder_forward.4} parent=39 // pred_check_branch
        %230 = sbr.rel (%p228) target = $region44
      $region43: #{encoder_forward.4} parent=39 // pred_region
        %p231 = scmp.lt.s32.totalorder %s13, 1
        %s232 = scalar_select %p231, %s13, 1
        %s233 = smul.addr %s232, 32
        %s234 = smul.addr %s233, 4
        %s235 = scalar_lea.vmem %s0, %s234
      $region44: #{encoder_forward.4} parent=39 // pred_fallthru
        _
    $region40: #{encoder_forward.4} parent=5 // pred_fallthru
      _
    %p236 = scmp.le.s32.totalorder 1, %s13
    %p237 = scmp.lt.s32.totalorder %s13, 3
    %p238 = pnand %p236, %p237
    %p239 = pneg %p238
    // Predicated region
    $region45: #{encoder_forward.4} parent=5 // pred_check
      _
    $region46: #{encoder_forward.4} parent=5 // pred_check_branch
      %241 = sbr.rel (%p238) target = $region48
    $region47: #{encoder_forward.4} parent=5 // pred_region
      %s242 = ssub.s32 %s13, 1
      %p243 = scmp.lt.s32.totalorder %s18, 1
      %s244 = scalar_select %p243, %s18, 1
      %s245 = smul.addr %s244, 32
      %s246 = smul.addr %s245, 4
      %s247 = scalar_lea.vmem %s0, %s246
      %p248 = pneg %p39
      %p249 = pneg %p36
      %p250 = pneg %p60
      %p251 = pneg %p57
      %p252 = pneg %p81
      %p253 = pneg %p78
      %p254 = pneg %p102
      %p255 = pneg %p99
      %p256 = pneg %p123
      %p257 = pneg %p120
      %p258 = pneg %p144
      %p259 = pneg %p141
      %p260 = pneg %p165
      %p261 = pneg %p162
      %p262 = pneg %p191
      %p263 = pneg %p188
      %p264 = scmp.lt.s32.totalorder %s18, 1
      %s265 = scalar_select %p264, %s18, 1
      %s266 = smul.addr %s265, 8
      %s267 = smul.addr %s266, 4
      %s268 = scalar_lea.vmem %s7, %s267
      %p269 = scmp.lt.s32.totalorder %s18, 1
      %s270 = scalar_select %p269, %s18, 1
      %s271 = smul.addr %s270, 32
      %s272 = smul.addr %s271, 4
      %s273 = scalar_lea.vmem %s0, %s272
      %p274 = scmp.lt.s32.totalorder %s18, 1
      %s275 = scalar_select %p274, %s18, 1
      %s276 = smul.addr %s275, 8
      %s277 = smul.addr %s276, 4
      %s278 = scalar_lea.vmem %s7, %s277
      %v280 = vld [vmem:[%s273] sm:$0xf]
      %v281 = vld [vmem:[%s273 + $0x4] sm:$0xf]
      %v282 = vld [vmem:[%s273 + $0x8] sm:$0xf]
      %v283 = vld [vmem:[%s273 + $0xc] sm:$0xf]
      %v284 = vld [vmem:[%s273 + $0x10] sm:$0xf]
      %v285 = vld [vmem:[%s273 + $0x14] sm:$0xf]
      %v286 = vld [vmem:[%s273 + $0x18] sm:$0xf]
      %v287 = vld [vmem:[%s273 + $0x1c] sm:$0xf]
      %v288 = vld [vmem:[%s273 + $0x20] sm:$0xf]
      %v289 = vld [vmem:[%s273 + $0x24] sm:$0xf]
      %v290 = vld [vmem:[%s273 + $0x28] sm:$0xf]
      %v291 = vld [vmem:[%s273 + $0x2c] sm:$0xf]
      %v292 = vld [vmem:[%s273 + $0x30] sm:$0xf]
      %v293 = vld [vmem:[%s273 + $0x34] sm:$0xf]
      %v294 = vld [vmem:[%s273 + $0x38] sm:$0xf]
      %v295 = vld [vmem:[%s273 + $0x3c] sm:$0xf]
      %v296 = vld [vmem:[%s273 + $0x40] sm:$0xf]
      %v297 = vld [vmem:[%s273 + $0x44] sm:$0xf]
      %v298 = vld [vmem:[%s273 + $0x48] sm:$0xf]
      %v299 = vld [vmem:[%s273 + $0x4c] sm:$0xf]
      %v300 = vld [vmem:[%s273 + $0x50] sm:$0xf]
      %v301 = vld [vmem:[%s273 + $0x54] sm:$0xf]
      %v302 = vld [vmem:[%s273 + $0x58] sm:$0xf]
      %v303 = vld [vmem:[%s273 + $0x5c] sm:$0xf]
      %v304 = vld [vmem:[%s273 + $0x60] sm:$0xf]
      %v305 = vld [vmem:[%s273 + $0x64] sm:$0xf]
      %v306 = vld [vmem:[%s273 + $0x68] sm:$0xf]
      %v307 = vld [vmem:[%s273 + $0x6c] sm:$0xf]
      %v308 = vld [vmem:[%s273 + $0x70] sm:$0xf]
      %v309 = vld [vmem:[%s273 + $0x74] sm:$0xf]
      %v310 = vld [vmem:[%s273 + $0x78] sm:$0xf]
      %v311 = vld [vmem:[%s273 + $0x7c] sm:$0xf]
      %v312 = vunpack.c.l.bf16 %v280
      %v313 = vunpack.c.l.bf16 %v281
      %v314 = vunpack.c.l.bf16 %v282
      %v315 = vunpack.c.l.bf16 %v283
      %v316 = vunpack.c.l.bf16 %v284
      %v317 = vunpack.c.l.bf16 %v285
      %v318 = vunpack.c.l.bf16 %v286
      %v319 = vunpack.c.l.bf16 %v287
      %v320 = vunpack.c.l.bf16 %v288
      %v321 = vunpack.c.l.bf16 %v289
      %v322 = vunpack.c.l.bf16 %v290
      %v323 = vunpack.c.l.bf16 %v291
      %v324 = vunpack.c.l.bf16 %v292
      %v325 = vunpack.c.l.bf16 %v293
      %v326 = vunpack.c.l.bf16 %v294
      %v327 = vunpack.c.l.bf16 %v295
      %v328 = vunpack.c.l.bf16 %v296
      %v329 = vunpack.c.l.bf16 %v297
      %v330 = vunpack.c.l.bf16 %v298
      %v331 = vunpack.c.l.bf16 %v299
      %v332 = vunpack.c.l.bf16 %v300
      %v333 = vunpack.c.l.bf16 %v301
      %v334 = vunpack.c.l.bf16 %v302
      %v335 = vunpack.c.l.bf16 %v303
      %v336 = vunpack.c.l.bf16 %v304
      %v337 = vunpack.c.l.bf16 %v305
      %v338 = vunpack.c.l.bf16 %v306
      %v339 = vunpack.c.l.bf16 %v307
      %v340 = vunpack.c.l.bf16 %v308
      %v341 = vunpack.c.l.bf16 %v309
      %v342 = vunpack.c.l.bf16 %v310
      %v343 = vunpack.c.l.bf16 %v311
      %v344 = vpack.c.bf16 %v313, %v312
      %v345 = vpack.c.bf16 %v315, %v314
      %v346 = vpack.c.bf16 %v317, %v316
      %v347 = vpack.c.bf16 %v319, %v318
      %v348 = vpack.c.bf16 %v321, %v320
      %v349 = vpack.c.bf16 %v323, %v322
      %v350 = vpack.c.bf16 %v325, %v324
      %v351 = vpack.c.bf16 %v327, %v326
      %v352 = vpack.c.bf16 %v329, %v328
      %v353 = vpack.c.bf16 %v331, %v330
      %v354 = vpack.c.bf16 %v333, %v332
      %v355 = vpack.c.bf16 %v335, %v334
      %v356 = vpack.c.bf16 %v337, %v336
      %v357 = vpack.c.bf16 %v339, %v338
      %v358 = vpack.c.bf16 %v341, %v340
      %v359 = vpack.c.bf16 %v343, %v342
      %v360 = vld [vmem:[%s1] sm:$0xf]
      %v361 = vld [vmem:[%s1 + $0x4] sm:$0xf]
      %v362 = vld [vmem:[%s1 + $0x8] sm:$0xf]
      %v363 = vld [vmem:[%s1 + $0xc] sm:$0xf]
      %v364 = vld [vmem:[%s1 + $0x10] sm:$0xf]
      %v365 = vld [vmem:[%s1 + $0x14] sm:$0xf]
      %v366 = vld [vmem:[%s1 + $0x18] sm:$0xf]
      %v367 = vld [vmem:[%s1 + $0x1c] sm:$0xf]
      %v368 = vld [vmem:[%s1 + $0x20] sm:$0xf]
      %v369 = vld [vmem:[%s1 + $0x24] sm:$0xf]
      %v370 = vld [vmem:[%s1 + $0x28] sm:$0xf]
      %v371 = vld [vmem:[%s1 + $0x2c] sm:$0xf]
      %v372 = vld [vmem:[%s1 + $0x30] sm:$0xf]
      %v373 = vld [vmem:[%s1 + $0x34] sm:$0xf]
      %v374 = vld [vmem:[%s1 + $0x38] sm:$0xf]
      %v375 = vld [vmem:[%s1 + $0x3c] sm:$0xf]
      %v376 = vld [vmem:[%s2] sm:$0x1]
      %v378 = vlaneseq
      %v379 = vshrl.u32 %v378, 7
      %v380 = vsub.s32 0, %v379
      %v381 = vrot.slane %v376, %v380
      %v399 = vunpack.c.l.b16 %v360
      %v400 = vunpack.c.l.b16 %v361
      %v401 = vunpack.c.l.b16 %v362
      %v402 = vunpack.c.l.b16 %v363
      %v403 = vunpack.c.l.b16 %v364
      %v404 = vunpack.c.l.b16 %v365
      %v405 = vunpack.c.l.b16 %v366
      %v406 = vunpack.c.l.b16 %v367
      %v407 = vunpack.c.l.b16 %v368
      %v408 = vunpack.c.l.b16 %v369
      %v409 = vunpack.c.l.b16 %v370
      %v410 = vunpack.c.l.b16 %v371
      %v411 = vunpack.c.l.b16 %v372
      %v412 = vunpack.c.l.b16 %v373
      %v413 = vunpack.c.l.b16 %v374
      %v414 = vunpack.c.l.b16 %v375
      %v415 = vpack.c.b16 %v400, %v399
      %v416 = vpack.c.b16 %v402, %v401
      %v417 = vpack.c.b16 %v404, %v403
      %v418 = vpack.c.b16 %v406, %v405
      %v419 = vpack.c.b16 %v408, %v407
      %v420 = vpack.c.b16 %v410, %v409
      %v421 = vpack.c.b16 %v412, %v411
      %v422 = vpack.c.b16 %v414, %v413
      %431 = vmatprep.subr.bf16.mxu0 0
      %432 = vmatpush1.bf16.msra.mxu0 %v422
      %433 = vmatprep.subr.bf16.mxu0 0
      %434 = vmatpush1.bf16.msra.mxu0 %v421
      %435 = vmatprep.subr.bf16.mxu0 0
      %436 = vmatpush1.bf16.msra.mxu0 %v420
      %437 = vmatprep.subr.bf16.mxu0 0
      %438 = vmatpush1.bf16.msra.mxu0 %v419
      %439 = vmatprep.subr.bf16.mxu0 0
      %440 = vmatpush1.bf16.msra.mxu0 %v418
      %441 = vmatprep.subr.bf16.mxu0 0
      %442 = vmatpush1.bf16.msra.mxu0 %v417
      %443 = vmatprep.subr.bf16.mxu0 0
      %444 = vmatpush1.bf16.msra.mxu0 %v416
      %445 = vmatprep.subr.bf16.mxu0 0
      %446 = vmatpush1.bf16.msra.mxu0 %v415
      %447 = vmatprep.subr.bf16.mxu0 0
      %448 = vmatpush2.bf16.msra.mxu0 0
      %449 = vmatprep.subr.bf16.mxu0 0
      %450 = vmatpush2.bf16.msra.mxu0 0
      %451 = vmatprep.subr.bf16.mxu0 0
      %452 = vmatpush2.bf16.msra.mxu0 0
      %453 = vmatprep.subr.bf16.mxu0 0
      %454 = vmatpush2.bf16.msra.mxu0 0
      %455 = vmatprep.subr.bf16.mxu0 0
      %456 = vmatpush2.bf16.msra.mxu0 0
      %457 = vmatprep.subr.bf16.mxu0 0
      %458 = vmatpush2.bf16.msra.mxu0 0
      %459 = vmatprep.subr.bf16.mxu0 0
      %460 = vmatpush2.bf16.msra.mxu0 0
      %461 = vmatprep.subr.bf16.mxu0 0
      %462 = vmatpush2.bf16.msra.mxu0 0
      %463 = vmatprep.mubr.bf16.mxu0 0
      %464 = vmatmul.mubr.bf16.gmra.mxu0 %v344
      %v465 = vpop.f32.mrf.mxu0
      %v466 = vadd.f32 %v381, %v465
      %v467 = vpop.f32.mrf.mxu0
      %v468 = vpop.f32.mrf.mxu0
      %v469 = vadd.f32 %v381, %v468
      %v470 = vpop.f32.mrf.mxu0
      %471 = vmatprep.mubr.bf16.mxu0 0
      %472 = vmatmul.mubr.bf16.gmra.mxu0 %v345
      %v473 = vpop.f32.mrf.mxu0
      %v474 = vadd.f32 %v381, %v473
      %v475 = vpop.f32.mrf.mxu0
      %v476 = vpop.f32.mrf.mxu0
      %v477 = vadd.f32 %v381, %v476
      %v478 = vpop.f32.mrf.mxu0
      %479 = vmatprep.mubr.bf16.mxu0 0
      %480 = vmatmul.mubr.bf16.gmra.mxu0 %v346
      %v481 = vpop.f32.mrf.mxu0
      %v482 = vadd.f32 %v381, %v481
      %v483 = vpop.f32.mrf.mxu0
      %v484 = vpop.f32.mrf.mxu0
      %v485 = vadd.f32 %v381, %v484
      %v486 = vpop.f32.mrf.mxu0
      %487 = vmatprep.mubr.bf16.mxu0 0
      %488 = vmatmul.mubr.bf16.gmra.mxu0 %v347
      %v489 = vpop.f32.mrf.mxu0
      %v490 = vadd.f32 %v381, %v489
      %v491 = vpop.f32.mrf.mxu0
      %v492 = vpop.f32.mrf.mxu0
      %v493 = vadd.f32 %v381, %v492
      %v494 = vpop.f32.mrf.mxu0
      %495 = vmatprep.mubr.bf16.mxu0 0
      %496 = vmatmul.mubr.bf16.gmra.mxu0 %v348
      %v497 = vpop.f32.mrf.mxu0
      %v498 = vadd.f32 %v381, %v497
      %v499 = vpop.f32.mrf.mxu0
      %v500 = vpop.f32.mrf.mxu0
      %v501 = vadd.f32 %v381, %v500
      %v502 = vpop.f32.mrf.mxu0
      %503 = vmatprep.mubr.bf16.mxu0 0
      %504 = vmatmul.mubr.bf16.gmra.mxu0 %v349
      %v505 = vpop.f32.mrf.mxu0
      %v506 = vadd.f32 %v381, %v505
      %v507 = vpop.f32.mrf.mxu0
      %v508 = vpop.f32.mrf.mxu0
      %v509 = vadd.f32 %v381, %v508
      %v510 = vpop.f32.mrf.mxu0
      %511 = vmatprep.mubr.bf16.mxu0 0
      %512 = vmatmul.mubr.bf16.gmra.mxu0 %v350
      %v513 = vpop.f32.mrf.mxu0
      %v514 = vadd.f32 %v381, %v513
      %v515 = vpop.f32.mrf.mxu0
      %v516 = vpop.f32.mrf.mxu0
      %v517 = vadd.f32 %v381, %v516
      %v518 = vpop.f32.mrf.mxu0
      %519 = vmatprep.mubr.bf16.mxu0 0
      %520 = vmatmul.mubr.bf16.gmra.mxu0 %v351
      %v521 = vpop.f32.mrf.mxu0
      %v522 = vadd.f32 %v381, %v521
      %v523 = vpop.f32.mrf.mxu0
      %v524 = vpop.f32.mrf.mxu0
      %v525 = vadd.f32 %v381, %v524
      %v526 = vpop.f32.mrf.mxu0
      %527 = vmatprep.mubr.bf16.mxu0 0
      %528 = vmatmul.mubr.bf16.gmra.mxu0 %v352
      %v529 = vpop.f32.mrf.mxu0
      %v530 = vadd.f32 %v381, %v529
      %v531 = vpop.f32.mrf.mxu0
      %v532 = vpop.f32.mrf.mxu0
      %v533 = vadd.f32 %v381, %v532
      %v534 = vpop.f32.mrf.mxu0
      %535 = vmatprep.mubr.bf16.mxu0 0
      %536 = vmatmul.mubr.bf16.gmra.mxu0 %v353
      %v537 = vpop.f32.mrf.mxu0
      %v538 = vadd.f32 %v381, %v537
      %v539 = vpop.f32.mrf.mxu0
      %v540 = vpop.f32.mrf.mxu0
      %v541 = vadd.f32 %v381, %v540
      %v542 = vpop.f32.mrf.mxu0
      %543 = vmatprep.mubr.bf16.mxu0 0
      %544 = vmatmul.mubr.bf16.gmra.mxu0 %v354
      %v545 = vpop.f32.mrf.mxu0
      %v546 = vadd.f32 %v381, %v545
      %v547 = vpop.f32.mrf.mxu0
      %v548 = vpop.f32.mrf.mxu0
      %v549 = vadd.f32 %v381, %v548
      %v550 = vpop.f32.mrf.mxu0
      %551 = vmatprep.mubr.bf16.mxu0 0
      %552 = vmatmul.mubr.bf16.gmra.mxu0 %v355
      %v553 = vpop.f32.mrf.mxu0
      %v554 = vadd.f32 %v381, %v553
      %v555 = vpop.f32.mrf.mxu0
      %v556 = vpop.f32.mrf.mxu0
      %v557 = vadd.f32 %v381, %v556
      %v558 = vpop.f32.mrf.mxu0
      %559 = vmatprep.mubr.bf16.mxu0 0
      %560 = vmatmul.mubr.bf16.gmra.mxu0 %v356
      %v561 = vpop.f32.mrf.mxu0
      %v562 = vadd.f32 %v381, %v561
      %v563 = vpop.f32.mrf.mxu0
      %v564 = vpop.f32.mrf.mxu0
      %v565 = vadd.f32 %v381, %v564
      %v566 = vpop.f32.mrf.mxu0
      %567 = vmatprep.mubr.bf16.mxu0 0
      %568 = vmatmul.mubr.bf16.gmra.mxu0 %v357
      %v569 = vpop.f32.mrf.mxu0
      %v570 = vadd.f32 %v381, %v569
      %v571 = vpop.f32.mrf.mxu0
      %v572 = vpop.f32.mrf.mxu0
      %v573 = vadd.f32 %v381, %v572
      %v574 = vpop.f32.mrf.mxu0
      %575 = vmatprep.mubr.bf16.mxu0 0
      %576 = vmatmul.mubr.bf16.gmra.mxu0 %v358
      %v577 = vpop.f32.mrf.mxu0
      %v578 = vadd.f32 %v381, %v577
      %v579 = vpop.f32.mrf.mxu0
      %v580 = vpop.f32.mrf.mxu0
      %v581 = vadd.f32 %v381, %v580
      %v582 = vpop.f32.mrf.mxu0
      %583 = vmatprep.mubr.bf16.mxu0 0
      %584 = vmatmul.mubr.bf16.gmra.mxu0 %v359
      %v585 = vpop.f32.mrf.mxu0
      %v586 = vadd.f32 %v381, %v585
      %v587 = vpop.f32.mrf.mxu0
      %v588 = vpop.f32.mrf.mxu0
      %v589 = vadd.f32 %v381, %v588
      %v590 = vpop.f32.mrf.mxu0
      %591 = vdwg.mxu0
      %v592 = vmax.f32 %v466, 0.0
      %v593 = vmax.f32 %v469, 0.0
      %v594 = vmax.f32 %v474, 0.0
      %v595 = vmax.f32 %v477, 0.0
      %v596 = vmax.f32 %v482, 0.0
      %v597 = vmax.f32 %v485, 0.0
      %v598 = vmax.f32 %v490, 0.0
      %v599 = vmax.f32 %v493, 0.0
      %v600 = vmax.f32 %v498, 0.0
      %v601 = vmax.f32 %v501, 0.0
      %v602 = vmax.f32 %v506, 0.0
      %v603 = vmax.f32 %v509, 0.0
      %v604 = vmax.f32 %v514, 0.0
      %v605 = vmax.f32 %v517, 0.0
      %v606 = vmax.f32 %v522, 0.0
      %v607 = vmax.f32 %v525, 0.0
      %v608 = vmax.f32 %v530, 0.0
      %v609 = vmax.f32 %v533, 0.0
      %v610 = vmax.f32 %v538, 0.0
      %v611 = vmax.f32 %v541, 0.0
      %v612 = vmax.f32 %v546, 0.0
      %v613 = vmax.f32 %v549, 0.0
      %v614 = vmax.f32 %v554, 0.0
      %v615 = vmax.f32 %v557, 0.0
      %v616 = vmax.f32 %v562, 0.0
      %v617 = vmax.f32 %v565, 0.0
      %v618 = vmax.f32 %v570, 0.0
      %v619 = vmax.f32 %v573, 0.0
      %v620 = vmax.f32 %v578, 0.0
      %v621 = vmax.f32 %v581, 0.0
      %v622 = vmax.f32 %v586, 0.0
      %v623 = vmax.f32 %v589, 0.0
      %624 = vst [vmem:[#allocation2] sm:$0xff] 0.0
      %625 = vst [vmem:[#allocation2 + $0x8] sm:$0xff] 0.0
      %626 = vst [vmem:[#allocation2 + $0x10] sm:$0xff] 0.0
      %627 = vst [vmem:[#allocation2 + $0x18] sm:$0xff] 0.0
      %628 = vst [vmem:[#allocation2 + $0x20] sm:$0xff] 0.0
      %629 = vst [vmem:[#allocation2 + $0x28] sm:$0xff] 0.0
      %630 = vst [vmem:[#allocation2 + $0x30] sm:$0xff] 0.0
      %631 = vst [vmem:[#allocation2 + $0x38] sm:$0xff] 0.0
      %632 = vst [vmem:[#allocation2 + $0x40] sm:$0xff] 0.0
      %633 = vst [vmem:[#allocation2 + $0x48] sm:$0xff] 0.0
      %634 = vst [vmem:[#allocation2 + $0x50] sm:$0xff] 0.0
      %635 = vst [vmem:[#allocation2 + $0x58] sm:$0xff] 0.0
      %636 = vst [vmem:[#allocation2 + $0x60] sm:$0xff] 0.0
      %637 = vst [vmem:[#allocation2 + $0x68] sm:$0xff] 0.0
      %638 = vst [vmem:[#allocation2 + $0x70] sm:$0xff] 0.0
      %639 = vst [vmem:[#allocation2 + $0x78] sm:$0xff] 0.0
      %640 = vst [vmem:[#allocation2 + $0x80] sm:$0xff] 0.0
      %641 = vst [vmem:[#allocation2 + $0x88] sm:$0xff] 0.0
      %642 = vst [vmem:[#allocation2 + $0x90] sm:$0xff] 0.0
      %643 = vst [vmem:[#allocation2 + $0x98] sm:$0xff] 0.0
      %644 = vst [vmem:[#allocation2 + $0xa0] sm:$0xff] 0.0
      %645 = vst [vmem:[#allocation2 + $0xa8] sm:$0xff] 0.0
      %646 = vst [vmem:[#allocation2 + $0xb0] sm:$0xff] 0.0
      %647 = vst [vmem:[#allocation2 + $0xb8] sm:$0xff] 0.0
      %648 = vst [vmem:[#allocation2 + $0xc0] sm:$0xff] 0.0
      %649 = vst [vmem:[#allocation2 + $0xc8] sm:$0xff] 0.0
      %650 = vst [vmem:[#allocation2 + $0xd0] sm:$0xff] 0.0
      %651 = vst [vmem:[#allocation2 + $0xd8] sm:$0xff] 0.0
      %652 = vst [vmem:[#allocation2 + $0xe0] sm:$0xff] 0.0
      %653 = vst [vmem:[#allocation2 + $0xe8] sm:$0xff] 0.0
      %654 = vst [vmem:[#allocation2 + $0xf0] sm:$0xff] 0.0
      %655 = vst [vmem:[#allocation2 + $0xf8] sm:$0xff] 0.0
      %656 = vst [vmem:[#allocation2 + $0x100] sm:$0xff] 0.0
      %657 = vst [vmem:[#allocation2 + $0x108] sm:$0xff] 0.0
      %658 = vst [vmem:[#allocation2 + $0x110] sm:$0xff] 0.0
      %659 = vst [vmem:[#allocation2 + $0x118] sm:$0xff] 0.0
      %660 = vst [vmem:[#allocation2 + $0x120] sm:$0xff] 0.0
      %661 = vst [vmem:[#allocation2 + $0x128] sm:$0xff] 0.0
      %662 = vst [vmem:[#allocation2 + $0x130] sm:$0xff] 0.0
      %663 = vst [vmem:[#allocation2 + $0x138] sm:$0xff] 0.0
      %664 = vst [vmem:[#allocation2 + $0x140] sm:$0xff] 0.0
      %665 = vst [vmem:[#allocation2 + $0x148] sm:$0xff] 0.0
      %666 = vst [vmem:[#allocation2 + $0x150] sm:$0xff] 0.0
      %667 = vst [vmem:[#allocation2 + $0x158] sm:$0xff] 0.0
      %668 = vst [vmem:[#allocation2 + $0x160] sm:$0xff] 0.0
      %669 = vst [vmem:[#allocation2 + $0x168] sm:$0xff] 0.0
      %670 = vst [vmem:[#allocation2 + $0x170] sm:$0xff] 0.0
      %671 = vst [vmem:[#allocation2 + $0x178] sm:$0xff] 0.0
      %672 = vst [vmem:[#allocation2 + $0x180] sm:$0xff] 0.0
      %673 = vst [vmem:[#allocation2 + $0x188] sm:$0xff] 0.0
      %674 = vst [vmem:[#allocation2 + $0x190] sm:$0xff] 0.0
      %675 = vst [vmem:[#allocation2 + $0x198] sm:$0xff] 0.0
      %676 = vst [vmem:[#allocation2 + $0x1a0] sm:$0xff] 0.0
      %677 = vst [vmem:[#allocation2 + $0x1a8] sm:$0xff] 0.0
      %678 = vst [vmem:[#allocation2 + $0x1b0] sm:$0xff] 0.0
      %679 = vst [vmem:[#allocation2 + $0x1b8] sm:$0xff] 0.0
      %680 = vst [vmem:[#allocation2 + $0x1c0] sm:$0xff] 0.0
      %681 = vst [vmem:[#allocation2 + $0x1c8] sm:$0xff] 0.0
      %682 = vst [vmem:[#allocation2 + $0x1d0] sm:$0xff] 0.0
      %683 = vst [vmem:[#allocation2 + $0x1d8] sm:$0xff] 0.0
      %684 = vst [vmem:[#allocation2 + $0x1e0] sm:$0xff] 0.0
      %685 = vst [vmem:[#allocation2 + $0x1e8] sm:$0xff] 0.0
      %686 = vst [vmem:[#allocation2 + $0x1f0] sm:$0xff] 0.0
      %687 = vst [vmem:[#allocation2 + $0x1f8] sm:$0xff] 0.0
      %688 = vst [vmem:[#allocation2 + $0x200] sm:$0xff] 0.0
      %689 = vst [vmem:[#allocation2 + $0x208] sm:$0xff] 0.0
      %690 = vst [vmem:[#allocation2 + $0x210] sm:$0xff] 0.0
      %691 = vst [vmem:[#allocation2 + $0x218] sm:$0xff] 0.0
      %692 = vst [vmem:[#allocation2 + $0x220] sm:$0xff] 0.0
      %693 = vst [vmem:[#allocation2 + $0x228] sm:$0xff] 0.0
      %694 = vst [vmem:[#allocation2 + $0x230] sm:$0xff] 0.0
      %695 = vst [vmem:[#allocation2 + $0x238] sm:$0xff] 0.0
      %s696 = scalar_lea.vmem [#allocation2], 32
      %697 = vst [vmem:[%s696 + $0x8] sm:$0xff] %v592
      %698 = vst [vmem:[%s696 + $0x10] sm:$0xff] %v593
      %699 = vst [vmem:[%s696 + $0x28] sm:$0xff] %v594
      %700 = vst [vmem:[%s696 + $0x30] sm:$0xff] %v595
      %701 = vst [vmem:[%s696 + $0x48] sm:$0xff] %v596
      %702 = vst [vmem:[%s696 + $0x50] sm:$0xff] %v597
      %703 = vst [vmem:[%s696 + $0x68] sm:$0xff] %v598
      %704 = vst [vmem:[%s696 + $0x70] sm:$0xff] %v599
      %705 = vst [vmem:[%s696 + $0x88] sm:$0xff] %v600
      %706 = vst [vmem:[%s696 + $0x90] sm:$0xff] %v601
      %707 = vst [vmem:[%s696 + $0xa8] sm:$0xff] %v602
      %708 = vst [vmem:[%s696 + $0xb0] sm:$0xff] %v603
      %709 = vst [vmem:[%s696 + $0xc8] sm:$0xff] %v604
      %710 = vst [vmem:[%s696 + $0xd0] sm:$0xff] %v605
      %711 = vst [vmem:[%s696 + $0xe8] sm:$0xff] %v606
      %712 = vst [vmem:[%s696 + $0xf0] sm:$0xff] %v607
      %713 = vst [vmem:[%s696 + $0x108] sm:$0xff] %v608
      %714 = vst [vmem:[%s696 + $0x110] sm:$0xff] %v609
      %715 = vst [vmem:[%s696 + $0x128] sm:$0xff] %v610
      %716 = vst [vmem:[%s696 + $0x130] sm:$0xff] %v611
      %717 = vst [vmem:[%s696 + $0x148] sm:$0xff] %v612
      %718 = vst [vmem:[%s696 + $0x150] sm:$0xff] %v613
      %719 = vst [vmem:[%s696 + $0x168] sm:$0xff] %v614
      %720 = vst [vmem:[%s696 + $0x170] sm:$0xff] %v615
      %721 = vst [vmem:[%s696 + $0x188] sm:$0xff] %v616
      %722 = vst [vmem:[%s696 + $0x190] sm:$0xff] %v617
      %723 = vst [vmem:[%s696 + $0x1a8] sm:$0xff] %v618
      %724 = vst [vmem:[%s696 + $0x1b0] sm:$0xff] %v619
      %725 = vst [vmem:[%s696 + $0x1c8] sm:$0xff] %v620
      %726 = vst [vmem:[%s696 + $0x1d0] sm:$0xff] %v621
      %727 = vst [vmem:[%s696 + $0x1e8] sm:$0xff] %v622
      %728 = vst [vmem:[%s696 + $0x1f0] sm:$0xff] %v623
      %v729 = vld [vmem:[%s3] sm:$0x7]
      %v730 = vld [vmem:[%s3 + $0x4] sm:$0x7]
      %v731 = vld [vmem:[%s3 + $0x8] sm:$0x7]
      %s732 = scalar_lea.vmem [#allocation2], 7
      %v733 = vld [vmem:[%s732] ss:$2 sm:$0xff]
      %s734 = scalar_lea.vmem [#allocation2], 71
      %v735 = vld [vmem:[%s734] ss:$2 sm:$0xff]
      %s736 = scalar_lea.vmem [#allocation2], 135
      %v737 = vld [vmem:[%s736] ss:$2 sm:$0xff]
      %s738 = scalar_lea.vmem [#allocation2], 199
      %v739 = vld [vmem:[%s738] ss:$2 sm:$0xff]
      %s740 = scalar_lea.vmem [#allocation2], 263
      %v741 = vld [vmem:[%s740] ss:$2 sm:$0xff]
      %s742 = scalar_lea.vmem [#allocation2], 327
      %v743 = vld [vmem:[%s742] ss:$2 sm:$0xff]
      %s744 = scalar_lea.vmem [#allocation2], 391
      %v745 = vld [vmem:[%s744] ss:$2 sm:$0xff]
      %s746 = scalar_lea.vmem [#allocation2], 455
      %v747 = vld [vmem:[%s746] ss:$2 sm:$0xff]
      %v748 = vlaneseq
      %v749 = vshrl.u32 %v748, 7
      %v750 = vsub.s32 0, %v749
      %v751 = vrot.slane %v729, %v750
      %v752 = vmul.f32 %v733, %v751
      %v753 = vmul.f32 %v735, %v751
      %v754 = vmul.f32 %v737, %v751
      %v755 = vmul.f32 %v739, %v751
      %v756 = vmul.f32 %v741, %v751
      %v757 = vmul.f32 %v743, %v751
      %v758 = vmul.f32 %v745, %v751
      %v759 = vmul.f32 %v747, %v751
      %v760 = vadd.f32 %v752, 0.0
      %v761 = vadd.f32 %v753, 0.0
      %v762 = vadd.f32 %v754, 0.0
      %v763 = vadd.f32 %v755, 0.0
      %v764 = vadd.f32 %v756, 0.0
      %v765 = vadd.f32 %v757, 0.0
      %v766 = vadd.f32 %v758, 0.0
      %v767 = vadd.f32 %v759, 0.0
      %s768 = scalar_lea.vmem [#allocation2], 8
      %v769 = vld [vmem:[%s768] ss:$2 sm:$0xff]
      %s770 = scalar_lea.vmem [#allocation2], 72
      %v771 = vld [vmem:[%s770] ss:$2 sm:$0xff]
      %s772 = scalar_lea.vmem [#allocation2], 136
      %v773 = vld [vmem:[%s772] ss:$2 sm:$0xff]
      %s774 = scalar_lea.vmem [#allocation2], 200
      %v775 = vld [vmem:[%s774] ss:$2 sm:$0xff]
      %s776 = scalar_lea.vmem [#allocation2], 264
      %v777 = vld [vmem:[%s776] ss:$2 sm:$0xff]
      %s778 = scalar_lea.vmem [#allocation2], 328
      %v779 = vld [vmem:[%s778] ss:$2 sm:$0xff]
      %s780 = scalar_lea.vmem [#allocation2], 392
      %v781 = vld [vmem:[%s780] ss:$2 sm:$0xff]
      %s782 = scalar_lea.vmem [#allocation2], 456
      %v783 = vld [vmem:[%s782] ss:$2 sm:$0xff]
      %v784 = vlaneseq
      %v785 = vshrl.u32 %v784, 7
      %v786 = vsub.s32 1, %v785
      %v787 = vrot.slane %v729, %v786
      %v788 = vmul.f32 %v769, %v787
      %v789 = vmul.f32 %v771, %v787
      %v790 = vmul.f32 %v773, %v787
      %v791 = vmul.f32 %v775, %v787
      %v792 = vmul.f32 %v777, %v787
      %v793 = vmul.f32 %v779, %v787
      %v794 = vmul.f32 %v781, %v787
      %v795 = vmul.f32 %v783, %v787
      %v796 = vadd.f32 %v760, %v788
      %v797 = vadd.f32 %v761, %v789
      %v798 = vadd.f32 %v762, %v790
      %v799 = vadd.f32 %v763, %v791
      %v800 = vadd.f32 %v764, %v792
      %v801 = vadd.f32 %v765, %v793
      %v802 = vadd.f32 %v766, %v794
      %v803 = vadd.f32 %v767, %v795
      %s804 = scalar_lea.vmem [#allocation2], 9
      %v805 = vld [vmem:[%s804] ss:$2 sm:$0xff]
      %s806 = scalar_lea.vmem [#allocation2], 73
      %v807 = vld [vmem:[%s806] ss:$2 sm:$0xff]
      %s808 = scalar_lea.vmem [#allocation2], 137
      %v809 = vld [vmem:[%s808] ss:$2 sm:$0xff]
      %s810 = scalar_lea.vmem [#allocation2], 201
      %v811 = vld [vmem:[%s810] ss:$2 sm:$0xff]
      %s812 = scalar_lea.vmem [#allocation2], 265
      %v813 = vld [vmem:[%s812] ss:$2 sm:$0xff]
      %s814 = scalar_lea.vmem [#allocation2], 329
      %v815 = vld [vmem:[%s814] ss:$2 sm:$0xff]
      %s816 = scalar_lea.vmem [#allocation2], 393
      %v817 = vld [vmem:[%s816] ss:$2 sm:$0xff]
      %s818 = scalar_lea.vmem [#allocation2], 457
      %v819 = vld [vmem:[%s818] ss:$2 sm:$0xff]
      %v820 = vlaneseq
      %v821 = vshrl.u32 %v820, 7
      %v822 = vsub.s32 2, %v821
      %v823 = vrot.slane %v729, %v822
      %v824 = vmul.f32 %v805, %v823
      %v825 = vmul.f32 %v807, %v823
      %v826 = vmul.f32 %v809, %v823
      %v827 = vmul.f32 %v811, %v823
      %v828 = vmul.f32 %v813, %v823
      %v829 = vmul.f32 %v815, %v823
      %v830 = vmul.f32 %v817, %v823
      %v831 = vmul.f32 %v819, %v823
      %v832 = vadd.f32 %v796, %v824
      %v833 = vadd.f32 %v797, %v825
      %v834 = vadd.f32 %v798, %v826
      %v835 = vadd.f32 %v799, %v827
      %v836 = vadd.f32 %v800, %v828
      %v837 = vadd.f32 %v801, %v829
      %v838 = vadd.f32 %v802, %v830
      %v839 = vadd.f32 %v803, %v831
      %s840 = scalar_lea.vmem %s696, 7 [#allocation2]
      %v841 = vld [vmem:[%s840] ss:$2 sm:$0xff]
      %s842 = scalar_lea.vmem %s696, 71 [#allocation2]
      %v843 = vld [vmem:[%s842] ss:$2 sm:$0xff]
      %s844 = scalar_lea.vmem %s696, 135 [#allocation2]
      %v845 = vld [vmem:[%s844] ss:$2 sm:$0xff]
      %s846 = scalar_lea.vmem %s696, 199 [#allocation2]
      %v847 = vld [vmem:[%s846] ss:$2 sm:$0xff]
      %s848 = scalar_lea.vmem %s696, 263 [#allocation2]
      %v849 = vld [vmem:[%s848] ss:$2 sm:$0xff]
      %s850 = scalar_lea.vmem %s696, 327 [#allocation2]
      %v851 = vld [vmem:[%s850] ss:$2 sm:$0xff]
      %s852 = scalar_lea.vmem %s696, 391 [#allocation2]
      %v853 = vld [vmem:[%s852] ss:$2 sm:$0xff]
      %s854 = scalar_lea.vmem %s696, 455 [#allocation2]
      %v855 = vld [vmem:[%s854] ss:$2 sm:$0xff]
      %v856 = vlaneseq
      %v857 = vshrl.u32 %v856, 7
      %v858 = vsub.s32 0, %v857
      %v859 = vrot.slane %v730, %v858
      %v860 = vmul.f32 %v841, %v859
      %v861 = vmul.f32 %v843, %v859
      %v862 = vmul.f32 %v845, %v859
      %v863 = vmul.f32 %v847, %v859
      %v864 = vmul.f32 %v849, %v859
      %v865 = vmul.f32 %v851, %v859
      %v866 = vmul.f32 %v853, %v859
      %v867 = vmul.f32 %v855, %v859
      %v868 = vadd.f32 %v832, %v860
      %v869 = vadd.f32 %v833, %v861
      %v870 = vadd.f32 %v834, %v862
      %v871 = vadd.f32 %v835, %v863
      %v872 = vadd.f32 %v836, %v864
      %v873 = vadd.f32 %v837, %v865
      %v874 = vadd.f32 %v838, %v866
      %v875 = vadd.f32 %v839, %v867
      %s876 = scalar_lea.vmem %s696, 8 [#allocation2]
      %v877 = vld [vmem:[%s876] ss:$2 sm:$0xff]
      %s878 = scalar_lea.vmem %s696, 72 [#allocation2]
      %v879 = vld [vmem:[%s878] ss:$2 sm:$0xff]
      %s880 = scalar_lea.vmem %s696, 136 [#allocation2]
      %v881 = vld [vmem:[%s880] ss:$2 sm:$0xff]
      %s882 = scalar_lea.vmem %s696, 200 [#allocation2]
      %v883 = vld [vmem:[%s882] ss:$2 sm:$0xff]
      %s884 = scalar_lea.vmem %s696, 264 [#allocation2]
      %v885 = vld [vmem:[%s884] ss:$2 sm:$0xff]
      %s886 = scalar_lea.vmem %s696, 328 [#allocation2]
      %v887 = vld [vmem:[%s886] ss:$2 sm:$0xff]
      %s888 = scalar_lea.vmem %s696, 392 [#allocation2]
      %v889 = vld [vmem:[%s888] ss:$2 sm:$0xff]
      %s890 = scalar_lea.vmem %s696, 456 [#allocation2]
      %v891 = vld [vmem:[%s890] ss:$2 sm:$0xff]
      %v892 = vlaneseq
      %v893 = vshrl.u32 %v892, 7
      %v894 = vsub.s32 1, %v893
      %v895 = vrot.slane %v730, %v894
      %v896 = vmul.f32 %v877, %v895
      %v897 = vmul.f32 %v879, %v895
      %v898 = vmul.f32 %v881, %v895
      %v899 = vmul.f32 %v883, %v895
      %v900 = vmul.f32 %v885, %v895
      %v901 = vmul.f32 %v887, %v895
      %v902 = vmul.f32 %v889, %v895
      %v903 = vmul.f32 %v891, %v895
      %v904 = vadd.f32 %v868, %v896
      %v905 = vadd.f32 %v869, %v897
      %v906 = vadd.f32 %v870, %v898
      %v907 = vadd.f32 %v871, %v899
      %v908 = vadd.f32 %v872, %v900
      %v909 = vadd.f32 %v873, %v901
      %v910 = vadd.f32 %v874, %v902
      %v911 = vadd.f32 %v875, %v903
      %s912 = scalar_lea.vmem %s696, 9 [#allocation2]
      %v913 = vld [vmem:[%s912] ss:$2 sm:$0xff]
      %s914 = scalar_lea.vmem %s696, 73 [#allocation2]
      %v915 = vld [vmem:[%s914] ss:$2 sm:$0xff]
      %s916 = scalar_lea.vmem %s696, 137 [#allocation2]
      %v917 = vld [vmem:[%s916] ss:$2 sm:$0xff]
      %s918 = scalar_lea.vmem %s696, 201 [#allocation2]
      %v919 = vld [vmem:[%s918] ss:$2 sm:$0xff]
      %s920 = scalar_lea.vmem %s696, 265 [#allocation2]
      %v921 = vld [vmem:[%s920] ss:$2 sm:$0xff]
      %s922 = scalar_lea.vmem %s696, 329 [#allocation2]
      %v923 = vld [vmem:[%s922] ss:$2 sm:$0xff]
      %s924 = scalar_lea.vmem %s696, 393 [#allocation2]
      %v925 = vld [vmem:[%s924] ss:$2 sm:$0xff]
      %s926 = scalar_lea.vmem %s696, 457 [#allocation2]
      %v927 = vld [vmem:[%s926] ss:$2 sm:$0xff]
      %v928 = vlaneseq
      %v929 = vshrl.u32 %v928, 7
      %v930 = vsub.s32 2, %v929
      %v931 = vrot.slane %v730, %v930
      %v932 = vmul.f32 %v913, %v931
      %v933 = vmul.f32 %v915, %v931
      %v934 = vmul.f32 %v917, %v931
      %v935 = vmul.f32 %v919, %v931
      %v936 = vmul.f32 %v921, %v931
      %v937 = vmul.f32 %v923, %v931
      %v938 = vmul.f32 %v925, %v931
      %v939 = vmul.f32 %v927, %v931
      %v940 = vadd.f32 %v904, %v932
      %v941 = vadd.f32 %v905, %v933
      %v942 = vadd.f32 %v906, %v934
      %v943 = vadd.f32 %v907, %v935
      %v944 = vadd.f32 %v908, %v936
      %v945 = vadd.f32 %v909, %v937
      %v946 = vadd.f32 %v910, %v938
      %v947 = vadd.f32 %v911, %v939
      %s948 = scalar_lea.vmem [#allocation2], 64
      %s949 = scalar_lea.vmem %s948, 7 [#allocation2]
      %v950 = vld [vmem:[%s949] ss:$2 sm:$0xff]
      %s951 = scalar_lea.vmem %s948, 71 [#allocation2]
      %v952 = vld [vmem:[%s951] ss:$2 sm:$0xff]
      %s953 = scalar_lea.vmem %s948, 135 [#allocation2]
      %v954 = vld [vmem:[%s953] ss:$2 sm:$0xff]
      %s955 = scalar_lea.vmem %s948, 199 [#allocation2]
      %v956 = vld [vmem:[%s955] ss:$2 sm:$0xff]
      %s957 = scalar_lea.vmem %s948, 263 [#allocation2]
      %v958 = vld [vmem:[%s957] ss:$2 sm:$0xff]
      %s959 = scalar_lea.vmem %s948, 327 [#allocation2]
      %v960 = vld [vmem:[%s959] ss:$2 sm:$0xff]
      %s961 = scalar_lea.vmem %s948, 391 [#allocation2]
      %v962 = vld [vmem:[%s961] ss:$2 sm:$0xff]
      %s963 = scalar_lea.vmem %s948, 455 [#allocation2]
      %v964 = vld [vmem:[%s963] ss:$2 sm:$0xff]
      %v965 = vlaneseq
      %v966 = vshrl.u32 %v965, 7
      %v967 = vsub.s32 0, %v966
      %v968 = vrot.slane %v731, %v967
      %v969 = vmul.f32 %v950, %v968
      %v970 = vmul.f32 %v952, %v968
      %v971 = vmul.f32 %v954, %v968
      %v972 = vmul.f32 %v956, %v968
      %v973 = vmul.f32 %v958, %v968
      %v974 = vmul.f32 %v960, %v968
      %v975 = vmul.f32 %v962, %v968
      %v976 = vmul.f32 %v964, %v968
      %v977 = vadd.f32 %v940, %v969
      %v978 = vadd.f32 %v941, %v970
      %v979 = vadd.f32 %v942, %v971
      %v980 = vadd.f32 %v943, %v972
      %v981 = vadd.f32 %v944, %v973
      %v982 = vadd.f32 %v945, %v974
      %v983 = vadd.f32 %v946, %v975
      %v984 = vadd.f32 %v947, %v976
      %s985 = scalar_lea.vmem %s948, 8 [#allocation2]
      %v986 = vld [vmem:[%s985] ss:$2 sm:$0xff]
      %s987 = scalar_lea.vmem %s948, 72 [#allocation2]
      %v988 = vld [vmem:[%s987] ss:$2 sm:$0xff]
      %s989 = scalar_lea.vmem %s948, 136 [#allocation2]
      %v990 = vld [vmem:[%s989] ss:$2 sm:$0xff]
      %s991 = scalar_lea.vmem %s948, 200 [#allocation2]
      %v992 = vld [vmem:[%s991] ss:$2 sm:$0xff]
      %s993 = scalar_lea.vmem %s948, 264 [#allocation2]
      %v994 = vld [vmem:[%s993] ss:$2 sm:$0xff]
      %s995 = scalar_lea.vmem %s948, 328 [#allocation2]
      %v996 = vld [vmem:[%s995] ss:$2 sm:$0xff]
      %s997 = scalar_lea.vmem %s948, 392 [#allocation2]
      %v998 = vld [vmem:[%s997] ss:$2 sm:$0xff]
      %s999 = scalar_lea.vmem %s948, 456 [#allocation2]
      %v1000 = vld [vmem:[%s999] ss:$2 sm:$0xff]
      %v1001 = vlaneseq
      %v1002 = vshrl.u32 %v1001, 7
      %v1003 = vsub.s32 1, %v1002
      %v1004 = vrot.slane %v731, %v1003
      %v1005 = vmul.f32 %v986, %v1004
      %v1006 = vmul.f32 %v988, %v1004
      %v1007 = vmul.f32 %v990, %v1004
      %v1008 = vmul.f32 %v992, %v1004
      %v1009 = vmul.f32 %v994, %v1004
      %v1010 = vmul.f32 %v996, %v1004
      %v1011 = vmul.f32 %v998, %v1004
      %v1012 = vmul.f32 %v1000, %v1004
      %v1013 = vadd.f32 %v977, %v1005
      %v1014 = vadd.f32 %v978, %v1006
      %v1015 = vadd.f32 %v979, %v1007
      %v1016 = vadd.f32 %v980, %v1008
      %v1017 = vadd.f32 %v981, %v1009
      %v1018 = vadd.f32 %v982, %v1010
      %v1019 = vadd.f32 %v983, %v1011
      %v1020 = vadd.f32 %v984, %v1012
      %s1021 = scalar_lea.vmem %s948, 9 [#allocation2]
      %v1022 = vld [vmem:[%s1021] ss:$2 sm:$0xff]
      %s1023 = scalar_lea.vmem %s948, 73 [#allocation2]
      %v1024 = vld [vmem:[%s1023] ss:$2 sm:$0xff]
      %s1025 = scalar_lea.vmem %s948, 137 [#allocation2]
      %v1026 = vld [vmem:[%s1025] ss:$2 sm:$0xff]
      %s1027 = scalar_lea.vmem %s948, 201 [#allocation2]
      %v1028 = vld [vmem:[%s1027] ss:$2 sm:$0xff]
      %s1029 = scalar_lea.vmem %s948, 265 [#allocation2]
      %v1030 = vld [vmem:[%s1029] ss:$2 sm:$0xff]
      %s1031 = scalar_lea.vmem %s948, 329 [#allocation2]
      %v1032 = vld [vmem:[%s1031] ss:$2 sm:$0xff]
      %s1033 = scalar_lea.vmem %s948, 393 [#allocation2]
      %v1034 = vld [vmem:[%s1033] ss:$2 sm:$0xff]
      %s1035 = scalar_lea.vmem %s948, 457 [#allocation2]
      %v1036 = vld [vmem:[%s1035] ss:$2 sm:$0xff]
      %v1037 = vlaneseq
      %v1038 = vshrl.u32 %v1037, 7
      %v1039 = vsub.s32 2, %v1038
      %v1040 = vrot.slane %v731, %v1039
      %v1041 = vmul.f32 %v1022, %v1040
      %v1042 = vmul.f32 %v1024, %v1040
      %v1043 = vmul.f32 %v1026, %v1040
      %v1044 = vmul.f32 %v1028, %v1040
      %v1045 = vmul.f32 %v1030, %v1040
      %v1046 = vmul.f32 %v1032, %v1040
      %v1047 = vmul.f32 %v1034, %v1040
      %v1048 = vmul.f32 %v1036, %v1040
      %v1049 = vadd.f32 %v1013, %v1041
      %v1050 = vadd.f32 %v1014, %v1042
      %v1051 = vadd.f32 %v1015, %v1043
      %v1052 = vadd.f32 %v1016, %v1044
      %v1053 = vadd.f32 %v1017, %v1045
      %v1054 = vadd.f32 %v1018, %v1046
      %v1055 = vadd.f32 %v1019, %v1047
      %v1056 = vadd.f32 %v1020, %v1048
      %v1057 = vld [vmem:[%s4] sm:$0x1]
      %v1059 = vlaneseq
      %v1060 = vshrl.u32 %v1059, 7
      %v1061 = vsub.s32 0, %v1060
      %v1062 = vrot.slane %v1057, %v1061
      %v1064 = vadd.f32 %v1049, %v1062
      %v1065 = vadd.f32 %v1050, %v1062
      %v1066 = vadd.f32 %v1051, %v1062
      %v1067 = vadd.f32 %v1052, %v1062
      %v1068 = vadd.f32 %v1053, %v1062
      %v1069 = vadd.f32 %v1054, %v1062
      %v1070 = vadd.f32 %v1055, %v1062
      %v1071 = vadd.f32 %v1056, %v1062
      %v1072 = vmax.f32 %v1064, 0.0
      %v1073 = vmax.f32 %v1065, 0.0
      %v1074 = vmax.f32 %v1066, 0.0
      %v1075 = vmax.f32 %v1067, 0.0
      %v1076 = vmax.f32 %v1068, 0.0
      %v1077 = vmax.f32 %v1069, 0.0
      %v1078 = vmax.f32 %v1070, 0.0
      %v1079 = vmax.f32 %v1071, 0.0
      %v1080 = vpack.c.bf16 %v1073, %v1072
      %v1081 = vpack.c.bf16 %v1075, %v1074
      %v1082 = vpack.c.bf16 %v1077, %v1076
      %v1083 = vpack.c.bf16 %v1079, %v1078
      %v1084 = vld [vmem:[%s5] sm:$0xf]
      %v1085 = vld [vmem:[%s5 + $0x4] sm:$0xf]
      %v1086 = vld [vmem:[%s5 + $0x8] sm:$0xf]
      %v1087 = vld [vmem:[%s5 + $0xc] sm:$0xf]
      %v1088 = vld [vmem:[%s5 + $0x10] sm:$0xf]
      %v1089 = vld [vmem:[%s5 + $0x14] sm:$0xf]
      %v1090 = vld [vmem:[%s5 + $0x18] sm:$0xf]
      %v1091 = vld [vmem:[%s5 + $0x1c] sm:$0xf]
      %v1092 = vld [vmem:[%s5 + $0x20] sm:$0xf]
      %v1093 = vld [vmem:[%s5 + $0x24] sm:$0xf]
      %v1094 = vld [vmem:[%s5 + $0x28] sm:$0xf]
      %v1095 = vld [vmem:[%s5 + $0x2c] sm:$0xf]
      %v1096 = vld [vmem:[%s5 + $0x30] sm:$0xf]
      %v1097 = vld [vmem:[%s5 + $0x34] sm:$0xf]
      %v1098 = vld [vmem:[%s5 + $0x38] sm:$0xf]
      %v1099 = vld [vmem:[%s5 + $0x3c] sm:$0xf]
      %v1100 = vld [vmem:[%s6] sm:$0x1]
      %v1102 = vlaneseq
      %v1103 = vshrl.u32 %v1102, 7
      %v1104 = vsub.s32 0, %v1103
      %v1105 = vrot.slane %v1100, %v1104
      %v1123 = vunpack.c.l.b16 %v1084
      %v1124 = vunpack.c.l.b16 %v1085
      %v1125 = vunpack.c.l.b16 %v1086
      %v1126 = vunpack.c.l.b16 %v1087
      %v1127 = vunpack.c.l.b16 %v1088
      %v1128 = vunpack.c.l.b16 %v1089
      %v1129 = vunpack.c.l.b16 %v1090
      %v1130 = vunpack.c.l.b16 %v1091
      %v1131 = vunpack.c.l.b16 %v1092
      %v1132 = vunpack.c.l.b16 %v1093
      %v1133 = vunpack.c.l.b16 %v1094
      %v1134 = vunpack.c.l.b16 %v1095
      %v1135 = vunpack.c.l.b16 %v1096
      %v1136 = vunpack.c.l.b16 %v1097
      %v1137 = vunpack.c.l.b16 %v1098
      %v1138 = vunpack.c.l.b16 %v1099
      %v1139 = vpack.c.b16 %v1124, %v1123
      %v1140 = vpack.c.b16 %v1126, %v1125
      %v1141 = vpack.c.b16 %v1128, %v1127
      %v1142 = vpack.c.b16 %v1130, %v1129
      %v1143 = vpack.c.b16 %v1132, %v1131
      %v1144 = vpack.c.b16 %v1134, %v1133
      %v1145 = vpack.c.b16 %v1136, %v1135
      %v1146 = vpack.c.b16 %v1138, %v1137
      %1155 = vmatprep.subr.bf16.mxu0 0
      %1156 = vmatpush1.bf16.msra.mxu0 %v1146
      %1157 = vmatprep.subr.bf16.mxu0 0
      %1158 = vmatpush1.bf16.msra.mxu0 %v1145
      %1159 = vmatprep.subr.bf16.mxu0 0
      %1160 = vmatpush1.bf16.msra.mxu0 %v1144
      %1161 = vmatprep.subr.bf16.mxu0 0
      %1162 = vmatpush1.bf16.msra.mxu0 %v1143
      %1163 = vmatprep.subr.bf16.mxu0 0
      %1164 = vmatpush1.bf16.msra.mxu0 %v1142
      %1165 = vmatprep.subr.bf16.mxu0 0
      %1166 = vmatpush1.bf16.msra.mxu0 %v1141
      %1167 = vmatprep.subr.bf16.mxu0 0
      %1168 = vmatpush1.bf16.msra.mxu0 %v1140
      %1169 = vmatprep.subr.bf16.mxu0 0
      %1170 = vmatpush1.bf16.msra.mxu0 %v1139
      %1171 = vmatprep.subr.bf16.mxu0 0
      %1172 = vmatpush2.bf16.msra.mxu0 0
      %1173 = vmatprep.subr.bf16.mxu0 0
      %1174 = vmatpush2.bf16.msra.mxu0 0
      %1175 = vmatprep.subr.bf16.mxu0 0
      %1176 = vmatpush2.bf16.msra.mxu0 0
      %1177 = vmatprep.subr.bf16.mxu0 0
      %1178 = vmatpush2.bf16.msra.mxu0 0
      %1179 = vmatprep.subr.bf16.mxu0 0
      %1180 = vmatpush2.bf16.msra.mxu0 0
      %1181 = vmatprep.subr.bf16.mxu0 0
      %1182 = vmatpush2.bf16.msra.mxu0 0
      %1183 = vmatprep.subr.bf16.mxu0 0
      %1184 = vmatpush2.bf16.msra.mxu0 0
      %1185 = vmatprep.subr.bf16.mxu0 0
      %1186 = vmatpush2.bf16.msra.mxu0 0
      %1187 = vmatprep.mubr.bf16.mxu0 0
      %1188 = vmatmul.mubr.bf16.gmra.mxu0 %v1080
      %v1189 = vpop.f32.mrf.mxu0
      %v1190 = vadd.f32 %v1105, %v1189
      %v1191 = vpop.f32.mrf.mxu0
      %v1192 = vpop.f32.mrf.mxu0
      %v1193 = vadd.f32 %v1105, %v1192
      %v1194 = vpop.f32.mrf.mxu0
      %1195 = vmatprep.mubr.bf16.mxu0 0
      %1196 = vmatmul.mubr.bf16.gmra.mxu0 %v1081
      %v1197 = vpop.f32.mrf.mxu0
      %v1198 = vadd.f32 %v1105, %v1197
      %v1199 = vpop.f32.mrf.mxu0
      %v1200 = vpop.f32.mrf.mxu0
      %v1201 = vadd.f32 %v1105, %v1200
      %v1202 = vpop.f32.mrf.mxu0
      %1203 = vmatprep.mubr.bf16.mxu0 0
      %1204 = vmatmul.mubr.bf16.gmra.mxu0 %v1082
      %v1205 = vpop.f32.mrf.mxu0
      %v1206 = vadd.f32 %v1105, %v1205
      %v1207 = vpop.f32.mrf.mxu0
      %v1208 = vpop.f32.mrf.mxu0
      %v1209 = vadd.f32 %v1105, %v1208
      %v1210 = vpop.f32.mrf.mxu0
      %1211 = vmatprep.mubr.bf16.mxu0 0
      %1212 = vmatmul.mubr.bf16.gmra.mxu0 %v1083
      %v1213 = vpop.f32.mrf.mxu0
      %v1214 = vadd.f32 %v1105, %v1213
      %v1215 = vpop.f32.mrf.mxu0
      %v1216 = vpop.f32.mrf.mxu0
      %v1217 = vadd.f32 %v1105, %v1216
      %v1218 = vpop.f32.mrf.mxu0
      %1219 = vdwg.mxu0
      %v1220 = vpack.c.bf16 %v1190, %v1190
      %v1221 = vpack.c.bf16 %v1193, %v1193
      %v1222 = vpack.c.bf16 %v1198, %v1198
      %v1223 = vpack.c.bf16 %v1201, %v1201
      %v1224 = vpack.c.bf16 %v1206, %v1206
      %v1225 = vpack.c.bf16 %v1209, %v1209
      %v1226 = vpack.c.bf16 %v1214, %v1214
      %v1227 = vpack.c.bf16 %v1217, %v1217
      %1228 = vst [vmem:[%s278] sm:$0xf] %v1220
      %1229 = vst [vmem:[%s278 + $0x4] sm:$0xf] %v1221
      %1230 = vst [vmem:[%s278 + $0x8] sm:$0xf] %v1222
      %1231 = vst [vmem:[%s278 + $0xc] sm:$0xf] %v1223
      %1232 = vst [vmem:[%s278 + $0x10] sm:$0xf] %v1224
      %1233 = vst [vmem:[%s278 + $0x14] sm:$0xf] %v1225
      %1234 = vst [vmem:[%s278 + $0x18] sm:$0xf] %v1226
      %1235 = vst [vmem:[%s278 + $0x1c] sm:$0xf] %v1227
      %p1236 = scmp.lt.s32.totalorder %s18, 1
      %s1237 = scalar_select %p1236, %s18, 1
      %s1238 = smul.addr %s1237, 8
      %s1239 = smul.addr %s1238, 4
      %s1240 = scalar_lea.vmem %s7, %s1239
      // Predicated region
      $region49: #{encoder_forward.4} parent=47 // pred_check
        %p1241 = pneg %p188
      $region50: #{encoder_forward.4} parent=47 // pred_check_branch
        %1243 = sbr.rel (%p1241) target = $region52
      $region51: #{encoder_forward.4} parent=47 // pred_region
        _
      $region52: #{encoder_forward.4} parent=47 // pred_fallthru
        _
    $region48: #{encoder_forward.4} parent=5 // pred_fallthru
      _
    %p1244 = scmp.le.s32.totalorder 2, %s13
    // Predicated region
    $region53: #{encoder_forward.4} parent=5 // pred_check
      %p1245 = pneg %p1244
    $region54: #{encoder_forward.4} parent=5 // pred_check_branch
      %1247 = sbr.rel (%p1245) target = $region56
    $region55: #{encoder_forward.4} parent=5 // pred_region
      %s1248 = ssub.s32 %s13, 2
      // Predicated region
      $region57: #{encoder_forward.4} parent=55 // pred_check
        %p1249 = pneg %p194
      $region58: #{encoder_forward.4} parent=55 // pred_check_branch
        %1251 = sbr.rel (%p1249) target = $region60
      $region59: #{encoder_forward.4} parent=55 // pred_region
        %p1252 = scmp.lt.s32.totalorder %s19, 1
        %s1253 = scalar_select %p1252, %s19, 1
        %s1254 = smul.addr %s1253, 8
        %s1255 = smul.addr %s1254, 4
        %s1256 = scalar_lea.vmem %s7, %s1255
      $region60: #{encoder_forward.4} parent=55 // pred_fallthru
        _
    $region56: #{encoder_forward.4} parent=5 // pred_fallthru
      _
  $region6: #{encoder_forward.4} parent=0 // loop_footer
    %s17 = sadd.s32 1, %s13
  $region7: #{encoder_forward.4} parent=0 // loop_footer_branch
    %12 = sbr.rel target = $region3
  $region8: #{encoder_forward.4} parent=0 // loop_exit
    _

// kernel: encoder_forward.3
$region0: #{encoder_forward.3}
  #allocation0 [shape = 'u32[]', space=smem, size = 0x4, offset = 0x4, fixed_abs, tag = 'smem constant byte address 0x4 - core index']
  #allocation1 [shape = 'u32[144,128]{1,0:T(1,128)}', space=vmem, size = 0x12000, scoped, tag = 'internal scratch']
  #allocation2 [shape = 'f32[34,48,3]{2,1,0:T(8,128)}', space=vmem, size = 0xcc000, scoped, tag = 'scratch operand']
  %s0 = inlined_call_operand.vmem [shape: f32[2,32,32,3], index: 0, kind: input, shape index: {}]
  %s1 = inlined_call_operand.vmem [shape: f32[3,3,3,128], index: 1, kind: input, shape index: {}]
  %s2 = inlined_call_operand.vmem [shape: f32[1,128], index: 2, kind: input, shape index: {}]
  %s3 = inlined_call_operand.vmem [shape: bf16[2,16,16,128], index: 3, kind: output, shape index: {}]
  %s4 = sld [smem:[#allocation0]]
  $region45: #{encoder_forward.3} parent=0
    _
  %s6 = ssub.s32 1, %s4
  %s7 = scalar_select 0, %s6, %s4
  loop: start=0, step=1, limit=4
  $region2: #{encoder_forward.3} parent=0 // loop_pre_header
    _
  $region3: #{encoder_forward.3} parent=0 // loop_header
    %s9 = sphi 0, %s13
    %p10 = scmp.ge.s32.totalorder %s9, 4
    %s19 = sphi 0, %s21
    %s22 = sphi 0, %s19
    %s23 = sphi 0, %s22
    %s39 = sphi 0, %s23
    %s43 = sphi 0, %s43
    %s45 = sphi 0, %s43
    %s46 = sphi 0, %s45
    %s60 = sphi 0, %s46
    %s64 = sphi 0, %s64
    %s66 = sphi 0, %s64
    %s67 = sphi 0, %s66
    %s81 = sphi 0, %s67
    %s87 = sphi 0, %s89
    %s90 = sphi 0, %s87
    %s91 = sphi 0, %s90
    %s107 = sphi 0, %s91
  $region4: #{encoder_forward.3} parent=0 // loop_header_branch
    %12 = sbr.rel (%p10) target = $region8
  $region5: #{encoder_forward.3} parent=0 // loop_body
    %s14 = ssub.s32 %s9, 1
    %s15 = ssub.s32 %s9, 2
    %s16 = sadd.s32 %s9, 1
    %s17 = ssub.s32 %s9, %s16
    %p18 = scmp.eq.s32.totalorder %s17, 0
    %s20 = sadd.s32 %s19, 1
    %s21 = scalar_select %p18, %s19, %s20
    %p24 = pneg %p18
    %p25 = scmp.eq.s32.totalorder %s9, 1
    %p26 = por %p24, %p25
    %p27 = scmp.ne.s32.totalorder %s19, %s22
    %p28 = scmp.eq.s32.totalorder %s9, 0
    %p29 = por %p27, %p28
    %p30 = scmp.ne.s32.totalorder %s19, %s22
    %p31 = scmp.eq.s32.totalorder %s14, 1
    %p32 = por %p30, %p31
    %p33 = scmp.ne.s32.totalorder %s22, %s23
    %p34 = scmp.eq.s32.totalorder %s14, 0
    %p35 = por %p33, %p34
    %p36 = scmp.ne.s32.totalorder %s22, %s23
    %p37 = scmp.eq.s32.totalorder %s15, 1
    %p38 = por %p36, %p37
    %p40 = scmp.ne.s32.totalorder %s23, %s39
    %p41 = scmp.eq.s32.totalorder %s15, 0
    %p42 = por %p40, %p41
    %s44 = sadd.s32 %s43, 1
    %p47 = scmp.eq.s32.totalorder %s9, 1
    %p48 = scmp.ne.s32.totalorder %s43, %s45
    %p49 = scmp.eq.s32.totalorder %s9, 0
    %p50 = por %p48, %p49
    %p51 = scmp.ne.s32.totalorder %s43, %s45
    %p52 = scmp.eq.s32.totalorder %s14, 1
    %p53 = por %p51, %p52
    %p54 = scmp.ne.s32.totalorder %s45, %s46
    %p55 = scmp.eq.s32.totalorder %s14, 0
    %p56 = por %p54, %p55
    %p57 = scmp.ne.s32.totalorder %s45, %s46
    %p58 = scmp.eq.s32.totalorder %s15, 1
    %p59 = por %p57, %p58
    %p61 = scmp.ne.s32.totalorder %s46, %s60
    %p62 = scmp.eq.s32.totalorder %s15, 0
    %p63 = por %p61, %p62
    %s65 = sadd.s32 %s64, 1
    %p68 = scmp.eq.s32.totalorder %s9, 1
    %p69 = scmp.ne.s32.totalorder %s64, %s66
    %p70 = scmp.eq.s32.totalorder %s9, 0
    %p71 = por %p69, %p70
    %p72 = scmp.ne.s32.totalorder %s64, %s66
    %p73 = scmp.eq.s32.totalorder %s14, 1
    %p74 = por %p72, %p73
    %p75 = scmp.ne.s32.totalorder %s66, %s67
    %p76 = scmp.eq.s32.totalorder %s14, 0
    %p77 = por %p75, %p76
    %p78 = scmp.ne.s32.totalorder %s66, %s67
    %p79 = scmp.eq.s32.totalorder %s15, 1
    %p80 = por %p78, %p79
    %p82 = scmp.ne.s32.totalorder %s67, %s81
    %p83 = scmp.eq.s32.totalorder %s15, 0
    %p84 = por %p82, %p83
    %s85 = ssub.s32 %s9, %s16
    %p86 = scmp.eq.s32.totalorder %s85, 0
    %s88 = sadd.s32 %s87, 1
    %s89 = scalar_select %p86, %s87, %s88
    %p92 = pneg %p86
    %p93 = scmp.eq.s32.totalorder %s9, 1
    %p94 = por %p92, %p93
    %p95 = scmp.ne.s32.totalorder %s87, %s90
    %p96 = scmp.eq.s32.totalorder %s9, 0
    %p97 = por %p95, %p96
    %p98 = scmp.ne.s32.totalorder %s87, %s90
    %p99 = scmp.eq.s32.totalorder %s14, 1
    %p100 = por %p98, %p99
    %p101 = scmp.ne.s32.totalorder %s90, %s91
    %p102 = scmp.eq.s32.totalorder %s14, 0
    %p103 = por %p101, %p102
    %p104 = scmp.ne.s32.totalorder %s90, %s91
    %p105 = scmp.eq.s32.totalorder %s15, 1
    %p106 = por %p104, %p105
    %p108 = scmp.ne.s32.totalorder %s91, %s107
    %p109 = scmp.eq.s32.totalorder %s15, 0
    %p110 = por %p108, %p109
    %p111 = scmp.le.s32.totalorder 1, %s9
    %p112 = scmp.lt.s32.totalorder %s9, 3
    %p113 = pnand %p111, %p112
    %p114 = pneg %p113
    // Predicated region
    $region9: #{encoder_forward.3} parent=5 // pred_check
      _
    $region10: #{encoder_forward.3} parent=5 // pred_check_branch
      %116 = sbr.rel (%p113) target = $region12
    $region11: #{encoder_forward.3} parent=5 // pred_region
      %s117 = ssub.s32 %s9, 1
      // Predicated region
      $region13: #{encoder_forward.3} parent=11 // pred_check
        %p118 = pneg %p56
      $region14: #{encoder_forward.3} parent=11 // pred_check_branch
        %120 = sbr.rel (%p118) target = $region16
      $region15: #{encoder_forward.3} parent=11 // pred_region
        _
      $region16: #{encoder_forward.3} parent=11 // pred_fallthru
        _
      // Predicated region
      $region17: #{encoder_forward.3} parent=11 // pred_check
        %p121 = pneg %p77
      $region18: #{encoder_forward.3} parent=11 // pred_check_branch
        %123 = sbr.rel (%p121) target = $region20
      $region19: #{encoder_forward.3} parent=11 // pred_region
        _
      $region20: #{encoder_forward.3} parent=11 // pred_fallthru
        _
    $region12: #{encoder_forward.3} parent=5 // pred_fallthru
      _
    %p124 = scmp.lt.s32.totalorder %s9, 2
    // Predicated region
    $region21: #{encoder_forward.3} parent=5 // pred_check
      %p125 = pneg %p124
    $region22: #{encoder_forward.3} parent=5 // pred_check_branch
      %127 = sbr.rel (%p125) target = $region24
    $region23: #{encoder_forward.3} parent=5 // pred_region
      // Predicated region
      $region25: #{encoder_forward.3} parent=23 // pred_check
        %p128 = pneg %p29
      $region26: #{encoder_forward.3} parent=23 // pred_check_branch
        %130 = sbr.rel (%p128) target = $region28
      $region27: #{encoder_forward.3} parent=23 // pred_region
        %p131 = scmp.lt.s32.totalorder %s9, 1
        %s132 = scalar_select %p131, %s9, 1
        %s133 = smul.addr %s132, 128
        %s134 = smul.addr %s133, 8
        %s135 = scalar_lea.vmem %s0, %s134
      $region28: #{encoder_forward.3} parent=23 // pred_fallthru
        _
    $region24: #{encoder_forward.3} parent=5 // pred_fallthru
      _
    %p136 = scmp.le.s32.totalorder 1, %s9
    %p137 = scmp.lt.s32.totalorder %s9, 3
    %p138 = pnand %p136, %p137
    %p139 = pneg %p138
    // Predicated region
    $region29: #{encoder_forward.3} parent=5 // pred_check
      _
    $region30: #{encoder_forward.3} parent=5 // pred_check_branch
      %141 = sbr.rel (%p138) target = $region32
    $region31: #{encoder_forward.3} parent=5 // pred_region
      %s142 = ssub.s32 %s9, 1
      %p143 = scmp.lt.s32.totalorder %s14, 1
      %s144 = scalar_select %p143, %s14, 1
      %s145 = smul.addr %s144, 128
      %s146 = smul.addr %s145, 8
      %s147 = scalar_lea.vmem %s0, %s146
      %p148 = pneg %p35
      %p149 = pneg %p32
      %p150 = pneg %p56
      %p151 = pneg %p53
      %p152 = pneg %p77
      %p153 = pneg %p74
      %p154 = pneg %p103
      %p155 = pneg %p100
      %p156 = scmp.lt.s32.totalorder %s14, 1
      %s157 = scalar_select %p156, %s14, 1
      %s158 = smul.addr %s157, 32
      %s159 = smul.addr %s158, 4
      %s160 = scalar_lea.vmem %s3, %s159
      %p161 = scmp.lt.s32.totalorder %s14, 1
      %s162 = scalar_select %p161, %s14, 1
      %s163 = smul.addr %s162, 128
      %s164 = smul.addr %s163, 8
      %s165 = scalar_lea.vmem %s0, %s164
      %p166 = scmp.lt.s32.totalorder %s14, 1
      %s167 = scalar_select %p166, %s14, 1
      %s168 = smul.addr %s167, 32
      %s169 = smul.addr %s168, 4
      %s170 = scalar_lea.vmem %s3, %s169
      %vm171 = vcmask 23552
      %172 = vst.msk [vmem:[#allocation2] sm:$0xff] %vm171, 0.0
      %173 = vst.msk [vmem:[#allocation2 + $0x8] sm:$0xff] %vm171, 0.0
      %174 = vst.msk [vmem:[#allocation2 + $0x10] sm:$0xff] %vm171, 0.0
      %175 = vst.msk [vmem:[#allocation2 + $0x18] sm:$0xff] %vm171, 0.0
      %176 = vst.msk [vmem:[#allocation2 + $0x20] sm:$0xff] %vm171, 0.0
      %177 = vst.msk [vmem:[#allocation2 + $0x28] sm:$0xff] %vm171, 0.0
      %178 = vst.msk [vmem:[#allocation2 + $0x30] sm:$0xff] %vm171, 0.0
      %179 = vst.msk [vmem:[#allocation2 + $0x38] sm:$0xff] %vm171, 0.0
      %180 = vst.msk [vmem:[#allocation2 + $0x40] sm:$0xff] %vm171, 0.0
      %181 = vst.msk [vmem:[#allocation2 + $0x48] sm:$0xff] %vm171, 0.0
      %182 = vst.msk [vmem:[#allocation2 + $0x50] sm:$0xff] %vm171, 0.0
      %183 = vst.msk [vmem:[#allocation2 + $0x58] sm:$0xff] %vm171, 0.0
      %184 = vst.msk [vmem:[#allocation2 + $0x60] sm:$0xff] %vm171, 0.0
      %185 = vst.msk [vmem:[#allocation2 + $0x68] sm:$0xff] %vm171, 0.0
      %186 = vst.msk [vmem:[#allocation2 + $0x70] sm:$0xff] %vm171, 0.0
      %187 = vst.msk [vmem:[#allocation2 + $0x78] sm:$0xff] %vm171, 0.0
      %188 = vst.msk [vmem:[#allocation2 + $0x80] sm:$0xff] %vm171, 0.0
      %189 = vst.msk [vmem:[#allocation2 + $0x88] sm:$0xff] %vm171, 0.0
      %190 = vst.msk [vmem:[#allocation2 + $0x90] sm:$0xff] %vm171, 0.0
      %191 = vst.msk [vmem:[#allocation2 + $0x98] sm:$0xff] %vm171, 0.0
      %192 = vst.msk [vmem:[#allocation2 + $0xa0] sm:$0xff] %vm171, 0.0
      %193 = vst.msk [vmem:[#allocation2 + $0xa8] sm:$0xff] %vm171, 0.0
      %194 = vst.msk [vmem:[#allocation2 + $0xb0] sm:$0xff] %vm171, 0.0
      %195 = vst.msk [vmem:[#allocation2 + $0xb8] sm:$0xff] %vm171, 0.0
      %196 = vst.msk [vmem:[#allocation2 + $0xc0] sm:$0xff] %vm171, 0.0
      %197 = vst.msk [vmem:[#allocation2 + $0xc8] sm:$0xff] %vm171, 0.0
      %198 = vst.msk [vmem:[#allocation2 + $0xd0] sm:$0xff] %vm171, 0.0
      %199 = vst.msk [vmem:[#allocation2 + $0xd8] sm:$0xff] %vm171, 0.0
      %200 = vst.msk [vmem:[#allocation2 + $0xe0] sm:$0xff] %vm171, 0.0
      %201 = vst.msk [vmem:[#allocation2 + $0xe8] sm:$0xff] %vm171, 0.0
      %202 = vst.msk [vmem:[#allocation2 + $0xf0] sm:$0xff] %vm171, 0.0
      %203 = vst.msk [vmem:[#allocation2 + $0xf8] sm:$0xff] %vm171, 0.0
      %204 = vst.msk [vmem:[#allocation2 + $0x100] sm:$0xff] %vm171, 0.0
      %205 = vst.msk [vmem:[#allocation2 + $0x108] sm:$0xff] %vm171, 0.0
      %206 = vst.msk [vmem:[#allocation2 + $0x110] sm:$0xff] %vm171, 0.0
      %207 = vst.msk [vmem:[#allocation2 + $0x118] sm:$0xff] %vm171, 0.0
      %208 = vst.msk [vmem:[#allocation2 + $0x120] sm:$0xff] %vm171, 0.0
      %209 = vst.msk [vmem:[#allocation2 + $0x128] sm:$0xff] %vm171, 0.0
      %210 = vst.msk [vmem:[#allocation2 + $0x130] sm:$0xff] %vm171, 0.0
      %211 = vst.msk [vmem:[#allocation2 + $0x138] sm:$0xff] %vm171, 0.0
      %212 = vst.msk [vmem:[#allocation2 + $0x140] sm:$0xff] %vm171, 0.0
      %213 = vst.msk [vmem:[#allocation2 + $0x148] sm:$0xff] %vm171, 0.0
      %214 = vst.msk [vmem:[#allocation2 + $0x150] sm:$0xff] %vm171, 0.0
      %215 = vst.msk [vmem:[#allocation2 + $0x158] sm:$0xff] %vm171, 0.0
      %216 = vst.msk [vmem:[#allocation2 + $0x160] sm:$0xff] %vm171, 0.0
      %217 = vst.msk [vmem:[#allocation2 + $0x168] sm:$0xff] %vm171, 0.0
      %218 = vst.msk [vmem:[#allocation2 + $0x170] sm:$0xff] %vm171, 0.0
      %219 = vst.msk [vmem:[#allocation2 + $0x178] sm:$0xff] %vm171, 0.0
      %220 = vst.msk [vmem:[#allocation2 + $0x180] sm:$0xff] %vm171, 0.0
      %221 = vst.msk [vmem:[#allocation2 + $0x188] sm:$0xff] %vm171, 0.0
      %222 = vst.msk [vmem:[#allocation2 + $0x190] sm:$0xff] %vm171, 0.0
      %223 = vst.msk [vmem:[#allocation2 + $0x198] sm:$0xff] %vm171, 0.0
      %224 = vst.msk [vmem:[#allocation2 + $0x1a0] sm:$0xff] %vm171, 0.0
      %225 = vst.msk [vmem:[#allocation2 + $0x1a8] sm:$0xff] %vm171, 0.0
      %226 = vst.msk [vmem:[#allocation2 + $0x1b0] sm:$0xff] %vm171, 0.0
      %227 = vst.msk [vmem:[#allocation2 + $0x1b8] sm:$0xff] %vm171, 0.0
      %228 = vst.msk [vmem:[#allocation2 + $0x1c0] sm:$0xff] %vm171, 0.0
      %229 = vst.msk [vmem:[#allocation2 + $0x1c8] sm:$0xff] %vm171, 0.0
      %230 = vst.msk [vmem:[#allocation2 + $0x1d0] sm:$0xff] %vm171, 0.0
      %231 = vst.msk [vmem:[#allocation2 + $0x1d8] sm:$0xff] %vm171, 0.0
      %232 = vst.msk [vmem:[#allocation2 + $0x1e0] sm:$0xff] %vm171, 0.0
      %233 = vst.msk [vmem:[#allocation2 + $0x1e8] sm:$0xff] %vm171, 0.0
      %234 = vst.msk [vmem:[#allocation2 + $0x1f0] sm:$0xff] %vm171, 0.0
      %235 = vst.msk [vmem:[#allocation2 + $0x1f8] sm:$0xff] %vm171, 0.0
      %236 = vst.msk [vmem:[#allocation2 + $0x200] sm:$0xff] %vm171, 0.0
      %237 = vst.msk [vmem:[#allocation2 + $0x208] sm:$0xff] %vm171, 0.0
      %238 = vst.msk [vmem:[#allocation2 + $0x210] sm:$0xff] %vm171, 0.0
      %239 = vst.msk [vmem:[#allocation2 + $0x218] sm:$0xff] %vm171, 0.0
      %240 = vst.msk [vmem:[#allocation2 + $0x220] sm:$0xff] %vm171, 0.0
      %241 = vst.msk [vmem:[#allocation2 + $0x228] sm:$0xff] %vm171, 0.0
      %242 = vst.msk [vmem:[#allocation2 + $0x230] sm:$0xff] %vm171, 0.0
      %243 = vst.msk [vmem:[#allocation2 + $0x238] sm:$0xff] %vm171, 0.0
      %244 = vst.msk [vmem:[#allocation2 + $0x240] sm:$0xff] %vm171, 0.0
      %245 = vst.msk [vmem:[#allocation2 + $0x248] sm:$0xff] %vm171, 0.0
      %246 = vst.msk [vmem:[#allocation2 + $0x250] sm:$0xff] %vm171, 0.0
      %247 = vst.msk [vmem:[#allocation2 + $0x258] sm:$0xff] %vm171, 0.0
      %248 = vst.msk [vmem:[#allocation2 + $0x260] sm:$0xff] %vm171, 0.0
      %249 = vst.msk [vmem:[#allocation2 + $0x268] sm:$0xff] %vm171, 0.0
      %250 = vst.msk [vmem:[#allocation2 + $0x270] sm:$0xff] %vm171, 0.0
      %251 = vst.msk [vmem:[#allocation2 + $0x278] sm:$0xff] %vm171, 0.0
      %252 = vst.msk [vmem:[#allocation2 + $0x280] sm:$0xff] %vm171, 0.0
      %253 = vst.msk [vmem:[#allocation2 + $0x288] sm:$0xff] %vm171, 0.0
      %254 = vst.msk [vmem:[#allocation2 + $0x290] sm:$0xff] %vm171, 0.0
      %255 = vst.msk [vmem:[#allocation2 + $0x298] sm:$0xff] %vm171, 0.0
      %256 = vst.msk [vmem:[#allocation2 + $0x2a0] sm:$0xff] %vm171, 0.0
      %257 = vst.msk [vmem:[#allocation2 + $0x2a8] sm:$0xff] %vm171, 0.0
      %258 = vst.msk [vmem:[#allocation2 + $0x2b0] sm:$0xff] %vm171, 0.0
      %259 = vst.msk [vmem:[#allocation2 + $0x2b8] sm:$0xff] %vm171, 0.0
      %260 = vst.msk [vmem:[#allocation2 + $0x2c0] sm:$0xff] %vm171, 0.0
      %261 = vst.msk [vmem:[#allocation2 + $0x2c8] sm:$0xff] %vm171, 0.0
      %262 = vst.msk [vmem:[#allocation2 + $0x2d0] sm:$0xff] %vm171, 0.0
      %263 = vst.msk [vmem:[#allocation2 + $0x2d8] sm:$0xff] %vm171, 0.0
      %264 = vst.msk [vmem:[#allocation2 + $0x2e0] sm:$0xff] %vm171, 0.0
      %265 = vst.msk [vmem:[#allocation2 + $0x2e8] sm:$0xff] %vm171, 0.0
      %266 = vst.msk [vmem:[#allocation2 + $0x2f0] sm:$0xff] %vm171, 0.0
      %267 = vst.msk [vmem:[#allocation2 + $0x2f8] sm:$0xff] %vm171, 0.0
      %268 = vst.msk [vmem:[#allocation2 + $0x300] sm:$0xff] %vm171, 0.0
      %269 = vst.msk [vmem:[#allocation2 + $0x308] sm:$0xff] %vm171, 0.0
      %270 = vst.msk [vmem:[#allocation2 + $0x310] sm:$0xff] %vm171, 0.0
      %271 = vst.msk [vmem:[#allocation2 + $0x318] sm:$0xff] %vm171, 0.0
      %272 = vst.msk [vmem:[#allocation2 + $0x320] sm:$0xff] %vm171, 0.0
      %273 = vst.msk [vmem:[#allocation2 + $0x328] sm:$0xff] %vm171, 0.0
      %274 = vst.msk [vmem:[#allocation2 + $0x330] sm:$0xff] %vm171, 0.0
      %275 = vst.msk [vmem:[#allocation2 + $0x338] sm:$0xff] %vm171, 0.0
      %276 = vst.msk [vmem:[#allocation2 + $0x340] sm:$0xff] %vm171, 0.0
      %277 = vst.msk [vmem:[#allocation2 + $0x348] sm:$0xff] %vm171, 0.0
      %278 = vst.msk [vmem:[#allocation2 + $0x350] sm:$0xff] %vm171, 0.0
      %279 = vst.msk [vmem:[#allocation2 + $0x358] sm:$0xff] %vm171, 0.0
      %280 = vst.msk [vmem:[#allocation2 + $0x360] sm:$0xff] %vm171, 0.0
      %281 = vst.msk [vmem:[#allocation2 + $0x368] sm:$0xff] %vm171, 0.0
      %282 = vst.msk [vmem:[#allocation2 + $0x370] sm:$0xff] %vm171, 0.0
      %283 = vst.msk [vmem:[#allocation2 + $0x378] sm:$0xff] %vm171, 0.0
      %284 = vst.msk [vmem:[#allocation2 + $0x380] sm:$0xff] %vm171, 0.0
      %285 = vst.msk [vmem:[#allocation2 + $0x388] sm:$0xff] %vm171, 0.0
      %286 = vst.msk [vmem:[#allocation2 + $0x390] sm:$0xff] %vm171, 0.0
      %287 = vst.msk [vmem:[#allocation2 + $0x398] sm:$0xff] %vm171, 0.0
      %288 = vst.msk [vmem:[#allocation2 + $0x3a0] sm:$0xff] %vm171, 0.0
      %289 = vst.msk [vmem:[#allocation2 + $0x3a8] sm:$0xff] %vm171, 0.0
      %290 = vst.msk [vmem:[#allocation2 + $0x3b0] sm:$0xff] %vm171, 0.0
      %291 = vst.msk [vmem:[#allocation2 + $0x3b8] sm:$0xff] %vm171, 0.0
      %292 = vst.msk [vmem:[#allocation2 + $0x3c0] sm:$0xff] %vm171, 0.0
      %293 = vst.msk [vmem:[#allocation2 + $0x3c8] sm:$0xff] %vm171, 0.0
      %294 = vst.msk [vmem:[#allocation2 + $0x3d0] sm:$0xff] %vm171, 0.0
      %295 = vst.msk [vmem:[#allocation2 + $0x3d8] sm:$0xff] %vm171, 0.0
      %296 = vst.msk [vmem:[#allocation2 + $0x3e0] sm:$0xff] %vm171, 0.0
      %297 = vst.msk [vmem:[#allocation2 + $0x3e8] sm:$0xff] %vm171, 0.0
      %298 = vst.msk [vmem:[#allocation2 + $0x3f0] sm:$0xff] %vm171, 0.0
      %299 = vst.msk [vmem:[#allocation2 + $0x3f8] sm:$0xff] %vm171, 0.0
      %300 = vst.msk [vmem:[#allocation2 + $0x400] sm:$0xff] %vm171, 0.0
      %301 = vst.msk [vmem:[#allocation2 + $0x408] sm:$0xff] %vm171, 0.0
      %302 = vst.msk [vmem:[#allocation2 + $0x410] sm:$0xff] %vm171, 0.0
      %303 = vst.msk [vmem:[#allocation2 + $0x418] sm:$0xff] %vm171, 0.0
      %304 = vst.msk [vmem:[#allocation2 + $0x420] sm:$0xff] %vm171, 0.0
      %305 = vst.msk [vmem:[#allocation2 + $0x428] sm:$0xff] %vm171, 0.0
      %306 = vst.msk [vmem:[#allocation2 + $0x430] sm:$0xff] %vm171, 0.0
      %307 = vst.msk [vmem:[#allocation2 + $0x438] sm:$0xff] %vm171, 0.0
      %308 = vst.msk [vmem:[#allocation2 + $0x440] sm:$0xff] %vm171, 0.0
      %309 = vst.msk [vmem:[#allocation2 + $0x448] sm:$0xff] %vm171, 0.0
      %310 = vst.msk [vmem:[#allocation2 + $0x450] sm:$0xff] %vm171, 0.0
      %311 = vst.msk [vmem:[#allocation2 + $0x458] sm:$0xff] %vm171, 0.0
      %312 = vst.msk [vmem:[#allocation2 + $0x460] sm:$0xff] %vm171, 0.0
      %313 = vst.msk [vmem:[#allocation2 + $0x468] sm:$0xff] %vm171, 0.0
      %314 = vst.msk [vmem:[#allocation2 + $0x470] sm:$0xff] %vm171, 0.0
      %315 = vst.msk [vmem:[#allocation2 + $0x478] sm:$0xff] %vm171, 0.0
      %316 = vst.msk [vmem:[#allocation2 + $0x480] sm:$0xff] %vm171, 0.0
      %317 = vst.msk [vmem:[#allocation2 + $0x488] sm:$0xff] %vm171, 0.0
      %318 = vst.msk [vmem:[#allocation2 + $0x490] sm:$0xff] %vm171, 0.0
      %319 = vst.msk [vmem:[#allocation2 + $0x498] sm:$0xff] %vm171, 0.0
      %320 = vst.msk [vmem:[#allocation2 + $0x4a0] sm:$0xff] %vm171, 0.0
      %321 = vst.msk [vmem:[#allocation2 + $0x4a8] sm:$0xff] %vm171, 0.0
      %322 = vst.msk [vmem:[#allocation2 + $0x4b0] sm:$0xff] %vm171, 0.0
      %323 = vst.msk [vmem:[#allocation2 + $0x4b8] sm:$0xff] %vm171, 0.0
      %324 = vst.msk [vmem:[#allocation2 + $0x4c0] sm:$0xff] %vm171, 0.0
      %325 = vst.msk [vmem:[#allocation2 + $0x4c8] sm:$0xff] %vm171, 0.0
      %326 = vst.msk [vmem:[#allocation2 + $0x4d0] sm:$0xff] %vm171, 0.0
      %327 = vst.msk [vmem:[#allocation2 + $0x4d8] sm:$0xff] %vm171, 0.0
      %328 = vst.msk [vmem:[#allocation2 + $0x4e0] sm:$0xff] %vm171, 0.0
      %329 = vst.msk [vmem:[#allocation2 + $0x4e8] sm:$0xff] %vm171, 0.0
      %330 = vst.msk [vmem:[#allocation2 + $0x4f0] sm:$0xff] %vm171, 0.0
      %331 = vst.msk [vmem:[#allocation2 + $0x4f8] sm:$0xff] %vm171, 0.0
      %332 = vst.msk [vmem:[#allocation2 + $0x500] sm:$0xff] %vm171, 0.0
      %333 = vst.msk [vmem:[#allocation2 + $0x508] sm:$0xff] %vm171, 0.0
      %334 = vst.msk [vmem:[#allocation2 + $0x510] sm:$0xff] %vm171, 0.0
      %335 = vst.msk [vmem:[#allocation2 + $0x518] sm:$0xff] %vm171, 0.0
      %336 = vst.msk [vmem:[#allocation2 + $0x520] sm:$0xff] %vm171, 0.0
      %337 = vst.msk [vmem:[#allocation2 + $0x528] sm:$0xff] %vm171, 0.0
      %338 = vst.msk [vmem:[#allocation2 + $0x530] sm:$0xff] %vm171, 0.0
      %339 = vst.msk [vmem:[#allocation2 + $0x538] sm:$0xff] %vm171, 0.0
      %340 = vst.msk [vmem:[#allocation2 + $0x540] sm:$0xff] %vm171, 0.0
      %341 = vst.msk [vmem:[#allocation2 + $0x548] sm:$0xff] %vm171, 0.0
      %342 = vst.msk [vmem:[#allocation2 + $0x550] sm:$0xff] %vm171, 0.0
      %343 = vst.msk [vmem:[#allocation2 + $0x558] sm:$0xff] %vm171, 0.0
      %344 = vst.msk [vmem:[#allocation2 + $0x560] sm:$0xff] %vm171, 0.0
      %345 = vst.msk [vmem:[#allocation2 + $0x568] sm:$0xff] %vm171, 0.0
      %346 = vst.msk [vmem:[#allocation2 + $0x570] sm:$0xff] %vm171, 0.0
      %347 = vst.msk [vmem:[#allocation2 + $0x578] sm:$0xff] %vm171, 0.0
      %348 = vst.msk [vmem:[#allocation2 + $0x580] sm:$0xff] %vm171, 0.0
      %349 = vst.msk [vmem:[#allocation2 + $0x588] sm:$0xff] %vm171, 0.0
      %350 = vst.msk [vmem:[#allocation2 + $0x590] sm:$0xff] %vm171, 0.0
      %351 = vst.msk [vmem:[#allocation2 + $0x598] sm:$0xff] %vm171, 0.0
      %352 = vst.msk [vmem:[#allocation2 + $0x5a0] sm:$0xff] %vm171, 0.0
      %353 = vst.msk [vmem:[#allocation2 + $0x5a8] sm:$0xff] %vm171, 0.0
      %354 = vst.msk [vmem:[#allocation2 + $0x5b0] sm:$0xff] %vm171, 0.0
      %355 = vst.msk [vmem:[#allocation2 + $0x5b8] sm:$0xff] %vm171, 0.0
      %356 = vst.msk [vmem:[#allocation2 + $0x5c0] sm:$0xff] %vm171, 0.0
      %357 = vst.msk [vmem:[#allocation2 + $0x5c8] sm:$0xff] %vm171, 0.0
      %358 = vst.msk [vmem:[#allocation2 + $0x5d0] sm:$0xff] %vm171, 0.0
      %359 = vst.msk [vmem:[#allocation2 + $0x5d8] sm:$0xff] %vm171, 0.0
      %360 = vst.msk [vmem:[#allocation2 + $0x5e0] sm:$0xff] %vm171, 0.0
      %361 = vst.msk [vmem:[#allocation2 + $0x5e8] sm:$0xff] %vm171, 0.0
      %362 = vst.msk [vmem:[#allocation2 + $0x5f0] sm:$0xff] %vm171, 0.0
      %363 = vst.msk [vmem:[#allocation2 + $0x5f8] sm:$0xff] %vm171, 0.0
      %364 = vst.msk [vmem:[#allocation2 + $0x600] sm:$0xff] %vm171, 0.0
      %365 = vst.msk [vmem:[#allocation2 + $0x608] sm:$0xff] %vm171, 0.0
      %366 = vst.msk [vmem:[#allocation2 + $0x610] sm:$0xff] %vm171, 0.0
      %367 = vst.msk [vmem:[#allocation2 + $0x618] sm:$0xff] %vm171, 0.0
      %368 = vst.msk [vmem:[#allocation2 + $0x620] sm:$0xff] %vm171, 0.0
      %369 = vst.msk [vmem:[#allocation2 + $0x628] sm:$0xff] %vm171, 0.0
      %370 = vst.msk [vmem:[#allocation2 + $0x630] sm:$0xff] %vm171, 0.0
      %371 = vst.msk [vmem:[#allocation2 + $0x638] sm:$0xff] %vm171, 0.0
      %372 = vst.msk [vmem:[#allocation2 + $0x640] sm:$0xff] %vm171, 0.0
      %373 = vst.msk [vmem:[#allocation2 + $0x648] sm:$0xff] %vm171, 0.0
      %374 = vst.msk [vmem:[#allocation2 + $0x650] sm:$0xff] %vm171, 0.0
      %375 = vst.msk [vmem:[#allocation2 + $0x658] sm:$0xff] %vm171, 0.0
      %v376 = vld [vmem:[%s165] sm:$0xff]
      %v377 = vld [vmem:[%s165 + $0x8] sm:$0xff]
      %v378 = vld [vmem:[%s165 + $0x10] sm:$0xff]
      %v379 = vld [vmem:[%s165 + $0x18] sm:$0xff]
      %v380 = vld [vmem:[%s165 + $0x20] sm:$0xff]
      %v381 = vld [vmem:[%s165 + $0x28] sm:$0xff]
      %v382 = vld [vmem:[%s165 + $0x30] sm:$0xff]
      %v383 = vld [vmem:[%s165 + $0x38] sm:$0xff]
      %v384 = vld [vmem:[%s165 + $0x40] sm:$0xff]
      %v385 = vld [vmem:[%s165 + $0x48] sm:$0xff]
      %v386 = vld [vmem:[%s165 + $0x50] sm:$0xff]
      %v387 = vld [vmem:[%s165 + $0x58] sm:$0xff]
      %v388 = vld [vmem:[%s165 + $0x60] sm:$0xff]
      %v389 = vld [vmem:[%s165 + $0x68] sm:$0xff]
      %v390 = vld [vmem:[%s165 + $0x70] sm:$0xff]
      %v391 = vld [vmem:[%s165 + $0x78] sm:$0xff]
      %v392 = vld [vmem:[%s165 + $0x80] sm:$0xff]
      %v393 = vld [vmem:[%s165 + $0x88] sm:$0xff]
      %v394 = vld [vmem:[%s165 + $0x90] sm:$0xff]
      %v395 = vld [vmem:[%s165 + $0x98] sm:$0xff]
      %v396 = vld [vmem:[%s165 + $0xa0] sm:$0xff]
      %v397 = vld [vmem:[%s165 + $0xa8] sm:$0xff]
      %v398 = vld [vmem:[%s165 + $0xb0] sm:$0xff]
      %v399 = vld [vmem:[%s165 + $0xb8] sm:$0xff]
      %v400 = vld [vmem:[%s165 + $0xc0] sm:$0xff]
      %v401 = vld [vmem:[%s165 + $0xc8] sm:$0xff]
      %v402 = vld [vmem:[%s165 + $0xd0] sm:$0xff]
      %v403 = vld [vmem:[%s165 + $0xd8] sm:$0xff]
      %v404 = vld [vmem:[%s165 + $0xe0] sm:$0xff]
      %v405 = vld [vmem:[%s165 + $0xe8] sm:$0xff]
      %v406 = vld [vmem:[%s165 + $0xf0] sm:$0xff]
      %v407 = vld [vmem:[%s165 + $0xf8] sm:$0xff]
      %v408 = vld [vmem:[%s165 + $0x100] sm:$0xff]
      %v409 = vld [vmem:[%s165 + $0x108] sm:$0xff]
      %v410 = vld [vmem:[%s165 + $0x110] sm:$0xff]
      %v411 = vld [vmem:[%s165 + $0x118] sm:$0xff]
      %v412 = vld [vmem:[%s165 + $0x120] sm:$0xff]
      %v413 = vld [vmem:[%s165 + $0x128] sm:$0xff]
      %v414 = vld [vmem:[%s165 + $0x130] sm:$0xff]
      %v415 = vld [vmem:[%s165 + $0x138] sm:$0xff]
      %v416 = vld [vmem:[%s165 + $0x140] sm:$0xff]
      %v417 = vld [vmem:[%s165 + $0x148] sm:$0xff]
      %v418 = vld [vmem:[%s165 + $0x150] sm:$0xff]
      %v419 = vld [vmem:[%s165 + $0x158] sm:$0xff]
      %v420 = vld [vmem:[%s165 + $0x160] sm:$0xff]
      %v421 = vld [vmem:[%s165 + $0x168] sm:$0xff]
      %v422 = vld [vmem:[%s165 + $0x170] sm:$0xff]
      %v423 = vld [vmem:[%s165 + $0x178] sm:$0xff]
      %v424 = vld [vmem:[%s165 + $0x180] sm:$0xff]
      %v425 = vld [vmem:[%s165 + $0x188] sm:$0xff]
      %v426 = vld [vmem:[%s165 + $0x190] sm:$0xff]
      %v427 = vld [vmem:[%s165 + $0x198] sm:$0xff]
      %v428 = vld [vmem:[%s165 + $0x1a0] sm:$0xff]
      %v429 = vld [vmem:[%s165 + $0x1a8] sm:$0xff]
      %v430 = vld [vmem:[%s165 + $0x1b0] sm:$0xff]
      %v431 = vld [vmem:[%s165 + $0x1b8] sm:$0xff]
      %v432 = vld [vmem:[%s165 + $0x1c0] sm:$0xff]
      %v433 = vld [vmem:[%s165 + $0x1c8] sm:$0xff]
      %v434 = vld [vmem:[%s165 + $0x1d0] sm:$0xff]
      %v435 = vld [vmem:[%s165 + $0x1d8] sm:$0xff]
      %v436 = vld [vmem:[%s165 + $0x1e0] sm:$0xff]
      %v437 = vld [vmem:[%s165 + $0x1e8] sm:$0xff]
      %v438 = vld [vmem:[%s165 + $0x1f0] sm:$0xff]
      %v439 = vld [vmem:[%s165 + $0x1f8] sm:$0xff]
      %v440 = vld [vmem:[%s165 + $0x200] sm:$0xff]
      %v441 = vld [vmem:[%s165 + $0x208] sm:$0xff]
      %v442 = vld [vmem:[%s165 + $0x210] sm:$0xff]
      %v443 = vld [vmem:[%s165 + $0x218] sm:$0xff]
      %v444 = vld [vmem:[%s165 + $0x220] sm:$0xff]
      %v445 = vld [vmem:[%s165 + $0x228] sm:$0xff]
      %v446 = vld [vmem:[%s165 + $0x230] sm:$0xff]
      %v447 = vld [vmem:[%s165 + $0x238] sm:$0xff]
      %v448 = vld [vmem:[%s165 + $0x240] sm:$0xff]
      %v449 = vld [vmem:[%s165 + $0x248] sm:$0xff]
      %v450 = vld [vmem:[%s165 + $0x250] sm:$0xff]
      %v451 = vld [vmem:[%s165 + $0x258] sm:$0xff]
      %v452 = vld [vmem:[%s165 + $0x260] sm:$0xff]
      %v453 = vld [vmem:[%s165 + $0x268] sm:$0xff]
      %v454 = vld [vmem:[%s165 + $0x270] sm:$0xff]
      %v455 = vld [vmem:[%s165 + $0x278] sm:$0xff]
      %v456 = vld [vmem:[%s165 + $0x280] sm:$0xff]
      %v457 = vld [vmem:[%s165 + $0x288] sm:$0xff]
      %v458 = vld [vmem:[%s165 + $0x290] sm:$0xff]
      %v459 = vld [vmem:[%s165 + $0x298] sm:$0xff]
      %v460 = vld [vmem:[%s165 + $0x2a0] sm:$0xff]
      %v461 = vld [vmem:[%s165 + $0x2a8] sm:$0xff]
      %v462 = vld [vmem:[%s165 + $0x2b0] sm:$0xff]
      %v463 = vld [vmem:[%s165 + $0x2b8] sm:$0xff]
      %v464 = vld [vmem:[%s165 + $0x2c0] sm:$0xff]
      %v465 = vld [vmem:[%s165 + $0x2c8] sm:$0xff]
      %v466 = vld [vmem:[%s165 + $0x2d0] sm:$0xff]
      %v467 = vld [vmem:[%s165 + $0x2d8] sm:$0xff]
      %v468 = vld [vmem:[%s165 + $0x2e0] sm:$0xff]
      %v469 = vld [vmem:[%s165 + $0x2e8] sm:$0xff]
      %v470 = vld [vmem:[%s165 + $0x2f0] sm:$0xff]
      %v471 = vld [vmem:[%s165 + $0x2f8] sm:$0xff]
      %v472 = vld [vmem:[%s165 + $0x300] sm:$0xff]
      %v473 = vld [vmem:[%s165 + $0x308] sm:$0xff]
      %v474 = vld [vmem:[%s165 + $0x310] sm:$0xff]
      %v475 = vld [vmem:[%s165 + $0x318] sm:$0xff]
      %v476 = vld [vmem:[%s165 + $0x320] sm:$0xff]
      %v477 = vld [vmem:[%s165 + $0x328] sm:$0xff]
      %v478 = vld [vmem:[%s165 + $0x330] sm:$0xff]
      %v479 = vld [vmem:[%s165 + $0x338] sm:$0xff]
      %v480 = vld [vmem:[%s165 + $0x340] sm:$0xff]
      %v481 = vld [vmem:[%s165 + $0x348] sm:$0xff]
      %v482 = vld [vmem:[%s165 + $0x350] sm:$0xff]
      %v483 = vld [vmem:[%s165 + $0x358] sm:$0xff]
      %v484 = vld [vmem:[%s165 + $0x360] sm:$0xff]
      %v485 = vld [vmem:[%s165 + $0x368] sm:$0xff]
      %v486 = vld [vmem:[%s165 + $0x370] sm:$0xff]
      %v487 = vld [vmem:[%s165 + $0x378] sm:$0xff]
      %v488 = vld [vmem:[%s165 + $0x380] sm:$0xff]
      %v489 = vld [vmem:[%s165 + $0x388] sm:$0xff]
      %v490 = vld [vmem:[%s165 + $0x390] sm:$0xff]
      %v491 = vld [vmem:[%s165 + $0x398] sm:$0xff]
      %v492 = vld [vmem:[%s165 + $0x3a0] sm:$0xff]
      %v493 = vld [vmem:[%s165 + $0x3a8] sm:$0xff]
      %v494 = vld [vmem:[%s165 + $0x3b0] sm:$0xff]
      %v495 = vld [vmem:[%s165 + $0x3b8] sm:$0xff]
      %v496 = vld [vmem:[%s165 + $0x3c0] sm:$0xff]
      %v497 = vld [vmem:[%s165 + $0x3c8] sm:$0xff]
      %v498 = vld [vmem:[%s165 + $0x3d0] sm:$0xff]
      %v499 = vld [vmem:[%s165 + $0x3d8] sm:$0xff]
      %v500 = vld [vmem:[%s165 + $0x3e0] sm:$0xff]
      %v501 = vld [vmem:[%s165 + $0x3e8] sm:$0xff]
      %v502 = vld [vmem:[%s165 + $0x3f0] sm:$0xff]
      %v503 = vld [vmem:[%s165 + $0x3f8] sm:$0xff]
      %s504 = scalar_lea.vmem [#allocation2], 48
      %505 = vst.msk [vmem:[%s504 + $0x8] sm:$0xff] %vm171, %v376
      %506 = vst.msk [vmem:[%s504 + $0x10] sm:$0xff] %vm171, %v377
      %507 = vst.msk [vmem:[%s504 + $0x18] sm:$0xff] %vm171, %v378
      %508 = vst.msk [vmem:[%s504 + $0x20] sm:$0xff] %vm171, %v379
      %509 = vst.msk [vmem:[%s504 + $0x38] sm:$0xff] %vm171, %v380
      %510 = vst.msk [vmem:[%s504 + $0x40] sm:$0xff] %vm171, %v381
      %511 = vst.msk [vmem:[%s504 + $0x48] sm:$0xff] %vm171, %v382
      %512 = vst.msk [vmem:[%s504 + $0x50] sm:$0xff] %vm171, %v383
      %513 = vst.msk [vmem:[%s504 + $0x68] sm:$0xff] %vm171, %v384
      %514 = vst.msk [vmem:[%s504 + $0x70] sm:$0xff] %vm171, %v385
      %515 = vst.msk [vmem:[%s504 + $0x78] sm:$0xff] %vm171, %v386
      %516 = vst.msk [vmem:[%s504 + $0x80] sm:$0xff] %vm171, %v387
      %517 = vst.msk [vmem:[%s504 + $0x98] sm:$0xff] %vm171, %v388
      %518 = vst.msk [vmem:[%s504 + $0xa0] sm:$0xff] %vm171, %v389
      %519 = vst.msk [vmem:[%s504 + $0xa8] sm:$0xff] %vm171, %v390
      %520 = vst.msk [vmem:[%s504 + $0xb0] sm:$0xff] %vm171, %v391
      %521 = vst.msk [vmem:[%s504 + $0xc8] sm:$0xff] %vm171, %v392
      %522 = vst.msk [vmem:[%s504 + $0xd0] sm:$0xff] %vm171, %v393
      %523 = vst.msk [vmem:[%s504 + $0xd8] sm:$0xff] %vm171, %v394
      %524 = vst.msk [vmem:[%s504 + $0xe0] sm:$0xff] %vm171, %v395
      %525 = vst.msk [vmem:[%s504 + $0xf8] sm:$0xff] %vm171, %v396
      %526 = vst.msk [vmem:[%s504 + $0x100] sm:$0xff] %vm171, %v397
      %527 = vst.msk [vmem:[%s504 + $0x108] sm:$0xff] %vm171, %v398
      %528 = vst.msk [vmem:[%s504 + $0x110] sm:$0xff] %vm171, %v399
      %529 = vst.msk [vmem:[%s504 + $0x128] sm:$0xff] %vm171, %v400
      %530 = vst.msk [vmem:[%s504 + $0x130] sm:$0xff] %vm171, %v401
      %531 = vst.msk [vmem:[%s504 + $0x138] sm:$0xff] %vm171, %v402
      %532 = vst.msk [vmem:[%s504 + $0x140] sm:$0xff] %vm171, %v403
      %533 = vst.msk [vmem:[%s504 + $0x158] sm:$0xff] %vm171, %v404
      %534 = vst.msk [vmem:[%s504 + $0x160] sm:$0xff] %vm171, %v405
      %535 = vst.msk [vmem:[%s504 + $0x168] sm:$0xff] %vm171, %v406
      %536 = vst.msk [vmem:[%s504 + $0x170] sm:$0xff] %vm171, %v407
      %537 = vst.msk [vmem:[%s504 + $0x188] sm:$0xff] %vm171, %v408
      %538 = vst.msk [vmem:[%s504 + $0x190] sm:$0xff] %vm171, %v409
      %539 = vst.msk [vmem:[%s504 + $0x198] sm:$0xff] %vm171, %v410
      %540 = vst.msk [vmem:[%s504 + $0x1a0] sm:$0xff] %vm171, %v411
      %541 = vst.msk [vmem:[%s504 + $0x1b8] sm:$0xff] %vm171, %v412
      %542 = vst.msk [vmem:[%s504 + $0x1c0] sm:$0xff] %vm171, %v413
      %543 = vst.msk [vmem:[%s504 + $0x1c8] sm:$0xff] %vm171, %v414
      %544 = vst.msk [vmem:[%s504 + $0x1d0] sm:$0xff] %vm171, %v415
      %545 = vst.msk [vmem:[%s504 + $0x1e8] sm:$0xff] %vm171, %v416
      %546 = vst.msk [vmem:[%s504 + $0x1f0] sm:$0xff] %vm171, %v417
      %547 = vst.msk [vmem:[%s504 + $0x1f8] sm:$0xff] %vm171, %v418
      %548 = vst.msk [vmem:[%s504 + $0x200] sm:$0xff] %vm171, %v419
      %549 = vst.msk [vmem:[%s504 + $0x218] sm:$0xff] %vm171, %v420
      %550 = vst.msk [vmem:[%s504 + $0x220] sm:$0xff] %vm171, %v421
      %551 = vst.msk [vmem:[%s504 + $0x228] sm:$0xff] %vm171, %v422
      %552 = vst.msk [vmem:[%s504 + $0x230] sm:$0xff] %vm171, %v423
      %553 = vst.msk [vmem:[%s504 + $0x248] sm:$0xff] %vm171, %v424
      %554 = vst.msk [vmem:[%s504 + $0x250] sm:$0xff] %vm171, %v425
      %555 = vst.msk [vmem:[%s504 + $0x258] sm:$0xff] %vm171, %v426
      %556 = vst.msk [vmem:[%s504 + $0x260] sm:$0xff] %vm171, %v427
      %557 = vst.msk [vmem:[%s504 + $0x278] sm:$0xff] %vm171, %v428
      %558 = vst.msk [vmem:[%s504 + $0x280] sm:$0xff] %vm171, %v429
      %559 = vst.msk [vmem:[%s504 + $0x288] sm:$0xff] %vm171, %v430
      %560 = vst.msk [vmem:[%s504 + $0x290] sm:$0xff] %vm171, %v431
      %561 = vst.msk [vmem:[%s504 + $0x2a8] sm:$0xff] %vm171, %v432
      %562 = vst.msk [vmem:[%s504 + $0x2b0] sm:$0xff] %vm171, %v433
      %563 = vst.msk [vmem:[%s504 + $0x2b8] sm:$0xff] %vm171, %v434
      %564 = vst.msk [vmem:[%s504 + $0x2c0] sm:$0xff] %vm171, %v435
      %565 = vst.msk [vmem:[%s504 + $0x2d8] sm:$0xff] %vm171, %v436
      %566 = vst.msk [vmem:[%s504 + $0x2e0] sm:$0xff] %vm171, %v437
      %567 = vst.msk [vmem:[%s504 + $0x2e8] sm:$0xff] %vm171, %v438
      %568 = vst.msk [vmem:[%s504 + $0x2f0] sm:$0xff] %vm171, %v439
      %569 = vst.msk [vmem:[%s504 + $0x308] sm:$0xff] %vm171, %v440
      %570 = vst.msk [vmem:[%s504 + $0x310] sm:$0xff] %vm171, %v441
      %571 = vst.msk [vmem:[%s504 + $0x318] sm:$0xff] %vm171, %v442
      %572 = vst.msk [vmem:[%s504 + $0x320] sm:$0xff] %vm171, %v443
      %573 = vst.msk [vmem:[%s504 + $0x338] sm:$0xff] %vm171, %v444
      %574 = vst.msk [vmem:[%s504 + $0x340] sm:$0xff] %vm171, %v445
      %575 = vst.msk [vmem:[%s504 + $0x348] sm:$0xff] %vm171, %v446
      %576 = vst.msk [vmem:[%s504 + $0x350] sm:$0xff] %vm171, %v447
      %577 = vst.msk [vmem:[%s504 + $0x368] sm:$0xff] %vm171, %v448
      %578 = vst.msk [vmem:[%s504 + $0x370] sm:$0xff] %vm171, %v449
      %579 = vst.msk [vmem:[%s504 + $0x378] sm:$0xff] %vm171, %v450
      %580 = vst.msk [vmem:[%s504 + $0x380] sm:$0xff] %vm171, %v451
      %581 = vst.msk [vmem:[%s504 + $0x398] sm:$0xff] %vm171, %v452
      %582 = vst.msk [vmem:[%s504 + $0x3a0] sm:$0xff] %vm171, %v453
      %583 = vst.msk [vmem:[%s504 + $0x3a8] sm:$0xff] %vm171, %v454
      %584 = vst.msk [vmem:[%s504 + $0x3b0] sm:$0xff] %vm171, %v455
      %585 = vst.msk [vmem:[%s504 + $0x3c8] sm:$0xff] %vm171, %v456
      %586 = vst.msk [vmem:[%s504 + $0x3d0] sm:$0xff] %vm171, %v457
      %587 = vst.msk [vmem:[%s504 + $0x3d8] sm:$0xff] %vm171, %v458
      %588 = vst.msk [vmem:[%s504 + $0x3e0] sm:$0xff] %vm171, %v459
      %589 = vst.msk [vmem:[%s504 + $0x3f8] sm:$0xff] %vm171, %v460
      %590 = vst.msk [vmem:[%s504 + $0x400] sm:$0xff] %vm171, %v461
      %591 = vst.msk [vmem:[%s504 + $0x408] sm:$0xff] %vm171, %v462
      %592 = vst.msk [vmem:[%s504 + $0x410] sm:$0xff] %vm171, %v463
      %593 = vst.msk [vmem:[%s504 + $0x428] sm:$0xff] %vm171, %v464
      %594 = vst.msk [vmem:[%s504 + $0x430] sm:$0xff] %vm171, %v465
      %595 = vst.msk [vmem:[%s504 + $0x438] sm:$0xff] %vm171, %v466
      %596 = vst.msk [vmem:[%s504 + $0x440] sm:$0xff] %vm171, %v467
      %597 = vst.msk [vmem:[%s504 + $0x458] sm:$0xff] %vm171, %v468
      %598 = vst.msk [vmem:[%s504 + $0x460] sm:$0xff] %vm171, %v469
      %599 = vst.msk [vmem:[%s504 + $0x468] sm:$0xff] %vm171, %v470
      %600 = vst.msk [vmem:[%s504 + $0x470] sm:$0xff] %vm171, %v471
      %601 = vst.msk [vmem:[%s504 + $0x488] sm:$0xff] %vm171, %v472
      %602 = vst.msk [vmem:[%s504 + $0x490] sm:$0xff] %vm171, %v473
      %603 = vst.msk [vmem:[%s504 + $0x498] sm:$0xff] %vm171, %v474
      %604 = vst.msk [vmem:[%s504 + $0x4a0] sm:$0xff] %vm171, %v475
      %605 = vst.msk [vmem:[%s504 + $0x4b8] sm:$0xff] %vm171, %v476
      %606 = vst.msk [vmem:[%s504 + $0x4c0] sm:$0xff] %vm171, %v477
      %607 = vst.msk [vmem:[%s504 + $0x4c8] sm:$0xff] %vm171, %v478
      %608 = vst.msk [vmem:[%s504 + $0x4d0] sm:$0xff] %vm171, %v479
      %609 = vst.msk [vmem:[%s504 + $0x4e8] sm:$0xff] %vm171, %v480
      %610 = vst.msk [vmem:[%s504 + $0x4f0] sm:$0xff] %vm171, %v481
      %611 = vst.msk [vmem:[%s504 + $0x4f8] sm:$0xff] %vm171, %v482
      %612 = vst.msk [vmem:[%s504 + $0x500] sm:$0xff] %vm171, %v483
      %613 = vst.msk [vmem:[%s504 + $0x518] sm:$0xff] %vm171, %v484
      %614 = vst.msk [vmem:[%s504 + $0x520] sm:$0xff] %vm171, %v485
      %615 = vst.msk [vmem:[%s504 + $0x528] sm:$0xff] %vm171, %v486
      %616 = vst.msk [vmem:[%s504 + $0x530] sm:$0xff] %vm171, %v487
      %617 = vst.msk [vmem:[%s504 + $0x548] sm:$0xff] %vm171, %v488
      %618 = vst.msk [vmem:[%s504 + $0x550] sm:$0xff] %vm171, %v489
      %619 = vst.msk [vmem:[%s504 + $0x558] sm:$0xff] %vm171, %v490
      %620 = vst.msk [vmem:[%s504 + $0x560] sm:$0xff] %vm171, %v491
      %621 = vst.msk [vmem:[%s504 + $0x578] sm:$0xff] %vm171, %v492
      %622 = vst.msk [vmem:[%s504 + $0x580] sm:$0xff] %vm171, %v493
      %623 = vst.msk [vmem:[%s504 + $0x588] sm:$0xff] %vm171, %v494
      %624 = vst.msk [vmem:[%s504 + $0x590] sm:$0xff] %vm171, %v495
      %625 = vst.msk [vmem:[%s504 + $0x5a8] sm:$0xff] %vm171, %v496
      %626 = vst.msk [vmem:[%s504 + $0x5b0] sm:$0xff] %vm171, %v497
      %627 = vst.msk [vmem:[%s504 + $0x5b8] sm:$0xff] %vm171, %v498
      %628 = vst.msk [vmem:[%s504 + $0x5c0] sm:$0xff] %vm171, %v499
      %629 = vst.msk [vmem:[%s504 + $0x5d8] sm:$0xff] %vm171, %v500
      %630 = vst.msk [vmem:[%s504 + $0x5e0] sm:$0xff] %vm171, %v501
      %631 = vst.msk [vmem:[%s504 + $0x5e8] sm:$0xff] %vm171, %v502
      %632 = vst.msk [vmem:[%s504 + $0x5f0] sm:$0xff] %vm171, %v503
      %v633 = vld [vmem:[%s1] sm:$0x7]
      %v634 = vld [vmem:[%s1 + $0x4] sm:$0x7]
      %v635 = vld [vmem:[%s1 + $0x8] sm:$0x7]
      %v636 = vld [vmem:[%s1 + $0xc] sm:$0x7]
      %v637 = vld [vmem:[%s1 + $0x10] sm:$0x7]
      %v638 = vld [vmem:[%s1 + $0x14] sm:$0x7]
      %v639 = vld [vmem:[%s1 + $0x18] sm:$0x7]
      %v640 = vld [vmem:[%s1 + $0x1c] sm:$0x7]
      %v641 = vld [vmem:[%s1 + $0x20] sm:$0x7]
      %s642 = scalar_lea.vmem [#allocation2], 7
      %v643 = vld [vmem:[%s642] ss:$2 sm:$0xff]
      %s644 = scalar_lea.vmem [#allocation2], 23
      %v645 = vld [vmem:[%s644] ss:$2 sm:$0xff]
      %s646 = scalar_lea.vmem [#allocation2], 103
      %v647 = vld [vmem:[%s646] ss:$2 sm:$0xff]
      %s648 = scalar_lea.vmem [#allocation2], 119
      %v649 = vld [vmem:[%s648] ss:$2 sm:$0xff]
      %s650 = scalar_lea.vmem [#allocation2], 199
      %v651 = vld [vmem:[%s650] ss:$2 sm:$0xff]
      %s652 = scalar_lea.vmem [#allocation2], 215
      %v653 = vld [vmem:[%s652] ss:$2 sm:$0xff]
      %s654 = scalar_lea.vmem [#allocation2], 295
      %v655 = vld [vmem:[%s654] ss:$2 sm:$0xff]
      %s656 = scalar_lea.vmem [#allocation2], 311
      %v657 = vld [vmem:[%s656] ss:$2 sm:$0xff]
      %s658 = scalar_lea.vmem [#allocation2], 391
      %v659 = vld [vmem:[%s658] ss:$2 sm:$0xff]
      %s660 = scalar_lea.vmem [#allocation2], 407
      %v661 = vld [vmem:[%s660] ss:$2 sm:$0xff]
      %s662 = scalar_lea.vmem [#allocation2], 487
      %v663 = vld [vmem:[%s662] ss:$2 sm:$0xff]
      %s664 = scalar_lea.vmem [#allocation2], 503
      %v665 = vld [vmem:[%s664] ss:$2 sm:$0xff]
      %s666 = scalar_lea.vmem [#allocation2], 583
      %v667 = vld [vmem:[%s666] ss:$2 sm:$0xff]
      %s668 = scalar_lea.vmem [#allocation2], 599
      %v669 = vld [vmem:[%s668] ss:$2 sm:$0xff]
      %s670 = scalar_lea.vmem [#allocation2], 679
      %v671 = vld [vmem:[%s670] ss:$2 sm:$0xff]
      %s672 = scalar_lea.vmem [#allocation2], 695
      %v673 = vld [vmem:[%s672] ss:$2 sm:$0xff]
      %s674 = scalar_lea.vmem [#allocation2], 775
      %v675 = vld [vmem:[%s674] ss:$2 sm:$0xff]
      %s676 = scalar_lea.vmem [#allocation2], 791
      %v677 = vld [vmem:[%s676] ss:$2 sm:$0xff]
      %s678 = scalar_lea.vmem [#allocation2], 871
      %v679 = vld [vmem:[%s678] ss:$2 sm:$0xff]
      %s680 = scalar_lea.vmem [#allocation2], 887
      %v681 = vld [vmem:[%s680] ss:$2 sm:$0xff]
      %s682 = scalar_lea.vmem [#allocation2], 967
      %v683 = vld [vmem:[%s682] ss:$2 sm:$0xff]
      %s684 = scalar_lea.vmem [#allocation2], 983
      %v685 = vld [vmem:[%s684] ss:$2 sm:$0xff]
      %s686 = scalar_lea.vmem [#allocation2], 1063
      %v687 = vld [vmem:[%s686] ss:$2 sm:$0xff]
      %s688 = scalar_lea.vmem [#allocation2], 1079
      %v689 = vld [vmem:[%s688] ss:$2 sm:$0xff]
      %s690 = scalar_lea.vmem [#allocation2], 1159
      %v691 = vld [vmem:[%s690] ss:$2 sm:$0xff]
      %s692 = scalar_lea.vmem [#allocation2], 1175
      %v693 = vld [vmem:[%s692] ss:$2 sm:$0xff]
      %s694 = scalar_lea.vmem [#allocation2], 1255
      %v695 = vld [vmem:[%s694] ss:$2 sm:$0xff]
      %s696 = scalar_lea.vmem [#allocation2], 1271
      %v697 = vld [vmem:[%s696] ss:$2 sm:$0xff]
      %s698 = scalar_lea.vmem [#allocation2], 1351
      %v699 = vld [vmem:[%s698] ss:$2 sm:$0xff]
      %s700 = scalar_lea.vmem [#allocation2], 1367
      %v701 = vld [vmem:[%s700] ss:$2 sm:$0xff]
      %s702 = scalar_lea.vmem [#allocation2], 1447
      %v703 = vld [vmem:[%s702] ss:$2 sm:$0xff]
      %s704 = scalar_lea.vmem [#allocation2], 1463
      %v705 = vld [vmem:[%s704] ss:$2 sm:$0xff]
      %s706 = scalar_lea.vmem [#allocation2], 8
      %v707 = vld [vmem:[%s706] ss:$2 sm:$0xff]
      %s708 = scalar_lea.vmem [#allocation2], 24
      %v709 = vld [vmem:[%s708] ss:$2 sm:$0xff]
      %s710 = scalar_lea.vmem [#allocation2], 104
      %v711 = vld [vmem:[%s710] ss:$2 sm:$0xff]
      %s712 = scalar_lea.vmem [#allocation2], 120
      %v713 = vld [vmem:[%s712] ss:$2 sm:$0xff]
      %s714 = scalar_lea.vmem [#allocation2], 200
      %v715 = vld [vmem:[%s714] ss:$2 sm:$0xff]
      %s716 = scalar_lea.vmem [#allocation2], 216
      %v717 = vld [vmem:[%s716] ss:$2 sm:$0xff]
      %s718 = scalar_lea.vmem [#allocation2], 296
      %v719 = vld [vmem:[%s718] ss:$2 sm:$0xff]
      %s720 = scalar_lea.vmem [#allocation2], 312
      %v721 = vld [vmem:[%s720] ss:$2 sm:$0xff]
      %s722 = scalar_lea.vmem [#allocation2], 392
      %v723 = vld [vmem:[%s722] ss:$2 sm:$0xff]
      %s724 = scalar_lea.vmem [#allocation2], 408
      %v725 = vld [vmem:[%s724] ss:$2 sm:$0xff]
      %s726 = scalar_lea.vmem [#allocation2], 488
      %v727 = vld [vmem:[%s726] ss:$2 sm:$0xff]
      %s728 = scalar_lea.vmem [#allocation2], 504
      %v729 = vld [vmem:[%s728] ss:$2 sm:$0xff]
      %s730 = scalar_lea.vmem [#allocation2], 584
      %v731 = vld [vmem:[%s730] ss:$2 sm:$0xff]
      %s732 = scalar_lea.vmem [#allocation2], 600
      %v733 = vld [vmem:[%s732] ss:$2 sm:$0xff]
      %s734 = scalar_lea.vmem [#allocation2], 680
      %v735 = vld [vmem:[%s734] ss:$2 sm:$0xff]
      %s736 = scalar_lea.vmem [#allocation2], 696
      %v737 = vld [vmem:[%s736] ss:$2 sm:$0xff]
      %s738 = scalar_lea.vmem [#allocation2], 776
      %v739 = vld [vmem:[%s738] ss:$2 sm:$0xff]
      %s740 = scalar_lea.vmem [#allocation2], 792
      %v741 = vld [vmem:[%s740] ss:$2 sm:$0xff]
      %s742 = scalar_lea.vmem [#allocation2], 872
      %v743 = vld [vmem:[%s742] ss:$2 sm:$0xff]
      %s744 = scalar_lea.vmem [#allocation2], 888
      %v745 = vld [vmem:[%s744] ss:$2 sm:$0xff]
      %s746 = scalar_lea.vmem [#allocation2], 968
      %v747 = vld [vmem:[%s746] ss:$2 sm:$0xff]
      %s748 = scalar_lea.vmem [#allocation2], 984
      %v749 = vld [vmem:[%s748] ss:$2 sm:$0xff]
      %s750 = scalar_lea.vmem [#allocation2], 1064
      %v751 = vld [vmem:[%s750] ss:$2 sm:$0xff]
      %s752 = scalar_lea.vmem [#allocation2], 1080
      %v753 = vld [vmem:[%s752] ss:$2 sm:$0xff]
      %s754 = scalar_lea.vmem [#allocation2], 1160
      %v755 = vld [vmem:[%s754] ss:$2 sm:$0xff]
      %s756 = scalar_lea.vmem [#allocation2], 1176
      %v757 = vld [vmem:[%s756] ss:$2 sm:$0xff]
      %s758 = scalar_lea.vmem [#allocation2], 1256
      %v759 = vld [vmem:[%s758] ss:$2 sm:$0xff]
      %s760 = scalar_lea.vmem [#allocation2], 1272
      %v761 = vld [vmem:[%s760] ss:$2 sm:$0xff]
      %s762 = scalar_lea.vmem [#allocation2], 1352
      %v763 = vld [vmem:[%s762] ss:$2 sm:$0xff]
      %s764 = scalar_lea.vmem [#allocation2], 1368
      %v765 = vld [vmem:[%s764] ss:$2 sm:$0xff]
      %s766 = scalar_lea.vmem [#allocation2], 1448
      %v767 = vld [vmem:[%s766] ss:$2 sm:$0xff]
      %s768 = scalar_lea.vmem [#allocation2], 1464
      %v769 = vld [vmem:[%s768] ss:$2 sm:$0xff]
      %v771 = vsel %vm171, %v707, 0
      %v774 = vsel %vm171, %v709, 0
      %v777 = vsel %vm171, %v711, 0
      %v780 = vsel %vm171, %v713, 0
      %v783 = vsel %vm171, %v715, 0
      %v786 = vsel %vm171, %v717, 0
      %v789 = vsel %vm171, %v719, 0
      %v792 = vsel %vm171, %v721, 0
      %v795 = vsel %vm171, %v723, 0
      %v798 = vsel %vm171, %v725, 0
      %v801 = vsel %vm171, %v727, 0
      %v804 = vsel %vm171, %v729, 0
      %v807 = vsel %vm171, %v731, 0
      %v810 = vsel %vm171, %v733, 0
      %v813 = vsel %vm171, %v735, 0
      %v816 = vsel %vm171, %v737, 0
      %v819 = vsel %vm171, %v739, 0
      %v822 = vsel %vm171, %v741, 0
      %v825 = vsel %vm171, %v743, 0
      %v828 = vsel %vm171, %v745, 0
      %v831 = vsel %vm171, %v747, 0
      %v834 = vsel %vm171, %v749, 0
      %v837 = vsel %vm171, %v751, 0
      %v840 = vsel %vm171, %v753, 0
      %v843 = vsel %vm171, %v755, 0
      %v846 = vsel %vm171, %v757, 0
      %v849 = vsel %vm171, %v759, 0
      %v852 = vsel %vm171, %v761, 0
      %v855 = vsel %vm171, %v763, 0
      %v858 = vsel %vm171, %v765, 0
      %v861 = vsel %vm171, %v767, 0
      %v864 = vsel %vm171, %v769, 0
      %vm866 = vcmask 1042432
      %v868 = vsel %vm866, %v634, 0
      %870 = vmatprep.subr.mxu0 0.0
      %871 = vmatpush1.msra.mxu0 0.0
      %872 = vmatprep.subr.mxu0 0.0
      %873 = vmatpush1.msra.mxu0 0.0
      %874 = vmatprep.subr.mxu0 0.0
      %875 = vmatpush1.msra.mxu0 0.0
      %876 = vmatprep.subr.mxu0 0.0
      %877 = vmatpush1.msra.mxu0 0.0
      %878 = vmatprep.subr.mxu0 0.0
      %879 = vmatpush1.msra.mxu0 0.0
      %880 = vmatprep.subr.mxu0 0.0
      %881 = vmatpush1.msra.mxu0 0.0
      %882 = vmatprep.subr.mxu0 0.0
      %883 = vmatpush1.msra.mxu0 0.0
      %884 = vmatprep.subr.mxu0 0.0
      %885 = vmatpush1.msra.mxu0 0.0
      %886 = vmatprep.subr.mxu0 0.0
      %887 = vmatpush1.msra.mxu0 0.0
      %888 = vmatprep.subr.mxu0 0.0
      %889 = vmatpush1.msra.mxu0 0.0
      %890 = vmatprep.subr.mxu0 0.0
      %891 = vmatpush1.msra.mxu0 0.0
      %892 = vmatprep.subr.mxu0 0.0
      %893 = vmatpush1.msra.mxu0 0.0
      %894 = vmatprep.subr.mxu0 0.0
      %895 = vmatpush1.msra.mxu0 0.0
      %896 = vmatprep.subr.mxu0 0.0
      %897 = vmatpush1.msra.mxu0 0.0
      %898 = vmatprep.subr.mxu0 0.0
      %899 = vmatpush1.msra.mxu0 0.0
      %900 = vmatprep.subr.mxu0 0.0
      %901 = vmatpush1.msra.mxu0 %v868
      %902 = vmatprep.subr.mxu0 0.0
      %903 = vmatpush2.msra.mxu0 0.0
      %904 = vmatprep.subr.mxu0 0.0
      %905 = vmatpush2.msra.mxu0 0.0
      %906 = vmatprep.subr.mxu0 0.0
      %907 = vmatpush2.msra.mxu0 0.0
      %908 = vmatprep.subr.mxu0 0.0
      %909 = vmatpush2.msra.mxu0 0.0
      %910 = vmatprep.subr.mxu0 0.0
      %911 = vmatpush2.msra.mxu0 0.0
      %912 = vmatprep.subr.mxu0 0.0
      %913 = vmatpush2.msra.mxu0 0.0
      %914 = vmatprep.subr.mxu0 0.0
      %915 = vmatpush2.msra.mxu0 0.0
      %916 = vmatprep.subr.mxu0 0.0
      %917 = vmatpush2.msra.mxu0 0.0
      %918 = vmatprep.subr.mxu0 0.0
      %919 = vmatpush2.msra.mxu0 0.0
      %920 = vmatprep.subr.mxu0 0.0
      %921 = vmatpush2.msra.mxu0 0.0
      %922 = vmatprep.subr.mxu0 0.0
      %923 = vmatpush2.msra.mxu0 0.0
      %924 = vmatprep.subr.mxu0 0.0
      %925 = vmatpush2.msra.mxu0 0.0
      %926 = vmatprep.subr.mxu0 0.0
      %927 = vmatpush2.msra.mxu0 0.0
      %928 = vmatprep.subr.mxu0 0.0
      %929 = vmatpush2.msra.mxu0 0.0
      %930 = vmatprep.subr.mxu0 0.0
      %931 = vmatpush2.msra.mxu0 0.0
      %932 = vmatprep.subr.mxu0 0.0
      %933 = vmatpush2.msra.mxu0 0.0
      %934 = vmatprep.mubr.f32.mxu0 0.0
      %935 = vmatmul.mubr.f32.gmra.mxu0 %v771
      %v936 = vpop.f32.mrf.mxu0
      %v937 = vadd.f32 0.0, %v936
      %v938 = vpop.f32.mrf.mxu0
      %939 = vmatprep.mubr.f32.mxu0 0.0
      %940 = vmatmul.mubr.f32.gmra.mxu0 %v774
      %v941 = vpop.f32.mrf.mxu0
      %v942 = vadd.f32 0.0, %v941
      %v943 = vpop.f32.mrf.mxu0
      %944 = vmatprep.mubr.f32.mxu0 0.0
      %945 = vmatmul.mubr.f32.gmra.mxu0 %v777
      %v946 = vpop.f32.mrf.mxu0
      %v947 = vadd.f32 0.0, %v946
      %v948 = vpop.f32.mrf.mxu0
      %949 = vmatprep.mubr.f32.mxu0 0.0
      %950 = vmatmul.mubr.f32.gmra.mxu0 %v780
      %v951 = vpop.f32.mrf.mxu0
      %v952 = vadd.f32 0.0, %v951
      %v953 = vpop.f32.mrf.mxu0
      %954 = vmatprep.mubr.f32.mxu0 0.0
      %955 = vmatmul.mubr.f32.gmra.mxu0 %v783
      %v956 = vpop.f32.mrf.mxu0
      %v957 = vadd.f32 0.0, %v956
      %v958 = vpop.f32.mrf.mxu0
      %959 = vmatprep.mubr.f32.mxu0 0.0
      %960 = vmatmul.mubr.f32.gmra.mxu0 %v786
      %v961 = vpop.f32.mrf.mxu0
      %v962 = vadd.f32 0.0, %v961
      %v963 = vpop.f32.mrf.mxu0
      %964 = vmatprep.mubr.f32.mxu0 0.0
      %965 = vmatmul.mubr.f32.gmra.mxu0 %v789
      %v966 = vpop.f32.mrf.mxu0
      %v967 = vadd.f32 0.0, %v966
      %v968 = vpop.f32.mrf.mxu0
      %969 = vmatprep.mubr.f32.mxu0 0.0
      %970 = vmatmul.mubr.f32.gmra.mxu0 %v792
      %v971 = vpop.f32.mrf.mxu0
      %v972 = vadd.f32 0.0, %v971
      %v973 = vpop.f32.mrf.mxu0
      %974 = vmatprep.mubr.f32.mxu0 0.0
      %975 = vmatmul.mubr.f32.gmra.mxu0 %v795
      %v976 = vpop.f32.mrf.mxu0
      %v977 = vadd.f32 0.0, %v976
      %v978 = vpop.f32.mrf.mxu0
      %979 = vmatprep.mubr.f32.mxu0 0.0
      %980 = vmatmul.mubr.f32.gmra.mxu0 %v798
      %v981 = vpop.f32.mrf.mxu0
      %v982 = vadd.f32 0.0, %v981
      %v983 = vpop.f32.mrf.mxu0
      %984 = vmatprep.mubr.f32.mxu0 0.0
      %985 = vmatmul.mubr.f32.gmra.mxu0 %v801
      %v986 = vpop.f32.mrf.mxu0
      %v987 = vadd.f32 0.0, %v986
      %v988 = vpop.f32.mrf.mxu0
      %989 = vmatprep.mubr.f32.mxu0 0.0
      %990 = vmatmul.mubr.f32.gmra.mxu0 %v804
      %v991 = vpop.f32.mrf.mxu0
      %v992 = vadd.f32 0.0, %v991
      %v993 = vpop.f32.mrf.mxu0
      %994 = vmatprep.mubr.f32.mxu0 0.0
      %995 = vmatmul.mubr.f32.gmra.mxu0 %v807
      %v996 = vpop.f32.mrf.mxu0
      %v997 = vadd.f32 0.0, %v996
      %v998 = vpop.f32.mrf.mxu0
      %999 = vmatprep.mubr.f32.mxu0 0.0
      %1000 = vmatmul.mubr.f32.gmra.mxu0 %v810
      %v1001 = vpop.f32.mrf.mxu0
      %v1002 = vadd.f32 0.0, %v1001
      %v1003 = vpop.f32.mrf.mxu0
      %1004 = vmatprep.mubr.f32.mxu0 0.0
      %1005 = vmatmul.mubr.f32.gmra.mxu0 %v813
      %v1006 = vpop.f32.mrf.mxu0
      %v1007 = vadd.f32 0.0, %v1006
      %v1008 = vpop.f32.mrf.mxu0
      %1009 = vmatprep.mubr.f32.mxu0 0.0
      %1010 = vmatmul.mubr.f32.gmra.mxu0 %v816
      %v1011 = vpop.f32.mrf.mxu0
      %v1012 = vadd.f32 0.0, %v1011
      %v1013 = vpop.f32.mrf.mxu0
      %1014 = vmatprep.mubr.f32.mxu0 0.0
      %1015 = vmatmul.mubr.f32.gmra.mxu0 %v819
      %v1016 = vpop.f32.mrf.mxu0
      %v1017 = vadd.f32 0.0, %v1016
      %v1018 = vpop.f32.mrf.mxu0
      %1019 = vmatprep.mubr.f32.mxu0 0.0
      %1020 = vmatmul.mubr.f32.gmra.mxu0 %v822
      %v1021 = vpop.f32.mrf.mxu0
      %v1022 = vadd.f32 0.0, %v1021
      %v1023 = vpop.f32.mrf.mxu0
      %1024 = vmatprep.mubr.f32.mxu0 0.0
      %1025 = vmatmul.mubr.f32.gmra.mxu0 %v825
      %v1026 = vpop.f32.mrf.mxu0
      %v1027 = vadd.f32 0.0, %v1026
      %v1028 = vpop.f32.mrf.mxu0
      %1029 = vmatprep.mubr.f32.mxu0 0.0
      %1030 = vmatmul.mubr.f32.gmra.mxu0 %v828
      %v1031 = vpop.f32.mrf.mxu0
      %v1032 = vadd.f32 0.0, %v1031
      %v1033 = vpop.f32.mrf.mxu0
      %1034 = vmatprep.mubr.f32.mxu0 0.0
      %1035 = vmatmul.mubr.f32.gmra.mxu0 %v831
      %v1036 = vpop.f32.mrf.mxu0
      %v1037 = vadd.f32 0.0, %v1036
      %v1038 = vpop.f32.mrf.mxu0
      %1039 = vmatprep.mubr.f32.mxu0 0.0
      %1040 = vmatmul.mubr.f32.gmra.mxu0 %v834
      %v1041 = vpop.f32.mrf.mxu0
      %v1042 = vadd.f32 0.0, %v1041
      %v1043 = vpop.f32.mrf.mxu0
      %1044 = vmatprep.mubr.f32.mxu0 0.0
      %1045 = vmatmul.mubr.f32.gmra.mxu0 %v837
      %v1046 = vpop.f32.mrf.mxu0
      %v1047 = vadd.f32 0.0, %v1046
      %v1048 = vpop.f32.mrf.mxu0
      %1049 = vmatprep.mubr.f32.mxu0 0.0
      %1050 = vmatmul.mubr.f32.gmra.mxu0 %v840
      %v1051 = vpop.f32.mrf.mxu0
      %v1052 = vadd.f32 0.0, %v1051
      %v1053 = vpop.f32.mrf.mxu0
      %1054 = vmatprep.mubr.f32.mxu0 0.0
      %1055 = vmatmul.mubr.f32.gmra.mxu0 %v843
      %v1056 = vpop.f32.mrf.mxu0
      %v1057 = vadd.f32 0.0, %v1056
      %v1058 = vpop.f32.mrf.mxu0
      %1059 = vmatprep.mubr.f32.mxu0 0.0
      %1060 = vmatmul.mubr.f32.gmra.mxu0 %v846
      %v1061 = vpop.f32.mrf.mxu0
      %v1062 = vadd.f32 0.0, %v1061
      %v1063 = vpop.f32.mrf.mxu0
      %1064 = vmatprep.mubr.f32.mxu0 0.0
      %1065 = vmatmul.mubr.f32.gmra.mxu0 %v849
      %v1066 = vpop.f32.mrf.mxu0
      %v1067 = vadd.f32 0.0, %v1066
      %v1068 = vpop.f32.mrf.mxu0
      %1069 = vmatprep.mubr.f32.mxu0 0.0
      %1070 = vmatmul.mubr.f32.gmra.mxu0 %v852
      %v1071 = vpop.f32.mrf.mxu0
      %v1072 = vadd.f32 0.0, %v1071
      %v1073 = vpop.f32.mrf.mxu0
      %1074 = vmatprep.mubr.f32.mxu0 0.0
      %1075 = vmatmul.mubr.f32.gmra.mxu0 %v855
      %v1076 = vpop.f32.mrf.mxu0
      %v1077 = vadd.f32 0.0, %v1076
      %v1078 = vpop.f32.mrf.mxu0
      %1079 = vmatprep.mubr.f32.mxu0 0.0
      %1080 = vmatmul.mubr.f32.gmra.mxu0 %v858
      %v1081 = vpop.f32.mrf.mxu0
      %v1082 = vadd.f32 0.0, %v1081
      %v1083 = vpop.f32.mrf.mxu0
      %1084 = vmatprep.mubr.f32.mxu0 0.0
      %1085 = vmatmul.mubr.f32.gmra.mxu0 %v861
      %v1086 = vpop.f32.mrf.mxu0
      %v1087 = vadd.f32 0.0, %v1086
      %v1088 = vpop.f32.mrf.mxu0
      %1089 = vmatprep.mubr.f32.mxu0 0.0
      %1090 = vmatmul.mubr.f32.gmra.mxu0 %v864
      %v1091 = vpop.f32.mrf.mxu0
      %v1092 = vadd.f32 0.0, %v1091
      %v1093 = vpop.f32.mrf.mxu0
      %1094 = vdwg.mxu0
      %v1096 = vsel %vm171, %v643, 0
      %v1099 = vsel %vm171, %v645, 0
      %v1102 = vsel %vm171, %v647, 0
      %v1105 = vsel %vm171, %v649, 0
      %v1108 = vsel %vm171, %v651, 0
      %v1111 = vsel %vm171, %v653, 0
      %v1114 = vsel %vm171, %v655, 0
      %v1117 = vsel %vm171, %v657, 0
      %v1120 = vsel %vm171, %v659, 0
      %v1123 = vsel %vm171, %v661, 0
      %v1126 = vsel %vm171, %v663, 0
      %v1129 = vsel %vm171, %v665, 0
      %v1132 = vsel %vm171, %v667, 0
      %v1135 = vsel %vm171, %v669, 0
      %v1138 = vsel %vm171, %v671, 0
      %v1141 = vsel %vm171, %v673, 0
      %v1144 = vsel %vm171, %v675, 0
      %v1147 = vsel %vm171, %v677, 0
      %v1150 = vsel %vm171, %v679, 0
      %v1153 = vsel %vm171, %v681, 0
      %v1156 = vsel %vm171, %v683, 0
      %v1159 = vsel %vm171, %v685, 0
      %v1162 = vsel %vm171, %v687, 0
      %v1165 = vsel %vm171, %v689, 0
      %v1168 = vsel %vm171, %v691, 0
      %v1171 = vsel %vm171, %v693, 0
      %v1174 = vsel %vm171, %v695, 0
      %v1177 = vsel %vm171, %v697, 0
      %v1180 = vsel %vm171, %v699, 0
      %v1183 = vsel %vm171, %v701, 0
      %v1186 = vsel %vm171, %v703, 0
      %v1189 = vsel %vm171, %v705, 0
      %v1192 = vsel %vm866, %v633, 0
      %1194 = vmatprep.subr.mxu0 0.0
      %1195 = vmatpush1.msra.mxu0 0.0
      %1196 = vmatprep.subr.mxu0 0.0
      %1197 = vmatpush1.msra.mxu0 0.0
      %1198 = vmatprep.subr.mxu0 0.0
      %1199 = vmatpush1.msra.mxu0 0.0
      %1200 = vmatprep.subr.mxu0 0.0
      %1201 = vmatpush1.msra.mxu0 0.0
      %1202 = vmatprep.subr.mxu0 0.0
      %1203 = vmatpush1.msra.mxu0 0.0
      %1204 = vmatprep.subr.mxu0 0.0
      %1205 = vmatpush1.msra.mxu0 0.0
      %1206 = vmatprep.subr.mxu0 0.0
      %1207 = vmatpush1.msra.mxu0 0.0
      %1208 = vmatprep.subr.mxu0 0.0
      %1209 = vmatpush1.msra.mxu0 0.0
      %1210 = vmatprep.subr.mxu0 0.0
      %1211 = vmatpush1.msra.mxu0 0.0
      %1212 = vmatprep.subr.mxu0 0.0
      %1213 = vmatpush1.msra.mxu0 0.0
      %1214 = vmatprep.subr.mxu0 0.0
      %1215 = vmatpush1.msra.mxu0 0.0
      %1216 = vmatprep.subr.mxu0 0.0
      %1217 = vmatpush1.msra.mxu0 0.0
      %1218 = vmatprep.subr.mxu0 0.0
      %1219 = vmatpush1.msra.mxu0 0.0
      %1220 = vmatprep.subr.mxu0 0.0
      %1221 = vmatpush1.msra.mxu0 0.0
      %1222 = vmatprep.subr.mxu0 0.0
      %1223 = vmatpush1.msra.mxu0 0.0
      %1224 = vmatprep.subr.mxu0 0.0
      %1225 = vmatpush1.msra.mxu0 %v1192
      %1226 = vmatprep.subr.mxu0 0.0
      %1227 = vmatpush2.msra.mxu0 0.0
      %1228 = vmatprep.subr.mxu0 0.0
      %1229 = vmatpush2.msra.mxu0 0.0
      %1230 = vmatprep.subr.mxu0 0.0
      %1231 = vmatpush2.msra.mxu0 0.0
      %1232 = vmatprep.subr.mxu0 0.0
      %1233 = vmatpush2.msra.mxu0 0.0
      %1234 = vmatprep.subr.mxu0 0.0
      %1235 = vmatpush2.msra.mxu0 0.0
      %1236 = vmatprep.subr.mxu0 0.0
      %1237 = vmatpush2.msra.mxu0 0.0
      %1238 = vmatprep.subr.mxu0 0.0
      %1239 = vmatpush2.msra.mxu0 0.0
      %1240 = vmatprep.subr.mxu0 0.0
      %1241 = vmatpush2.msra.mxu0 0.0
      %1242 = vmatprep.subr.mxu0 0.0
      %1243 = vmatpush2.msra.mxu0 0.0
      %1244 = vmatprep.subr.mxu0 0.0
      %1245 = vmatpush2.msra.mxu0 0.0
      %1246 = vmatprep.subr.mxu0 0.0
      %1247 = vmatpush2.msra.mxu0 0.0
      %1248 = vmatprep.subr.mxu0 0.0
      %1249 = vmatpush2.msra.mxu0 0.0
      %1250 = vmatprep.subr.mxu0 0.0
      %1251 = vmatpush2.msra.mxu0 0.0
      %1252 = vmatprep.subr.mxu0 0.0
      %1253 = vmatpush2.msra.mxu0 0.0
      %1254 = vmatprep.subr.mxu0 0.0
      %1255 = vmatpush2.msra.mxu0 0.0
      %1256 = vmatprep.subr.mxu0 0.0
      %1257 = vmatpush2.msra.mxu0 0.0
      %1258 = vmatprep.mubr.f32.mxu0 0.0
      %1259 = vmatmul.mubr.f32.gmra.mxu0 %v1096
      %v1260 = vpop.f32.mrf.mxu0
      %v1261 = vadd.f32 %v937, %v1260
      %v1262 = vpop.f32.mrf.mxu0
      %1263 = vmatprep.mubr.f32.mxu0 0.0
      %1264 = vmatmul.mubr.f32.gmra.mxu0 %v1099
      %v1265 = vpop.f32.mrf.mxu0
      %v1266 = vadd.f32 %v942, %v1265
      %v1267 = vpop.f32.mrf.mxu0
      %1268 = vmatprep.mubr.f32.mxu0 0.0
      %1269 = vmatmul.mubr.f32.gmra.mxu0 %v1102
      %v1270 = vpop.f32.mrf.mxu0
      %v1271 = vadd.f32 %v947, %v1270
      %v1272 = vpop.f32.mrf.mxu0
      %1273 = vmatprep.mubr.f32.mxu0 0.0
      %1274 = vmatmul.mubr.f32.gmra.mxu0 %v1105
      %v1275 = vpop.f32.mrf.mxu0
      %v1276 = vadd.f32 %v952, %v1275
      %v1277 = vpop.f32.mrf.mxu0
      %1278 = vmatprep.mubr.f32.mxu0 0.0
      %1279 = vmatmul.mubr.f32.gmra.mxu0 %v1108
      %v1280 = vpop.f32.mrf.mxu0
      %v1281 = vadd.f32 %v957, %v1280
      %v1282 = vpop.f32.mrf.mxu0
      %1283 = vmatprep.mubr.f32.mxu0 0.0
      %1284 = vmatmul.mubr.f32.gmra.mxu0 %v1111
      %v1285 = vpop.f32.mrf.mxu0
      %v1286 = vadd.f32 %v962, %v1285
      %v1287 = vpop.f32.mrf.mxu0
      %1288 = vmatprep.mubr.f32.mxu0 0.0
      %1289 = vmatmul.mubr.f32.gmra.mxu0 %v1114
      %v1290 = vpop.f32.mrf.mxu0
      %v1291 = vadd.f32 %v967, %v1290
      %v1292 = vpop.f32.mrf.mxu0
      %1293 = vmatprep.mubr.f32.mxu0 0.0
      %1294 = vmatmul.mubr.f32.gmra.mxu0 %v1117
      %v1295 = vpop.f32.mrf.mxu0
      %v1296 = vadd.f32 %v972, %v1295
      %v1297 = vpop.f32.mrf.mxu0
      %1298 = vmatprep.mubr.f32.mxu0 0.0
      %1299 = vmatmul.mubr.f32.gmra.mxu0 %v1120
      %v1300 = vpop.f32.mrf.mxu0
      %v1301 = vadd.f32 %v977, %v1300
      %v1302 = vpop.f32.mrf.mxu0
      %1303 = vmatprep.mubr.f32.mxu0 0.0
      %1304 = vmatmul.mubr.f32.gmra.mxu0 %v1123
      %v1305 = vpop.f32.mrf.mxu0
      %v1306 = vadd.f32 %v982, %v1305
      %v1307 = vpop.f32.mrf.mxu0
      %1308 = vmatprep.mubr.f32.mxu0 0.0
      %1309 = vmatmul.mubr.f32.gmra.mxu0 %v1126
      %v1310 = vpop.f32.mrf.mxu0
      %v1311 = vadd.f32 %v987, %v1310
      %v1312 = vpop.f32.mrf.mxu0
      %1313 = vmatprep.mubr.f32.mxu0 0.0
      %1314 = vmatmul.mubr.f32.gmra.mxu0 %v1129
      %v1315 = vpop.f32.mrf.mxu0
      %v1316 = vadd.f32 %v992, %v1315
      %v1317 = vpop.f32.mrf.mxu0
      %1318 = vmatprep.mubr.f32.mxu0 0.0
      %1319 = vmatmul.mubr.f32.gmra.mxu0 %v1132
      %v1320 = vpop.f32.mrf.mxu0
      %v1321 = vadd.f32 %v997, %v1320
      %v1322 = vpop.f32.mrf.mxu0
      %1323 = vmatprep.mubr.f32.mxu0 0.0
      %1324 = vmatmul.mubr.f32.gmra.mxu0 %v1135
      %v1325 = vpop.f32.mrf.mxu0
      %v1326 = vadd.f32 %v1002, %v1325
      %v1327 = vpop.f32.mrf.mxu0
      %1328 = vmatprep.mubr.f32.mxu0 0.0
      %1329 = vmatmul.mubr.f32.gmra.mxu0 %v1138
      %v1330 = vpop.f32.mrf.mxu0
      %v1331 = vadd.f32 %v1007, %v1330
      %v1332 = vpop.f32.mrf.mxu0
      %1333 = vmatprep.mubr.f32.mxu0 0.0
      %1334 = vmatmul.mubr.f32.gmra.mxu0 %v1141
      %v1335 = vpop.f32.mrf.mxu0
      %v1336 = vadd.f32 %v1012, %v1335
      %v1337 = vpop.f32.mrf.mxu0
      %1338 = vmatprep.mubr.f32.mxu0 0.0
      %1339 = vmatmul.mubr.f32.gmra.mxu0 %v1144
      %v1340 = vpop.f32.mrf.mxu0
      %v1341 = vadd.f32 %v1017, %v1340
      %v1342 = vpop.f32.mrf.mxu0
      %1343 = vmatprep.mubr.f32.mxu0 0.0
      %1344 = vmatmul.mubr.f32.gmra.mxu0 %v1147
      %v1345 = vpop.f32.mrf.mxu0
      %v1346 = vadd.f32 %v1022, %v1345
      %v1347 = vpop.f32.mrf.mxu0
      %1348 = vmatprep.mubr.f32.mxu0 0.0
      %1349 = vmatmul.mubr.f32.gmra.mxu0 %v1150
      %v1350 = vpop.f32.mrf.mxu0
      %v1351 = vadd.f32 %v1027, %v1350
      %v1352 = vpop.f32.mrf.mxu0
      %1353 = vmatprep.mubr.f32.mxu0 0.0
      %1354 = vmatmul.mubr.f32.gmra.mxu0 %v1153
      %v1355 = vpop.f32.mrf.mxu0
      %v1356 = vadd.f32 %v1032, %v1355
      %v1357 = vpop.f32.mrf.mxu0
      %1358 = vmatprep.mubr.f32.mxu0 0.0
      %1359 = vmatmul.mubr.f32.gmra.mxu0 %v1156
      %v1360 = vpop.f32.mrf.mxu0
      %v1361 = vadd.f32 %v1037, %v1360
      %v1362 = vpop.f32.mrf.mxu0
      %1363 = vmatprep.mubr.f32.mxu0 0.0
      %1364 = vmatmul.mubr.f32.gmra.mxu0 %v1159
      %v1365 = vpop.f32.mrf.mxu0
      %v1366 = vadd.f32 %v1042, %v1365
      %v1367 = vpop.f32.mrf.mxu0
      %1368 = vmatprep.mubr.f32.mxu0 0.0
      %1369 = vmatmul.mubr.f32.gmra.mxu0 %v1162
      %v1370 = vpop.f32.mrf.mxu0
      %v1371 = vadd.f32 %v1047, %v1370
      %v1372 = vpop.f32.mrf.mxu0
      %1373 = vmatprep.mubr.f32.mxu0 0.0
      %1374 = vmatmul.mubr.f32.gmra.mxu0 %v1165
      %v1375 = vpop.f32.mrf.mxu0
      %v1376 = vadd.f32 %v1052, %v1375
      %v1377 = vpop.f32.mrf.mxu0
      %1378 = vmatprep.mubr.f32.mxu0 0.0
      %1379 = vmatmul.mubr.f32.gmra.mxu0 %v1168
      %v1380 = vpop.f32.mrf.mxu0
      %v1381 = vadd.f32 %v1057, %v1380
      %v1382 = vpop.f32.mrf.mxu0
      %1383 = vmatprep.mubr.f32.mxu0 0.0
      %1384 = vmatmul.mubr.f32.gmra.mxu0 %v1171
      %v1385 = vpop.f32.mrf.mxu0
      %v1386 = vadd.f32 %v1062, %v1385
      %v1387 = vpop.f32.mrf.mxu0
      %1388 = vmatprep.mubr.f32.mxu0 0.0
      %1389 = vmatmul.mubr.f32.gmra.mxu0 %v1174
      %v1390 = vpop.f32.mrf.mxu0
      %v1391 = vadd.f32 %v1067, %v1390
      %v1392 = vpop.f32.mrf.mxu0
      %1393 = vmatprep.mubr.f32.mxu0 0.0
      %1394 = vmatmul.mubr.f32.gmra.mxu0 %v1177
      %v1395 = vpop.f32.mrf.mxu0
      %v1396 = vadd.f32 %v1072, %v1395
      %v1397 = vpop.f32.mrf.mxu0
      %1398 = vmatprep.mubr.f32.mxu0 0.0
      %1399 = vmatmul.mubr.f32.gmra.mxu0 %v1180
      %v1400 = vpop.f32.mrf.mxu0
      %v1401 = vadd.f32 %v1077, %v1400
      %v1402 = vpop.f32.mrf.mxu0
      %1403 = vmatprep.mubr.f32.mxu0 0.0
      %1404 = vmatmul.mubr.f32.gmra.mxu0 %v1183
      %v1405 = vpop.f32.mrf.mxu0
      %v1406 = vadd.f32 %v1082, %v1405
      %v1407 = vpop.f32.mrf.mxu0
      %1408 = vmatprep.mubr.f32.mxu0 0.0
      %1409 = vmatmul.mubr.f32.gmra.mxu0 %v1186
      %v1410 = vpop.f32.mrf.mxu0
      %v1411 = vadd.f32 %v1087, %v1410
      %v1412 = vpop.f32.mrf.mxu0
      %1413 = vmatprep.mubr.f32.mxu0 0.0
      %1414 = vmatmul.mubr.f32.gmra.mxu0 %v1189
      %v1415 = vpop.f32.mrf.mxu0
      %v1416 = vadd.f32 %v1092, %v1415
      %v1417 = vpop.f32.mrf.mxu0
      %1418 = vdwg.mxu0
      %s1419 = scalar_lea.vmem [#allocation2], 9
      %v1420 = vld [vmem:[%s1419] ss:$2 sm:$0xff]
      %s1421 = scalar_lea.vmem [#allocation2], 25
      %v1422 = vld [vmem:[%s1421] ss:$2 sm:$0xff]
      %s1423 = scalar_lea.vmem [#allocation2], 105
      %v1424 = vld [vmem:[%s1423] ss:$2 sm:$0xff]
      %s1425 = scalar_lea.vmem [#allocation2], 121
      %v1426 = vld [vmem:[%s1425] ss:$2 sm:$0xff]
      %s1427 = scalar_lea.vmem [#allocation2], 201
      %v1428 = vld [vmem:[%s1427] ss:$2 sm:$0xff]
      %s1429 = scalar_lea.vmem [#allocation2], 217
      %v1430 = vld [vmem:[%s1429] ss:$2 sm:$0xff]
      %s1431 = scalar_lea.vmem [#allocation2], 297
      %v1432 = vld [vmem:[%s1431] ss:$2 sm:$0xff]
      %s1433 = scalar_lea.vmem [#allocation2], 313
      %v1434 = vld [vmem:[%s1433] ss:$2 sm:$0xff]
      %s1435 = scalar_lea.vmem [#allocation2], 393
      %v1436 = vld [vmem:[%s1435] ss:$2 sm:$0xff]
      %s1437 = scalar_lea.vmem [#allocation2], 409
      %v1438 = vld [vmem:[%s1437] ss:$2 sm:$0xff]
      %s1439 = scalar_lea.vmem [#allocation2], 489
      %v1440 = vld [vmem:[%s1439] ss:$2 sm:$0xff]
      %s1441 = scalar_lea.vmem [#allocation2], 505
      %v1442 = vld [vmem:[%s1441] ss:$2 sm:$0xff]
      %s1443 = scalar_lea.vmem [#allocation2], 585
      %v1444 = vld [vmem:[%s1443] ss:$2 sm:$0xff]
      %s1445 = scalar_lea.vmem [#allocation2], 601
      %v1446 = vld [vmem:[%s1445] ss:$2 sm:$0xff]
      %s1447 = scalar_lea.vmem [#allocation2], 681
      %v1448 = vld [vmem:[%s1447] ss:$2 sm:$0xff]
      %s1449 = scalar_lea.vmem [#allocation2], 697
      %v1450 = vld [vmem:[%s1449] ss:$2 sm:$0xff]
      %s1451 = scalar_lea.vmem [#allocation2], 777
      %v1452 = vld [vmem:[%s1451] ss:$2 sm:$0xff]
      %s1453 = scalar_lea.vmem [#allocation2], 793
      %v1454 = vld [vmem:[%s1453] ss:$2 sm:$0xff]
      %s1455 = scalar_lea.vmem [#allocation2], 873
      %v1456 = vld [vmem:[%s1455] ss:$2 sm:$0xff]
      %s1457 = scalar_lea.vmem [#allocation2], 889
      %v1458 = vld [vmem:[%s1457] ss:$2 sm:$0xff]
      %s1459 = scalar_lea.vmem [#allocation2], 969
      %v1460 = vld [vmem:[%s1459] ss:$2 sm:$0xff]
      %s1461 = scalar_lea.vmem [#allocation2], 985
      %v1462 = vld [vmem:[%s1461] ss:$2 sm:$0xff]
      %s1463 = scalar_lea.vmem [#allocation2], 1065
      %v1464 = vld [vmem:[%s1463] ss:$2 sm:$0xff]
      %s1465 = scalar_lea.vmem [#allocation2], 1081
      %v1466 = vld [vmem:[%s1465] ss:$2 sm:$0xff]
      %s1467 = scalar_lea.vmem [#allocation2], 1161
      %v1468 = vld [vmem:[%s1467] ss:$2 sm:$0xff]
      %s1469 = scalar_lea.vmem [#allocation2], 1177
      %v1470 = vld [vmem:[%s1469] ss:$2 sm:$0xff]
      %s1471 = scalar_lea.vmem [#allocation2], 1257
      %v1472 = vld [vmem:[%s1471] ss:$2 sm:$0xff]
      %s1473 = scalar_lea.vmem [#allocation2], 1273
      %v1474 = vld [vmem:[%s1473] ss:$2 sm:$0xff]
      %s1475 = scalar_lea.vmem [#allocation2], 1353
      %v1476 = vld [vmem:[%s1475] ss:$2 sm:$0xff]
      %s1477 = scalar_lea.vmem [#allocation2], 1369
      %v1478 = vld [vmem:[%s1477] ss:$2 sm:$0xff]
      %s1479 = scalar_lea.vmem [#allocation2], 1449
      %v1480 = vld [vmem:[%s1479] ss:$2 sm:$0xff]
      %s1481 = scalar_lea.vmem [#allocation2], 1465
      %v1482 = vld [vmem:[%s1481] ss:$2 sm:$0xff]
      %v1484 = vsel %vm171, %v1420, 0
      %v1487 = vsel %vm171, %v1422, 0
      %v1490 = vsel %vm171, %v1424, 0
      %v1493 = vsel %vm171, %v1426, 0
      %v1496 = vsel %vm171, %v1428, 0
      %v1499 = vsel %vm171, %v1430, 0
      %v1502 = vsel %vm171, %v1432, 0
      %v1505 = vsel %vm171, %v1434, 0
      %v1508 = vsel %vm171, %v1436, 0
      %v1511 = vsel %vm171, %v1438, 0
      %v1514 = vsel %vm171, %v1440, 0
      %v1517 = vsel %vm171, %v1442, 0
      %v1520 = vsel %vm171, %v1444, 0
      %v1523 = vsel %vm171, %v1446, 0
      %v1526 = vsel %vm171, %v1448, 0
      %v1529 = vsel %vm171, %v1450, 0
      %v1532 = vsel %vm171, %v1452, 0
      %v1535 = vsel %vm171, %v1454, 0
      %v1538 = vsel %vm171, %v1456, 0
      %v1541 = vsel %vm171, %v1458, 0
      %v1544 = vsel %vm171, %v1460, 0
      %v1547 = vsel %vm171, %v1462, 0
      %v1550 = vsel %vm171, %v1464, 0
      %v1553 = vsel %vm171, %v1466, 0
      %v1556 = vsel %vm171, %v1468, 0
      %v1559 = vsel %vm171, %v1470, 0
      %v1562 = vsel %vm171, %v1472, 0
      %v1565 = vsel %vm171, %v1474, 0
      %v1568 = vsel %vm171, %v1476, 0
      %v1571 = vsel %vm171, %v1478, 0
      %v1574 = vsel %vm171, %v1480, 0
      %v1577 = vsel %vm171, %v1482, 0
      %v1580 = vsel %vm866, %v635, 0
      %1582 = vmatprep.subr.mxu0 0.0
      %1583 = vmatpush1.msra.mxu0 0.0
      %1584 = vmatprep.subr.mxu0 0.0
      %1585 = vmatpush1.msra.mxu0 0.0
      %1586 = vmatprep.subr.mxu0 0.0
      %1587 = vmatpush1.msra.mxu0 0.0
      %1588 = vmatprep.subr.mxu0 0.0
      %1589 = vmatpush1.msra.mxu0 0.0
      %1590 = vmatprep.subr.mxu0 0.0
      %1591 = vmatpush1.msra.mxu0 0.0
      %1592 = vmatprep.subr.mxu0 0.0
      %1593 = vmatpush1.msra.mxu0 0.0
      %1594 = vmatprep.subr.mxu0 0.0
      %1595 = vmatpush1.msra.mxu0 0.0
      %1596 = vmatprep.subr.mxu0 0.0
      %1597 = vmatpush1.msra.mxu0 0.0
      %1598 = vmatprep.subr.mxu0 0.0
      %1599 = vmatpush1.msra.mxu0 0.0
      %1600 = vmatprep.subr.mxu0 0.0
      %1601 = vmatpush1.msra.mxu0 0.0
      %1602 = vmatprep.subr.mxu0 0.0
      %1603 = vmatpush1.msra.mxu0 0.0
      %1604 = vmatprep.subr.mxu0 0.0
      %1605 = vmatpush1.msra.mxu0 0.0
      %1606 = vmatprep.subr.mxu0 0.0
      %1607 = vmatpush1.msra.mxu0 0.0
      %1608 = vmatprep.subr.mxu0 0.0
      %1609 = vmatpush1.msra.mxu0 0.0
      %1610 = vmatprep.subr.mxu0 0.0
      %1611 = vmatpush1.msra.mxu0 0.0
      %1612 = vmatprep.subr.mxu0 0.0
      %1613 = vmatpush1.msra.mxu0 %v1580
      %1614 = vmatprep.subr.mxu0 0.0
      %1615 = vmatpush2.msra.mxu0 0.0
      %1616 = vmatprep.subr.mxu0 0.0
      %1617 = vmatpush2.msra.mxu0 0.0
      %1618 = vmatprep.subr.mxu0 0.0
      %1619 = vmatpush2.msra.mxu0 0.0
      %1620 = vmatprep.subr.mxu0 0.0
      %1621 = vmatpush2.msra.mxu0 0.0
      %1622 = vmatprep.subr.mxu0 0.0
      %1623 = vmatpush2.msra.mxu0 0.0
      %1624 = vmatprep.subr.mxu0 0.0
      %1625 = vmatpush2.msra.mxu0 0.0
      %1626 = vmatprep.subr.mxu0 0.0
      %1627 = vmatpush2.msra.mxu0 0.0
      %1628 = vmatprep.subr.mxu0 0.0
      %1629 = vmatpush2.msra.mxu0 0.0
      %1630 = vmatprep.subr.mxu0 0.0
      %1631 = vmatpush2.msra.mxu0 0.0
      %1632 = vmatprep.subr.mxu0 0.0
      %1633 = vmatpush2.msra.mxu0 0.0
      %1634 = vmatprep.subr.mxu0 0.0
      %1635 = vmatpush2.msra.mxu0 0.0
      %1636 = vmatprep.subr.mxu0 0.0
      %1637 = vmatpush2.msra.mxu0 0.0
      %1638 = vmatprep.subr.mxu0 0.0
      %1639 = vmatpush2.msra.mxu0 0.0
      %1640 = vmatprep.subr.mxu0 0.0
      %1641 = vmatpush2.msra.mxu0 0.0
      %1642 = vmatprep.subr.mxu0 0.0
      %1643 = vmatpush2.msra.mxu0 0.0
      %1644 = vmatprep.subr.mxu0 0.0
      %1645 = vmatpush2.msra.mxu0 0.0
      %1646 = vmatprep.mubr.f32.mxu0 0.0
      %1647 = vmatmul.mubr.f32.gmra.mxu0 %v1484
      %v1648 = vpop.f32.mrf.mxu0
      %v1649 = vadd.f32 0.0, %v1648
      %v1650 = vpop.f32.mrf.mxu0
      %1651 = vmatprep.mubr.f32.mxu0 0.0
      %1652 = vmatmul.mubr.f32.gmra.mxu0 %v1487
      %v1653 = vpop.f32.mrf.mxu0
      %v1654 = vadd.f32 0.0, %v1653
      %v1655 = vpop.f32.mrf.mxu0
      %1656 = vmatprep.mubr.f32.mxu0 0.0
      %1657 = vmatmul.mubr.f32.gmra.mxu0 %v1490
      %v1658 = vpop.f32.mrf.mxu0
      %v1659 = vadd.f32 0.0, %v1658
      %v1660 = vpop.f32.mrf.mxu0
      %1661 = vmatprep.mubr.f32.mxu0 0.0
      %1662 = vmatmul.mubr.f32.gmra.mxu0 %v1493
      %v1663 = vpop.f32.mrf.mxu0
      %v1664 = vadd.f32 0.0, %v1663
      %v1665 = vpop.f32.mrf.mxu0
      %1666 = vmatprep.mubr.f32.mxu0 0.0
      %1667 = vmatmul.mubr.f32.gmra.mxu0 %v1496
      %v1668 = vpop.f32.mrf.mxu0
      %v1669 = vadd.f32 0.0, %v1668
      %v1670 = vpop.f32.mrf.mxu0
      %1671 = vmatprep.mubr.f32.mxu0 0.0
      %1672 = vmatmul.mubr.f32.gmra.mxu0 %v1499
      %v1673 = vpop.f32.mrf.mxu0
      %v1674 = vadd.f32 0.0, %v1673
      %v1675 = vpop.f32.mrf.mxu0
      %1676 = vmatprep.mubr.f32.mxu0 0.0
      %1677 = vmatmul.mubr.f32.gmra.mxu0 %v1502
      %v1678 = vpop.f32.mrf.mxu0
      %v1679 = vadd.f32 0.0, %v1678
      %v1680 = vpop.f32.mrf.mxu0
      %1681 = vmatprep.mubr.f32.mxu0 0.0
      %1682 = vmatmul.mubr.f32.gmra.mxu0 %v1505
      %v1683 = vpop.f32.mrf.mxu0
      %v1684 = vadd.f32 0.0, %v1683
      %v1685 = vpop.f32.mrf.mxu0
      %1686 = vmatprep.mubr.f32.mxu0 0.0
      %1687 = vmatmul.mubr.f32.gmra.mxu0 %v1508
      %v1688 = vpop.f32.mrf.mxu0
      %v1689 = vadd.f32 0.0, %v1688
      %v1690 = vpop.f32.mrf.mxu0
      %1691 = vmatprep.mubr.f32.mxu0 0.0
      %1692 = vmatmul.mubr.f32.gmra.mxu0 %v1511
      %v1693 = vpop.f32.mrf.mxu0
      %v1694 = vadd.f32 0.0, %v1693
      %v1695 = vpop.f32.mrf.mxu0
      %1696 = vmatprep.mubr.f32.mxu0 0.0
      %1697 = vmatmul.mubr.f32.gmra.mxu0 %v1514
      %v1698 = vpop.f32.mrf.mxu0
      %v1699 = vadd.f32 0.0, %v1698
      %v1700 = vpop.f32.mrf.mxu0
      %1701 = vmatprep.mubr.f32.mxu0 0.0
      %1702 = vmatmul.mubr.f32.gmra.mxu0 %v1517
      %v1703 = vpop.f32.mrf.mxu0
      %v1704 = vadd.f32 0.0, %v1703
      %v1705 = vpop.f32.mrf.mxu0
      %1706 = vmatprep.mubr.f32.mxu0 0.0
      %1707 = vmatmul.mubr.f32.gmra.mxu0 %v1520
      %v1708 = vpop.f32.mrf.mxu0
      %v1709 = vadd.f32 0.0, %v1708
      %v1710 = vpop.f32.mrf.mxu0
      %1711 = vmatprep.mubr.f32.mxu0 0.0
      %1712 = vmatmul.mubr.f32.gmra.mxu0 %v1523
      %v1713 = vpop.f32.mrf.mxu0
      %v1714 = vadd.f32 0.0, %v1713
      %v1715 = vpop.f32.mrf.mxu0
      %1716 = vmatprep.mubr.f32.mxu0 0.0
      %1717 = vmatmul.mubr.f32.gmra.mxu0 %v1526
      %v1718 = vpop.f32.mrf.mxu0
      %v1719 = vadd.f32 0.0, %v1718
      %v1720 = vpop.f32.mrf.mxu0
      %1721 = vmatprep.mubr.f32.mxu0 0.0
      %1722 = vmatmul.mubr.f32.gmra.mxu0 %v1529
      %v1723 = vpop.f32.mrf.mxu0
      %v1724 = vadd.f32 0.0, %v1723
      %v1725 = vpop.f32.mrf.mxu0
      %1726 = vmatprep.mubr.f32.mxu0 0.0
      %1727 = vmatmul.mubr.f32.gmra.mxu0 %v1532
      %v1728 = vpop.f32.mrf.mxu0
      %v1729 = vadd.f32 0.0, %v1728
      %v1730 = vpop.f32.mrf.mxu0
      %1731 = vmatprep.mubr.f32.mxu0 0.0
      %1732 = vmatmul.mubr.f32.gmra.mxu0 %v1535
      %v1733 = vpop.f32.mrf.mxu0
      %v1734 = vadd.f32 0.0, %v1733
      %v1735 = vpop.f32.mrf.mxu0
      %1736 = vmatprep.mubr.f32.mxu0 0.0
      %1737 = vmatmul.mubr.f32.gmra.mxu0 %v1538
      %v1738 = vpop.f32.mrf.mxu0
      %v1739 = vadd.f32 0.0, %v1738
      %v1740 = vpop.f32.mrf.mxu0
      %1741 = vmatprep.mubr.f32.mxu0 0.0
      %1742 = vmatmul.mubr.f32.gmra.mxu0 %v1541
      %v1743 = vpop.f32.mrf.mxu0
      %v1744 = vadd.f32 0.0, %v1743
      %v1745 = vpop.f32.mrf.mxu0
      %1746 = vmatprep.mubr.f32.mxu0 0.0
      %1747 = vmatmul.mubr.f32.gmra.mxu0 %v1544
      %v1748 = vpop.f32.mrf.mxu0
      %v1749 = vadd.f32 0.0, %v1748
      %v1750 = vpop.f32.mrf.mxu0
      %1751 = vmatprep.mubr.f32.mxu0 0.0
      %1752 = vmatmul.mubr.f32.gmra.mxu0 %v1547
      %v1753 = vpop.f32.mrf.mxu0
      %v1754 = vadd.f32 0.0, %v1753
      %v1755 = vpop.f32.mrf.mxu0
      %1756 = vmatprep.mubr.f32.mxu0 0.0
      %1757 = vmatmul.mubr.f32.gmra.mxu0 %v1550
      %v1758 = vpop.f32.mrf.mxu0
      %v1759 = vadd.f32 0.0, %v1758
      %v1760 = vpop.f32.mrf.mxu0
      %1761 = vmatprep.mubr.f32.mxu0 0.0
      %1762 = vmatmul.mubr.f32.gmra.mxu0 %v1553
      %v1763 = vpop.f32.mrf.mxu0
      %v1764 = vadd.f32 0.0, %v1763
      %v1765 = vpop.f32.mrf.mxu0
      %1766 = vmatprep.mubr.f32.mxu0 0.0
      %1767 = vmatmul.mubr.f32.gmra.mxu0 %v1556
      %v1768 = vpop.f32.mrf.mxu0
      %v1769 = vadd.f32 0.0, %v1768
      %v1770 = vpop.f32.mrf.mxu0
      %1771 = vmatprep.mubr.f32.mxu0 0.0
      %1772 = vmatmul.mubr.f32.gmra.mxu0 %v1559
      %v1773 = vpop.f32.mrf.mxu0
      %v1774 = vadd.f32 0.0, %v1773
      %v1775 = vpop.f32.mrf.mxu0
      %1776 = vmatprep.mubr.f32.mxu0 0.0
      %1777 = vmatmul.mubr.f32.gmra.mxu0 %v1562
      %v1778 = vpop.f32.mrf.mxu0
      %v1779 = vadd.f32 0.0, %v1778
      %v1780 = vpop.f32.mrf.mxu0
      %1781 = vmatprep.mubr.f32.mxu0 0.0
      %1782 = vmatmul.mubr.f32.gmra.mxu0 %v1565
      %v1783 = vpop.f32.mrf.mxu0
      %v1784 = vadd.f32 0.0, %v1783
      %v1785 = vpop.f32.mrf.mxu0
      %1786 = vmatprep.mubr.f32.mxu0 0.0
      %1787 = vmatmul.mubr.f32.gmra.mxu0 %v1568
      %v1788 = vpop.f32.mrf.mxu0
      %v1789 = vadd.f32 0.0, %v1788
      %v1790 = vpop.f32.mrf.mxu0
      %1791 = vmatprep.mubr.f32.mxu0 0.0
      %1792 = vmatmul.mubr.f32.gmra.mxu0 %v1571
      %v1793 = vpop.f32.mrf.mxu0
      %v1794 = vadd.f32 0.0, %v1793
      %v1795 = vpop.f32.mrf.mxu0
      %1796 = vmatprep.mubr.f32.mxu0 0.0
      %1797 = vmatmul.mubr.f32.gmra.mxu0 %v1574
      %v1798 = vpop.f32.mrf.mxu0
      %v1799 = vadd.f32 0.0, %v1798
      %v1800 = vpop.f32.mrf.mxu0
      %1801 = vmatprep.mubr.f32.mxu0 0.0
      %1802 = vmatmul.mubr.f32.gmra.mxu0 %v1577
      %v1803 = vpop.f32.mrf.mxu0
      %v1804 = vadd.f32 0.0, %v1803
      %v1805 = vpop.f32.mrf.mxu0
      %1806 = vdwg.mxu0
      %v1807 = vadd.f32 %v1261, %v1649
      %v1808 = vadd.f32 %v1266, %v1654
      %v1809 = vadd.f32 %v1271, %v1659
      %v1810 = vadd.f32 %v1276, %v1664
      %v1811 = vadd.f32 %v1281, %v1669
      %v1812 = vadd.f32 %v1286, %v1674
      %v1813 = vadd.f32 %v1291, %v1679
      %v1814 = vadd.f32 %v1296, %v1684
      %v1815 = vadd.f32 %v1301, %v1689
      %v1816 = vadd.f32 %v1306, %v1694
      %v1817 = vadd.f32 %v1311, %v1699
      %v1818 = vadd.f32 %v1316, %v1704
      %v1819 = vadd.f32 %v1321, %v1709
      %v1820 = vadd.f32 %v1326, %v1714
      %v1821 = vadd.f32 %v1331, %v1719
      %v1822 = vadd.f32 %v1336, %v1724
      %v1823 = vadd.f32 %v1341, %v1729
      %v1824 = vadd.f32 %v1346, %v1734
      %v1825 = vadd.f32 %v1351, %v1739
      %v1826 = vadd.f32 %v1356, %v1744
      %v1827 = vadd.f32 %v1361, %v1749
      %v1828 = vadd.f32 %v1366, %v1754
      %v1829 = vadd.f32 %v1371, %v1759
      %v1830 = vadd.f32 %v1376, %v1764
      %v1831 = vadd.f32 %v1381, %v1769
      %v1832 = vadd.f32 %v1386, %v1774
      %v1833 = vadd.f32 %v1391, %v1779
      %v1834 = vadd.f32 %v1396, %v1784
      %v1835 = vadd.f32 %v1401, %v1789
      %v1836 = vadd.f32 %v1406, %v1794
      %v1837 = vadd.f32 %v1411, %v1799
      %v1838 = vadd.f32 %v1416, %v1804
      %s1839 = scalar_lea.vmem %s504, 7 [#allocation2]
      %v1840 = vld [vmem:[%s1839] ss:$2 sm:$0xff]
      %s1841 = scalar_lea.vmem %s504, 23 [#allocation2]
      %v1842 = vld [vmem:[%s1841] ss:$2 sm:$0xff]
      %s1843 = scalar_lea.vmem %s504, 103 [#allocation2]
      %v1844 = vld [vmem:[%s1843] ss:$2 sm:$0xff]
      %s1845 = scalar_lea.vmem %s504, 119 [#allocation2]
      %v1846 = vld [vmem:[%s1845] ss:$2 sm:$0xff]
      %s1847 = scalar_lea.vmem %s504, 199 [#allocation2]
      %v1848 = vld [vmem:[%s1847] ss:$2 sm:$0xff]
      %s1849 = scalar_lea.vmem %s504, 215 [#allocation2]
      %v1850 = vld [vmem:[%s1849] ss:$2 sm:$0xff]
      %s1851 = scalar_lea.vmem %s504, 295 [#allocation2]
      %v1852 = vld [vmem:[%s1851] ss:$2 sm:$0xff]
      %s1853 = scalar_lea.vmem %s504, 311 [#allocation2]
      %v1854 = vld [vmem:[%s1853] ss:$2 sm:$0xff]
      %s1855 = scalar_lea.vmem %s504, 391 [#allocation2]
      %v1856 = vld [vmem:[%s1855] ss:$2 sm:$0xff]
      %s1857 = scalar_lea.vmem %s504, 407 [#allocation2]
      %v1858 = vld [vmem:[%s1857] ss:$2 sm:$0xff]
      %s1859 = scalar_lea.vmem %s504, 487 [#allocation2]
      %v1860 = vld [vmem:[%s1859] ss:$2 sm:$0xff]
      %s1861 = scalar_lea.vmem %s504, 503 [#allocation2]
      %v1862 = vld [vmem:[%s1861] ss:$2 sm:$0xff]
      %s1863 = scalar_lea.vmem %s504, 583 [#allocation2]
      %v1864 = vld [vmem:[%s1863] ss:$2 sm:$0xff]
      %s1865 = scalar_lea.vmem %s504, 599 [#allocation2]
      %v1866 = vld [vmem:[%s1865] ss:$2 sm:$0xff]
      %s1867 = scalar_lea.vmem %s504, 679 [#allocation2]
      %v1868 = vld [vmem:[%s1867] ss:$2 sm:$0xff]
      %s1869 = scalar_lea.vmem %s504, 695 [#allocation2]
      %v1870 = vld [vmem:[%s1869] ss:$2 sm:$0xff]
      %s1871 = scalar_lea.vmem %s504, 775 [#allocation2]
      %v1872 = vld [vmem:[%s1871] ss:$2 sm:$0xff]
      %s1873 = scalar_lea.vmem %s504, 791 [#allocation2]
      %v1874 = vld [vmem:[%s1873] ss:$2 sm:$0xff]
      %s1875 = scalar_lea.vmem %s504, 871 [#allocation2]
      %v1876 = vld [vmem:[%s1875] ss:$2 sm:$0xff]
      %s1877 = scalar_lea.vmem %s504, 887 [#allocation2]
      %v1878 = vld [vmem:[%s1877] ss:$2 sm:$0xff]
      %s1879 = scalar_lea.vmem %s504, 967 [#allocation2]
      %v1880 = vld [vmem:[%s1879] ss:$2 sm:$0xff]
      %s1881 = scalar_lea.vmem %s504, 983 [#allocation2]
      %v1882 = vld [vmem:[%s1881] ss:$2 sm:$0xff]
      %s1883 = scalar_lea.vmem %s504, 1063 [#allocation2]
      %v1884 = vld [vmem:[%s1883] ss:$2 sm:$0xff]
      %s1885 = scalar_lea.vmem %s504, 1079 [#allocation2]
      %v1886 = vld [vmem:[%s1885] ss:$2 sm:$0xff]
      %s1887 = scalar_lea.vmem %s504, 1159 [#allocation2]
      %v1888 = vld [vmem:[%s1887] ss:$2 sm:$0xff]
      %s1889 = scalar_lea.vmem %s504, 1175 [#allocation2]
      %v1890 = vld [vmem:[%s1889] ss:$2 sm:$0xff]
      %s1891 = scalar_lea.vmem %s504, 1255 [#allocation2]
      %v1892 = vld [vmem:[%s1891] ss:$2 sm:$0xff]
      %s1893 = scalar_lea.vmem %s504, 1271 [#allocation2]
      %v1894 = vld [vmem:[%s1893] ss:$2 sm:$0xff]
      %s1895 = scalar_lea.vmem %s504, 1351 [#allocation2]
      %v1896 = vld [vmem:[%s1895] ss:$2 sm:$0xff]
      %s1897 = scalar_lea.vmem %s504, 1367 [#allocation2]
      %v1898 = vld [vmem:[%s1897] ss:$2 sm:$0xff]
      %s1899 = scalar_lea.vmem %s504, 1447 [#allocation2]
      %v1900 = vld [vmem:[%s1899] ss:$2 sm:$0xff]
      %s1901 = scalar_lea.vmem %s504, 1463 [#allocation2]
      %v1902 = vld [vmem:[%s1901] ss:$2 sm:$0xff]
      %v1904 = vsel %vm171, %v1840, 0
      %v1907 = vsel %vm171, %v1842, 0
      %v1910 = vsel %vm171, %v1844, 0
      %v1913 = vsel %vm171, %v1846, 0
      %v1916 = vsel %vm171, %v1848, 0
      %v1919 = vsel %vm171, %v1850, 0
      %v1922 = vsel %vm171, %v1852, 0
      %v1925 = vsel %vm171, %v1854, 0
      %v1928 = vsel %vm171, %v1856, 0
      %v1931 = vsel %vm171, %v1858, 0
      %v1934 = vsel %vm171, %v1860, 0
      %v1937 = vsel %vm171, %v1862, 0
      %v1940 = vsel %vm171, %v1864, 0
      %v1943 = vsel %vm171, %v1866, 0
      %v1946 = vsel %vm171, %v1868, 0
      %v1949 = vsel %vm171, %v1870, 0
      %v1952 = vsel %vm171, %v1872, 0
      %v1955 = vsel %vm171, %v1874, 0
      %v1958 = vsel %vm171, %v1876, 0
      %v1961 = vsel %vm171, %v1878, 0
      %v1964 = vsel %vm171, %v1880, 0
      %v1967 = vsel %vm171, %v1882, 0
      %v1970 = vsel %vm171, %v1884, 0
      %v1973 = vsel %vm171, %v1886, 0
      %v1976 = vsel %vm171, %v1888, 0
      %v1979 = vsel %vm171, %v1890, 0
      %v1982 = vsel %vm171, %v1892, 0
      %v1985 = vsel %vm171, %v1894, 0
      %v1988 = vsel %vm171, %v1896, 0
      %v1991 = vsel %vm171, %v1898, 0
      %v1994 = vsel %vm171, %v1900, 0
      %v1997 = vsel %vm171, %v1902, 0
      %v2000 = vsel %vm866, %v636, 0
      %2002 = vmatprep.subr.mxu0 0.0
      %2003 = vmatpush1.msra.mxu0 0.0
      %2004 = vmatprep.subr.mxu0 0.0
      %2005 = vmatpush1.msra.mxu0 0.0
      %2006 = vmatprep.subr.mxu0 0.0
      %2007 = vmatpush1.msra.mxu0 0.0
      %2008 = vmatprep.subr.mxu0 0.0
      %2009 = vmatpush1.msra.mxu0 0.0
      %2010 = vmatprep.subr.mxu0 0.0
      %2011 = vmatpush1.msra.mxu0 0.0
      %2012 = vmatprep.subr.mxu0 0.0
      %2013 = vmatpush1.msra.mxu0 0.0
      %2014 = vmatprep.subr.mxu0 0.0
      %2015 = vmatpush1.msra.mxu0 0.0
      %2016 = vmatprep.subr.mxu0 0.0
      %2017 = vmatpush1.msra.mxu0 0.0
      %2018 = vmatprep.subr.mxu0 0.0
      %2019 = vmatpush1.msra.mxu0 0.0
      %2020 = vmatprep.subr.mxu0 0.0
      %2021 = vmatpush1.msra.mxu0 0.0
      %2022 = vmatprep.subr.mxu0 0.0
      %2023 = vmatpush1.msra.mxu0 0.0
      %2024 = vmatprep.subr.mxu0 0.0
      %2025 = vmatpush1.msra.mxu0 0.0
      %2026 = vmatprep.subr.mxu0 0.0
      %2027 = vmatpush1.msra.mxu0 0.0
      %2028 = vmatprep.subr.mxu0 0.0
      %2029 = vmatpush1.msra.mxu0 0.0
      %2030 = vmatprep.subr.mxu0 0.0
      %2031 = vmatpush1.msra.mxu0 0.0
      %2032 = vmatprep.subr.mxu0 0.0
      %2033 = vmatpush1.msra.mxu0 %v2000
      %2034 = vmatprep.subr.mxu0 0.0
      %2035 = vmatpush2.msra.mxu0 0.0
      %2036 = vmatprep.subr.mxu0 0.0
      %2037 = vmatpush2.msra.mxu0 0.0
      %2038 = vmatprep.subr.mxu0 0.0
      %2039 = vmatpush2.msra.mxu0 0.0
      %2040 = vmatprep.subr.mxu0 0.0
      %2041 = vmatpush2.msra.mxu0 0.0
      %2042 = vmatprep.subr.mxu0 0.0
      %2043 = vmatpush2.msra.mxu0 0.0
      %2044 = vmatprep.subr.mxu0 0.0
      %2045 = vmatpush2.msra.mxu0 0.0
      %2046 = vmatprep.subr.mxu0 0.0
      %2047 = vmatpush2.msra.mxu0 0.0
      %2048 = vmatprep.subr.mxu0 0.0
      %2049 = vmatpush2.msra.mxu0 0.0
      %2050 = vmatprep.subr.mxu0 0.0
      %2051 = vmatpush2.msra.mxu0 0.0
      %2052 = vmatprep.subr.mxu0 0.0
      %2053 = vmatpush2.msra.mxu0 0.0
      %2054 = vmatprep.subr.mxu0 0.0
      %2055 = vmatpush2.msra.mxu0 0.0
      %2056 = vmatprep.subr.mxu0 0.0
      %2057 = vmatpush2.msra.mxu0 0.0
      %2058 = vmatprep.subr.mxu0 0.0
      %2059 = vmatpush2.msra.mxu0 0.0
      %2060 = vmatprep.subr.mxu0 0.0
      %2061 = vmatpush2.msra.mxu0 0.0
      %2062 = vmatprep.subr.mxu0 0.0
      %2063 = vmatpush2.msra.mxu0 0.0
      %2064 = vmatprep.subr.mxu0 0.0
      %2065 = vmatpush2.msra.mxu0 0.0
      %2066 = vmatprep.mubr.f32.mxu0 0.0
      %2067 = vmatmul.mubr.f32.gmra.mxu0 %v1904
      %v2068 = vpop.f32.mrf.mxu0
      %v2069 = vadd.f32 0.0, %v2068
      %v2070 = vpop.f32.mrf.mxu0
      %2071 = vmatprep.mubr.f32.mxu0 0.0
      %2072 = vmatmul.mubr.f32.gmra.mxu0 %v1907
      %v2073 = vpop.f32.mrf.mxu0
      %v2074 = vadd.f32 0.0, %v2073
      %v2075 = vpop.f32.mrf.mxu0
      %2076 = vmatprep.mubr.f32.mxu0 0.0
      %2077 = vmatmul.mubr.f32.gmra.mxu0 %v1910
      %v2078 = vpop.f32.mrf.mxu0
      %v2079 = vadd.f32 0.0, %v2078
      %v2080 = vpop.f32.mrf.mxu0
      %2081 = vmatprep.mubr.f32.mxu0 0.0
      %2082 = vmatmul.mubr.f32.gmra.mxu0 %v1913
      %v2083 = vpop.f32.mrf.mxu0
      %v2084 = vadd.f32 0.0, %v2083
      %v2085 = vpop.f32.mrf.mxu0
      %2086 = vmatprep.mubr.f32.mxu0 0.0
      %2087 = vmatmul.mubr.f32.gmra.mxu0 %v1916
      %v2088 = vpop.f32.mrf.mxu0
      %v2089 = vadd.f32 0.0, %v2088
      %v2090 = vpop.f32.mrf.mxu0
      %2091 = vmatprep.mubr.f32.mxu0 0.0
      %2092 = vmatmul.mubr.f32.gmra.mxu0 %v1919
      %v2093 = vpop.f32.mrf.mxu0
      %v2094 = vadd.f32 0.0, %v2093
      %v2095 = vpop.f32.mrf.mxu0
      %2096 = vmatprep.mubr.f32.mxu0 0.0
      %2097 = vmatmul.mubr.f32.gmra.mxu0 %v1922
      %v2098 = vpop.f32.mrf.mxu0
      %v2099 = vadd.f32 0.0, %v2098
      %v2100 = vpop.f32.mrf.mxu0
      %2101 = vmatprep.mubr.f32.mxu0 0.0
      %2102 = vmatmul.mubr.f32.gmra.mxu0 %v1925
      %v2103 = vpop.f32.mrf.mxu0
      %v2104 = vadd.f32 0.0, %v2103
      %v2105 = vpop.f32.mrf.mxu0
      %2106 = vmatprep.mubr.f32.mxu0 0.0
      %2107 = vmatmul.mubr.f32.gmra.mxu0 %v1928
      %v2108 = vpop.f32.mrf.mxu0
      %v2109 = vadd.f32 0.0, %v2108
      %v2110 = vpop.f32.mrf.mxu0
      %2111 = vmatprep.mubr.f32.mxu0 0.0
      %2112 = vmatmul.mubr.f32.gmra.mxu0 %v1931
      %v2113 = vpop.f32.mrf.mxu0
      %v2114 = vadd.f32 0.0, %v2113
      %v2115 = vpop.f32.mrf.mxu0
      %2116 = vmatprep.mubr.f32.mxu0 0.0
      %2117 = vmatmul.mubr.f32.gmra.mxu0 %v1934
      %v2118 = vpop.f32.mrf.mxu0
      %v2119 = vadd.f32 0.0, %v2118
      %v2120 = vpop.f32.mrf.mxu0
      %2121 = vmatprep.mubr.f32.mxu0 0.0
      %2122 = vmatmul.mubr.f32.gmra.mxu0 %v1937
      %v2123 = vpop.f32.mrf.mxu0
      %v2124 = vadd.f32 0.0, %v2123
      %v2125 = vpop.f32.mrf.mxu0
      %2126 = vmatprep.mubr.f32.mxu0 0.0
      %2127 = vmatmul.mubr.f32.gmra.mxu0 %v1940
      %v2128 = vpop.f32.mrf.mxu0
      %v2129 = vadd.f32 0.0, %v2128
      %v2130 = vpop.f32.mrf.mxu0
      %2131 = vmatprep.mubr.f32.mxu0 0.0
      %2132 = vmatmul.mubr.f32.gmra.mxu0 %v1943
      %v2133 = vpop.f32.mrf.mxu0
      %v2134 = vadd.f32 0.0, %v2133
      %v2135 = vpop.f32.mrf.mxu0
      %2136 = vmatprep.mubr.f32.mxu0 0.0
      %2137 = vmatmul.mubr.f32.gmra.mxu0 %v1946
      %v2138 = vpop.f32.mrf.mxu0
      %v2139 = vadd.f32 0.0, %v2138
      %v2140 = vpop.f32.mrf.mxu0
      %2141 = vmatprep.mubr.f32.mxu0 0.0
      %2142 = vmatmul.mubr.f32.gmra.mxu0 %v1949
      %v2143 = vpop.f32.mrf.mxu0
      %v2144 = vadd.f32 0.0, %v2143
      %v2145 = vpop.f32.mrf.mxu0
      %2146 = vmatprep.mubr.f32.mxu0 0.0
      %2147 = vmatmul.mubr.f32.gmra.mxu0 %v1952
      %v2148 = vpop.f32.mrf.mxu0
      %v2149 = vadd.f32 0.0, %v2148
      %v2150 = vpop.f32.mrf.mxu0
      %2151 = vmatprep.mubr.f32.mxu0 0.0
      %2152 = vmatmul.mubr.f32.gmra.mxu0 %v1955
      %v2153 = vpop.f32.mrf.mxu0
      %v2154 = vadd.f32 0.0, %v2153
      %v2155 = vpop.f32.mrf.mxu0
      %2156 = vmatprep.mubr.f32.mxu0 0.0
      %2157 = vmatmul.mubr.f32.gmra.mxu0 %v1958
      %v2158 = vpop.f32.mrf.mxu0
      %v2159 = vadd.f32 0.0, %v2158
      %v2160 = vpop.f32.mrf.mxu0
      %2161 = vmatprep.mubr.f32.mxu0 0.0
      %2162 = vmatmul.mubr.f32.gmra.mxu0 %v1961
      %v2163 = vpop.f32.mrf.mxu0
      %v2164 = vadd.f32 0.0, %v2163
      %v2165 = vpop.f32.mrf.mxu0
      %2166 = vmatprep.mubr.f32.mxu0 0.0
      %2167 = vmatmul.mubr.f32.gmra.mxu0 %v1964
      %v2168 = vpop.f32.mrf.mxu0
      %v2169 = vadd.f32 0.0, %v2168
      %v2170 = vpop.f32.mrf.mxu0
      %2171 = vmatprep.mubr.f32.mxu0 0.0
      %2172 = vmatmul.mubr.f32.gmra.mxu0 %v1967
      %v2173 = vpop.f32.mrf.mxu0
      %v2174 = vadd.f32 0.0, %v2173
      %v2175 = vpop.f32.mrf.mxu0
      %2176 = vmatprep.mubr.f32.mxu0 0.0
      %2177 = vmatmul.mubr.f32.gmra.mxu0 %v1970
      %v2178 = vpop.f32.mrf.mxu0
      %v2179 = vadd.f32 0.0, %v2178
      %v2180 = vpop.f32.mrf.mxu0
      %2181 = vmatprep.mubr.f32.mxu0 0.0
      %2182 = vmatmul.mubr.f32.gmra.mxu0 %v1973
      %v2183 = vpop.f32.mrf.mxu0
      %v2184 = vadd.f32 0.0, %v2183
      %v2185 = vpop.f32.mrf.mxu0
      %2186 = vmatprep.mubr.f32.mxu0 0.0
      %2187 = vmatmul.mubr.f32.gmra.mxu0 %v1976
      %v2188 = vpop.f32.mrf.mxu0
      %v2189 = vadd.f32 0.0, %v2188
      %v2190 = vpop.f32.mrf.mxu0
      %2191 = vmatprep.mubr.f32.mxu0 0.0
      %2192 = vmatmul.mubr.f32.gmra.mxu0 %v1979
      %v2193 = vpop.f32.mrf.mxu0
      %v2194 = vadd.f32 0.0, %v2193
      %v2195 = vpop.f32.mrf.mxu0
      %2196 = vmatprep.mubr.f32.mxu0 0.0
      %2197 = vmatmul.mubr.f32.gmra.mxu0 %v1982
      %v2198 = vpop.f32.mrf.mxu0
      %v2199 = vadd.f32 0.0, %v2198
      %v2200 = vpop.f32.mrf.mxu0
      %2201 = vmatprep.mubr.f32.mxu0 0.0
      %2202 = vmatmul.mubr.f32.gmra.mxu0 %v1985
      %v2203 = vpop.f32.mrf.mxu0
      %v2204 = vadd.f32 0.0, %v2203
      %v2205 = vpop.f32.mrf.mxu0
      %2206 = vmatprep.mubr.f32.mxu0 0.0
      %2207 = vmatmul.mubr.f32.gmra.mxu0 %v1988
      %v2208 = vpop.f32.mrf.mxu0
      %v2209 = vadd.f32 0.0, %v2208
      %v2210 = vpop.f32.mrf.mxu0
      %2211 = vmatprep.mubr.f32.mxu0 0.0
      %2212 = vmatmul.mubr.f32.gmra.mxu0 %v1991
      %v2213 = vpop.f32.mrf.mxu0
      %v2214 = vadd.f32 0.0, %v2213
      %v2215 = vpop.f32.mrf.mxu0
      %2216 = vmatprep.mubr.f32.mxu0 0.0
      %2217 = vmatmul.mubr.f32.gmra.mxu0 %v1994
      %v2218 = vpop.f32.mrf.mxu0
      %v2219 = vadd.f32 0.0, %v2218
      %v2220 = vpop.f32.mrf.mxu0
      %2221 = vmatprep.mubr.f32.mxu0 0.0
      %2222 = vmatmul.mubr.f32.gmra.mxu0 %v1997
      %v2223 = vpop.f32.mrf.mxu0
      %v2224 = vadd.f32 0.0, %v2223
      %v2225 = vpop.f32.mrf.mxu0
      %2226 = vdwg.mxu0
      %v2227 = vadd.f32 %v1807, %v2069
      %v2228 = vadd.f32 %v1808, %v2074
      %v2229 = vadd.f32 %v1809, %v2079
      %v2230 = vadd.f32 %v1810, %v2084
      %v2231 = vadd.f32 %v1811, %v2089
      %v2232 = vadd.f32 %v1812, %v2094
      %v2233 = vadd.f32 %v1813, %v2099
      %v2234 = vadd.f32 %v1814, %v2104
      %v2235 = vadd.f32 %v1815, %v2109
      %v2236 = vadd.f32 %v1816, %v2114
      %v2237 = vadd.f32 %v1817, %v2119
      %v2238 = vadd.f32 %v1818, %v2124
      %v2239 = vadd.f32 %v1819, %v2129
      %v2240 = vadd.f32 %v1820, %v2134
      %v2241 = vadd.f32 %v1821, %v2139
      %v2242 = vadd.f32 %v1822, %v2144
      %v2243 = vadd.f32 %v1823, %v2149
      %v2244 = vadd.f32 %v1824, %v2154
      %v2245 = vadd.f32 %v1825, %v2159
      %v2246 = vadd.f32 %v1826, %v2164
      %v2247 = vadd.f32 %v1827, %v2169
      %v2248 = vadd.f32 %v1828, %v2174
      %v2249 = vadd.f32 %v1829, %v2179
      %v2250 = vadd.f32 %v1830, %v2184
      %v2251 = vadd.f32 %v1831, %v2189
      %v2252 = vadd.f32 %v1832, %v2194
      %v2253 = vadd.f32 %v1833, %v2199
      %v2254 = vadd.f32 %v1834, %v2204
      %v2255 = vadd.f32 %v1835, %v2209
      %v2256 = vadd.f32 %v1836, %v2214
      %v2257 = vadd.f32 %v1837, %v2219
      %v2258 = vadd.f32 %v1838, %v2224
      %s2259 = scalar_lea.vmem %s504, 8 [#allocation2]
      %v2260 = vld [vmem:[%s2259] ss:$2 sm:$0xff]
      %s2261 = scalar_lea.vmem %s504, 24 [#allocation2]
      %v2262 = vld [vmem:[%s2261] ss:$2 sm:$0xff]
      %s2263 = scalar_lea.vmem %s504, 104 [#allocation2]
      %v2264 = vld [vmem:[%s2263] ss:$2 sm:$0xff]
      %s2265 = scalar_lea.vmem %s504, 120 [#allocation2]
      %v2266 = vld [vmem:[%s2265] ss:$2 sm:$0xff]
      %s2267 = scalar_lea.vmem %s504, 200 [#allocation2]
      %v2268 = vld [vmem:[%s2267] ss:$2 sm:$0xff]
      %s2269 = scalar_lea.vmem %s504, 216 [#allocation2]
      %v2270 = vld [vmem:[%s2269] ss:$2 sm:$0xff]
      %s2271 = scalar_lea.vmem %s504, 296 [#allocation2]
      %v2272 = vld [vmem:[%s2271] ss:$2 sm:$0xff]
      %s2273 = scalar_lea.vmem %s504, 312 [#allocation2]
      %v2274 = vld [vmem:[%s2273] ss:$2 sm:$0xff]
      %s2275 = scalar_lea.vmem %s504, 392 [#allocation2]
      %v2276 = vld [vmem:[%s2275] ss:$2 sm:$0xff]
      %s2277 = scalar_lea.vmem %s504, 408 [#allocation2]
      %v2278 = vld [vmem:[%s2277] ss:$2 sm:$0xff]
      %s2279 = scalar_lea.vmem %s504, 488 [#allocation2]
      %v2280 = vld [vmem:[%s2279] ss:$2 sm:$0xff]
      %s2281 = scalar_lea.vmem %s504, 504 [#allocation2]
      %v2282 = vld [vmem:[%s2281] ss:$2 sm:$0xff]
      %s2283 = scalar_lea.vmem %s504, 584 [#allocation2]
      %v2284 = vld [vmem:[%s2283] ss:$2 sm:$0xff]
      %s2285 = scalar_lea.vmem %s504, 600 [#allocation2]
      %v2286 = vld [vmem:[%s2285] ss:$2 sm:$0xff]
      %s2287 = scalar_lea.vmem %s504, 680 [#allocation2]
      %v2288 = vld [vmem:[%s2287] ss:$2 sm:$0xff]
      %s2289 = scalar_lea.vmem %s504, 696 [#allocation2]
      %v2290 = vld [vmem:[%s2289] ss:$2 sm:$0xff]
      %s2291 = scalar_lea.vmem %s504, 776 [#allocation2]
      %v2292 = vld [vmem:[%s2291] ss:$2 sm:$0xff]
      %s2293 = scalar_lea.vmem %s504, 792 [#allocation2]
      %v2294 = vld [vmem:[%s2293] ss:$2 sm:$0xff]
      %s2295 = scalar_lea.vmem %s504, 872 [#allocation2]
      %v2296 = vld [vmem:[%s2295] ss:$2 sm:$0xff]
      %s2297 = scalar_lea.vmem %s504, 888 [#allocation2]
      %v2298 = vld [vmem:[%s2297] ss:$2 sm:$0xff]
      %s2299 = scalar_lea.vmem %s504, 968 [#allocation2]
      %v2300 = vld [vmem:[%s2299] ss:$2 sm:$0xff]
      %s2301 = scalar_lea.vmem %s504, 984 [#allocation2]
      %v2302 = vld [vmem:[%s2301] ss:$2 sm:$0xff]
      %s2303 = scalar_lea.vmem %s504, 1064 [#allocation2]
      %v2304 = vld [vmem:[%s2303] ss:$2 sm:$0xff]
      %s2305 = scalar_lea.vmem %s504, 1080 [#allocation2]
      %v2306 = vld [vmem:[%s2305] ss:$2 sm:$0xff]
      %s2307 = scalar_lea.vmem %s504, 1160 [#allocation2]
      %v2308 = vld [vmem:[%s2307] ss:$2 sm:$0xff]
      %s2309 = scalar_lea.vmem %s504, 1176 [#allocation2]
      %v2310 = vld [vmem:[%s2309] ss:$2 sm:$0xff]
      %s2311 = scalar_lea.vmem %s504, 1256 [#allocation2]
      %v2312 = vld [vmem:[%s2311] ss:$2 sm:$0xff]
      %s2313 = scalar_lea.vmem %s504, 1272 [#allocation2]
      %v2314 = vld [vmem:[%s2313] ss:$2 sm:$0xff]
      %s2315 = scalar_lea.vmem %s504, 1352 [#allocation2]
      %v2316 = vld [vmem:[%s2315] ss:$2 sm:$0xff]
      %s2317 = scalar_lea.vmem %s504, 1368 [#allocation2]
      %v2318 = vld [vmem:[%s2317] ss:$2 sm:$0xff]
      %s2319 = scalar_lea.vmem %s504, 1448 [#allocation2]
      %v2320 = vld [vmem:[%s2319] ss:$2 sm:$0xff]
      %s2321 = scalar_lea.vmem %s504, 1464 [#allocation2]
      %v2322 = vld [vmem:[%s2321] ss:$2 sm:$0xff]
      %v2324 = vsel %vm171, %v2260, 0
      %v2327 = vsel %vm171, %v2262, 0
      %v2330 = vsel %vm171, %v2264, 0
      %v2333 = vsel %vm171, %v2266, 0
      %v2336 = vsel %vm171, %v2268, 0
      %v2339 = vsel %vm171, %v2270, 0
      %v2342 = vsel %vm171, %v2272, 0
      %v2345 = vsel %vm171, %v2274, 0
      %v2348 = vsel %vm171, %v2276, 0
      %v2351 = vsel %vm171, %v2278, 0
      %v2354 = vsel %vm171, %v2280, 0
      %v2357 = vsel %vm171, %v2282, 0
      %v2360 = vsel %vm171, %v2284, 0
      %v2363 = vsel %vm171, %v2286, 0
      %v2366 = vsel %vm171, %v2288, 0
      %v2369 = vsel %vm171, %v2290, 0
      %v2372 = vsel %vm171, %v2292, 0
      %v2375 = vsel %vm171, %v2294, 0
      %v2378 = vsel %vm171, %v2296, 0
      %v2381 = vsel %vm171, %v2298, 0
      %v2384 = vsel %vm171, %v2300, 0
      %v2387 = vsel %vm171, %v2302, 0
      %v2390 = vsel %vm171, %v2304, 0
      %v2393 = vsel %vm171, %v2306, 0
      %v2396 = vsel %vm171, %v2308, 0
      %v2399 = vsel %vm171, %v2310, 0
      %v2402 = vsel %vm171, %v2312, 0
      %v2405 = vsel %vm171, %v2314, 0
      %v2408 = vsel %vm171, %v2316, 0
      %v2411 = vsel %vm171, %v2318, 0
      %v2414 = vsel %vm171, %v2320, 0
      %v2417 = vsel %vm171, %v2322, 0
      %v2420 = vsel %vm866, %v637, 0
      %2422 = vmatprep.subr.mxu0 0.0
      %2423 = vmatpush1.msra.mxu0 0.0
      %2424 = vmatprep.subr.mxu0 0.0
      %2425 = vmatpush1.msra.mxu0 0.0
      %2426 = vmatprep.subr.mxu0 0.0
      %2427 = vmatpush1.msra.mxu0 0.0
      %2428 = vmatprep.subr.mxu0 0.0
      %2429 = vmatpush1.msra.mxu0 0.0
      %2430 = vmatprep.subr.mxu0 0.0
      %2431 = vmatpush1.msra.mxu0 0.0
      %2432 = vmatprep.subr.mxu0 0.0
      %2433 = vmatpush1.msra.mxu0 0.0
      %2434 = vmatprep.subr.mxu0 0.0
      %2435 = vmatpush1.msra.mxu0 0.0
      %2436 = vmatprep.subr.mxu0 0.0
      %2437 = vmatpush1.msra.mxu0 0.0
      %2438 = vmatprep.subr.mxu0 0.0
      %2439 = vmatpush1.msra.mxu0 0.0
      %2440 = vmatprep.subr.mxu0 0.0
      %2441 = vmatpush1.msra.mxu0 0.0
      %2442 = vmatprep.subr.mxu0 0.0
      %2443 = vmatpush1.msra.mxu0 0.0
      %2444 = vmatprep.subr.mxu0 0.0
      %2445 = vmatpush1.msra.mxu0 0.0
      %2446 = vmatprep.subr.mxu0 0.0
      %2447 = vmatpush1.msra.mxu0 0.0
      %2448 = vmatprep.subr.mxu0 0.0
      %2449 = vmatpush1.msra.mxu0 0.0
      %2450 = vmatprep.subr.mxu0 0.0
      %2451 = vmatpush1.msra.mxu0 0.0
      %2452 = vmatprep.subr.mxu0 0.0
      %2453 = vmatpush1.msra.mxu0 %v2420
      %2454 = vmatprep.subr.mxu0 0.0
      %2455 = vmatpush2.msra.mxu0 0.0
      %2456 = vmatprep.subr.mxu0 0.0
      %2457 = vmatpush2.msra.mxu0 0.0
      %2458 = vmatprep.subr.mxu0 0.0
      %2459 = vmatpush2.msra.mxu0 0.0
      %2460 = vmatprep.subr.mxu0 0.0
      %2461 = vmatpush2.msra.mxu0 0.0
      %2462 = vmatprep.subr.mxu0 0.0
      %2463 = vmatpush2.msra.mxu0 0.0
      %2464 = vmatprep.subr.mxu0 0.0
      %2465 = vmatpush2.msra.mxu0 0.0
      %2466 = vmatprep.subr.mxu0 0.0
      %2467 = vmatpush2.msra.mxu0 0.0
      %2468 = vmatprep.subr.mxu0 0.0
      %2469 = vmatpush2.msra.mxu0 0.0
      %2470 = vmatprep.subr.mxu0 0.0
      %2471 = vmatpush2.msra.mxu0 0.0
      %2472 = vmatprep.subr.mxu0 0.0
      %2473 = vmatpush2.msra.mxu0 0.0
      %2474 = vmatprep.subr.mxu0 0.0
      %2475 = vmatpush2.msra.mxu0 0.0
      %2476 = vmatprep.subr.mxu0 0.0
      %2477 = vmatpush2.msra.mxu0 0.0
      %2478 = vmatprep.subr.mxu0 0.0
      %2479 = vmatpush2.msra.mxu0 0.0
      %2480 = vmatprep.subr.mxu0 0.0
      %2481 = vmatpush2.msra.mxu0 0.0
      %2482 = vmatprep.subr.mxu0 0.0
      %2483 = vmatpush2.msra.mxu0 0.0
      %2484 = vmatprep.subr.mxu0 0.0
      %2485 = vmatpush2.msra.mxu0 0.0
      %2486 = vmatprep.mubr.f32.mxu0 0.0
      %2487 = vmatmul.mubr.f32.gmra.mxu0 %v2324
      %v2488 = vpop.f32.mrf.mxu0
      %v2489 = vadd.f32 0.0, %v2488
      %v2490 = vpop.f32.mrf.mxu0
      %2491 = vmatprep.mubr.f32.mxu0 0.0
      %2492 = vmatmul.mubr.f32.gmra.mxu0 %v2327
      %v2493 = vpop.f32.mrf.mxu0
      %v2494 = vadd.f32 0.0, %v2493
      %v2495 = vpop.f32.mrf.mxu0
      %2496 = vmatprep.mubr.f32.mxu0 0.0
      %2497 = vmatmul.mubr.f32.gmra.mxu0 %v2330
      %v2498 = vpop.f32.mrf.mxu0
      %v2499 = vadd.f32 0.0, %v2498
      %v2500 = vpop.f32.mrf.mxu0
      %2501 = vmatprep.mubr.f32.mxu0 0.0
      %2502 = vmatmul.mubr.f32.gmra.mxu0 %v2333
      %v2503 = vpop.f32.mrf.mxu0
      %v2504 = vadd.f32 0.0, %v2503
      %v2505 = vpop.f32.mrf.mxu0
      %2506 = vmatprep.mubr.f32.mxu0 0.0
      %2507 = vmatmul.mubr.f32.gmra.mxu0 %v2336
      %v2508 = vpop.f32.mrf.mxu0
      %v2509 = vadd.f32 0.0, %v2508
      %v2510 = vpop.f32.mrf.mxu0
      %2511 = vmatprep.mubr.f32.mxu0 0.0
      %2512 = vmatmul.mubr.f32.gmra.mxu0 %v2339
      %v2513 = vpop.f32.mrf.mxu0
      %v2514 = vadd.f32 0.0, %v2513
      %v2515 = vpop.f32.mrf.mxu0
      %2516 = vmatprep.mubr.f32.mxu0 0.0
      %2517 = vmatmul.mubr.f32.gmra.mxu0 %v2342
      %v2518 = vpop.f32.mrf.mxu0
      %v2519 = vadd.f32 0.0, %v2518
      %v2520 = vpop.f32.mrf.mxu0
      %2521 = vmatprep.mubr.f32.mxu0 0.0
      %2522 = vmatmul.mubr.f32.gmra.mxu0 %v2345
      %v2523 = vpop.f32.mrf.mxu0
      %v2524 = vadd.f32 0.0, %v2523
      %v2525 = vpop.f32.mrf.mxu0
      %2526 = vmatprep.mubr.f32.mxu0 0.0
      %2527 = vmatmul.mubr.f32.gmra.mxu0 %v2348
      %v2528 = vpop.f32.mrf.mxu0
      %v2529 = vadd.f32 0.0, %v2528
      %v2530 = vpop.f32.mrf.mxu0
      %2531 = vmatprep.mubr.f32.mxu0 0.0
      %2532 = vmatmul.mubr.f32.gmra.mxu0 %v2351
      %v2533 = vpop.f32.mrf.mxu0
      %v2534 = vadd.f32 0.0, %v2533
      %v2535 = vpop.f32.mrf.mxu0
      %2536 = vmatprep.mubr.f32.mxu0 0.0
      %2537 = vmatmul.mubr.f32.gmra.mxu0 %v2354
      %v2538 = vpop.f32.mrf.mxu0
      %v2539 = vadd.f32 0.0, %v2538
      %v2540 = vpop.f32.mrf.mxu0
      %2541 = vmatprep.mubr.f32.mxu0 0.0
      %2542 = vmatmul.mubr.f32.gmra.mxu0 %v2357
      %v2543 = vpop.f32.mrf.mxu0
      %v2544 = vadd.f32 0.0, %v2543
      %v2545 = vpop.f32.mrf.mxu0
      %2546 = vmatprep.mubr.f32.mxu0 0.0
      %2547 = vmatmul.mubr.f32.gmra.mxu0 %v2360
      %v2548 = vpop.f32.mrf.mxu0
      %v2549 = vadd.f32 0.0, %v2548
      %v2550 = vpop.f32.mrf.mxu0
      %2551 = vmatprep.mubr.f32.mxu0 0.0
      %2552 = vmatmul.mubr.f32.gmra.mxu0 %v2363
      %v2553 = vpop.f32.mrf.mxu0
      %v2554 = vadd.f32 0.0, %v2553
      %v2555 = vpop.f32.mrf.mxu0
      %2556 = vmatprep.mubr.f32.mxu0 0.0
      %2557 = vmatmul.mubr.f32.gmra.mxu0 %v2366
      %v2558 = vpop.f32.mrf.mxu0
      %v2559 = vadd.f32 0.0, %v2558
      %v2560 = vpop.f32.mrf.mxu0
      %2561 = vmatprep.mubr.f32.mxu0 0.0
      %2562 = vmatmul.mubr.f32.gmra.mxu0 %v2369
      %v2563 = vpop.f32.mrf.mxu0
      %v2564 = vadd.f32 0.0, %v2563
      %v2565 = vpop.f32.mrf.mxu0
      %2566 = vmatprep.mubr.f32.mxu0 0.0
      %2567 = vmatmul.mubr.f32.gmra.mxu0 %v2372
      %v2568 = vpop.f32.mrf.mxu0
      %v2569 = vadd.f32 0.0, %v2568
      %v2570 = vpop.f32.mrf.mxu0
      %2571 = vmatprep.mubr.f32.mxu0 0.0
      %2572 = vmatmul.mubr.f32.gmra.mxu0 %v2375
      %v2573 = vpop.f32.mrf.mxu0
      %v2574 = vadd.f32 0.0, %v2573
      %v2575 = vpop.f32.mrf.mxu0
      %2576 = vmatprep.mubr.f32.mxu0 0.0
      %2577 = vmatmul.mubr.f32.gmra.mxu0 %v2378
      %v2578 = vpop.f32.mrf.mxu0
      %v2579 = vadd.f32 0.0, %v2578
      %v2580 = vpop.f32.mrf.mxu0
      %2581 = vmatprep.mubr.f32.mxu0 0.0
      %2582 = vmatmul.mubr.f32.gmra.mxu0 %v2381
      %v2583 = vpop.f32.mrf.mxu0
      %v2584 = vadd.f32 0.0, %v2583
      %v2585 = vpop.f32.mrf.mxu0
      %2586 = vmatprep.mubr.f32.mxu0 0.0
      %2587 = vmatmul.mubr.f32.gmra.mxu0 %v2384
      %v2588 = vpop.f32.mrf.mxu0
      %v2589 = vadd.f32 0.0, %v2588
      %v2590 = vpop.f32.mrf.mxu0
      %2591 = vmatprep.mubr.f32.mxu0 0.0
      %2592 = vmatmul.mubr.f32.gmra.mxu0 %v2387
      %v2593 = vpop.f32.mrf.mxu0
      %v2594 = vadd.f32 0.0, %v2593
      %v2595 = vpop.f32.mrf.mxu0
      %2596 = vmatprep.mubr.f32.mxu0 0.0
      %2597 = vmatmul.mubr.f32.gmra.mxu0 %v2390
      %v2598 = vpop.f32.mrf.mxu0
      %v2599 = vadd.f32 0.0, %v2598
      %v2600 = vpop.f32.mrf.mxu0
      %2601 = vmatprep.mubr.f32.mxu0 0.0
      %2602 = vmatmul.mubr.f32.gmra.mxu0 %v2393
      %v2603 = vpop.f32.mrf.mxu0
      %v2604 = vadd.f32 0.0, %v2603
      %v2605 = vpop.f32.mrf.mxu0
      %2606 = vmatprep.mubr.f32.mxu0 0.0
      %2607 = vmatmul.mubr.f32.gmra.mxu0 %v2396
      %v2608 = vpop.f32.mrf.mxu0
      %v2609 = vadd.f32 0.0, %v2608
      %v2610 = vpop.f32.mrf.mxu0
      %2611 = vmatprep.mubr.f32.mxu0 0.0
      %2612 = vmatmul.mubr.f32.gmra.mxu0 %v2399
      %v2613 = vpop.f32.mrf.mxu0
      %v2614 = vadd.f32 0.0, %v2613
      %v2615 = vpop.f32.mrf.mxu0
      %2616 = vmatprep.mubr.f32.mxu0 0.0
      %2617 = vmatmul.mubr.f32.gmra.mxu0 %v2402
      %v2618 = vpop.f32.mrf.mxu0
      %v2619 = vadd.f32 0.0, %v2618
      %v2620 = vpop.f32.mrf.mxu0
      %2621 = vmatprep.mubr.f32.mxu0 0.0
      %2622 = vmatmul.mubr.f32.gmra.mxu0 %v2405
      %v2623 = vpop.f32.mrf.mxu0
      %v2624 = vadd.f32 0.0, %v2623
      %v2625 = vpop.f32.mrf.mxu0
      %2626 = vmatprep.mubr.f32.mxu0 0.0
      %2627 = vmatmul.mubr.f32.gmra.mxu0 %v2408
      %v2628 = vpop.f32.mrf.mxu0
      %v2629 = vadd.f32 0.0, %v2628
      %v2630 = vpop.f32.mrf.mxu0
      %2631 = vmatprep.mubr.f32.mxu0 0.0
      %2632 = vmatmul.mubr.f32.gmra.mxu0 %v2411
      %v2633 = vpop.f32.mrf.mxu0
      %v2634 = vadd.f32 0.0, %v2633
      %v2635 = vpop.f32.mrf.mxu0
      %2636 = vmatprep.mubr.f32.mxu0 0.0
      %2637 = vmatmul.mubr.f32.gmra.mxu0 %v2414
      %v2638 = vpop.f32.mrf.mxu0
      %v2639 = vadd.f32 0.0, %v2638
      %v2640 = vpop.f32.mrf.mxu0
      %2641 = vmatprep.mubr.f32.mxu0 0.0
      %2642 = vmatmul.mubr.f32.gmra.mxu0 %v2417
      %v2643 = vpop.f32.mrf.mxu0
      %v2644 = vadd.f32 0.0, %v2643
      %v2645 = vpop.f32.mrf.mxu0
      %2646 = vdwg.mxu0
      %v2647 = vadd.f32 %v2227, %v2489
      %v2648 = vadd.f32 %v2228, %v2494
      %v2649 = vadd.f32 %v2229, %v2499
      %v2650 = vadd.f32 %v2230, %v2504
      %v2651 = vadd.f32 %v2231, %v2509
      %v2652 = vadd.f32 %v2232, %v2514
      %v2653 = vadd.f32 %v2233, %v2519
      %v2654 = vadd.f32 %v2234, %v2524
      %v2655 = vadd.f32 %v2235, %v2529
      %v2656 = vadd.f32 %v2236, %v2534
      %v2657 = vadd.f32 %v2237, %v2539
      %v2658 = vadd.f32 %v2238, %v2544
      %v2659 = vadd.f32 %v2239, %v2549
      %v2660 = vadd.f32 %v2240, %v2554
      %v2661 = vadd.f32 %v2241, %v2559
      %v2662 = vadd.f32 %v2242, %v2564
      %v2663 = vadd.f32 %v2243, %v2569
      %v2664 = vadd.f32 %v2244, %v2574
      %v2665 = vadd.f32 %v2245, %v2579
      %v2666 = vadd.f32 %v2246, %v2584
      %v2667 = vadd.f32 %v2247, %v2589
      %v2668 = vadd.f32 %v2248, %v2594
      %v2669 = vadd.f32 %v2249, %v2599
      %v2670 = vadd.f32 %v2250, %v2604
      %v2671 = vadd.f32 %v2251, %v2609
      %v2672 = vadd.f32 %v2252, %v2614
      %v2673 = vadd.f32 %v2253, %v2619
      %v2674 = vadd.f32 %v2254, %v2624
      %v2675 = vadd.f32 %v2255, %v2629
      %v2676 = vadd.f32 %v2256, %v2634
      %v2677 = vadd.f32 %v2257, %v2639
      %v2678 = vadd.f32 %v2258, %v2644
      %s2679 = scalar_lea.vmem %s504, 9 [#allocation2]
      %v2680 = vld [vmem:[%s2679] ss:$2 sm:$0xff]
      %s2681 = scalar_lea.vmem %s504, 25 [#allocation2]
      %v2682 = vld [vmem:[%s2681] ss:$2 sm:$0xff]
      %s2683 = scalar_lea.vmem %s504, 105 [#allocation2]
      %v2684 = vld [vmem:[%s2683] ss:$2 sm:$0xff]
      %s2685 = scalar_lea.vmem %s504, 121 [#allocation2]
      %v2686 = vld [vmem:[%s2685] ss:$2 sm:$0xff]
      %s2687 = scalar_lea.vmem %s504, 201 [#allocation2]
      %v2688 = vld [vmem:[%s2687] ss:$2 sm:$0xff]
      %s2689 = scalar_lea.vmem %s504, 217 [#allocation2]
      %v2690 = vld [vmem:[%s2689] ss:$2 sm:$0xff]
      %s2691 = scalar_lea.vmem %s504, 297 [#allocation2]
      %v2692 = vld [vmem:[%s2691] ss:$2 sm:$0xff]
      %s2693 = scalar_lea.vmem %s504, 313 [#allocation2]
      %v2694 = vld [vmem:[%s2693] ss:$2 sm:$0xff]
      %s2695 = scalar_lea.vmem %s504, 393 [#allocation2]
      %v2696 = vld [vmem:[%s2695] ss:$2 sm:$0xff]
      %s2697 = scalar_lea.vmem %s504, 409 [#allocation2]
      %v2698 = vld [vmem:[%s2697] ss:$2 sm:$0xff]
      %s2699 = scalar_lea.vmem %s504, 489 [#allocation2]
      %v2700 = vld [vmem:[%s2699] ss:$2 sm:$0xff]
      %s2701 = scalar_lea.vmem %s504, 505 [#allocation2]
      %v2702 = vld [vmem:[%s2701] ss:$2 sm:$0xff]
      %s2703 = scalar_lea.vmem %s504, 585 [#allocation2]
      %v2704 = vld [vmem:[%s2703] ss:$2 sm:$0xff]
      %s2705 = scalar_lea.vmem %s504, 601 [#allocation2]
      %v2706 = vld [vmem:[%s2705] ss:$2 sm:$0xff]
      %s2707 = scalar_lea.vmem %s504, 681 [#allocation2]
      %v2708 = vld [vmem:[%s2707] ss:$2 sm:$0xff]
      %s2709 = scalar_lea.vmem %s504, 697 [#allocation2]
      %v2710 = vld [vmem:[%s2709] ss:$2 sm:$0xff]
      %s2711 = scalar_lea.vmem %s504, 777 [#allocation2]
      %v2712 = vld [vmem:[%s2711] ss:$2 sm:$0xff]
      %s2713 = scalar_lea.vmem %s504, 793 [#allocation2]
      %v2714 = vld [vmem:[%s2713] ss:$2 sm:$0xff]
      %s2715 = scalar_lea.vmem %s504, 873 [#allocation2]
      %v2716 = vld [vmem:[%s2715] ss:$2 sm:$0xff]
      %s2717 = scalar_lea.vmem %s504, 889 [#allocation2]
      %v2718 = vld [vmem:[%s2717] ss:$2 sm:$0xff]
      %s2719 = scalar_lea.vmem %s504, 969 [#allocation2]
      %v2720 = vld [vmem:[%s2719] ss:$2 sm:$0xff]
      %s2721 = scalar_lea.vmem %s504, 985 [#allocation2]
      %v2722 = vld [vmem:[%s2721] ss:$2 sm:$0xff]
      %s2723 = scalar_lea.vmem %s504, 1065 [#allocation2]
      %v2724 = vld [vmem:[%s2723] ss:$2 sm:$0xff]
      %s2725 = scalar_lea.vmem %s504, 1081 [#allocation2]
      %v2726 = vld [vmem:[%s2725] ss:$2 sm:$0xff]
      %s2727 = scalar_lea.vmem %s504, 1161 [#allocation2]
      %v2728 = vld [vmem:[%s2727] ss:$2 sm:$0xff]
      %s2729 = scalar_lea.vmem %s504, 1177 [#allocation2]
      %v2730 = vld [vmem:[%s2729] ss:$2 sm:$0xff]
      %s2731 = scalar_lea.vmem %s504, 1257 [#allocation2]
      %v2732 = vld [vmem:[%s2731] ss:$2 sm:$0xff]
      %s2733 = scalar_lea.vmem %s504, 1273 [#allocation2]
      %v2734 = vld [vmem:[%s2733] ss:$2 sm:$0xff]
      %s2735 = scalar_lea.vmem %s504, 1353 [#allocation2]
      %v2736 = vld [vmem:[%s2735] ss:$2 sm:$0xff]
      %s2737 = scalar_lea.vmem %s504, 1369 [#allocation2]
      %v2738 = vld [vmem:[%s2737] ss:$2 sm:$0xff]
      %s2739 = scalar_lea.vmem %s504, 1449 [#allocation2]
      %v2740 = vld [vmem:[%s2739] ss:$2 sm:$0xff]
      %s2741 = scalar_lea.vmem %s504, 1465 [#allocation2]
      %v2742 = vld [vmem:[%s2741] ss:$2 sm:$0xff]
      %v2744 = vsel %vm171, %v2680, 0
      %v2747 = vsel %vm171, %v2682, 0
      %v2750 = vsel %vm171, %v2684, 0
      %v2753 = vsel %vm171, %v2686, 0
      %v2756 = vsel %vm171, %v2688, 0
      %v2759 = vsel %vm171, %v2690, 0
      %v2762 = vsel %vm171, %v2692, 0
      %v2765 = vsel %vm171, %v2694, 0
      %v2768 = vsel %vm171, %v2696, 0
      %v2771 = vsel %vm171, %v2698, 0
      %v2774 = vsel %vm171, %v2700, 0
      %v2777 = vsel %vm171, %v2702, 0
      %v2780 = vsel %vm171, %v2704, 0
      %v2783 = vsel %vm171, %v2706, 0
      %v2786 = vsel %vm171, %v2708, 0
      %v2789 = vsel %vm171, %v2710, 0
      %v2792 = vsel %vm171, %v2712, 0
      %v2795 = vsel %vm171, %v2714, 0
      %v2798 = vsel %vm171, %v2716, 0
      %v2801 = vsel %vm171, %v2718, 0
      %v2804 = vsel %vm171, %v2720, 0
      %v2807 = vsel %vm171, %v2722, 0
      %v2810 = vsel %vm171, %v2724, 0
      %v2813 = vsel %vm171, %v2726, 0
      %v2816 = vsel %vm171, %v2728, 0
      %v2819 = vsel %vm171, %v2730, 0
      %v2822 = vsel %vm171, %v2732, 0
      %v2825 = vsel %vm171, %v2734, 0
      %v2828 = vsel %vm171, %v2736, 0
      %v2831 = vsel %vm171, %v2738, 0
      %v2834 = vsel %vm171, %v2740, 0
      %v2837 = vsel %vm171, %v2742, 0
      %v2840 = vsel %vm866, %v638, 0
      %2842 = vmatprep.subr.mxu0 0.0
      %2843 = vmatpush1.msra.mxu0 0.0
      %2844 = vmatprep.subr.mxu0 0.0
      %2845 = vmatpush1.msra.mxu0 0.0
      %2846 = vmatprep.subr.mxu0 0.0
      %2847 = vmatpush1.msra.mxu0 0.0
      %2848 = vmatprep.subr.mxu0 0.0
      %2849 = vmatpush1.msra.mxu0 0.0
      %2850 = vmatprep.subr.mxu0 0.0
      %2851 = vmatpush1.msra.mxu0 0.0
      %2852 = vmatprep.subr.mxu0 0.0
      %2853 = vmatpush1.msra.mxu0 0.0
      %2854 = vmatprep.subr.mxu0 0.0
      %2855 = vmatpush1.msra.mxu0 0.0
      %2856 = vmatprep.subr.mxu0 0.0
      %2857 = vmatpush1.msra.mxu0 0.0
      %2858 = vmatprep.subr.mxu0 0.0
      %2859 = vmatpush1.msra.mxu0 0.0
      %2860 = vmatprep.subr.mxu0 0.0
      %2861 = vmatpush1.msra.mxu0 0.0
      %2862 = vmatprep.subr.mxu0 0.0
      %2863 = vmatpush1.msra.mxu0 0.0
      %2864 = vmatprep.subr.mxu0 0.0
      %2865 = vmatpush1.msra.mxu0 0.0
      %2866 = vmatprep.subr.mxu0 0.0
      %2867 = vmatpush1.msra.mxu0 0.0
      %2868 = vmatprep.subr.mxu0 0.0
      %2869 = vmatpush1.msra.mxu0 0.0
      %2870 = vmatprep.subr.mxu0 0.0
      %2871 = vmatpush1.msra.mxu0 0.0
      %2872 = vmatprep.subr.mxu0 0.0
      %2873 = vmatpush1.msra.mxu0 %v2840
      %2874 = vmatprep.subr.mxu0 0.0
      %2875 = vmatpush2.msra.mxu0 0.0
      %2876 = vmatprep.subr.mxu0 0.0
      %2877 = vmatpush2.msra.mxu0 0.0
      %2878 = vmatprep.subr.mxu0 0.0
      %2879 = vmatpush2.msra.mxu0 0.0
      %2880 = vmatprep.subr.mxu0 0.0
      %2881 = vmatpush2.msra.mxu0 0.0
      %2882 = vmatprep.subr.mxu0 0.0
      %2883 = vmatpush2.msra.mxu0 0.0
      %2884 = vmatprep.subr.mxu0 0.0
      %2885 = vmatpush2.msra.mxu0 0.0
      %2886 = vmatprep.subr.mxu0 0.0
      %2887 = vmatpush2.msra.mxu0 0.0
      %2888 = vmatprep.subr.mxu0 0.0
      %2889 = vmatpush2.msra.mxu0 0.0
      %2890 = vmatprep.subr.mxu0 0.0
      %2891 = vmatpush2.msra.mxu0 0.0
      %2892 = vmatprep.subr.mxu0 0.0
      %2893 = vmatpush2.msra.mxu0 0.0
      %2894 = vmatprep.subr.mxu0 0.0
      %2895 = vmatpush2.msra.mxu0 0.0
      %2896 = vmatprep.subr.mxu0 0.0
      %2897 = vmatpush2.msra.mxu0 0.0
      %2898 = vmatprep.subr.mxu0 0.0
      %2899 = vmatpush2.msra.mxu0 0.0
      %2900 = vmatprep.subr.mxu0 0.0
      %2901 = vmatpush2.msra.mxu0 0.0
      %2902 = vmatprep.subr.mxu0 0.0
      %2903 = vmatpush2.msra.mxu0 0.0
      %2904 = vmatprep.subr.mxu0 0.0
      %2905 = vmatpush2.msra.mxu0 0.0
      %2906 = vmatprep.mubr.f32.mxu0 0.0
      %2907 = vmatmul.mubr.f32.gmra.mxu0 %v2744
      %v2908 = vpop.f32.mrf.mxu0
      %v2909 = vadd.f32 0.0, %v2908
      %v2910 = vpop.f32.mrf.mxu0
      %2911 = vmatprep.mubr.f32.mxu0 0.0
      %2912 = vmatmul.mubr.f32.gmra.mxu0 %v2747
      %v2913 = vpop.f32.mrf.mxu0
      %v2914 = vadd.f32 0.0, %v2913
      %v2915 = vpop.f32.mrf.mxu0
      %2916 = vmatprep.mubr.f32.mxu0 0.0
      %2917 = vmatmul.mubr.f32.gmra.mxu0 %v2750
      %v2918 = vpop.f32.mrf.mxu0
      %v2919 = vadd.f32 0.0, %v2918
      %v2920 = vpop.f32.mrf.mxu0
      %2921 = vmatprep.mubr.f32.mxu0 0.0
      %2922 = vmatmul.mubr.f32.gmra.mxu0 %v2753
      %v2923 = vpop.f32.mrf.mxu0
      %v2924 = vadd.f32 0.0, %v2923
      %v2925 = vpop.f32.mrf.mxu0
      %2926 = vmatprep.mubr.f32.mxu0 0.0
      %2927 = vmatmul.mubr.f32.gmra.mxu0 %v2756
      %v2928 = vpop.f32.mrf.mxu0
      %v2929 = vadd.f32 0.0, %v2928
      %v2930 = vpop.f32.mrf.mxu0
      %2931 = vmatprep.mubr.f32.mxu0 0.0
      %2932 = vmatmul.mubr.f32.gmra.mxu0 %v2759
      %v2933 = vpop.f32.mrf.mxu0
      %v2934 = vadd.f32 0.0, %v2933
      %v2935 = vpop.f32.mrf.mxu0
      %2936 = vmatprep.mubr.f32.mxu0 0.0
      %2937 = vmatmul.mubr.f32.gmra.mxu0 %v2762
      %v2938 = vpop.f32.mrf.mxu0
      %v2939 = vadd.f32 0.0, %v2938
      %v2940 = vpop.f32.mrf.mxu0
      %2941 = vmatprep.mubr.f32.mxu0 0.0
      %2942 = vmatmul.mubr.f32.gmra.mxu0 %v2765
      %v2943 = vpop.f32.mrf.mxu0
      %v2944 = vadd.f32 0.0, %v2943
      %v2945 = vpop.f32.mrf.mxu0
      %2946 = vmatprep.mubr.f32.mxu0 0.0
      %2947 = vmatmul.mubr.f32.gmra.mxu0 %v2768
      %v2948 = vpop.f32.mrf.mxu0
      %v2949 = vadd.f32 0.0, %v2948
      %v2950 = vpop.f32.mrf.mxu0
      %2951 = vmatprep.mubr.f32.mxu0 0.0
      %2952 = vmatmul.mubr.f32.gmra.mxu0 %v2771
      %v2953 = vpop.f32.mrf.mxu0
      %v2954 = vadd.f32 0.0, %v2953
      %v2955 = vpop.f32.mrf.mxu0
      %2956 = vmatprep.mubr.f32.mxu0 0.0
      %2957 = vmatmul.mubr.f32.gmra.mxu0 %v2774
      %v2958 = vpop.f32.mrf.mxu0
      %v2959 = vadd.f32 0.0, %v2958
      %v2960 = vpop.f32.mrf.mxu0
      %2961 = vmatprep.mubr.f32.mxu0 0.0
      %2962 = vmatmul.mubr.f32.gmra.mxu0 %v2777
      %v2963 = vpop.f32.mrf.mxu0
      %v2964 = vadd.f32 0.0, %v2963
      %v2965 = vpop.f32.mrf.mxu0
      %2966 = vmatprep.mubr.f32.mxu0 0.0
      %2967 = vmatmul.mubr.f32.gmra.mxu0 %v2780
      %v2968 = vpop.f32.mrf.mxu0
      %v2969 = vadd.f32 0.0, %v2968
      %v2970 = vpop.f32.mrf.mxu0
      %2971 = vmatprep.mubr.f32.mxu0 0.0
      %2972 = vmatmul.mubr.f32.gmra.mxu0 %v2783
      %v2973 = vpop.f32.mrf.mxu0
      %v2974 = vadd.f32 0.0, %v2973
      %v2975 = vpop.f32.mrf.mxu0
      %2976 = vmatprep.mubr.f32.mxu0 0.0
      %2977 = vmatmul.mubr.f32.gmra.mxu0 %v2786
      %v2978 = vpop.f32.mrf.mxu0
      %v2979 = vadd.f32 0.0, %v2978
      %v2980 = vpop.f32.mrf.mxu0
      %2981 = vmatprep.mubr.f32.mxu0 0.0
      %2982 = vmatmul.mubr.f32.gmra.mxu0 %v2789
      %v2983 = vpop.f32.mrf.mxu0
      %v2984 = vadd.f32 0.0, %v2983
      %v2985 = vpop.f32.mrf.mxu0
      %2986 = vmatprep.mubr.f32.mxu0 0.0
      %2987 = vmatmul.mubr.f32.gmra.mxu0 %v2792
      %v2988 = vpop.f32.mrf.mxu0
      %v2989 = vadd.f32 0.0, %v2988
      %v2990 = vpop.f32.mrf.mxu0
      %2991 = vmatprep.mubr.f32.mxu0 0.0
      %2992 = vmatmul.mubr.f32.gmra.mxu0 %v2795
      %v2993 = vpop.f32.mrf.mxu0
      %v2994 = vadd.f32 0.0, %v2993
      %v2995 = vpop.f32.mrf.mxu0
      %2996 = vmatprep.mubr.f32.mxu0 0.0
      %2997 = vmatmul.mubr.f32.gmra.mxu0 %v2798
      %v2998 = vpop.f32.mrf.mxu0
      %v2999 = vadd.f32 0.0, %v2998
      %v3000 = vpop.f32.mrf.mxu0
      %3001 = vmatprep.mubr.f32.mxu0 0.0
      %3002 = vmatmul.mubr.f32.gmra.mxu0 %v2801
      %v3003 = vpop.f32.mrf.mxu0
      %v3004 = vadd.f32 0.0, %v3003
      %v3005 = vpop.f32.mrf.mxu0
      %3006 = vmatprep.mubr.f32.mxu0 0.0
      %3007 = vmatmul.mubr.f32.gmra.mxu0 %v2804
      %v3008 = vpop.f32.mrf.mxu0
      %v3009 = vadd.f32 0.0, %v3008
      %v3010 = vpop.f32.mrf.mxu0
      %3011 = vmatprep.mubr.f32.mxu0 0.0
      %3012 = vmatmul.mubr.f32.gmra.mxu0 %v2807
      %v3013 = vpop.f32.mrf.mxu0
      %v3014 = vadd.f32 0.0, %v3013
      %v3015 = vpop.f32.mrf.mxu0
      %3016 = vmatprep.mubr.f32.mxu0 0.0
      %3017 = vmatmul.mubr.f32.gmra.mxu0 %v2810
      %v3018 = vpop.f32.mrf.mxu0
      %v3019 = vadd.f32 0.0, %v3018
      %v3020 = vpop.f32.mrf.mxu0
      %3021 = vmatprep.mubr.f32.mxu0 0.0
      %3022 = vmatmul.mubr.f32.gmra.mxu0 %v2813
      %v3023 = vpop.f32.mrf.mxu0
      %v3024 = vadd.f32 0.0, %v3023
      %v3025 = vpop.f32.mrf.mxu0
      %3026 = vmatprep.mubr.f32.mxu0 0.0
      %3027 = vmatmul.mubr.f32.gmra.mxu0 %v2816
      %v3028 = vpop.f32.mrf.mxu0
      %v3029 = vadd.f32 0.0, %v3028
      %v3030 = vpop.f32.mrf.mxu0
      %3031 = vmatprep.mubr.f32.mxu0 0.0
      %3032 = vmatmul.mubr.f32.gmra.mxu0 %v2819
      %v3033 = vpop.f32.mrf.mxu0
      %v3034 = vadd.f32 0.0, %v3033
      %v3035 = vpop.f32.mrf.mxu0
      %3036 = vmatprep.mubr.f32.mxu0 0.0
      %3037 = vmatmul.mubr.f32.gmra.mxu0 %v2822
      %v3038 = vpop.f32.mrf.mxu0
      %v3039 = vadd.f32 0.0, %v3038
      %v3040 = vpop.f32.mrf.mxu0
      %3041 = vmatprep.mubr.f32.mxu0 0.0
      %3042 = vmatmul.mubr.f32.gmra.mxu0 %v2825
      %v3043 = vpop.f32.mrf.mxu0
      %v3044 = vadd.f32 0.0, %v3043
      %v3045 = vpop.f32.mrf.mxu0
      %3046 = vmatprep.mubr.f32.mxu0 0.0
      %3047 = vmatmul.mubr.f32.gmra.mxu0 %v2828
      %v3048 = vpop.f32.mrf.mxu0
      %v3049 = vadd.f32 0.0, %v3048
      %v3050 = vpop.f32.mrf.mxu0
      %3051 = vmatprep.mubr.f32.mxu0 0.0
      %3052 = vmatmul.mubr.f32.gmra.mxu0 %v2831
      %v3053 = vpop.f32.mrf.mxu0
      %v3054 = vadd.f32 0.0, %v3053
      %v3055 = vpop.f32.mrf.mxu0
      %3056 = vmatprep.mubr.f32.mxu0 0.0
      %3057 = vmatmul.mubr.f32.gmra.mxu0 %v2834
      %v3058 = vpop.f32.mrf.mxu0
      %v3059 = vadd.f32 0.0, %v3058
      %v3060 = vpop.f32.mrf.mxu0
      %3061 = vmatprep.mubr.f32.mxu0 0.0
      %3062 = vmatmul.mubr.f32.gmra.mxu0 %v2837
      %v3063 = vpop.f32.mrf.mxu0
      %v3064 = vadd.f32 0.0, %v3063
      %v3065 = vpop.f32.mrf.mxu0
      %3066 = vdwg.mxu0
      %v3067 = vadd.f32 %v2647, %v2909
      %v3068 = vadd.f32 %v2648, %v2914
      %v3069 = vadd.f32 %v2649, %v2919
      %v3070 = vadd.f32 %v2650, %v2924
      %v3071 = vadd.f32 %v2651, %v2929
      %v3072 = vadd.f32 %v2652, %v2934
      %v3073 = vadd.f32 %v2653, %v2939
      %v3074 = vadd.f32 %v2654, %v2944
      %v3075 = vadd.f32 %v2655, %v2949
      %v3076 = vadd.f32 %v2656, %v2954
      %v3077 = vadd.f32 %v2657, %v2959
      %v3078 = vadd.f32 %v2658, %v2964
      %v3079 = vadd.f32 %v2659, %v2969
      %v3080 = vadd.f32 %v2660, %v2974
      %v3081 = vadd.f32 %v2661, %v2979
      %v3082 = vadd.f32 %v2662, %v2984
      %v3083 = vadd.f32 %v2663, %v2989
      %v3084 = vadd.f32 %v2664, %v2994
      %v3085 = vadd.f32 %v2665, %v2999
      %v3086 = vadd.f32 %v2666, %v3004
      %v3087 = vadd.f32 %v2667, %v3009
      %v3088 = vadd.f32 %v2668, %v3014
      %v3089 = vadd.f32 %v2669, %v3019
      %v3090 = vadd.f32 %v2670, %v3024
      %v3091 = vadd.f32 %v2671, %v3029
      %v3092 = vadd.f32 %v2672, %v3034
      %v3093 = vadd.f32 %v2673, %v3039
      %v3094 = vadd.f32 %v2674, %v3044
      %v3095 = vadd.f32 %v2675, %v3049
      %v3096 = vadd.f32 %v2676, %v3054
      %v3097 = vadd.f32 %v2677, %v3059
      %v3098 = vadd.f32 %v2678, %v3064
      %s3099 = scalar_lea.vmem [#allocation2], 96
      %s3100 = scalar_lea.vmem %s3099, 7 [#allocation2]
      %v3101 = vld [vmem:[%s3100] ss:$2 sm:$0xff]
      %s3102 = scalar_lea.vmem %s3099, 23 [#allocation2]
      %v3103 = vld [vmem:[%s3102] ss:$2 sm:$0xff]
      %s3104 = scalar_lea.vmem %s3099, 103 [#allocation2]
      %v3105 = vld [vmem:[%s3104] ss:$2 sm:$0xff]
      %s3106 = scalar_lea.vmem %s3099, 119 [#allocation2]
      %v3107 = vld [vmem:[%s3106] ss:$2 sm:$0xff]
      %s3108 = scalar_lea.vmem %s3099, 199 [#allocation2]
      %v3109 = vld [vmem:[%s3108] ss:$2 sm:$0xff]
      %s3110 = scalar_lea.vmem %s3099, 215 [#allocation2]
      %v3111 = vld [vmem:[%s3110] ss:$2 sm:$0xff]
      %s3112 = scalar_lea.vmem %s3099, 295 [#allocation2]
      %v3113 = vld [vmem:[%s3112] ss:$2 sm:$0xff]
      %s3114 = scalar_lea.vmem %s3099, 311 [#allocation2]
      %v3115 = vld [vmem:[%s3114] ss:$2 sm:$0xff]
      %s3116 = scalar_lea.vmem %s3099, 391 [#allocation2]
      %v3117 = vld [vmem:[%s3116] ss:$2 sm:$0xff]
      %s3118 = scalar_lea.vmem %s3099, 407 [#allocation2]
      %v3119 = vld [vmem:[%s3118] ss:$2 sm:$0xff]
      %s3120 = scalar_lea.vmem %s3099, 487 [#allocation2]
      %v3121 = vld [vmem:[%s3120] ss:$2 sm:$0xff]
      %s3122 = scalar_lea.vmem %s3099, 503 [#allocation2]
      %v3123 = vld [vmem:[%s3122] ss:$2 sm:$0xff]
      %s3124 = scalar_lea.vmem %s3099, 583 [#allocation2]
      %v3125 = vld [vmem:[%s3124] ss:$2 sm:$0xff]
      %s3126 = scalar_lea.vmem %s3099, 599 [#allocation2]
      %v3127 = vld [vmem:[%s3126] ss:$2 sm:$0xff]
      %s3128 = scalar_lea.vmem %s3099, 679 [#allocation2]
      %v3129 = vld [vmem:[%s3128] ss:$2 sm:$0xff]
      %s3130 = scalar_lea.vmem %s3099, 695 [#allocation2]
      %v3131 = vld [vmem:[%s3130] ss:$2 sm:$0xff]
      %s3132 = scalar_lea.vmem %s3099, 775 [#allocation2]
      %v3133 = vld [vmem:[%s3132] ss:$2 sm:$0xff]
      %s3134 = scalar_lea.vmem %s3099, 791 [#allocation2]
      %v3135 = vld [vmem:[%s3134] ss:$2 sm:$0xff]
      %s3136 = scalar_lea.vmem %s3099, 871 [#allocation2]
      %v3137 = vld [vmem:[%s3136] ss:$2 sm:$0xff]
      %s3138 = scalar_lea.vmem %s3099, 887 [#allocation2]
      %v3139 = vld [vmem:[%s3138] ss:$2 sm:$0xff]
      %s3140 = scalar_lea.vmem %s3099, 967 [#allocation2]
      %v3141 = vld [vmem:[%s3140] ss:$2 sm:$0xff]
      %s3142 = scalar_lea.vmem %s3099, 983 [#allocation2]
      %v3143 = vld [vmem:[%s3142] ss:$2 sm:$0xff]
      %s3144 = scalar_lea.vmem %s3099, 1063 [#allocation2]
      %v3145 = vld [vmem:[%s3144] ss:$2 sm:$0xff]
      %s3146 = scalar_lea.vmem %s3099, 1079 [#allocation2]
      %v3147 = vld [vmem:[%s3146] ss:$2 sm:$0xff]
      %s3148 = scalar_lea.vmem %s3099, 1159 [#allocation2]
      %v3149 = vld [vmem:[%s3148] ss:$2 sm:$0xff]
      %s3150 = scalar_lea.vmem %s3099, 1175 [#allocation2]
      %v3151 = vld [vmem:[%s3150] ss:$2 sm:$0xff]
      %s3152 = scalar_lea.vmem %s3099, 1255 [#allocation2]
      %v3153 = vld [vmem:[%s3152] ss:$2 sm:$0xff]
      %s3154 = scalar_lea.vmem %s3099, 1271 [#allocation2]
      %v3155 = vld [vmem:[%s3154] ss:$2 sm:$0xff]
      %s3156 = scalar_lea.vmem %s3099, 1351 [#allocation2]
      %v3157 = vld [vmem:[%s3156] ss:$2 sm:$0xff]
      %s3158 = scalar_lea.vmem %s3099, 1367 [#allocation2]
      %v3159 = vld [vmem:[%s3158] ss:$2 sm:$0xff]
      %s3160 = scalar_lea.vmem %s3099, 1447 [#allocation2]
      %v3161 = vld [vmem:[%s3160] ss:$2 sm:$0xff]
      %s3162 = scalar_lea.vmem %s3099, 1463 [#allocation2]
      %v3163 = vld [vmem:[%s3162] ss:$2 sm:$0xff]
      %v3165 = vsel %vm171, %v3101, 0
      %v3168 = vsel %vm171, %v3103, 0
      %v3171 = vsel %vm171, %v3105, 0
      %v3174 = vsel %vm171, %v3107, 0
      %v3177 = vsel %vm171, %v3109, 0
      %v3180 = vsel %vm171, %v3111, 0
      %v3183 = vsel %vm171, %v3113, 0
      %v3186 = vsel %vm171, %v3115, 0
      %v3189 = vsel %vm171, %v3117, 0
      %v3192 = vsel %vm171, %v3119, 0
      %v3195 = vsel %vm171, %v3121, 0
      %v3198 = vsel %vm171, %v3123, 0
      %v3201 = vsel %vm171, %v3125, 0
      %v3204 = vsel %vm171, %v3127, 0
      %v3207 = vsel %vm171, %v3129, 0
      %v3210 = vsel %vm171, %v3131, 0
      %v3213 = vsel %vm171, %v3133, 0
      %v3216 = vsel %vm171, %v3135, 0
      %v3219 = vsel %vm171, %v3137, 0
      %v3222 = vsel %vm171, %v3139, 0
      %v3225 = vsel %vm171, %v3141, 0
      %v3228 = vsel %vm171, %v3143, 0
      %v3231 = vsel %vm171, %v3145, 0
      %v3234 = vsel %vm171, %v3147, 0
      %v3237 = vsel %vm171, %v3149, 0
      %v3240 = vsel %vm171, %v3151, 0
      %v3243 = vsel %vm171, %v3153, 0
      %v3246 = vsel %vm171, %v3155, 0
      %v3249 = vsel %vm171, %v3157, 0
      %v3252 = vsel %vm171, %v3159, 0
      %v3255 = vsel %vm171, %v3161, 0
      %v3258 = vsel %vm171, %v3163, 0
      %v3261 = vsel %vm866, %v639, 0
      %3263 = vmatprep.subr.mxu0 0.0
      %3264 = vmatpush1.msra.mxu0 0.0
      %3265 = vmatprep.subr.mxu0 0.0
      %3266 = vmatpush1.msra.mxu0 0.0
      %3267 = vmatprep.subr.mxu0 0.0
      %3268 = vmatpush1.msra.mxu0 0.0
      %3269 = vmatprep.subr.mxu0 0.0
      %3270 = vmatpush1.msra.mxu0 0.0
      %3271 = vmatprep.subr.mxu0 0.0
      %3272 = vmatpush1.msra.mxu0 0.0
      %3273 = vmatprep.subr.mxu0 0.0
      %3274 = vmatpush1.msra.mxu0 0.0
      %3275 = vmatprep.subr.mxu0 0.0
      %3276 = vmatpush1.msra.mxu0 0.0
      %3277 = vmatprep.subr.mxu0 0.0
      %3278 = vmatpush1.msra.mxu0 0.0
      %3279 = vmatprep.subr.mxu0 0.0
      %3280 = vmatpush1.msra.mxu0 0.0
      %3281 = vmatprep.subr.mxu0 0.0
      %3282 = vmatpush1.msra.mxu0 0.0
      %3283 = vmatprep.subr.mxu0 0.0
      %3284 = vmatpush1.msra.mxu0 0.0
      %3285 = vmatprep.subr.mxu0 0.0
      %3286 = vmatpush1.msra.mxu0 0.0
      %3287 = vmatprep.subr.mxu0 0.0
      %3288 = vmatpush1.msra.mxu0 0.0
      %3289 = vmatprep.subr.mxu0 0.0
      %3290 = vmatpush1.msra.mxu0 0.0
      %3291 = vmatprep.subr.mxu0 0.0
      %3292 = vmatpush1.msra.mxu0 0.0
      %3293 = vmatprep.subr.mxu0 0.0
      %3294 = vmatpush1.msra.mxu0 %v3261
      %3295 = vmatprep.subr.mxu0 0.0
      %3296 = vmatpush2.msra.mxu0 0.0
      %3297 = vmatprep.subr.mxu0 0.0
      %3298 = vmatpush2.msra.mxu0 0.0
      %3299 = vmatprep.subr.mxu0 0.0
      %3300 = vmatpush2.msra.mxu0 0.0
      %3301 = vmatprep.subr.mxu0 0.0
      %3302 = vmatpush2.msra.mxu0 0.0
      %3303 = vmatprep.subr.mxu0 0.0
      %3304 = vmatpush2.msra.mxu0 0.0
      %3305 = vmatprep.subr.mxu0 0.0
      %3306 = vmatpush2.msra.mxu0 0.0
      %3307 = vmatprep.subr.mxu0 0.0
      %3308 = vmatpush2.msra.mxu0 0.0
      %3309 = vmatprep.subr.mxu0 0.0
      %3310 = vmatpush2.msra.mxu0 0.0
      %3311 = vmatprep.subr.mxu0 0.0
      %3312 = vmatpush2.msra.mxu0 0.0
      %3313 = vmatprep.subr.mxu0 0.0
      %3314 = vmatpush2.msra.mxu0 0.0
      %3315 = vmatprep.subr.mxu0 0.0
      %3316 = vmatpush2.msra.mxu0 0.0
      %3317 = vmatprep.subr.mxu0 0.0
      %3318 = vmatpush2.msra.mxu0 0.0
      %3319 = vmatprep.subr.mxu0 0.0
      %3320 = vmatpush2.msra.mxu0 0.0
      %3321 = vmatprep.subr.mxu0 0.0
      %3322 = vmatpush2.msra.mxu0 0.0
      %3323 = vmatprep.subr.mxu0 0.0
      %3324 = vmatpush2.msra.mxu0 0.0
      %3325 = vmatprep.subr.mxu0 0.0
      %3326 = vmatpush2.msra.mxu0 0.0
      %3327 = vmatprep.mubr.f32.mxu0 0.0
      %3328 = vmatmul.mubr.f32.gmra.mxu0 %v3165
      %v3329 = vpop.f32.mrf.mxu0
      %v3330 = vadd.f32 0.0, %v3329
      %v3331 = vpop.f32.mrf.mxu0
      %3332 = vmatprep.mubr.f32.mxu0 0.0
      %3333 = vmatmul.mubr.f32.gmra.mxu0 %v3168
      %v3334 = vpop.f32.mrf.mxu0
      %v3335 = vadd.f32 0.0, %v3334
      %v3336 = vpop.f32.mrf.mxu0
      %3337 = vmatprep.mubr.f32.mxu0 0.0
      %3338 = vmatmul.mubr.f32.gmra.mxu0 %v3171
      %v3339 = vpop.f32.mrf.mxu0
      %v3340 = vadd.f32 0.0, %v3339
      %v3341 = vpop.f32.mrf.mxu0
      %3342 = vmatprep.mubr.f32.mxu0 0.0
      %3343 = vmatmul.mubr.f32.gmra.mxu0 %v3174
      %v3344 = vpop.f32.mrf.mxu0
      %v3345 = vadd.f32 0.0, %v3344
      %v3346 = vpop.f32.mrf.mxu0
      %3347 = vmatprep.mubr.f32.mxu0 0.0
      %3348 = vmatmul.mubr.f32.gmra.mxu0 %v3177
      %v3349 = vpop.f32.mrf.mxu0
      %v3350 = vadd.f32 0.0, %v3349
      %v3351 = vpop.f32.mrf.mxu0
      %3352 = vmatprep.mubr.f32.mxu0 0.0
      %3353 = vmatmul.mubr.f32.gmra.mxu0 %v3180
      %v3354 = vpop.f32.mrf.mxu0
      %v3355 = vadd.f32 0.0, %v3354
      %v3356 = vpop.f32.mrf.mxu0
      %3357 = vmatprep.mubr.f32.mxu0 0.0
      %3358 = vmatmul.mubr.f32.gmra.mxu0 %v3183
      %v3359 = vpop.f32.mrf.mxu0
      %v3360 = vadd.f32 0.0, %v3359
      %v3361 = vpop.f32.mrf.mxu0
      %3362 = vmatprep.mubr.f32.mxu0 0.0
      %3363 = vmatmul.mubr.f32.gmra.mxu0 %v3186
      %v3364 = vpop.f32.mrf.mxu0
      %v3365 = vadd.f32 0.0, %v3364
      %v3366 = vpop.f32.mrf.mxu0
      %3367 = vmatprep.mubr.f32.mxu0 0.0
      %3368 = vmatmul.mubr.f32.gmra.mxu0 %v3189
      %v3369 = vpop.f32.mrf.mxu0
      %v3370 = vadd.f32 0.0, %v3369
      %v3371 = vpop.f32.mrf.mxu0
      %3372 = vmatprep.mubr.f32.mxu0 0.0
      %3373 = vmatmul.mubr.f32.gmra.mxu0 %v3192
      %v3374 = vpop.f32.mrf.mxu0
      %v3375 = vadd.f32 0.0, %v3374
      %v3376 = vpop.f32.mrf.mxu0
      %3377 = vmatprep.mubr.f32.mxu0 0.0
      %3378 = vmatmul.mubr.f32.gmra.mxu0 %v3195
      %v3379 = vpop.f32.mrf.mxu0
      %v3380 = vadd.f32 0.0, %v3379
      %v3381 = vpop.f32.mrf.mxu0
      %3382 = vmatprep.mubr.f32.mxu0 0.0
      %3383 = vmatmul.mubr.f32.gmra.mxu0 %v3198
      %v3384 = vpop.f32.mrf.mxu0
      %v3385 = vadd.f32 0.0, %v3384
      %v3386 = vpop.f32.mrf.mxu0
      %3387 = vmatprep.mubr.f32.mxu0 0.0
      %3388 = vmatmul.mubr.f32.gmra.mxu0 %v3201
      %v3389 = vpop.f32.mrf.mxu0
      %v3390 = vadd.f32 0.0, %v3389
      %v3391 = vpop.f32.mrf.mxu0
      %3392 = vmatprep.mubr.f32.mxu0 0.0
      %3393 = vmatmul.mubr.f32.gmra.mxu0 %v3204
      %v3394 = vpop.f32.mrf.mxu0
      %v3395 = vadd.f32 0.0, %v3394
      %v3396 = vpop.f32.mrf.mxu0
      %3397 = vmatprep.mubr.f32.mxu0 0.0
      %3398 = vmatmul.mubr.f32.gmra.mxu0 %v3207
      %v3399 = vpop.f32.mrf.mxu0
      %v3400 = vadd.f32 0.0, %v3399
      %v3401 = vpop.f32.mrf.mxu0
      %3402 = vmatprep.mubr.f32.mxu0 0.0
      %3403 = vmatmul.mubr.f32.gmra.mxu0 %v3210
      %v3404 = vpop.f32.mrf.mxu0
      %v3405 = vadd.f32 0.0, %v3404
      %v3406 = vpop.f32.mrf.mxu0
      %3407 = vmatprep.mubr.f32.mxu0 0.0
      %3408 = vmatmul.mubr.f32.gmra.mxu0 %v3213
      %v3409 = vpop.f32.mrf.mxu0
      %v3410 = vadd.f32 0.0, %v3409
      %v3411 = vpop.f32.mrf.mxu0
      %3412 = vmatprep.mubr.f32.mxu0 0.0
      %3413 = vmatmul.mubr.f32.gmra.mxu0 %v3216
      %v3414 = vpop.f32.mrf.mxu0
      %v3415 = vadd.f32 0.0, %v3414
      %v3416 = vpop.f32.mrf.mxu0
      %3417 = vmatprep.mubr.f32.mxu0 0.0
      %3418 = vmatmul.mubr.f32.gmra.mxu0 %v3219
      %v3419 = vpop.f32.mrf.mxu0
      %v3420 = vadd.f32 0.0, %v3419
      %v3421 = vpop.f32.mrf.mxu0
      %3422 = vmatprep.mubr.f32.mxu0 0.0
      %3423 = vmatmul.mubr.f32.gmra.mxu0 %v3222
      %v3424 = vpop.f32.mrf.mxu0
      %v3425 = vadd.f32 0.0, %v3424
      %v3426 = vpop.f32.mrf.mxu0
      %3427 = vmatprep.mubr.f32.mxu0 0.0
      %3428 = vmatmul.mubr.f32.gmra.mxu0 %v3225
      %v3429 = vpop.f32.mrf.mxu0
      %v3430 = vadd.f32 0.0, %v3429
      %v3431 = vpop.f32.mrf.mxu0
      %3432 = vmatprep.mubr.f32.mxu0 0.0
      %3433 = vmatmul.mubr.f32.gmra.mxu0 %v3228
      %v3434 = vpop.f32.mrf.mxu0
      %v3435 = vadd.f32 0.0, %v3434
      %v3436 = vpop.f32.mrf.mxu0
      %3437 = vmatprep.mubr.f32.mxu0 0.0
      %3438 = vmatmul.mubr.f32.gmra.mxu0 %v3231
      %v3439 = vpop.f32.mrf.mxu0
      %v3440 = vadd.f32 0.0, %v3439
      %v3441 = vpop.f32.mrf.mxu0
      %3442 = vmatprep.mubr.f32.mxu0 0.0
      %3443 = vmatmul.mubr.f32.gmra.mxu0 %v3234
      %v3444 = vpop.f32.mrf.mxu0
      %v3445 = vadd.f32 0.0, %v3444
      %v3446 = vpop.f32.mrf.mxu0
      %3447 = vmatprep.mubr.f32.mxu0 0.0
      %3448 = vmatmul.mubr.f32.gmra.mxu0 %v3237
      %v3449 = vpop.f32.mrf.mxu0
      %v3450 = vadd.f32 0.0, %v3449
      %v3451 = vpop.f32.mrf.mxu0
      %3452 = vmatprep.mubr.f32.mxu0 0.0
      %3453 = vmatmul.mubr.f32.gmra.mxu0 %v3240
      %v3454 = vpop.f32.mrf.mxu0
      %v3455 = vadd.f32 0.0, %v3454
      %v3456 = vpop.f32.mrf.mxu0
      %3457 = vmatprep.mubr.f32.mxu0 0.0
      %3458 = vmatmul.mubr.f32.gmra.mxu0 %v3243
      %v3459 = vpop.f32.mrf.mxu0
      %v3460 = vadd.f32 0.0, %v3459
      %v3461 = vpop.f32.mrf.mxu0
      %3462 = vmatprep.mubr.f32.mxu0 0.0
      %3463 = vmatmul.mubr.f32.gmra.mxu0 %v3246
      %v3464 = vpop.f32.mrf.mxu0
      %v3465 = vadd.f32 0.0, %v3464
      %v3466 = vpop.f32.mrf.mxu0
      %3467 = vmatprep.mubr.f32.mxu0 0.0
      %3468 = vmatmul.mubr.f32.gmra.mxu0 %v3249
      %v3469 = vpop.f32.mrf.mxu0
      %v3470 = vadd.f32 0.0, %v3469
      %v3471 = vpop.f32.mrf.mxu0
      %3472 = vmatprep.mubr.f32.mxu0 0.0
      %3473 = vmatmul.mubr.f32.gmra.mxu0 %v3252
      %v3474 = vpop.f32.mrf.mxu0
      %v3475 = vadd.f32 0.0, %v3474
      %v3476 = vpop.f32.mrf.mxu0
      %3477 = vmatprep.mubr.f32.mxu0 0.0
      %3478 = vmatmul.mubr.f32.gmra.mxu0 %v3255
      %v3479 = vpop.f32.mrf.mxu0
      %v3480 = vadd.f32 0.0, %v3479
      %v3481 = vpop.f32.mrf.mxu0
      %3482 = vmatprep.mubr.f32.mxu0 0.0
      %3483 = vmatmul.mubr.f32.gmra.mxu0 %v3258
      %v3484 = vpop.f32.mrf.mxu0
      %v3485 = vadd.f32 0.0, %v3484
      %v3486 = vpop.f32.mrf.mxu0
      %3487 = vdwg.mxu0
      %v3488 = vadd.f32 %v3067, %v3330
      %v3489 = vadd.f32 %v3068, %v3335
      %v3490 = vadd.f32 %v3069, %v3340
      %v3491 = vadd.f32 %v3070, %v3345
      %v3492 = vadd.f32 %v3071, %v3350
      %v3493 = vadd.f32 %v3072, %v3355
      %v3494 = vadd.f32 %v3073, %v3360
      %v3495 = vadd.f32 %v3074, %v3365
      %v3496 = vadd.f32 %v3075, %v3370
      %v3497 = vadd.f32 %v3076, %v3375
      %v3498 = vadd.f32 %v3077, %v3380
      %v3499 = vadd.f32 %v3078, %v3385
      %v3500 = vadd.f32 %v3079, %v3390
      %v3501 = vadd.f32 %v3080, %v3395
      %v3502 = vadd.f32 %v3081, %v3400
      %v3503 = vadd.f32 %v3082, %v3405
      %v3504 = vadd.f32 %v3083, %v3410
      %v3505 = vadd.f32 %v3084, %v3415
      %v3506 = vadd.f32 %v3085, %v3420
      %v3507 = vadd.f32 %v3086, %v3425
      %v3508 = vadd.f32 %v3087, %v3430
      %v3509 = vadd.f32 %v3088, %v3435
      %v3510 = vadd.f32 %v3089, %v3440
      %v3511 = vadd.f32 %v3090, %v3445
      %v3512 = vadd.f32 %v3091, %v3450
      %v3513 = vadd.f32 %v3092, %v3455
      %v3514 = vadd.f32 %v3093, %v3460
      %v3515 = vadd.f32 %v3094, %v3465
      %v3516 = vadd.f32 %v3095, %v3470
      %v3517 = vadd.f32 %v3096, %v3475
      %v3518 = vadd.f32 %v3097, %v3480
      %v3519 = vadd.f32 %v3098, %v3485
      %s3520 = scalar_lea.vmem %s3099, 8 [#allocation2]
      %v3521 = vld [vmem:[%s3520] ss:$2 sm:$0xff]
      %s3522 = scalar_lea.vmem %s3099, 24 [#allocation2]
      %v3523 = vld [vmem:[%s3522] ss:$2 sm:$0xff]
      %s3524 = scalar_lea.vmem %s3099, 104 [#allocation2]
      %v3525 = vld [vmem:[%s3524] ss:$2 sm:$0xff]
      %s3526 = scalar_lea.vmem %s3099, 120 [#allocation2]
      %v3527 = vld [vmem:[%s3526] ss:$2 sm:$0xff]
      %s3528 = scalar_lea.vmem %s3099, 200 [#allocation2]
      %v3529 = vld [vmem:[%s3528] ss:$2 sm:$0xff]
      %s3530 = scalar_lea.vmem %s3099, 216 [#allocation2]
      %v3531 = vld [vmem:[%s3530] ss:$2 sm:$0xff]
      %s3532 = scalar_lea.vmem %s3099, 296 [#allocation2]
      %v3533 = vld [vmem:[%s3532] ss:$2 sm:$0xff]
      %s3534 = scalar_lea.vmem %s3099, 312 [#allocation2]
      %v3535 = vld [vmem:[%s3534] ss:$2 sm:$0xff]
      %s3536 = scalar_lea.vmem %s3099, 392 [#allocation2]
      %v3537 = vld [vmem:[%s3536] ss:$2 sm:$0xff]
      %s3538 = scalar_lea.vmem %s3099, 408 [#allocation2]
      %v3539 = vld [vmem:[%s3538] ss:$2 sm:$0xff]
      %s3540 = scalar_lea.vmem %s3099, 488 [#allocation2]
      %v3541 = vld [vmem:[%s3540] ss:$2 sm:$0xff]
      %s3542 = scalar_lea.vmem %s3099, 504 [#allocation2]
      %v3543 = vld [vmem:[%s3542] ss:$2 sm:$0xff]
      %s3544 = scalar_lea.vmem %s3099, 584 [#allocation2]
      %v3545 = vld [vmem:[%s3544] ss:$2 sm:$0xff]
      %s3546 = scalar_lea.vmem %s3099, 600 [#allocation2]
      %v3547 = vld [vmem:[%s3546] ss:$2 sm:$0xff]
      %s3548 = scalar_lea.vmem %s3099, 680 [#allocation2]
      %v3549 = vld [vmem:[%s3548] ss:$2 sm:$0xff]
      %s3550 = scalar_lea.vmem %s3099, 696 [#allocation2]
      %v3551 = vld [vmem:[%s3550] ss:$2 sm:$0xff]
      %s3552 = scalar_lea.vmem %s3099, 776 [#allocation2]
      %v3553 = vld [vmem:[%s3552] ss:$2 sm:$0xff]
      %s3554 = scalar_lea.vmem %s3099, 792 [#allocation2]
      %v3555 = vld [vmem:[%s3554] ss:$2 sm:$0xff]
      %s3556 = scalar_lea.vmem %s3099, 872 [#allocation2]
      %v3557 = vld [vmem:[%s3556] ss:$2 sm:$0xff]
      %s3558 = scalar_lea.vmem %s3099, 888 [#allocation2]
      %v3559 = vld [vmem:[%s3558] ss:$2 sm:$0xff]
      %s3560 = scalar_lea.vmem %s3099, 968 [#allocation2]
      %v3561 = vld [vmem:[%s3560] ss:$2 sm:$0xff]
      %s3562 = scalar_lea.vmem %s3099, 984 [#allocation2]
      %v3563 = vld [vmem:[%s3562] ss:$2 sm:$0xff]
      %s3564 = scalar_lea.vmem %s3099, 1064 [#allocation2]
      %v3565 = vld [vmem:[%s3564] ss:$2 sm:$0xff]
      %s3566 = scalar_lea.vmem %s3099, 1080 [#allocation2]
      %v3567 = vld [vmem:[%s3566] ss:$2 sm:$0xff]
      %s3568 = scalar_lea.vmem %s3099, 1160 [#allocation2]
      %v3569 = vld [vmem:[%s3568] ss:$2 sm:$0xff]
      %s3570 = scalar_lea.vmem %s3099, 1176 [#allocation2]
      %v3571 = vld [vmem:[%s3570] ss:$2 sm:$0xff]
      %s3572 = scalar_lea.vmem %s3099, 1256 [#allocation2]
      %v3573 = vld [vmem:[%s3572] ss:$2 sm:$0xff]
      %s3574 = scalar_lea.vmem %s3099, 1272 [#allocation2]
      %v3575 = vld [vmem:[%s3574] ss:$2 sm:$0xff]
      %s3576 = scalar_lea.vmem %s3099, 1352 [#allocation2]
      %v3577 = vld [vmem:[%s3576] ss:$2 sm:$0xff]
      %s3578 = scalar_lea.vmem %s3099, 1368 [#allocation2]
      %v3579 = vld [vmem:[%s3578] ss:$2 sm:$0xff]
      %s3580 = scalar_lea.vmem %s3099, 1448 [#allocation2]
      %v3581 = vld [vmem:[%s3580] ss:$2 sm:$0xff]
      %s3582 = scalar_lea.vmem %s3099, 1464 [#allocation2]
      %v3583 = vld [vmem:[%s3582] ss:$2 sm:$0xff]
      %v3585 = vsel %vm171, %v3521, 0
      %v3588 = vsel %vm171, %v3523, 0
      %v3591 = vsel %vm171, %v3525, 0
      %v3594 = vsel %vm171, %v3527, 0
      %v3597 = vsel %vm171, %v3529, 0
      %v3600 = vsel %vm171, %v3531, 0
      %v3603 = vsel %vm171, %v3533, 0
      %v3606 = vsel %vm171, %v3535, 0
      %v3609 = vsel %vm171, %v3537, 0
      %v3612 = vsel %vm171, %v3539, 0
      %v3615 = vsel %vm171, %v3541, 0
      %v3618 = vsel %vm171, %v3543, 0
      %v3621 = vsel %vm171, %v3545, 0
      %v3624 = vsel %vm171, %v3547, 0
      %v3627 = vsel %vm171, %v3549, 0
      %v3630 = vsel %vm171, %v3551, 0
      %v3633 = vsel %vm171, %v3553, 0
      %v3636 = vsel %vm171, %v3555, 0
      %v3639 = vsel %vm171, %v3557, 0
      %v3642 = vsel %vm171, %v3559, 0
      %v3645 = vsel %vm171, %v3561, 0
      %v3648 = vsel %vm171, %v3563, 0
      %v3651 = vsel %vm171, %v3565, 0
      %v3654 = vsel %vm171, %v3567, 0
      %v3657 = vsel %vm171, %v3569, 0
      %v3660 = vsel %vm171, %v3571, 0
      %v3663 = vsel %vm171, %v3573, 0
      %v3666 = vsel %vm171, %v3575, 0
      %v3669 = vsel %vm171, %v3577, 0
      %v3672 = vsel %vm171, %v3579, 0
      %v3675 = vsel %vm171, %v3581, 0
      %v3678 = vsel %vm171, %v3583, 0
      %v3681 = vsel %vm866, %v640, 0
      %3683 = vmatprep.subr.mxu0 0.0
      %3684 = vmatpush1.msra.mxu0 0.0
      %3685 = vmatprep.subr.mxu0 0.0
      %3686 = vmatpush1.msra.mxu0 0.0
      %3687 = vmatprep.subr.mxu0 0.0
      %3688 = vmatpush1.msra.mxu0 0.0
      %3689 = vmatprep.subr.mxu0 0.0
      %3690 = vmatpush1.msra.mxu0 0.0
      %3691 = vmatprep.subr.mxu0 0.0
      %3692 = vmatpush1.msra.mxu0 0.0
      %3693 = vmatprep.subr.mxu0 0.0
      %3694 = vmatpush1.msra.mxu0 0.0
      %3695 = vmatprep.subr.mxu0 0.0
      %3696 = vmatpush1.msra.mxu0 0.0
      %3697 = vmatprep.subr.mxu0 0.0
      %3698 = vmatpush1.msra.mxu0 0.0
      %3699 = vmatprep.subr.mxu0 0.0
      %3700 = vmatpush1.msra.mxu0 0.0
      %3701 = vmatprep.subr.mxu0 0.0
      %3702 = vmatpush1.msra.mxu0 0.0
      %3703 = vmatprep.subr.mxu0 0.0
      %3704 = vmatpush1.msra.mxu0 0.0
      %3705 = vmatprep.subr.mxu0 0.0
      %3706 = vmatpush1.msra.mxu0 0.0
      %3707 = vmatprep.subr.mxu0 0.0
      %3708 = vmatpush1.msra.mxu0 0.0
      %3709 = vmatprep.subr.mxu0 0.0
      %3710 = vmatpush1.msra.mxu0 0.0
      %3711 = vmatprep.subr.mxu0 0.0
      %3712 = vmatpush1.msra.mxu0 0.0
      %3713 = vmatprep.subr.mxu0 0.0
      %3714 = vmatpush1.msra.mxu0 %v3681
      %3715 = vmatprep.subr.mxu0 0.0
      %3716 = vmatpush2.msra.mxu0 0.0
      %3717 = vmatprep.subr.mxu0 0.0
      %3718 = vmatpush2.msra.mxu0 0.0
      %3719 = vmatprep.subr.mxu0 0.0
      %3720 = vmatpush2.msra.mxu0 0.0
      %3721 = vmatprep.subr.mxu0 0.0
      %3722 = vmatpush2.msra.mxu0 0.0
      %3723 = vmatprep.subr.mxu0 0.0
      %3724 = vmatpush2.msra.mxu0 0.0
      %3725 = vmatprep.subr.mxu0 0.0
      %3726 = vmatpush2.msra.mxu0 0.0
      %3727 = vmatprep.subr.mxu0 0.0
      %3728 = vmatpush2.msra.mxu0 0.0
      %3729 = vmatprep.subr.mxu0 0.0
      %3730 = vmatpush2.msra.mxu0 0.0
      %3731 = vmatprep.subr.mxu0 0.0
      %3732 = vmatpush2.msra.mxu0 0.0
      %3733 = vmatprep.subr.mxu0 0.0
      %3734 = vmatpush2.msra.mxu0 0.0
      %3735 = vmatprep.subr.mxu0 0.0
      %3736 = vmatpush2.msra.mxu0 0.0
      %3737 = vmatprep.subr.mxu0 0.0
      %3738 = vmatpush2.msra.mxu0 0.0
      %3739 = vmatprep.subr.mxu0 0.0
      %3740 = vmatpush2.msra.mxu0 0.0
      %3741 = vmatprep.subr.mxu0 0.0
      %3742 = vmatpush2.msra.mxu0 0.0
      %3743 = vmatprep.subr.mxu0 0.0
      %3744 = vmatpush2.msra.mxu0 0.0
      %3745 = vmatprep.subr.mxu0 0.0
      %3746 = vmatpush2.msra.mxu0 0.0
      %3747 = vmatprep.mubr.f32.mxu0 0.0
      %3748 = vmatmul.mubr.f32.gmra.mxu0 %v3585
      %v3749 = vpop.f32.mrf.mxu0
      %v3750 = vadd.f32 0.0, %v3749
      %v3751 = vpop.f32.mrf.mxu0
      %3752 = vmatprep.mubr.f32.mxu0 0.0
      %3753 = vmatmul.mubr.f32.gmra.mxu0 %v3588
      %v3754 = vpop.f32.mrf.mxu0
      %v3755 = vadd.f32 0.0, %v3754
      %v3756 = vpop.f32.mrf.mxu0
      %3757 = vmatprep.mubr.f32.mxu0 0.0
      %3758 = vmatmul.mubr.f32.gmra.mxu0 %v3591
      %v3759 = vpop.f32.mrf.mxu0
      %v3760 = vadd.f32 0.0, %v3759
      %v3761 = vpop.f32.mrf.mxu0
      %3762 = vmatprep.mubr.f32.mxu0 0.0
      %3763 = vmatmul.mubr.f32.gmra.mxu0 %v3594
      %v3764 = vpop.f32.mrf.mxu0
      %v3765 = vadd.f32 0.0, %v3764
      %v3766 = vpop.f32.mrf.mxu0
      %3767 = vmatprep.mubr.f32.mxu0 0.0
      %3768 = vmatmul.mubr.f32.gmra.mxu0 %v3597
      %v3769 = vpop.f32.mrf.mxu0
      %v3770 = vadd.f32 0.0, %v3769
      %v3771 = vpop.f32.mrf.mxu0
      %3772 = vmatprep.mubr.f32.mxu0 0.0
      %3773 = vmatmul.mubr.f32.gmra.mxu0 %v3600
      %v3774 = vpop.f32.mrf.mxu0
      %v3775 = vadd.f32 0.0, %v3774
      %v3776 = vpop.f32.mrf.mxu0
      %3777 = vmatprep.mubr.f32.mxu0 0.0
      %3778 = vmatmul.mubr.f32.gmra.mxu0 %v3603
      %v3779 = vpop.f32.mrf.mxu0
      %v3780 = vadd.f32 0.0, %v3779
      %v3781 = vpop.f32.mrf.mxu0
      %3782 = vmatprep.mubr.f32.mxu0 0.0
      %3783 = vmatmul.mubr.f32.gmra.mxu0 %v3606
      %v3784 = vpop.f32.mrf.mxu0
      %v3785 = vadd.f32 0.0, %v3784
      %v3786 = vpop.f32.mrf.mxu0
      %3787 = vmatprep.mubr.f32.mxu0 0.0
      %3788 = vmatmul.mubr.f32.gmra.mxu0 %v3609
      %v3789 = vpop.f32.mrf.mxu0
      %v3790 = vadd.f32 0.0, %v3789
      %v3791 = vpop.f32.mrf.mxu0
      %3792 = vmatprep.mubr.f32.mxu0 0.0
      %3793 = vmatmul.mubr.f32.gmra.mxu0 %v3612
      %v3794 = vpop.f32.mrf.mxu0
      %v3795 = vadd.f32 0.0, %v3794
      %v3796 = vpop.f32.mrf.mxu0
      %3797 = vmatprep.mubr.f32.mxu0 0.0
      %3798 = vmatmul.mubr.f32.gmra.mxu0 %v3615
      %v3799 = vpop.f32.mrf.mxu0
      %v3800 = vadd.f32 0.0, %v3799
      %v3801 = vpop.f32.mrf.mxu0
      %3802 = vmatprep.mubr.f32.mxu0 0.0
      %3803 = vmatmul.mubr.f32.gmra.mxu0 %v3618
      %v3804 = vpop.f32.mrf.mxu0
      %v3805 = vadd.f32 0.0, %v3804
      %v3806 = vpop.f32.mrf.mxu0
      %3807 = vmatprep.mubr.f32.mxu0 0.0
      %3808 = vmatmul.mubr.f32.gmra.mxu0 %v3621
      %v3809 = vpop.f32.mrf.mxu0
      %v3810 = vadd.f32 0.0, %v3809
      %v3811 = vpop.f32.mrf.mxu0
      %3812 = vmatprep.mubr.f32.mxu0 0.0
      %3813 = vmatmul.mubr.f32.gmra.mxu0 %v3624
      %v3814 = vpop.f32.mrf.mxu0
      %v3815 = vadd.f32 0.0, %v3814
      %v3816 = vpop.f32.mrf.mxu0
      %3817 = vmatprep.mubr.f32.mxu0 0.0
      %3818 = vmatmul.mubr.f32.gmra.mxu0 %v3627
      %v3819 = vpop.f32.mrf.mxu0
      %v3820 = vadd.f32 0.0, %v3819
      %v3821 = vpop.f32.mrf.mxu0
      %3822 = vmatprep.mubr.f32.mxu0 0.0
      %3823 = vmatmul.mubr.f32.gmra.mxu0 %v3630
      %v3824 = vpop.f32.mrf.mxu0
      %v3825 = vadd.f32 0.0, %v3824
      %v3826 = vpop.f32.mrf.mxu0
      %3827 = vmatprep.mubr.f32.mxu0 0.0
      %3828 = vmatmul.mubr.f32.gmra.mxu0 %v3633
      %v3829 = vpop.f32.mrf.mxu0
      %v3830 = vadd.f32 0.0, %v3829
      %v3831 = vpop.f32.mrf.mxu0
      %3832 = vmatprep.mubr.f32.mxu0 0.0
      %3833 = vmatmul.mubr.f32.gmra.mxu0 %v3636
      %v3834 = vpop.f32.mrf.mxu0
      %v3835 = vadd.f32 0.0, %v3834
      %v3836 = vpop.f32.mrf.mxu0
      %3837 = vmatprep.mubr.f32.mxu0 0.0
      %3838 = vmatmul.mubr.f32.gmra.mxu0 %v3639
      %v3839 = vpop.f32.mrf.mxu0
      %v3840 = vadd.f32 0.0, %v3839
      %v3841 = vpop.f32.mrf.mxu0
      %3842 = vmatprep.mubr.f32.mxu0 0.0
      %3843 = vmatmul.mubr.f32.gmra.mxu0 %v3642
      %v3844 = vpop.f32.mrf.mxu0
      %v3845 = vadd.f32 0.0, %v3844
      %v3846 = vpop.f32.mrf.mxu0
      %3847 = vmatprep.mubr.f32.mxu0 0.0
      %3848 = vmatmul.mubr.f32.gmra.mxu0 %v3645
      %v3849 = vpop.f32.mrf.mxu0
      %v3850 = vadd.f32 0.0, %v3849
      %v3851 = vpop.f32.mrf.mxu0
      %3852 = vmatprep.mubr.f32.mxu0 0.0
      %3853 = vmatmul.mubr.f32.gmra.mxu0 %v3648
      %v3854 = vpop.f32.mrf.mxu0
      %v3855 = vadd.f32 0.0, %v3854
      %v3856 = vpop.f32.mrf.mxu0
      %3857 = vmatprep.mubr.f32.mxu0 0.0
      %3858 = vmatmul.mubr.f32.gmra.mxu0 %v3651
      %v3859 = vpop.f32.mrf.mxu0
      %v3860 = vadd.f32 0.0, %v3859
      %v3861 = vpop.f32.mrf.mxu0
      %3862 = vmatprep.mubr.f32.mxu0 0.0
      %3863 = vmatmul.mubr.f32.gmra.mxu0 %v3654
      %v3864 = vpop.f32.mrf.mxu0
      %v3865 = vadd.f32 0.0, %v3864
      %v3866 = vpop.f32.mrf.mxu0
      %3867 = vmatprep.mubr.f32.mxu0 0.0
      %3868 = vmatmul.mubr.f32.gmra.mxu0 %v3657
      %v3869 = vpop.f32.mrf.mxu0
      %v3870 = vadd.f32 0.0, %v3869
      %v3871 = vpop.f32.mrf.mxu0
      %3872 = vmatprep.mubr.f32.mxu0 0.0
      %3873 = vmatmul.mubr.f32.gmra.mxu0 %v3660
      %v3874 = vpop.f32.mrf.mxu0
      %v3875 = vadd.f32 0.0, %v3874
      %v3876 = vpop.f32.mrf.mxu0
      %3877 = vmatprep.mubr.f32.mxu0 0.0
      %3878 = vmatmul.mubr.f32.gmra.mxu0 %v3663
      %v3879 = vpop.f32.mrf.mxu0
      %v3880 = vadd.f32 0.0, %v3879
      %v3881 = vpop.f32.mrf.mxu0
      %3882 = vmatprep.mubr.f32.mxu0 0.0
      %3883 = vmatmul.mubr.f32.gmra.mxu0 %v3666
      %v3884 = vpop.f32.mrf.mxu0
      %v3885 = vadd.f32 0.0, %v3884
      %v3886 = vpop.f32.mrf.mxu0
      %3887 = vmatprep.mubr.f32.mxu0 0.0
      %3888 = vmatmul.mubr.f32.gmra.mxu0 %v3669
      %v3889 = vpop.f32.mrf.mxu0
      %v3890 = vadd.f32 0.0, %v3889
      %v3891 = vpop.f32.mrf.mxu0
      %3892 = vmatprep.mubr.f32.mxu0 0.0
      %3893 = vmatmul.mubr.f32.gmra.mxu0 %v3672
      %v3894 = vpop.f32.mrf.mxu0
      %v3895 = vadd.f32 0.0, %v3894
      %v3896 = vpop.f32.mrf.mxu0
      %3897 = vmatprep.mubr.f32.mxu0 0.0
      %3898 = vmatmul.mubr.f32.gmra.mxu0 %v3675
      %v3899 = vpop.f32.mrf.mxu0
      %v3900 = vadd.f32 0.0, %v3899
      %v3901 = vpop.f32.mrf.mxu0
      %3902 = vmatprep.mubr.f32.mxu0 0.0
      %3903 = vmatmul.mubr.f32.gmra.mxu0 %v3678
      %v3904 = vpop.f32.mrf.mxu0
      %v3905 = vadd.f32 0.0, %v3904
      %v3906 = vpop.f32.mrf.mxu0
      %3907 = vdwg.mxu0
      %v3908 = vadd.f32 %v3488, %v3750
      %v3909 = vadd.f32 %v3489, %v3755
      %v3910 = vadd.f32 %v3490, %v3760
      %v3911 = vadd.f32 %v3491, %v3765
      %v3912 = vadd.f32 %v3492, %v3770
      %v3913 = vadd.f32 %v3493, %v3775
      %v3914 = vadd.f32 %v3494, %v3780
      %v3915 = vadd.f32 %v3495, %v3785
      %v3916 = vadd.f32 %v3496, %v3790
      %v3917 = vadd.f32 %v3497, %v3795
      %v3918 = vadd.f32 %v3498, %v3800
      %v3919 = vadd.f32 %v3499, %v3805
      %v3920 = vadd.f32 %v3500, %v3810
      %v3921 = vadd.f32 %v3501, %v3815
      %v3922 = vadd.f32 %v3502, %v3820
      %v3923 = vadd.f32 %v3503, %v3825
      %v3924 = vadd.f32 %v3504, %v3830
      %v3925 = vadd.f32 %v3505, %v3835
      %v3926 = vadd.f32 %v3506, %v3840
      %v3927 = vadd.f32 %v3507, %v3845
      %v3928 = vadd.f32 %v3508, %v3850
      %v3929 = vadd.f32 %v3509, %v3855
      %v3930 = vadd.f32 %v3510, %v3860
      %v3931 = vadd.f32 %v3511, %v3865
      %v3932 = vadd.f32 %v3512, %v3870
      %v3933 = vadd.f32 %v3513, %v3875
      %v3934 = vadd.f32 %v3514, %v3880
      %v3935 = vadd.f32 %v3515, %v3885
      %v3936 = vadd.f32 %v3516, %v3890
      %v3937 = vadd.f32 %v3517, %v3895
      %v3938 = vadd.f32 %v3518, %v3900
      %v3939 = vadd.f32 %v3519, %v3905
      %s3940 = scalar_lea.vmem %s3099, 9 [#allocation2]
      %v3941 = vld [vmem:[%s3940] ss:$2 sm:$0xff]
      %s3942 = scalar_lea.vmem %s3099, 25 [#allocation2]
      %v3943 = vld [vmem:[%s3942] ss:$2 sm:$0xff]
      %s3944 = scalar_lea.vmem %s3099, 105 [#allocation2]
      %v3945 = vld [vmem:[%s3944] ss:$2 sm:$0xff]
      %s3946 = scalar_lea.vmem %s3099, 121 [#allocation2]
      %v3947 = vld [vmem:[%s3946] ss:$2 sm:$0xff]
      %s3948 = scalar_lea.vmem %s3099, 201 [#allocation2]
      %v3949 = vld [vmem:[%s3948] ss:$2 sm:$0xff]
      %s3950 = scalar_lea.vmem %s3099, 217 [#allocation2]
      %v3951 = vld [vmem:[%s3950] ss:$2 sm:$0xff]
      %s3952 = scalar_lea.vmem %s3099, 297 [#allocation2]
      %v3953 = vld [vmem:[%s3952] ss:$2 sm:$0xff]
      %s3954 = scalar_lea.vmem %s3099, 313 [#allocation2]
      %v3955 = vld [vmem:[%s3954] ss:$2 sm:$0xff]
      %s3956 = scalar_lea.vmem %s3099, 393 [#allocation2]
      %v3957 = vld [vmem:[%s3956] ss:$2 sm:$0xff]
      %s3958 = scalar_lea.vmem %s3099, 409 [#allocation2]
      %v3959 = vld [vmem:[%s3958] ss:$2 sm:$0xff]
      %s3960 = scalar_lea.vmem %s3099, 489 [#allocation2]
      %v3961 = vld [vmem:[%s3960] ss:$2 sm:$0xff]
      %s3962 = scalar_lea.vmem %s3099, 505 [#allocation2]
      %v3963 = vld [vmem:[%s3962] ss:$2 sm:$0xff]
      %s3964 = scalar_lea.vmem %s3099, 585 [#allocation2]
      %v3965 = vld [vmem:[%s3964] ss:$2 sm:$0xff]
      %s3966 = scalar_lea.vmem %s3099, 601 [#allocation2]
      %v3967 = vld [vmem:[%s3966] ss:$2 sm:$0xff]
      %s3968 = scalar_lea.vmem %s3099, 681 [#allocation2]
      %v3969 = vld [vmem:[%s3968] ss:$2 sm:$0xff]
      %s3970 = scalar_lea.vmem %s3099, 697 [#allocation2]
      %v3971 = vld [vmem:[%s3970] ss:$2 sm:$0xff]
      %s3972 = scalar_lea.vmem %s3099, 777 [#allocation2]
      %v3973 = vld [vmem:[%s3972] ss:$2 sm:$0xff]
      %s3974 = scalar_lea.vmem %s3099, 793 [#allocation2]
      %v3975 = vld [vmem:[%s3974] ss:$2 sm:$0xff]
      %s3976 = scalar_lea.vmem %s3099, 873 [#allocation2]
      %v3977 = vld [vmem:[%s3976] ss:$2 sm:$0xff]
      %s3978 = scalar_lea.vmem %s3099, 889 [#allocation2]
      %v3979 = vld [vmem:[%s3978] ss:$2 sm:$0xff]
      %s3980 = scalar_lea.vmem %s3099, 969 [#allocation2]
      %v3981 = vld [vmem:[%s3980] ss:$2 sm:$0xff]
      %s3982 = scalar_lea.vmem %s3099, 985 [#allocation2]
      %v3983 = vld [vmem:[%s3982] ss:$2 sm:$0xff]
      %s3984 = scalar_lea.vmem %s3099, 1065 [#allocation2]
      %v3985 = vld [vmem:[%s3984] ss:$2 sm:$0xff]
      %s3986 = scalar_lea.vmem %s3099, 1081 [#allocation2]
      %v3987 = vld [vmem:[%s3986] ss:$2 sm:$0xff]
      %s3988 = scalar_lea.vmem %s3099, 1161 [#allocation2]
      %v3989 = vld [vmem:[%s3988] ss:$2 sm:$0xff]
      %s3990 = scalar_lea.vmem %s3099, 1177 [#allocation2]
      %v3991 = vld [vmem:[%s3990] ss:$2 sm:$0xff]
      %s3992 = scalar_lea.vmem %s3099, 1257 [#allocation2]
      %v3993 = vld [vmem:[%s3992] ss:$2 sm:$0xff]
      %s3994 = scalar_lea.vmem %s3099, 1273 [#allocation2]
      %v3995 = vld [vmem:[%s3994] ss:$2 sm:$0xff]
      %s3996 = scalar_lea.vmem %s3099, 1353 [#allocation2]
      %v3997 = vld [vmem:[%s3996] ss:$2 sm:$0xff]
      %s3998 = scalar_lea.vmem %s3099, 1369 [#allocation2]
      %v3999 = vld [vmem:[%s3998] ss:$2 sm:$0xff]
      %s4000 = scalar_lea.vmem %s3099, 1449 [#allocation2]
      %v4001 = vld [vmem:[%s4000] ss:$2 sm:$0xff]
      %s4002 = scalar_lea.vmem %s3099, 1465 [#allocation2]
      %v4003 = vld [vmem:[%s4002] ss:$2 sm:$0xff]
      %v4005 = vsel %vm171, %v3941, 0
      %v4008 = vsel %vm171, %v3943, 0
      %v4011 = vsel %vm171, %v3945, 0
      %v4014 = vsel %vm171, %v3947, 0
      %v4017 = vsel %vm171, %v3949, 0
      %v4020 = vsel %vm171, %v3951, 0
      %v4023 = vsel %vm171, %v3953, 0
      %v4026 = vsel %vm171, %v3955, 0
      %v4029 = vsel %vm171, %v3957, 0
      %v4032 = vsel %vm171, %v3959, 0
      %v4035 = vsel %vm171, %v3961, 0
      %v4038 = vsel %vm171, %v3963, 0
      %v4041 = vsel %vm171, %v3965, 0
      %v4044 = vsel %vm171, %v3967, 0
      %v4047 = vsel %vm171, %v3969, 0
      %v4050 = vsel %vm171, %v3971, 0
      %v4053 = vsel %vm171, %v3973, 0
      %v4056 = vsel %vm171, %v3975, 0
      %v4059 = vsel %vm171, %v3977, 0
      %v4062 = vsel %vm171, %v3979, 0
      %v4065 = vsel %vm171, %v3981, 0
      %v4068 = vsel %vm171, %v3983, 0
      %v4071 = vsel %vm171, %v3985, 0
      %v4074 = vsel %vm171, %v3987, 0
      %v4077 = vsel %vm171, %v3989, 0
      %v4080 = vsel %vm171, %v3991, 0
      %v4083 = vsel %vm171, %v3993, 0
      %v4086 = vsel %vm171, %v3995, 0
      %v4089 = vsel %vm171, %v3997, 0
      %v4092 = vsel %vm171, %v3999, 0
      %v4095 = vsel %vm171, %v4001, 0
      %v4098 = vsel %vm171, %v4003, 0
      %v4101 = vsel %vm866, %v641, 0
      %4103 = vmatprep.subr.mxu0 0.0
      %4104 = vmatpush1.msra.mxu0 0.0
      %4105 = vmatprep.subr.mxu0 0.0
      %4106 = vmatpush1.msra.mxu0 0.0
      %4107 = vmatprep.subr.mxu0 0.0
      %4108 = vmatpush1.msra.mxu0 0.0
      %4109 = vmatprep.subr.mxu0 0.0
      %4110 = vmatpush1.msra.mxu0 0.0
      %4111 = vmatprep.subr.mxu0 0.0
      %4112 = vmatpush1.msra.mxu0 0.0
      %4113 = vmatprep.subr.mxu0 0.0
      %4114 = vmatpush1.msra.mxu0 0.0
      %4115 = vmatprep.subr.mxu0 0.0
      %4116 = vmatpush1.msra.mxu0 0.0
      %4117 = vmatprep.subr.mxu0 0.0
      %4118 = vmatpush1.msra.mxu0 0.0
      %4119 = vmatprep.subr.mxu0 0.0
      %4120 = vmatpush1.msra.mxu0 0.0
      %4121 = vmatprep.subr.mxu0 0.0
      %4122 = vmatpush1.msra.mxu0 0.0
      %4123 = vmatprep.subr.mxu0 0.0
      %4124 = vmatpush1.msra.mxu0 0.0
      %4125 = vmatprep.subr.mxu0 0.0
      %4126 = vmatpush1.msra.mxu0 0.0
      %4127 = vmatprep.subr.mxu0 0.0
      %4128 = vmatpush1.msra.mxu0 0.0
      %4129 = vmatprep.subr.mxu0 0.0
      %4130 = vmatpush1.msra.mxu0 0.0
      %4131 = vmatprep.subr.mxu0 0.0
      %4132 = vmatpush1.msra.mxu0 0.0
      %4133 = vmatprep.subr.mxu0 0.0
      %4134 = vmatpush1.msra.mxu0 %v4101
      %4135 = vmatprep.subr.mxu0 0.0
      %4136 = vmatpush2.msra.mxu0 0.0
      %4137 = vmatprep.subr.mxu0 0.0
      %4138 = vmatpush2.msra.mxu0 0.0
      %4139 = vmatprep.subr.mxu0 0.0
      %4140 = vmatpush2.msra.mxu0 0.0
      %4141 = vmatprep.subr.mxu0 0.0
      %4142 = vmatpush2.msra.mxu0 0.0
      %4143 = vmatprep.subr.mxu0 0.0
      %4144 = vmatpush2.msra.mxu0 0.0
      %4145 = vmatprep.subr.mxu0 0.0
      %4146 = vmatpush2.msra.mxu0 0.0
      %4147 = vmatprep.subr.mxu0 0.0
      %4148 = vmatpush2.msra.mxu0 0.0
      %4149 = vmatprep.subr.mxu0 0.0
      %4150 = vmatpush2.msra.mxu0 0.0
      %4151 = vmatprep.subr.mxu0 0.0
      %4152 = vmatpush2.msra.mxu0 0.0
      %4153 = vmatprep.subr.mxu0 0.0
      %4154 = vmatpush2.msra.mxu0 0.0
      %4155 = vmatprep.subr.mxu0 0.0
      %4156 = vmatpush2.msra.mxu0 0.0
      %4157 = vmatprep.subr.mxu0 0.0
      %4158 = vmatpush2.msra.mxu0 0.0
      %4159 = vmatprep.subr.mxu0 0.0
      %4160 = vmatpush2.msra.mxu0 0.0
      %4161 = vmatprep.subr.mxu0 0.0
      %4162 = vmatpush2.msra.mxu0 0.0
      %4163 = vmatprep.subr.mxu0 0.0
      %4164 = vmatpush2.msra.mxu0 0.0
      %4165 = vmatprep.subr.mxu0 0.0
      %4166 = vmatpush2.msra.mxu0 0.0
      %4167 = vmatprep.mubr.f32.mxu0 0.0
      %4168 = vmatmul.mubr.f32.gmra.mxu0 %v4005
      %v4169 = vpop.f32.mrf.mxu0
      %v4170 = vadd.f32 0.0, %v4169
      %v4171 = vpop.f32.mrf.mxu0
      %4172 = vmatprep.mubr.f32.mxu0 0.0
      %4173 = vmatmul.mubr.f32.gmra.mxu0 %v4008
      %v4174 = vpop.f32.mrf.mxu0
      %v4175 = vadd.f32 0.0, %v4174
      %v4176 = vpop.f32.mrf.mxu0
      %4177 = vmatprep.mubr.f32.mxu0 0.0
      %4178 = vmatmul.mubr.f32.gmra.mxu0 %v4011
      %v4179 = vpop.f32.mrf.mxu0
      %v4180 = vadd.f32 0.0, %v4179
      %v4181 = vpop.f32.mrf.mxu0
      %4182 = vmatprep.mubr.f32.mxu0 0.0
      %4183 = vmatmul.mubr.f32.gmra.mxu0 %v4014
      %v4184 = vpop.f32.mrf.mxu0
      %v4185 = vadd.f32 0.0, %v4184
      %v4186 = vpop.f32.mrf.mxu0
      %4187 = vmatprep.mubr.f32.mxu0 0.0
      %4188 = vmatmul.mubr.f32.gmra.mxu0 %v4017
      %v4189 = vpop.f32.mrf.mxu0
      %v4190 = vadd.f32 0.0, %v4189
      %v4191 = vpop.f32.mrf.mxu0
      %4192 = vmatprep.mubr.f32.mxu0 0.0
      %4193 = vmatmul.mubr.f32.gmra.mxu0 %v4020
      %v4194 = vpop.f32.mrf.mxu0
      %v4195 = vadd.f32 0.0, %v4194
      %v4196 = vpop.f32.mrf.mxu0
      %4197 = vmatprep.mubr.f32.mxu0 0.0
      %4198 = vmatmul.mubr.f32.gmra.mxu0 %v4023
      %v4199 = vpop.f32.mrf.mxu0
      %v4200 = vadd.f32 0.0, %v4199
      %v4201 = vpop.f32.mrf.mxu0
      %4202 = vmatprep.mubr.f32.mxu0 0.0
      %4203 = vmatmul.mubr.f32.gmra.mxu0 %v4026
      %v4204 = vpop.f32.mrf.mxu0
      %v4205 = vadd.f32 0.0, %v4204
      %v4206 = vpop.f32.mrf.mxu0
      %4207 = vmatprep.mubr.f32.mxu0 0.0
      %4208 = vmatmul.mubr.f32.gmra.mxu0 %v4029
      %v4209 = vpop.f32.mrf.mxu0
      %v4210 = vadd.f32 0.0, %v4209
      %v4211 = vpop.f32.mrf.mxu0
      %4212 = vmatprep.mubr.f32.mxu0 0.0
      %4213 = vmatmul.mubr.f32.gmra.mxu0 %v4032
      %v4214 = vpop.f32.mrf.mxu0
      %v4215 = vadd.f32 0.0, %v4214
      %v4216 = vpop.f32.mrf.mxu0
      %4217 = vmatprep.mubr.f32.mxu0 0.0
      %4218 = vmatmul.mubr.f32.gmra.mxu0 %v4035
      %v4219 = vpop.f32.mrf.mxu0
      %v4220 = vadd.f32 0.0, %v4219
      %v4221 = vpop.f32.mrf.mxu0
      %4222 = vmatprep.mubr.f32.mxu0 0.0
      %4223 = vmatmul.mubr.f32.gmra.mxu0 %v4038
      %v4224 = vpop.f32.mrf.mxu0
      %v4225 = vadd.f32 0.0, %v4224
      %v4226 = vpop.f32.mrf.mxu0
      %4227 = vmatprep.mubr.f32.mxu0 0.0
      %4228 = vmatmul.mubr.f32.gmra.mxu0 %v4041
      %v4229 = vpop.f32.mrf.mxu0
      %v4230 = vadd.f32 0.0, %v4229
      %v4231 = vpop.f32.mrf.mxu0
      %4232 = vmatprep.mubr.f32.mxu0 0.0
      %4233 = vmatmul.mubr.f32.gmra.mxu0 %v4044
      %v4234 = vpop.f32.mrf.mxu0
      %v4235 = vadd.f32 0.0, %v4234
      %v4236 = vpop.f32.mrf.mxu0
      %4237 = vmatprep.mubr.f32.mxu0 0.0
      %4238 = vmatmul.mubr.f32.gmra.mxu0 %v4047
      %v4239 = vpop.f32.mrf.mxu0
      %v4240 = vadd.f32 0.0, %v4239
      %v4241 = vpop.f32.mrf.mxu0
      %4242 = vmatprep.mubr.f32.mxu0 0.0
      %4243 = vmatmul.mubr.f32.gmra.mxu0 %v4050
      %v4244 = vpop.f32.mrf.mxu0
      %v4245 = vadd.f32 0.0, %v4244
      %v4246 = vpop.f32.mrf.mxu0
      %4247 = vmatprep.mubr.f32.mxu0 0.0
      %4248 = vmatmul.mubr.f32.gmra.mxu0 %v4053
      %v4249 = vpop.f32.mrf.mxu0
      %v4250 = vadd.f32 0.0, %v4249
      %v4251 = vpop.f32.mrf.mxu0
      %4252 = vmatprep.mubr.f32.mxu0 0.0
      %4253 = vmatmul.mubr.f32.gmra.mxu0 %v4056
      %v4254 = vpop.f32.mrf.mxu0
      %v4255 = vadd.f32 0.0, %v4254
      %v4256 = vpop.f32.mrf.mxu0
      %4257 = vmatprep.mubr.f32.mxu0 0.0
      %4258 = vmatmul.mubr.f32.gmra.mxu0 %v4059
      %v4259 = vpop.f32.mrf.mxu0
      %v4260 = vadd.f32 0.0, %v4259
      %v4261 = vpop.f32.mrf.mxu0
      %4262 = vmatprep.mubr.f32.mxu0 0.0
      %4263 = vmatmul.mubr.f32.gmra.mxu0 %v4062
      %v4264 = vpop.f32.mrf.mxu0
      %v4265 = vadd.f32 0.0, %v4264
      %v4266 = vpop.f32.mrf.mxu0
      %4267 = vmatprep.mubr.f32.mxu0 0.0
      %4268 = vmatmul.mubr.f32.gmra.mxu0 %v4065
      %v4269 = vpop.f32.mrf.mxu0
      %v4270 = vadd.f32 0.0, %v4269
      %v4271 = vpop.f32.mrf.mxu0
      %4272 = vmatprep.mubr.f32.mxu0 0.0
      %4273 = vmatmul.mubr.f32.gmra.mxu0 %v4068
      %v4274 = vpop.f32.mrf.mxu0
      %v4275 = vadd.f32 0.0, %v4274
      %v4276 = vpop.f32.mrf.mxu0
      %4277 = vmatprep.mubr.f32.mxu0 0.0
      %4278 = vmatmul.mubr.f32.gmra.mxu0 %v4071
      %v4279 = vpop.f32.mrf.mxu0
      %v4280 = vadd.f32 0.0, %v4279
      %v4281 = vpop.f32.mrf.mxu0
      %4282 = vmatprep.mubr.f32.mxu0 0.0
      %4283 = vmatmul.mubr.f32.gmra.mxu0 %v4074
      %v4284 = vpop.f32.mrf.mxu0
      %v4285 = vadd.f32 0.0, %v4284
      %v4286 = vpop.f32.mrf.mxu0
      %4287 = vmatprep.mubr.f32.mxu0 0.0
      %4288 = vmatmul.mubr.f32.gmra.mxu0 %v4077
      %v4289 = vpop.f32.mrf.mxu0
      %v4290 = vadd.f32 0.0, %v4289
      %v4291 = vpop.f32.mrf.mxu0
      %4292 = vmatprep.mubr.f32.mxu0 0.0
      %4293 = vmatmul.mubr.f32.gmra.mxu0 %v4080
      %v4294 = vpop.f32.mrf.mxu0
      %v4295 = vadd.f32 0.0, %v4294
      %v4296 = vpop.f32.mrf.mxu0
      %4297 = vmatprep.mubr.f32.mxu0 0.0
      %4298 = vmatmul.mubr.f32.gmra.mxu0 %v4083
      %v4299 = vpop.f32.mrf.mxu0
      %v4300 = vadd.f32 0.0, %v4299
      %v4301 = vpop.f32.mrf.mxu0
      %4302 = vmatprep.mubr.f32.mxu0 0.0
      %4303 = vmatmul.mubr.f32.gmra.mxu0 %v4086
      %v4304 = vpop.f32.mrf.mxu0
      %v4305 = vadd.f32 0.0, %v4304
      %v4306 = vpop.f32.mrf.mxu0
      %4307 = vmatprep.mubr.f32.mxu0 0.0
      %4308 = vmatmul.mubr.f32.gmra.mxu0 %v4089
      %v4309 = vpop.f32.mrf.mxu0
      %v4310 = vadd.f32 0.0, %v4309
      %v4311 = vpop.f32.mrf.mxu0
      %4312 = vmatprep.mubr.f32.mxu0 0.0
      %4313 = vmatmul.mubr.f32.gmra.mxu0 %v4092
      %v4314 = vpop.f32.mrf.mxu0
      %v4315 = vadd.f32 0.0, %v4314
      %v4316 = vpop.f32.mrf.mxu0
      %4317 = vmatprep.mubr.f32.mxu0 0.0
      %4318 = vmatmul.mubr.f32.gmra.mxu0 %v4095
      %v4319 = vpop.f32.mrf.mxu0
      %v4320 = vadd.f32 0.0, %v4319
      %v4321 = vpop.f32.mrf.mxu0
      %4322 = vmatprep.mubr.f32.mxu0 0.0
      %4323 = vmatmul.mubr.f32.gmra.mxu0 %v4098
      %v4324 = vpop.f32.mrf.mxu0
      %v4325 = vadd.f32 0.0, %v4324
      %v4326 = vpop.f32.mrf.mxu0
      %4327 = vdwg.mxu0
      %v4328 = vadd.f32 %v3908, %v4170
      %v4329 = vadd.f32 %v3909, %v4175
      %v4330 = vadd.f32 %v3910, %v4180
      %v4331 = vadd.f32 %v3911, %v4185
      %v4332 = vadd.f32 %v3912, %v4190
      %v4333 = vadd.f32 %v3913, %v4195
      %v4334 = vadd.f32 %v3914, %v4200
      %v4335 = vadd.f32 %v3915, %v4205
      %v4336 = vadd.f32 %v3916, %v4210
      %v4337 = vadd.f32 %v3917, %v4215
      %v4338 = vadd.f32 %v3918, %v4220
      %v4339 = vadd.f32 %v3919, %v4225
      %v4340 = vadd.f32 %v3920, %v4230
      %v4341 = vadd.f32 %v3921, %v4235
      %v4342 = vadd.f32 %v3922, %v4240
      %v4343 = vadd.f32 %v3923, %v4245
      %v4344 = vadd.f32 %v3924, %v4250
      %v4345 = vadd.f32 %v3925, %v4255
      %v4346 = vadd.f32 %v3926, %v4260
      %v4347 = vadd.f32 %v3927, %v4265
      %v4348 = vadd.f32 %v3928, %v4270
      %v4349 = vadd.f32 %v3929, %v4275
      %v4350 = vadd.f32 %v3930, %v4280
      %v4351 = vadd.f32 %v3931, %v4285
      %v4352 = vadd.f32 %v3932, %v4290
      %v4353 = vadd.f32 %v3933, %v4295
      %v4354 = vadd.f32 %v3934, %v4300
      %v4355 = vadd.f32 %v3935, %v4305
      %v4356 = vadd.f32 %v3936, %v4310
      %v4357 = vadd.f32 %v3937, %v4315
      %v4358 = vadd.f32 %v3938, %v4320
      %v4359 = vadd.f32 %v3939, %v4325
      %v4360 = vld [vmem:[%s2] sm:$0x1]
      %v4362 = vlaneseq
      %v4363 = vshrl.u32 %v4362, 7
      %v4364 = vsub.s32 0, %v4363
      %v4365 = vrot.slane %v4360, %v4364
      %v4367 = vadd.f32 %v4328, %v4365
      %v4368 = vadd.f32 %v4329, %v4365
      %v4369 = vadd.f32 %v4330, %v4365
      %v4370 = vadd.f32 %v4331, %v4365
      %v4371 = vadd.f32 %v4332, %v4365
      %v4372 = vadd.f32 %v4333, %v4365
      %v4373 = vadd.f32 %v4334, %v4365
      %v4374 = vadd.f32 %v4335, %v4365
      %v4375 = vadd.f32 %v4336, %v4365
      %v4376 = vadd.f32 %v4337, %v4365
      %v4377 = vadd.f32 %v4338, %v4365
      %v4378 = vadd.f32 %v4339, %v4365
      %v4379 = vadd.f32 %v4340, %v4365
      %v4380 = vadd.f32 %v4341, %v4365
      %v4381 = vadd.f32 %v4342, %v4365
      %v4382 = vadd.f32 %v4343, %v4365
      %v4383 = vadd.f32 %v4344, %v4365
      %v4384 = vadd.f32 %v4345, %v4365
      %v4385 = vadd.f32 %v4346, %v4365
      %v4386 = vadd.f32 %v4347, %v4365
      %v4387 = vadd.f32 %v4348, %v4365
      %v4388 = vadd.f32 %v4349, %v4365
      %v4389 = vadd.f32 %v4350, %v4365
      %v4390 = vadd.f32 %v4351, %v4365
      %v4391 = vadd.f32 %v4352, %v4365
      %v4392 = vadd.f32 %v4353, %v4365
      %v4393 = vadd.f32 %v4354, %v4365
      %v4394 = vadd.f32 %v4355, %v4365
      %v4395 = vadd.f32 %v4356, %v4365
      %v4396 = vadd.f32 %v4357, %v4365
      %v4397 = vadd.f32 %v4358, %v4365
      %v4398 = vadd.f32 %v4359, %v4365
      %v4399 = vmax.f32 %v4367, 0.0
      %v4400 = vmax.f32 %v4368, 0.0
      %v4401 = vmax.f32 %v4369, 0.0
      %v4402 = vmax.f32 %v4370, 0.0
      %v4403 = vmax.f32 %v4371, 0.0
      %v4404 = vmax.f32 %v4372, 0.0
      %v4405 = vmax.f32 %v4373, 0.0
      %v4406 = vmax.f32 %v4374, 0.0
      %v4407 = vmax.f32 %v4375, 0.0
      %v4408 = vmax.f32 %v4376, 0.0
      %v4409 = vmax.f32 %v4377, 0.0
      %v4410 = vmax.f32 %v4378, 0.0
      %v4411 = vmax.f32 %v4379, 0.0
      %v4412 = vmax.f32 %v4380, 0.0
      %v4413 = vmax.f32 %v4381, 0.0
      %v4414 = vmax.f32 %v4382, 0.0
      %v4415 = vmax.f32 %v4383, 0.0
      %v4416 = vmax.f32 %v4384, 0.0
      %v4417 = vmax.f32 %v4385, 0.0
      %v4418 = vmax.f32 %v4386, 0.0
      %v4419 = vmax.f32 %v4387, 0.0
      %v4420 = vmax.f32 %v4388, 0.0
      %v4421 = vmax.f32 %v4389, 0.0
      %v4422 = vmax.f32 %v4390, 0.0
      %v4423 = vmax.f32 %v4391, 0.0
      %v4424 = vmax.f32 %v4392, 0.0
      %v4425 = vmax.f32 %v4393, 0.0
      %v4426 = vmax.f32 %v4394, 0.0
      %v4427 = vmax.f32 %v4395, 0.0
      %v4428 = vmax.f32 %v4396, 0.0
      %v4429 = vmax.f32 %v4397, 0.0
      %v4430 = vmax.f32 %v4398, 0.0
      %v4431 = vpack.c.bf16 %v4400, %v4399
      %v4432 = vpack.c.bf16 %v4402, %v4401
      %v4433 = vpack.c.bf16 %v4404, %v4403
      %v4434 = vpack.c.bf16 %v4406, %v4405
      %v4435 = vpack.c.bf16 %v4408, %v4407
      %v4436 = vpack.c.bf16 %v4410, %v4409
      %v4437 = vpack.c.bf16 %v4412, %v4411
      %v4438 = vpack.c.bf16 %v4414, %v4413
      %v4439 = vpack.c.bf16 %v4416, %v4415
      %v4440 = vpack.c.bf16 %v4418, %v4417
      %v4441 = vpack.c.bf16 %v4420, %v4419
      %v4442 = vpack.c.bf16 %v4422, %v4421
      %v4443 = vpack.c.bf16 %v4424, %v4423
      %v4444 = vpack.c.bf16 %v4426, %v4425
      %v4445 = vpack.c.bf16 %v4428, %v4427
      %v4446 = vpack.c.bf16 %v4430, %v4429
      %v4463 = vunpack.c.l.b16 %v4431
      %v4464 = vunpack.c.h.b16 %v4431
      %v4465 = vunpack.c.l.b16 %v4432
      %v4466 = vunpack.c.h.b16 %v4432
      %v4467 = vunpack.c.l.b16 %v4433
      %v4468 = vunpack.c.h.b16 %v4433
      %v4469 = vunpack.c.l.b16 %v4434
      %v4470 = vunpack.c.h.b16 %v4434
      %v4471 = vunpack.c.l.b16 %v4435
      %v4472 = vunpack.c.h.b16 %v4435
      %v4473 = vunpack.c.l.b16 %v4436
      %v4474 = vunpack.c.h.b16 %v4436
      %v4475 = vunpack.c.l.b16 %v4437
      %v4476 = vunpack.c.h.b16 %v4437
      %v4477 = vunpack.c.l.b16 %v4438
      %v4478 = vunpack.c.h.b16 %v4438
      %v4479 = vunpack.c.l.b16 %v4439
      %v4480 = vunpack.c.h.b16 %v4439
      %v4481 = vunpack.c.l.b16 %v4440
      %v4482 = vunpack.c.h.b16 %v4440
      %v4483 = vunpack.c.l.b16 %v4441
      %v4484 = vunpack.c.h.b16 %v4441
      %v4485 = vunpack.c.l.b16 %v4442
      %v4486 = vunpack.c.h.b16 %v4442
      %v4487 = vunpack.c.l.b16 %v4443
      %v4488 = vunpack.c.h.b16 %v4443
      %v4489 = vunpack.c.l.b16 %v4444
      %v4490 = vunpack.c.h.b16 %v4444
      %v4491 = vunpack.c.l.b16 %v4445
      %v4492 = vunpack.c.h.b16 %v4445
      %v4493 = vunpack.c.l.b16 %v4446
      %v4494 = vunpack.c.h.b16 %v4446
      %v4495 = vpack.c.b16 %v4463, %v4463
      %v4496 = vpack.c.b16 %v4464, %v4464
      %v4497 = vpack.c.b16 %v4465, %v4465
      %v4498 = vpack.c.b16 %v4466, %v4466
      %v4499 = vpack.c.b16 %v4467, %v4467
      %v4500 = vpack.c.b16 %v4468, %v4468
      %v4501 = vpack.c.b16 %v4469, %v4469
      %v4502 = vpack.c.b16 %v4470, %v4470
      %v4503 = vpack.c.b16 %v4471, %v4471
      %v4504 = vpack.c.b16 %v4472, %v4472
      %v4505 = vpack.c.b16 %v4473, %v4473
      %v4506 = vpack.c.b16 %v4474, %v4474
      %v4507 = vpack.c.b16 %v4475, %v4475
      %v4508 = vpack.c.b16 %v4476, %v4476
      %v4509 = vpack.c.b16 %v4477, %v4477
      %v4510 = vpack.c.b16 %v4478, %v4478
      %v4511 = vpack.c.b16 %v4479, %v4479
      %v4512 = vpack.c.b16 %v4480, %v4480
      %v4513 = vpack.c.b16 %v4481, %v4481
      %v4514 = vpack.c.b16 %v4482, %v4482
      %v4515 = vpack.c.b16 %v4483, %v4483
      %v4516 = vpack.c.b16 %v4484, %v4484
      %v4517 = vpack.c.b16 %v4485, %v4485
      %v4518 = vpack.c.b16 %v4486, %v4486
      %v4519 = vpack.c.b16 %v4487, %v4487
      %v4520 = vpack.c.b16 %v4488, %v4488
      %v4521 = vpack.c.b16 %v4489, %v4489
      %v4522 = vpack.c.b16 %v4490, %v4490
      %v4523 = vpack.c.b16 %v4491, %v4491
      %v4524 = vpack.c.b16 %v4492, %v4492
      %v4525 = vpack.c.b16 %v4493, %v4493
      %v4526 = vpack.c.b16 %v4494, %v4494
      %4559 = vst [vmem:[%s170] sm:$0xf] %v4495
      %4560 = vst [vmem:[%s170 + $0x4] sm:$0xf] %v4496
      %4561 = vst [vmem:[%s170 + $0x8] sm:$0xf] %v4497
      %4562 = vst [vmem:[%s170 + $0xc] sm:$0xf] %v4498
      %4563 = vst [vmem:[%s170 + $0x10] sm:$0xf] %v4499
      %4564 = vst [vmem:[%s170 + $0x14] sm:$0xf] %v4500
      %4565 = vst [vmem:[%s170 + $0x18] sm:$0xf] %v4501
      %4566 = vst [vmem:[%s170 + $0x1c] sm:$0xf] %v4502
      %4567 = vst [vmem:[%s170 + $0x20] sm:$0xf] %v4503
      %4568 = vst [vmem:[%s170 + $0x24] sm:$0xf] %v4504
      %4569 = vst [vmem:[%s170 + $0x28] sm:$0xf] %v4505
      %4570 = vst [vmem:[%s170 + $0x2c] sm:$0xf] %v4506
      %4571 = vst [vmem:[%s170 + $0x30] sm:$0xf] %v4507
      %4572 = vst [vmem:[%s170 + $0x34] sm:$0xf] %v4508
      %4573 = vst [vmem:[%s170 + $0x38] sm:$0xf] %v4509
      %4574 = vst [vmem:[%s170 + $0x3c] sm:$0xf] %v4510
      %4575 = vst [vmem:[%s170 + $0x40] sm:$0xf] %v4511
      %4576 = vst [vmem:[%s170 + $0x44] sm:$0xf] %v4512
      %4577 = vst [vmem:[%s170 + $0x48] sm:$0xf] %v4513
      %4578 = vst [vmem:[%s170 + $0x4c] sm:$0xf] %v4514
      %4579 = vst [vmem:[%s170 + $0x50] sm:$0xf] %v4515
      %4580 = vst [vmem:[%s170 + $0x54] sm:$0xf] %v4516
      %4581 = vst [vmem:[%s170 + $0x58] sm:$0xf] %v4517
      %4582 = vst [vmem:[%s170 + $0x5c] sm:$0xf] %v4518
      %4583 = vst [vmem:[%s170 + $0x60] sm:$0xf] %v4519
      %4584 = vst [vmem:[%s170 + $0x64] sm:$0xf] %v4520
      %4585 = vst [vmem:[%s170 + $0x68] sm:$0xf] %v4521
      %4586 = vst [vmem:[%s170 + $0x6c] sm:$0xf] %v4522
      %4587 = vst [vmem:[%s170 + $0x70] sm:$0xf] %v4523
      %4588 = vst [vmem:[%s170 + $0x74] sm:$0xf] %v4524
      %4589 = vst [vmem:[%s170 + $0x78] sm:$0xf] %v4525
      %4590 = vst [vmem:[%s170 + $0x7c] sm:$0xf] %v4526
      %p4591 = scmp.lt.s32.totalorder %s14, 1
      %s4592 = scalar_select %p4591, %s14, 1
      %s4593 = smul.addr %s4592, 32
      %s4594 = smul.addr %s4593, 4
      %s4595 = scalar_lea.vmem %s3, %s4594
      // Predicated region
      $region33: #{encoder_forward.3} parent=31 // pred_check
        %p4596 = pneg %p100
      $region34: #{encoder_forward.3} parent=31 // pred_check_branch
        %4598 = sbr.rel (%p4596) target = $region36
      $region35: #{encoder_forward.3} parent=31 // pred_region
        _
      $region36: #{encoder_forward.3} parent=31 // pred_fallthru
        _
    $region32: #{encoder_forward.3} parent=5 // pred_fallthru
      _
    %p4599 = scmp.le.s32.totalorder 2, %s9
    // Predicated region
    $region37: #{encoder_forward.3} parent=5 // pred_check
      %p4600 = pneg %p4599
    $region38: #{encoder_forward.3} parent=5 // pred_check_branch
      %4602 = sbr.rel (%p4600) target = $region40
    $region39: #{encoder_forward.3} parent=5 // pred_region
      %s4603 = ssub.s32 %s9, 2
      // Predicated region
      $region41: #{encoder_forward.3} parent=39 // pred_check
        %p4604 = pneg %p106
      $region42: #{encoder_forward.3} parent=39 // pred_check_branch
        %4606 = sbr.rel (%p4604) target = $region44
      $region43: #{encoder_forward.3} parent=39 // pred_region
        %p4607 = scmp.lt.s32.totalorder %s15, 1
        %s4608 = scalar_select %p4607, %s15, 1
        %s4609 = smul.addr %s4608, 32
        %s4610 = smul.addr %s4609, 4
        %s4611 = scalar_lea.vmem %s3, %s4610
      $region44: #{encoder_forward.3} parent=39 // pred_fallthru
        _
    $region40: #{encoder_forward.3} parent=5 // pred_fallthru
      _
  $region6: #{encoder_forward.3} parent=0 // loop_footer
    %s13 = sadd.s32 1, %s9
  $region7: #{encoder_forward.3} parent=0 // loop_footer_branch
    %8 = sbr.rel target = $region3
  $region8: #{encoder_forward.3} parent=0 // loop_exit
    _

</llo_original>
